<compile_context>
chip_gen: v7x
topology: tpu7x:2x2x1
jax: 0.10.0
libtpu: 0.0.40
codegen_flags: <defaults>
</compile_context>

<pallas_src>
import functools

import jax
import jax.numpy as jnp
from jax.experimental import pallas as pl
from jax.experimental.pallas import tpu as pltpu

LANE = 128


def _double_conv_kernel(
    x_ref,    # (1, H*W, Cin)  input rows (row-major over H,W), true channels
    w1_ref,   # (9, Cin, Cp)   conv1 weights, taps flattened ki*3+kj, out-ch padded
    w2_ref,   # (9, Cp, Cp)    conv2 weights, both channel dims padded
    p_ref,    # (8, Cp)        rows: b1, g1, be1, b2, g2, be2, 0, 0
    out_ref,  # (1, H*W, Cp)   output rows (channel-padded, lane-dense)
    x1f_ref,  # VMEM ((H+2)*W, Cin)  conv1 input, H-halo padded
    x2f_ref,  # VMEM ((H+2)*W, Cp)   conv2 input (= conv1 output), H-halo padded
    *,
    H, W, Cin, Cout, Cp, B, eps,
):
    HW = H * W
    nblk = HW // B
    count = float(HW * Cout)          # TRUE element count for GroupNorm(1, C)

    # Column masks for the +/-1 W-shifts.  Blocks start at multiples of W, so
    # the in-block column index is (t mod W); the roll wrap-around rows land
    # exactly on the masked columns, hence a block-local roll is exact.
    col = jax.lax.broadcasted_iota(jnp.int32, (B, 1), 0) % W
    mask_r = (col < (W - 1)).astype(jnp.float32)   # neighbour j+1 valid
    mask_l = (col > 0).astype(jnp.float32)         # neighbour j-1 valid

    # ---- stage input: zero H-halo rows, interior = x (full-width store) ----
    zrow_in = jnp.zeros((W, Cin), jnp.float32)
    x1f_ref[0:W, :] = zrow_in
    x1f_ref[(H + 1) * W:(H + 2) * W, :] = zrow_in
    x1f_ref[W:W + HW, :] = x_ref[0]
    # conv2 input: only the halo rows need zeroing (interior fully rewritten)
    zrow_mid = jnp.zeros((W, Cp), jnp.float32)
    x2f_ref[0:W, :] = zrow_mid
    x2f_ref[(H + 1) * W:(H + 2) * W, :] = zrow_mid

    def conv3x3(src_ref, w_ref, bias, write):
        """3x3 conv (padding=1) over the flattened H-halo buffer.

        Writes the pre-norm result via `write(r0, value)` and returns
        (sum, sum_of_squares) over all written elements (padded lanes are 0).
        """
        s = jnp.zeros((), jnp.float32)
        ssq = jnp.zeros((), jnp.float32)
        for blk in range(nblk):
            r0 = blk * B
            acc = jnp.zeros((B, Cp), jnp.float32)
            for ki in range(3):
                slab0 = src_ref[pl.ds(ki * W + r0, B), :]     # aligned slice
                for kj in range(3):
                    if kj == 1:
                        slab = slab0
                    elif kj == 2:   # needs column j+1
                        slab = pltpu.roll(slab0, shift=B - 1, axis=0) * mask_r
                    else:           # needs column j-1
                        slab = pltpu.roll(slab0, shift=1, axis=0) * mask_l
                    acc += jnp.dot(slab, w_ref[ki * 3 + kj],
                                   preferred_element_type=jnp.float32)
            acc = acc + bias
            write(r0, acc)
            s = s + jnp.sum(acc)
            ssq = ssq + jnp.sum(acc * acc)
        return s, ssq

    def norm_relu(read, write, s, ssq, gamma, beta):
        """GroupNorm(1, Cout) + ReLU as a second in-place pass."""
        mean = s / count
        var = jnp.maximum(ssq / count - mean * mean, 0.0)
        inv = jax.lax.rsqrt(var + eps)
        for blk in range(nblk):
            r0 = blk * B
            v = read(r0)
            write(r0, jnp.maximum((v - mean) * inv * gamma + beta, 0.0))

    b1, g1, be1 = p_ref[0:1, :], p_ref[1:2, :], p_ref[2:3, :]
    b2, g2, be2 = p_ref[3:4, :], p_ref[4:5, :], p_ref[5:6, :]

    def write_mid(r0, v):
        x2f_ref[pl.ds(W + r0, B), :] = v

    def read_mid(r0):
        return x2f_ref[pl.ds(W + r0, B), :]

    def write_out(r0, v):
        out_ref[0, pl.ds(r0, B), :] = v

    def read_out(r0):
        return out_ref[0, pl.ds(r0, B), :]

    # conv1 -> GN -> ReLU  (result becomes the halo-padded conv2 input)
    s1, q1 = conv3x3(x1f_ref, w1_ref, b1, write_mid)
    norm_relu(read_mid, write_mid, s1, q1, g1, be1)

    # conv2 -> GN -> ReLU  (written straight into the output block, in place)
    s2, q2 = conv3x3(x2f_ref, w2_ref, b2, write_out)
    norm_relu(read_out, write_out, s2, q2, g2, be2)


def _round_up(x, m):
    return (x + m - 1) // m * m


def double_conv_pallas(x_nchw, params, *, eps=1e-5):
    """x_nchw: (N, Cin, H, W) float32.  Returns (N, Cout, H, W) float32."""
    w1, b1, g1, be1, w2, b2, g2, be2 = params
    N, Cin, H, W = x_nchw.shape
    Cout = w1.shape[-1]
    Cp = _round_up(max(Cout, 1), LANE)

    # Row block size: a multiple of W (so the block-local roll/mask trick is
    # exact), roughly 128 rows, dividing H*W.
    target_rows = max(1, 128 // max(W, 1))
    rpb = 1
    for d in range(1, H + 1):
        if H % d == 0 and d <= target_rows:
            rpb = d
    B = rpb * W

    # ---- parameter packing (tiny, done once) ----
    def pad_c(v):
        return jnp.pad(v.astype(jnp.float32), (0, Cp - v.shape[0]))

    w1p = jnp.pad(w1.astype(jnp.float32),
                  ((0, 0), (0, 0), (0, 0), (0, Cp - Cout))).reshape(9, Cin, Cp)
    w2p = jnp.pad(w2.astype(jnp.float32),
                  ((0, 0), (0, 0), (0, Cp - Cout), (0, Cp - Cout))).reshape(9, Cp, Cp)
    prm = jnp.stack(
        [pad_c(b1), pad_c(g1), pad_c(be1), pad_c(b2), pad_c(g2), pad_c(be2),
         jnp.zeros((Cp,), jnp.float32), jnp.zeros((Cp,), jnp.float32)], axis=0)

    # NCHW -> row-major (N, H*W, Cin); no spatial / channel padding in HBM.
    x_rows = jnp.transpose(x_nchw, (0, 2, 3, 1)).reshape(N, H * W, Cin)

    kernel = functools.partial(
        _double_conv_kernel,
        H=H, W=W, Cin=Cin, Cout=Cout, Cp=Cp, B=B, eps=eps)

    out_rows = pl.pallas_call(
        kernel,
        out_shape=jax.ShapeDtypeStruct((N, H * W, Cp), jnp.float32),
        grid_spec=pltpu.PrefetchScalarGridSpec(
            num_scalar_prefetch=0,
            grid=(N,),
            in_specs=[
                pl.BlockSpec((1, H * W, Cin), lambda n: (n, 0, 0)),
                pl.BlockSpec((9, Cin, Cp), lambda n: (0, 0, 0)),
                pl.BlockSpec((9, Cp, Cp), lambda n: (0, 0, 0)),
                pl.BlockSpec((8, Cp), lambda n: (0, 0)),
            ],
            out_specs=pl.BlockSpec((1, H * W, Cp), lambda n: (n, 0, 0)),
            scratch_shapes=[
                pltpu.VMEM(((H + 2) * W, Cin), jnp.float32),
                pltpu.VMEM(((H + 2) * W, Cp), jnp.float32),
            ],
        ),
        compiler_params=pltpu.CompilerParams(
            dimension_semantics=("parallel",),
            vmem_limit_bytes=32 * 1024 * 1024,
        ),
    )(x_rows, w1p, w2p, prm)

    out = out_rows.reshape(N, H, W, Cp)[..., :Cout]
    return jnp.transpose(out, (0, 3, 1, 2))  # back to NCHW (matches nn.Conv2d)


def _reference(x_nchw, params, eps=1e-5):
    """Pure-JAX reference matching PyTorch semantics."""
    w1, b1, g1, be1, w2, b2, g2, be2 = params

    def block(x, w, b, g, be):
        y = jax.lax.conv_general_dilated(
            x, w, window_strides=(1, 1), padding=((1, 1), (1, 1)),
            dimension_numbers=("NCHW", "HWIO", "NCHW"))
        y = y + b[None, :, None, None]
        mean = jnp.mean(y, axis=(1, 2, 3), keepdims=True)
        var = jnp.mean((y - mean) ** 2, axis=(1, 2, 3), keepdims=True)
        y = (y - mean) * jax.lax.rsqrt(var + eps)
        y = y * g[None, :, None, None] + be[None, :, None, None]
        return jnp.maximum(y, 0.0)

    x = block(x_nchw, w1, b1, g1, be1)
    x = block(x, w2, b2, g2, be2)
    return x


if __name__ == "__main__":
    key = jax.random.PRNGKey(0)
    N, Cin, Cout, H, W = 2, 4, 8, 16, 16

    k = jax.random.split(key, 6)
    x = jax.random.normal(k[0], (N, Cin, H, W), dtype=jnp.float32)

    # Deterministic parameter init (HWIO conv weights; GroupNorm gamma=1, beta=0).
    w1 = jax.random.normal(k[1], (3, 3, Cin, Cout), jnp.float32) * (1.0 / (3 * 3 * Cin)) ** 0.5
    b1 = jax.random.normal(k[2], (Cout,), jnp.float32) * 0.05
    g1 = jnp.ones((Cout,), jnp.float32)
    be1 = jnp.zeros((Cout,), jnp.float32)
    w2 = jax.random.normal(k[3], (3, 3, Cout, Cout), jnp.float32) * (1.0 / (3 * 3 * Cout)) ** 0.5
    b2 = jax.random.normal(k[4], (Cout,), jnp.float32) * 0.05
    g2 = jnp.ones((Cout,), jnp.float32)
    be2 = jnp.zeros((Cout,), jnp.float32)
    params = (w1, b1, g1, be1, w2, b2, g2, be2)

    out = double_conv_pallas(x, params)
    out = jax.block_until_ready(out)

    ref = _reference(x, params)
    assert out.shape == (N, Cout, H, W)
    assert jnp.allclose(out, ref, atol=1e-3, rtol=1e-3), \
        f"max err = {jnp.max(jnp.abs(out - ref))}"

    print("KERNEL_OK")
</pallas_src>

<mosaic_0001>
module attributes {stable_mosaic.version = 11 : i64} {
  func.func @_double_conv_kernel(%arg0: i32, %arg1: memref<1x256x4xf32, #tpu.memory_space<vmem>>, %arg2: memref<9x4x128xf32, #tpu.memory_space<vmem>>, %arg3: memref<9x128x128xf32, #tpu.memory_space<vmem>>, %arg4: memref<8x128xf32, #tpu.memory_space<vmem>>, %arg5: memref<1x256x128xf32, #tpu.memory_space<vmem>>, %arg6: memref<288x4xf32, #tpu.memory_space<vmem>>, %arg7: memref<288x128xf32, #tpu.memory_space<vmem>>) attributes {dimension_semantics = [#tpu.dimension_semantics<parallel>], iteration_bounds = array<i64: 2>, scalar_prefetch = 0 : i64, scratch_operands = 2 : i64, tpu.core_type = #tpu.core_type<tc>, window_params = [{transform_indices = @transform_0, window_bounds = array<i64: 1, 256, 4>}, {pipeline_mode = #tpu.pipeline_mode<synchronous>, transform_indices = @transform_1, window_bounds = array<i64: 9, 4, 128>}, {pipeline_mode = #tpu.pipeline_mode<synchronous>, transform_indices = @transform_2, window_bounds = array<i64: 9, 128, 128>}, {pipeline_mode = #tpu.pipeline_mode<synchronous>, transform_indices = @transform_3, window_bounds = array<i64: 8, 128>}, {transform_indices = @transform_4, window_bounds = array<i64: 1, 256, 128>}]} {
    %0 = tpu.iota {dimensions = array<i32: 0>} : vector<128x1xi32>
    %c16_i32 = arith.constant 16 : i32
    %c0_i32 = arith.constant 0 : i32
    %1 = arith.cmpi eq, %c16_i32, %c0_i32 : i32
    %c1_i32 = arith.constant 1 : i32
    %2 = arith.select %1, %c1_i32, %c16_i32 : i32
    %3 = vector.broadcast %2 : i32 to vector<128x1xi32>
    %4 = arith.remsi %0, %3 : vector<128x1xi32>
    %c0_i32_0 = arith.constant 0 : i32
    %5 = vector.broadcast %c0_i32_0 : i32 to vector<128x1xi32>
    %6 = arith.cmpi ne, %4, %5 : vector<128x1xi32>
    %c0_i32_1 = arith.constant 0 : i32
    %7 = vector.broadcast %c0_i32_1 : i32 to vector<128x1xi32>
    %8 = arith.cmpi slt, %4, %7 : vector<128x1xi32>
    %c0_i32_2 = arith.constant 0 : i32
    %9 = arith.cmpi slt, %2, %c0_i32_2 : i32
    %10 = vector.broadcast %9 : i1 to vector<128x1xi1>
    %11 = vector.broadcast %10 : vector<128x1xi1> to vector<128x1xi1>
    %12 = arith.xori %8, %11 : vector<128x1xi1>
    %13 = arith.andi %12, %6 : vector<128x1xi1>
    %14 = vector.broadcast %2 : i32 to vector<128x1xi32>
    %15 = arith.addi %4, %14 : vector<128x1xi32>
    %16 = arith.select %13, %15, %4 : vector<128x1xi1>, vector<128x1xi32>
    %c15_i32 = arith.constant 15 : i32
    %17 = vector.broadcast %c15_i32 : i32 to vector<128x1xi32>
    %18 = arith.cmpi slt, %16, %17 : vector<128x1xi32>
    %19 = arith.extui %18 : vector<128x1xi1> to vector<128x1xi32>
    %20 = arith.sitofp %19 : vector<128x1xi32> to vector<128x1xf32>
    %c0_i32_3 = arith.constant 0 : i32
    %21 = vector.broadcast %c0_i32_3 : i32 to vector<128x1xi32>
    %22 = arith.cmpi sgt, %16, %21 : vector<128x1xi32>
    %23 = arith.extui %22 : vector<128x1xi1> to vector<128x1xi32>
    %24 = arith.sitofp %23 : vector<128x1xi32> to vector<128x1xf32>
    %cst = arith.constant 0.000000e+00 : f32
    %25 = vector.broadcast %cst : f32 to vector<16x4xf32>
    %c0 = arith.constant 0 : index
    %c0_4 = arith.constant 0 : index
    %26 = vector.load %arg6[%c0, %c0_4] : memref<288x4xf32, #tpu.memory_space<vmem>>, vector<16x4xf32>
    tpu.vector_store %arg6[%c0, %c0_4], %25 {strides = array<i32>} : memref<288x4xf32, #tpu.memory_space<vmem>>, vector<16x4xf32>,
    %c272 = arith.constant 272 : index
    %c0_5 = arith.constant 0 : index
    %27 = vector.load %arg6[%c272, %c0_5] : memref<288x4xf32, #tpu.memory_space<vmem>>, vector<16x4xf32>
    tpu.vector_store %arg6[%c272, %c0_5], %25 {strides = array<i32>} : memref<288x4xf32, #tpu.memory_space<vmem>>, vector<16x4xf32>,
    %c0_6 = arith.constant 0 : index
    %c0_7 = arith.constant 0 : index
    %c0_8 = arith.constant 0 : index
    %28 = vector.load %arg1[%c0_6, %c0_7, %c0_8] : memref<1x256x4xf32, #tpu.memory_space<vmem>>, vector<1x256x4xf32>
    %29 = vector.shape_cast %28 : vector<1x256x4xf32> to vector<256x4xf32>
    %c16 = arith.constant 16 : index
    %c0_9 = arith.constant 0 : index
    %30 = vector.load %arg6[%c16, %c0_9] : memref<288x4xf32, #tpu.memory_space<vmem>>, vector<256x4xf32>
    tpu.vector_store %arg6[%c16, %c0_9], %29 {strides = array<i32>} : memref<288x4xf32, #tpu.memory_space<vmem>>, vector<256x4xf32>,
    %cst_10 = arith.constant 0.000000e+00 : f32
    %31 = vector.broadcast %cst_10 : f32 to vector<16x128xf32>
    %c0_11 = arith.constant 0 : index
    %c0_12 = arith.constant 0 : index
    %32 = vector.load %arg7[%c0_11, %c0_12] : memref<288x128xf32, #tpu.memory_space<vmem>>, vector<16x128xf32>
    tpu.vector_store %arg7[%c0_11, %c0_12], %31 {strides = array<i32>} : memref<288x128xf32, #tpu.memory_space<vmem>>, vector<16x128xf32>,
    %c272_13 = arith.constant 272 : index
    %c0_14 = arith.constant 0 : index
    %33 = vector.load %arg7[%c272_13, %c0_14] : memref<288x128xf32, #tpu.memory_space<vmem>>, vector<16x128xf32>
    tpu.vector_store %arg7[%c272_13, %c0_14], %31 {strides = array<i32>} : memref<288x128xf32, #tpu.memory_space<vmem>>, vector<16x128xf32>,
    %c0_15 = arith.constant 0 : index
    %c0_16 = arith.constant 0 : index
    %34 = vector.load %arg4[%c0_15, %c0_16] : memref<8x128xf32, #tpu.memory_space<vmem>>, vector<1x128xf32>
    %c1 = arith.constant 1 : index
    %c0_17 = arith.constant 0 : index
    %35 = vector.load %arg4[%c1, %c0_17] : memref<8x128xf32, #tpu.memory_space<vmem>>, vector<1x128xf32>
    %c2 = arith.constant 2 : index
    %c0_18 = arith.constant 0 : index
    %36 = vector.load %arg4[%c2, %c0_18] : memref<8x128xf32, #tpu.memory_space<vmem>>, vector<1x128xf32>
    %c3 = arith.constant 3 : index
    %c0_19 = arith.constant 0 : index
    %37 = vector.load %arg4[%c3, %c0_19] : memref<8x128xf32, #tpu.memory_space<vmem>>, vector<1x128xf32>
    %c4 = arith.constant 4 : index
    %c0_20 = arith.constant 0 : index
    %38 = vector.load %arg4[%c4, %c0_20] : memref<8x128xf32, #tpu.memory_space<vmem>>, vector<1x128xf32>
    %c5 = arith.constant 5 : index
    %c0_21 = arith.constant 0 : index
    %39 = vector.load %arg4[%c5, %c0_21] : memref<8x128xf32, #tpu.memory_space<vmem>>, vector<1x128xf32>
    %cst_22 = arith.constant 0.000000e+00 : f32
    %40 = vector.broadcast %cst_22 : f32 to vector<128x128xf32>
    %c0_23 = arith.constant 0 : index
    %c0_24 = arith.constant 0 : index
    %41 = vector.load %arg6[%c0_23, %c0_24] : memref<288x4xf32, #tpu.memory_space<vmem>>, vector<128x4xf32>
    %c1_i32_25 = arith.constant 1 : i32
    %42 = tpu.dynamic_rotate %41 by %c1_i32_25 dim 0 : vector<128x4xf32>, i32 -> vector<128x4xf32>
    %43 = vector.broadcast %24 : vector<128x1xf32> to vector<128x4xf32>
    %44 = arith.mulf %42, %43 : vector<128x4xf32>
    %c0_26 = arith.constant 0 : index
    %c0_27 = arith.constant 0 : index
    %c0_28 = arith.constant 0 : index
    %45 = vector.load %arg2[%c0_26, %c0_27, %c0_28] : memref<9x4x128xf32, #tpu.memory_space<vmem>>, vector<1x4x128xf32>
    %46 = vector.shape_cast %45 : vector<1x4x128xf32> to vector<4x128xf32>
    %cst_29 = arith.constant dense<0.000000e+00> : vector<128x128xf32>
    %47 = tpu.matmul %44, %46, %cst_29 {dimension_numbers = #tpu.dot_dimension_numbers<[1], [0], [0], [1], [0, 0, 1, 1], [], []>} : vector<128x4xf32>, vector<4x128xf32>, vector<128x128xf32> -> vector<128x128xf32>
    %48 = arith.addf %40, %47 : vector<128x128xf32>
    %c1_30 = arith.constant 1 : index
    %c0_31 = arith.constant 0 : index
    %c0_32 = arith.constant 0 : index
    %49 = vector.load %arg2[%c1_30, %c0_31, %c0_32] : memref<9x4x128xf32, #tpu.memory_space<vmem>>, vector<1x4x128xf32>
    %50 = vector.shape_cast %49 : vector<1x4x128xf32> to vector<4x128xf32>
    %cst_33 = arith.constant dense<0.000000e+00> : vector<128x128xf32>
    %51 = tpu.matmul %41, %50, %cst_33 {dimension_numbers = #tpu.dot_dimension_numbers<[1], [0], [0], [1], [0, 0, 1, 1], [], []>} : vector<128x4xf32>, vector<4x128xf32>, vector<128x128xf32> -> vector<128x128xf32>
    %52 = arith.addf %48, %51 : vector<128x128xf32>
    %c127_i32 = arith.constant 127 : i32
    %53 = tpu.dynamic_rotate %41 by %c127_i32 dim 0 : vector<128x4xf32>, i32 -> vector<128x4xf32>
    %54 = vector.broadcast %20 : vector<128x1xf32> to vector<128x4xf32>
    %55 = arith.mulf %53, %54 : vector<128x4xf32>
    %c2_34 = arith.constant 2 : index
    %c0_35 = arith.constant 0 : index
    %c0_36 = arith.constant 0 : index
    %56 = vector.load %arg2[%c2_34, %c0_35, %c0_36] : memref<9x4x128xf32, #tpu.memory_space<vmem>>, vector<1x4x128xf32>
    %57 = vector.shape_cast %56 : vector<1x4x128xf32> to vector<4x128xf32>
    %cst_37 = arith.constant dense<0.000000e+00> : vector<128x128xf32>
    %58 = tpu.matmul %55, %57, %cst_37 {dimension_numbers = #tpu.dot_dimension_numbers<[1], [0], [0], [1], [0, 0, 1, 1], [], []>} : vector<128x4xf32>, vector<4x128xf32>, vector<128x128xf32> -> vector<128x128xf32>
    %59 = arith.addf %52, %58 : vector<128x128xf32>
    %c16_38 = arith.constant 16 : index
    %c0_39 = arith.constant 0 : index
    %60 = vector.load %arg6[%c16_38, %c0_39] : memref<288x4xf32, #tpu.memory_space<vmem>>, vector<128x4xf32>
    %c1_i32_40 = arith.constant 1 : i32
    %61 = tpu.dynamic_rotate %60 by %c1_i32_40 dim 0 : vector<128x4xf32>, i32 -> vector<128x4xf32>
    %62 = vector.broadcast %24 : vector<128x1xf32> to vector<128x4xf32>
    %63 = arith.mulf %61, %62 : vector<128x4xf32>
    %c3_41 = arith.constant 3 : index
    %c0_42 = arith.constant 0 : index
    %c0_43 = arith.constant 0 : index
    %64 = vector.load %arg2[%c3_41, %c0_42, %c0_43] : memref<9x4x128xf32, #tpu.memory_space<vmem>>, vector<1x4x128xf32>
    %65 = vector.shape_cast %64 : vector<1x4x128xf32> to vector<4x128xf32>
    %cst_44 = arith.constant dense<0.000000e+00> : vector<128x128xf32>
    %66 = tpu.matmul %63, %65, %cst_44 {dimension_numbers = #tpu.dot_dimension_numbers<[1], [0], [0], [1], [0, 0, 1, 1], [], []>} : vector<128x4xf32>, vector<4x128xf32>, vector<128x128xf32> -> vector<128x128xf32>
    %67 = arith.addf %59, %66 : vector<128x128xf32>
    %c4_45 = arith.constant 4 : index
    %c0_46 = arith.constant 0 : index
    %c0_47 = arith.constant 0 : index
    %68 = vector.load %arg2[%c4_45, %c0_46, %c0_47] : memref<9x4x128xf32, #tpu.memory_space<vmem>>, vector<1x4x128xf32>
    %69 = vector.shape_cast %68 : vector<1x4x128xf32> to vector<4x128xf32>
    %cst_48 = arith.constant dense<0.000000e+00> : vector<128x128xf32>
    %70 = tpu.matmul %60, %69, %cst_48 {dimension_numbers = #tpu.dot_dimension_numbers<[1], [0], [0], [1], [0, 0, 1, 1], [], []>} : vector<128x4xf32>, vector<4x128xf32>, vector<128x128xf32> -> vector<128x128xf32>
    %71 = arith.addf %67, %70 : vector<128x128xf32>
    %c127_i32_49 = arith.constant 127 : i32
    %72 = tpu.dynamic_rotate %60 by %c127_i32_49 dim 0 : vector<128x4xf32>, i32 -> vector<128x4xf32>
    %73 = vector.broadcast %20 : vector<128x1xf32> to vector<128x4xf32>
    %74 = arith.mulf %72, %73 : vector<128x4xf32>
    %c5_50 = arith.constant 5 : index
    %c0_51 = arith.constant 0 : index
    %c0_52 = arith.constant 0 : index
    %75 = vector.load %arg2[%c5_50, %c0_51, %c0_52] : memref<9x4x128xf32, #tpu.memory_space<vmem>>, vector<1x4x128xf32>
    %76 = vector.shape_cast %75 : vector<1x4x128xf32> to vector<4x128xf32>
    %cst_53 = arith.constant dense<0.000000e+00> : vector<128x128xf32>
    %77 = tpu.matmul %74, %76, %cst_53 {dimension_numbers = #tpu.dot_dimension_numbers<[1], [0], [0], [1], [0, 0, 1, 1], [], []>} : vector<128x4xf32>, vector<4x128xf32>, vector<128x128xf32> -> vector<128x128xf32>
    %78 = arith.addf %71, %77 : vector<128x128xf32>
    %c32 = arith.constant 32 : index
    %c0_54 = arith.constant 0 : index
    %79 = vector.load %arg6[%c32, %c0_54] : memref<288x4xf32, #tpu.memory_space<vmem>>, vector<128x4xf32>
    %c1_i32_55 = arith.constant 1 : i32
    %80 = tpu.dynamic_rotate %79 by %c1_i32_55 dim 0 : vector<128x4xf32>, i32 -> vector<128x4xf32>
    %81 = vector.broadcast %24 : vector<128x1xf32> to vector<128x4xf32>
    %82 = arith.mulf %80, %81 : vector<128x4xf32>
    %c6 = arith.constant 6 : index
    %c0_56 = arith.constant 0 : index
    %c0_57 = arith.constant 0 : index
    %83 = vector.load %arg2[%c6, %c0_56, %c0_57] : memref<9x4x128xf32, #tpu.memory_space<vmem>>, vector<1x4x128xf32>
    %84 = vector.shape_cast %83 : vector<1x4x128xf32> to vector<4x128xf32>
    %cst_58 = arith.constant dense<0.000000e+00> : vector<128x128xf32>
    %85 = tpu.matmul %82, %84, %cst_58 {dimension_numbers = #tpu.dot_dimension_numbers<[1], [0], [0], [1], [0, 0, 1, 1], [], []>} : vector<128x4xf32>, vector<4x128xf32>, vector<128x128xf32> -> vector<128x128xf32>
    %86 = arith.addf %78, %85 : vector<128x128xf32>
    %c7 = arith.constant 7 : index
    %c0_59 = arith.constant 0 : index
    %c0_60 = arith.constant 0 : index
    %87 = vector.load %arg2[%c7, %c0_59, %c0_60] : memref<9x4x128xf32, #tpu.memory_space<vmem>>, vector<1x4x128xf32>
    %88 = vector.shape_cast %87 : vector<1x4x128xf32> to vector<4x128xf32>
    %cst_61 = arith.constant dense<0.000000e+00> : vector<128x128xf32>
    %89 = tpu.matmul %79, %88, %cst_61 {dimension_numbers = #tpu.dot_dimension_numbers<[1], [0], [0], [1], [0, 0, 1, 1], [], []>} : vector<128x4xf32>, vector<4x128xf32>, vector<128x128xf32> -> vector<128x128xf32>
    %90 = arith.addf %86, %89 : vector<128x128xf32>
    %c127_i32_62 = arith.constant 127 : i32
    %91 = tpu.dynamic_rotate %79 by %c127_i32_62 dim 0 : vector<128x4xf32>, i32 -> vector<128x4xf32>
    %92 = vector.broadcast %20 : vector<128x1xf32> to vector<128x4xf32>
    %93 = arith.mulf %91, %92 : vector<128x4xf32>
    %c8 = arith.constant 8 : index
    %c0_63 = arith.constant 0 : index
    %c0_64 = arith.constant 0 : index
    %94 = vector.load %arg2[%c8, %c0_63, %c0_64] : memref<9x4x128xf32, #tpu.memory_space<vmem>>, vector<1x4x128xf32>
    %95 = vector.shape_cast %94 : vector<1x4x128xf32> to vector<4x128xf32>
    %cst_65 = arith.constant dense<0.000000e+00> : vector<128x128xf32>
    %96 = tpu.matmul %93, %95, %cst_65 {dimension_numbers = #tpu.dot_dimension_numbers<[1], [0], [0], [1], [0, 0, 1, 1], [], []>} : vector<128x4xf32>, vector<4x128xf32>, vector<128x128xf32> -> vector<128x128xf32>
    %97 = arith.addf %90, %96 : vector<128x128xf32>
    %98 = vector.broadcast %34 : vector<1x128xf32> to vector<128x128xf32>
    %99 = arith.addf %97, %98 : vector<128x128xf32>
    %c16_66 = arith.constant 16 : index
    %c0_67 = arith.constant 0 : index
    %100 = vector.load %arg7[%c16_66, %c0_67] : memref<288x128xf32, #tpu.memory_space<vmem>>, vector<128x128xf32>
    tpu.vector_store %arg7[%c16_66, %c0_67], %99 {strides = array<i32>} : memref<288x128xf32, #tpu.memory_space<vmem>>, vector<128x128xf32>,
    %101 = vector.shape_cast %99 : vector<128x128xf32> to vector<1x128x128xf32>
    %cst_68 = arith.constant dense<0.000000e+00> : vector<1xf32>
    %102 = vector.multi_reduction <add>, %101, %cst_68 [1, 2] : vector<1x128x128xf32> to vector<1xf32>
    %103 = vector.shape_cast %102 : vector<1xf32> to vector<1x1x1xf32>
    %104 = vector.extract %103[0, 0, 0] : f32 from vector<1x1x1xf32>
    %cst_69 = arith.constant 0.000000e+00 : f32
    %105 = arith.addf %cst_69, %104 : f32
    %106 = arith.mulf %99, %99 : vector<128x128xf32>
    %107 = vector.shape_cast %106 : vector<128x128xf32> to vector<1x128x128xf32>
    %cst_70 = arith.constant dense<0.000000e+00> : vector<1xf32>
    %108 = vector.multi_reduction <add>, %107, %cst_70 [1, 2] : vector<1x128x128xf32> to vector<1xf32>
    %109 = vector.shape_cast %108 : vector<1xf32> to vector<1x1x1xf32>
    %110 = vector.extract %109[0, 0, 0] : f32 from vector<1x1x1xf32>
    %cst_71 = arith.constant 0.000000e+00 : f32
    %111 = arith.addf %cst_71, %110 : f32
    %cst_72 = arith.constant 0.000000e+00 : f32
    %112 = vector.broadcast %cst_72 : f32 to vector<128x128xf32>
    %c128 = arith.constant 128 : index
    %c0_73 = arith.constant 0 : index
    %113 = vector.load %arg6[%c128, %c0_73] : memref<288x4xf32, #tpu.memory_space<vmem>>, vector<128x4xf32>
    %c1_i32_74 = arith.constant 1 : i32
    %114 = tpu.dynamic_rotate %113 by %c1_i32_74 dim 0 : vector<128x4xf32>, i32 -> vector<128x4xf32>
    %115 = vector.broadcast %24 : vector<128x1xf32> to vector<128x4xf32>
    %116 = arith.mulf %114, %115 : vector<128x4xf32>
    %c0_75 = arith.constant 0 : index
    %c0_76 = arith.constant 0 : index
    %c0_77 = arith.constant 0 : index
    %117 = vector.load %arg2[%c0_75, %c0_76, %c0_77] : memref<9x4x128xf32, #tpu.memory_space<vmem>>, vector<1x4x128xf32>
    %118 = vector.shape_cast %117 : vector<1x4x128xf32> to vector<4x128xf32>
    %cst_78 = arith.constant dense<0.000000e+00> : vector<128x128xf32>
    %119 = tpu.matmul %116, %118, %cst_78 {dimension_numbers = #tpu.dot_dimension_numbers<[1], [0], [0], [1], [0, 0, 1, 1], [], []>} : vector<128x4xf32>, vector<4x128xf32>, vector<128x128xf32> -> vector<128x128xf32>
    %120 = arith.addf %112, %119 : vector<128x128xf32>
    %c1_79 = arith.constant 1 : index
    %c0_80 = arith.constant 0 : index
    %c0_81 = arith.constant 0 : index
    %121 = vector.load %arg2[%c1_79, %c0_80, %c0_81] : memref<9x4x128xf32, #tpu.memory_space<vmem>>, vector<1x4x128xf32>
    %122 = vector.shape_cast %121 : vector<1x4x128xf32> to vector<4x128xf32>
    %cst_82 = arith.constant dense<0.000000e+00> : vector<128x128xf32>
    %123 = tpu.matmul %113, %122, %cst_82 {dimension_numbers = #tpu.dot_dimension_numbers<[1], [0], [0], [1], [0, 0, 1, 1], [], []>} : vector<128x4xf32>, vector<4x128xf32>, vector<128x128xf32> -> vector<128x128xf32>
    %124 = arith.addf %120, %123 : vector<128x128xf32>
    %c127_i32_83 = arith.constant 127 : i32
    %125 = tpu.dynamic_rotate %113 by %c127_i32_83 dim 0 : vector<128x4xf32>, i32 -> vector<128x4xf32>
    %126 = vector.broadcast %20 : vector<128x1xf32> to vector<128x4xf32>
    %127 = arith.mulf %125, %126 : vector<128x4xf32>
    %c2_84 = arith.constant 2 : index
    %c0_85 = arith.constant 0 : index
    %c0_86 = arith.constant 0 : index
    %128 = vector.load %arg2[%c2_84, %c0_85, %c0_86] : memref<9x4x128xf32, #tpu.memory_space<vmem>>, vector<1x4x128xf32>
    %129 = vector.shape_cast %128 : vector<1x4x128xf32> to vector<4x128xf32>
    %cst_87 = arith.constant dense<0.000000e+00> : vector<128x128xf32>
    %130 = tpu.matmul %127, %129, %cst_87 {dimension_numbers = #tpu.dot_dimension_numbers<[1], [0], [0], [1], [0, 0, 1, 1], [], []>} : vector<128x4xf32>, vector<4x128xf32>, vector<128x128xf32> -> vector<128x128xf32>
    %131 = arith.addf %124, %130 : vector<128x128xf32>
    %c144 = arith.constant 144 : index
    %c0_88 = arith.constant 0 : index
    %132 = vector.load %arg6[%c144, %c0_88] : memref<288x4xf32, #tpu.memory_space<vmem>>, vector<128x4xf32>
    %c1_i32_89 = arith.constant 1 : i32
    %133 = tpu.dynamic_rotate %132 by %c1_i32_89 dim 0 : vector<128x4xf32>, i32 -> vector<128x4xf32>
    %134 = vector.broadcast %24 : vector<128x1xf32> to vector<128x4xf32>
    %135 = arith.mulf %133, %134 : vector<128x4xf32>
    %c3_90 = arith.constant 3 : index
    %c0_91 = arith.constant 0 : index
    %c0_92 = arith.constant 0 : index
    %136 = vector.load %arg2[%c3_90, %c0_91, %c0_92] : memref<9x4x128xf32, #tpu.memory_space<vmem>>, vector<1x4x128xf32>
    %137 = vector.shape_cast %136 : vector<1x4x128xf32> to vector<4x128xf32>
    %cst_93 = arith.constant dense<0.000000e+00> : vector<128x128xf32>
    %138 = tpu.matmul %135, %137, %cst_93 {dimension_numbers = #tpu.dot_dimension_numbers<[1], [0], [0], [1], [0, 0, 1, 1], [], []>} : vector<128x4xf32>, vector<4x128xf32>, vector<128x128xf32> -> vector<128x128xf32>
    %139 = arith.addf %131, %138 : vector<128x128xf32>
    %c4_94 = arith.constant 4 : index
    %c0_95 = arith.constant 0 : index
    %c0_96 = arith.constant 0 : index
    %140 = vector.load %arg2[%c4_94, %c0_95, %c0_96] : memref<9x4x128xf32, #tpu.memory_space<vmem>>, vector<1x4x128xf32>
    %141 = vector.shape_cast %140 : vector<1x4x128xf32> to vector<4x128xf32>
    %cst_97 = arith.constant dense<0.000000e+00> : vector<128x128xf32>
    %142 = tpu.matmul %132, %141, %cst_97 {dimension_numbers = #tpu.dot_dimension_numbers<[1], [0], [0], [1], [0, 0, 1, 1], [], []>} : vector<128x4xf32>, vector<4x128xf32>, vector<128x128xf32> -> vector<128x128xf32>
    %143 = arith.addf %139, %142 : vector<128x128xf32>
    %c127_i32_98 = arith.constant 127 : i32
    %144 = tpu.dynamic_rotate %132 by %c127_i32_98 dim 0 : vector<128x4xf32>, i32 -> vector<128x4xf32>
    %145 = vector.broadcast %20 : vector<128x1xf32> to vector<128x4xf32>
    %146 = arith.mulf %144, %145 : vector<128x4xf32>
    %c5_99 = arith.constant 5 : index
    %c0_100 = arith.constant 0 : index
    %c0_101 = arith.constant 0 : index
    %147 = vector.load %arg2[%c5_99, %c0_100, %c0_101] : memref<9x4x128xf32, #tpu.memory_space<vmem>>, vector<1x4x128xf32>
    %148 = vector.shape_cast %147 : vector<1x4x128xf32> to vector<4x128xf32>
    %cst_102 = arith.constant dense<0.000000e+00> : vector<128x128xf32>
    %149 = tpu.matmul %146, %148, %cst_102 {dimension_numbers = #tpu.dot_dimension_numbers<[1], [0], [0], [1], [0, 0, 1, 1], [], []>} : vector<128x4xf32>, vector<4x128xf32>, vector<128x128xf32> -> vector<128x128xf32>
    %150 = arith.addf %143, %149 : vector<128x128xf32>
    %c160 = arith.constant 160 : index
    %c0_103 = arith.constant 0 : index
    %151 = vector.load %arg6[%c160, %c0_103] : memref<288x4xf32, #tpu.memory_space<vmem>>, vector<128x4xf32>
    %c1_i32_104 = arith.constant 1 : i32
    %152 = tpu.dynamic_rotate %151 by %c1_i32_104 dim 0 : vector<128x4xf32>, i32 -> vector<128x4xf32>
    %153 = vector.broadcast %24 : vector<128x1xf32> to vector<128x4xf32>
    %154 = arith.mulf %152, %153 : vector<128x4xf32>
    %c6_105 = arith.constant 6 : index
    %c0_106 = arith.constant 0 : index
    %c0_107 = arith.constant 0 : index
    %155 = vector.load %arg2[%c6_105, %c0_106, %c0_107] : memref<9x4x128xf32, #tpu.memory_space<vmem>>, vector<1x4x128xf32>
    %156 = vector.shape_cast %155 : vector<1x4x128xf32> to vector<4x128xf32>
    %cst_108 = arith.constant dense<0.000000e+00> : vector<128x128xf32>
    %157 = tpu.matmul %154, %156, %cst_108 {dimension_numbers = #tpu.dot_dimension_numbers<[1], [0], [0], [1], [0, 0, 1, 1], [], []>} : vector<128x4xf32>, vector<4x128xf32>, vector<128x128xf32> -> vector<128x128xf32>
    %158 = arith.addf %150, %157 : vector<128x128xf32>
    %c7_109 = arith.constant 7 : index
    %c0_110 = arith.constant 0 : index
    %c0_111 = arith.constant 0 : index
    %159 = vector.load %arg2[%c7_109, %c0_110, %c0_111] : memref<9x4x128xf32, #tpu.memory_space<vmem>>, vector<1x4x128xf32>
    %160 = vector.shape_cast %159 : vector<1x4x128xf32> to vector<4x128xf32>
    %cst_112 = arith.constant dense<0.000000e+00> : vector<128x128xf32>
    %161 = tpu.matmul %151, %160, %cst_112 {dimension_numbers = #tpu.dot_dimension_numbers<[1], [0], [0], [1], [0, 0, 1, 1], [], []>} : vector<128x4xf32>, vector<4x128xf32>, vector<128x128xf32> -> vector<128x128xf32>
    %162 = arith.addf %158, %161 : vector<128x128xf32>
    %c127_i32_113 = arith.constant 127 : i32
    %163 = tpu.dynamic_rotate %151 by %c127_i32_113 dim 0 : vector<128x4xf32>, i32 -> vector<128x4xf32>
    %164 = vector.broadcast %20 : vector<128x1xf32> to vector<128x4xf32>
    %165 = arith.mulf %163, %164 : vector<128x4xf32>
    %c8_114 = arith.constant 8 : index
    %c0_115 = arith.constant 0 : index
    %c0_116 = arith.constant 0 : index
    %166 = vector.load %arg2[%c8_114, %c0_115, %c0_116] : memref<9x4x128xf32, #tpu.memory_space<vmem>>, vector<1x4x128xf32>
    %167 = vector.shape_cast %166 : vector<1x4x128xf32> to vector<4x128xf32>
    %cst_117 = arith.constant dense<0.000000e+00> : vector<128x128xf32>
    %168 = tpu.matmul %165, %167, %cst_117 {dimension_numbers = #tpu.dot_dimension_numbers<[1], [0], [0], [1], [0, 0, 1, 1], [], []>} : vector<128x4xf32>, vector<4x128xf32>, vector<128x128xf32> -> vector<128x128xf32>
    %169 = arith.addf %162, %168 : vector<128x128xf32>
    %170 = vector.broadcast %34 : vector<1x128xf32> to vector<128x128xf32>
    %171 = arith.addf %169, %170 : vector<128x128xf32>
    %c144_118 = arith.constant 144 : index
    %c0_119 = arith.constant 0 : index
    %172 = vector.load %arg7[%c144_118, %c0_119] : memref<288x128xf32, #tpu.memory_space<vmem>>, vector<128x128xf32>
    tpu.vector_store %arg7[%c144_118, %c0_119], %171 {strides = array<i32>} : memref<288x128xf32, #tpu.memory_space<vmem>>, vector<128x128xf32>,
    %173 = vector.shape_cast %171 : vector<128x128xf32> to vector<1x128x128xf32>
    %cst_120 = arith.constant dense<0.000000e+00> : vector<1xf32>
    %174 = vector.multi_reduction <add>, %173, %cst_120 [1, 2] : vector<1x128x128xf32> to vector<1xf32>
    %175 = vector.shape_cast %174 : vector<1xf32> to vector<1x1x1xf32>
    %176 = vector.extract %175[0, 0, 0] : f32 from vector<1x1x1xf32>
    %177 = arith.addf %105, %176 : f32
    %178 = arith.mulf %171, %171 : vector<128x128xf32>
    %179 = vector.shape_cast %178 : vector<128x128xf32> to vector<1x128x128xf32>
    %cst_121 = arith.constant dense<0.000000e+00> : vector<1xf32>
    %180 = vector.multi_reduction <add>, %179, %cst_121 [1, 2] : vector<1x128x128xf32> to vector<1xf32>
    %181 = vector.shape_cast %180 : vector<1xf32> to vector<1x1x1xf32>
    %182 = vector.extract %181[0, 0, 0] : f32 from vector<1x1x1xf32>
    %183 = arith.addf %111, %182 : f32
    %cst_122 = arith.constant 2.048000e+03 : f32
    %184 = arith.divf %177, %cst_122 : f32
    %cst_123 = arith.constant 2.048000e+03 : f32
    %185 = arith.divf %183, %cst_123 : f32
    %186 = arith.mulf %184, %184 : f32
    %187 = arith.subf %185, %186 : f32
    %cst_124 = arith.constant 0.000000e+00 : f32
    %188 = arith.maximumf %187, %cst_124 : f32
    %cst_125 = arith.constant 9.99999974E-6 : f32
    %189 = arith.addf %188, %cst_125 : f32
    %190 = math.rsqrt %189 : f32
    %c16_126 = arith.constant 16 : index
    %c0_127 = arith.constant 0 : index
    %191 = vector.load %arg7[%c16_126, %c0_127] : memref<288x128xf32, #tpu.memory_space<vmem>>, vector<128x128xf32>
    %192 = vector.broadcast %184 : f32 to vector<128x128xf32>
    %193 = arith.subf %191, %192 : vector<128x128xf32>
    %194 = vector.broadcast %190 : f32 to vector<128x128xf32>
    %195 = arith.mulf %193, %194 : vector<128x128xf32>
    %196 = vector.broadcast %35 : vector<1x128xf32> to vector<128x128xf32>
    %197 = arith.mulf %195, %196 : vector<128x128xf32>
    %198 = vector.broadcast %36 : vector<1x128xf32> to vector<128x128xf32>
    %199 = arith.addf %197, %198 : vector<128x128xf32>
    %cst_128 = arith.constant 0.000000e+00 : f32
    %200 = vector.broadcast %cst_128 : f32 to vector<128x128xf32>
    %201 = arith.maximumf %199, %200 : vector<128x128xf32>
    %c16_129 = arith.constant 16 : index
    %c0_130 = arith.constant 0 : index
    %202 = vector.load %arg7[%c16_129, %c0_130] : memref<288x128xf32, #tpu.memory_space<vmem>>, vector<128x128xf32>
    tpu.vector_store %arg7[%c16_129, %c0_130], %201 {strides = array<i32>} : memref<288x128xf32, #tpu.memory_space<vmem>>, vector<128x128xf32>,
    %c144_131 = arith.constant 144 : index
    %c0_132 = arith.constant 0 : index
    %203 = vector.load %arg7[%c144_131, %c0_132] : memref<288x128xf32, #tpu.memory_space<vmem>>, vector<128x128xf32>
    %204 = vector.broadcast %184 : f32 to vector<128x128xf32>
    %205 = arith.subf %203, %204 : vector<128x128xf32>
    %206 = vector.broadcast %190 : f32 to vector<128x128xf32>
    %207 = arith.mulf %205, %206 : vector<128x128xf32>
    %208 = vector.broadcast %35 : vector<1x128xf32> to vector<128x128xf32>
    %209 = arith.mulf %207, %208 : vector<128x128xf32>
    %210 = vector.broadcast %36 : vector<1x128xf32> to vector<128x128xf32>
    %211 = arith.addf %209, %210 : vector<128x128xf32>
    %cst_133 = arith.constant 0.000000e+00 : f32
    %212 = vector.broadcast %cst_133 : f32 to vector<128x128xf32>
    %213 = arith.maximumf %211, %212 : vector<128x128xf32>
    %c144_134 = arith.constant 144 : index
    %c0_135 = arith.constant 0 : index
    %214 = vector.load %arg7[%c144_134, %c0_135] : memref<288x128xf32, #tpu.memory_space<vmem>>, vector<128x128xf32>
    tpu.vector_store %arg7[%c144_134, %c0_135], %213 {strides = array<i32>} : memref<288x128xf32, #tpu.memory_space<vmem>>, vector<128x128xf32>,
    %cst_136 = arith.constant 0.000000e+00 : f32
    %215 = vector.broadcast %cst_136 : f32 to vector<128x128xf32>
    %c0_137 = arith.constant 0 : index
    %c0_138 = arith.constant 0 : index
    %216 = vector.load %arg7[%c0_137, %c0_138] : memref<288x128xf32, #tpu.memory_space<vmem>>, vector<128x128xf32>
    %c1_i32_139 = arith.constant 1 : i32
    %217 = tpu.dynamic_rotate %216 by %c1_i32_139 dim 0 : vector<128x128xf32>, i32 -> vector<128x128xf32>
    %218 = vector.broadcast %24 : vector<128x1xf32> to vector<128x128xf32>
    %219 = arith.mulf %217, %218 : vector<128x128xf32>
    %c0_140 = arith.constant 0 : index
    %c0_141 = arith.constant 0 : index
    %c0_142 = arith.constant 0 : index
    %220 = vector.load %arg3[%c0_140, %c0_141, %c0_142] : memref<9x128x128xf32, #tpu.memory_space<vmem>>, vector<1x128x128xf32>
    %221 = vector.shape_cast %220 : vector<1x128x128xf32> to vector<128x128xf32>
    %cst_143 = arith.constant dense<0.000000e+00> : vector<128x128xf32>
    %222 = tpu.matmul %219, %221, %cst_143 {dimension_numbers = #tpu.dot_dimension_numbers<[1], [0], [0], [1], [0, 0, 1, 1], [], []>} : vector<128x128xf32>, vector<128x128xf32>, vector<128x128xf32> -> vector<128x128xf32>
    %223 = arith.addf %215, %222 : vector<128x128xf32>
    %c1_144 = arith.constant 1 : index
    %c0_145 = arith.constant 0 : index
    %c0_146 = arith.constant 0 : index
    %224 = vector.load %arg3[%c1_144, %c0_145, %c0_146] : memref<9x128x128xf32, #tpu.memory_space<vmem>>, vector<1x128x128xf32>
    %225 = vector.shape_cast %224 : vector<1x128x128xf32> to vector<128x128xf32>
    %cst_147 = arith.constant dense<0.000000e+00> : vector<128x128xf32>
    %226 = tpu.matmul %216, %225, %cst_147 {dimension_numbers = #tpu.dot_dimension_numbers<[1], [0], [0], [1], [0, 0, 1, 1], [], []>} : vector<128x128xf32>, vector<128x128xf32>, vector<128x128xf32> -> vector<128x128xf32>
    %227 = arith.addf %223, %226 : vector<128x128xf32>
    %c127_i32_148 = arith.constant 127 : i32
    %228 = tpu.dynamic_rotate %216 by %c127_i32_148 dim 0 : vector<128x128xf32>, i32 -> vector<128x128xf32>
    %229 = vector.broadcast %20 : vector<128x1xf32> to vector<128x128xf32>
    %230 = arith.mulf %228, %229 : vector<128x128xf32>
    %c2_149 = arith.constant 2 : index
    %c0_150 = arith.constant 0 : index
    %c0_151 = arith.constant 0 : index
    %231 = vector.load %arg3[%c2_149, %c0_150, %c0_151] : memref<9x128x128xf32, #tpu.memory_space<vmem>>, vector<1x128x128xf32>
    %232 = vector.shape_cast %231 : vector<1x128x128xf32> to vector<128x128xf32>
    %cst_152 = arith.constant dense<0.000000e+00> : vector<128x128xf32>
    %233 = tpu.matmul %230, %232, %cst_152 {dimension_numbers = #tpu.dot_dimension_numbers<[1], [0], [0], [1], [0, 0, 1, 1], [], []>} : vector<128x128xf32>, vector<128x128xf32>, vector<128x128xf32> -> vector<128x128xf32>
    %234 = arith.addf %227, %233 : vector<128x128xf32>
    %c16_153 = arith.constant 16 : index
    %c0_154 = arith.constant 0 : index
    %235 = vector.load %arg7[%c16_153, %c0_154] : memref<288x128xf32, #tpu.memory_space<vmem>>, vector<128x128xf32>
    %c1_i32_155 = arith.constant 1 : i32
    %236 = tpu.dynamic_rotate %235 by %c1_i32_155 dim 0 : vector<128x128xf32>, i32 -> vector<128x128xf32>
    %237 = vector.broadcast %24 : vector<128x1xf32> to vector<128x128xf32>
    %238 = arith.mulf %236, %237 : vector<128x128xf32>
    %c3_156 = arith.constant 3 : index
    %c0_157 = arith.constant 0 : index
    %c0_158 = arith.constant 0 : index
    %239 = vector.load %arg3[%c3_156, %c0_157, %c0_158] : memref<9x128x128xf32, #tpu.memory_space<vmem>>, vector<1x128x128xf32>
    %240 = vector.shape_cast %239 : vector<1x128x128xf32> to vector<128x128xf32>
    %cst_159 = arith.constant dense<0.000000e+00> : vector<128x128xf32>
    %241 = tpu.matmul %238, %240, %cst_159 {dimension_numbers = #tpu.dot_dimension_numbers<[1], [0], [0], [1], [0, 0, 1, 1], [], []>} : vector<128x128xf32>, vector<128x128xf32>, vector<128x128xf32> -> vector<128x128xf32>
    %242 = arith.addf %234, %241 : vector<128x128xf32>
    %c4_160 = arith.constant 4 : index
    %c0_161 = arith.constant 0 : index
    %c0_162 = arith.constant 0 : index
    %243 = vector.load %arg3[%c4_160, %c0_161, %c0_162] : memref<9x128x128xf32, #tpu.memory_space<vmem>>, vector<1x128x128xf32>
    %244 = vector.shape_cast %243 : vector<1x128x128xf32> to vector<128x128xf32>
    %cst_163 = arith.constant dense<0.000000e+00> : vector<128x128xf32>
    %245 = tpu.matmul %235, %244, %cst_163 {dimension_numbers = #tpu.dot_dimension_numbers<[1], [0], [0], [1], [0, 0, 1, 1], [], []>} : vector<128x128xf32>, vector<128x128xf32>, vector<128x128xf32> -> vector<128x128xf32>
    %246 = arith.addf %242, %245 : vector<128x128xf32>
    %c127_i32_164 = arith.constant 127 : i32
    %247 = tpu.dynamic_rotate %235 by %c127_i32_164 dim 0 : vector<128x128xf32>, i32 -> vector<128x128xf32>
    %248 = vector.broadcast %20 : vector<128x1xf32> to vector<128x128xf32>
    %249 = arith.mulf %247, %248 : vector<128x128xf32>
    %c5_165 = arith.constant 5 : index
    %c0_166 = arith.constant 0 : index
    %c0_167 = arith.constant 0 : index
    %250 = vector.load %arg3[%c5_165, %c0_166, %c0_167] : memref<9x128x128xf32, #tpu.memory_space<vmem>>, vector<1x128x128xf32>
    %251 = vector.shape_cast %250 : vector<1x128x128xf32> to vector<128x128xf32>
    %cst_168 = arith.constant dense<0.000000e+00> : vector<128x128xf32>
    %252 = tpu.matmul %249, %251, %cst_168 {dimension_numbers = #tpu.dot_dimension_numbers<[1], [0], [0], [1], [0, 0, 1, 1], [], []>} : vector<128x128xf32>, vector<128x128xf32>, vector<128x128xf32> -> vector<128x128xf32>
    %253 = arith.addf %246, %252 : vector<128x128xf32>
    %c32_169 = arith.constant 32 : index
    %c0_170 = arith.constant 0 : index
    %254 = vector.load %arg7[%c32_169, %c0_170] : memref<288x128xf32, #tpu.memory_space<vmem>>, vector<128x128xf32>
    %c1_i32_171 = arith.constant 1 : i32
    %255 = tpu.dynamic_rotate %254 by %c1_i32_171 dim 0 : vector<128x128xf32>, i32 -> vector<128x128xf32>
    %256 = vector.broadcast %24 : vector<128x1xf32> to vector<128x128xf32>
    %257 = arith.mulf %255, %256 : vector<128x128xf32>
    %c6_172 = arith.constant 6 : index
    %c0_173 = arith.constant 0 : index
    %c0_174 = arith.constant 0 : index
    %258 = vector.load %arg3[%c6_172, %c0_173, %c0_174] : memref<9x128x128xf32, #tpu.memory_space<vmem>>, vector<1x128x128xf32>
    %259 = vector.shape_cast %258 : vector<1x128x128xf32> to vector<128x128xf32>
    %cst_175 = arith.constant dense<0.000000e+00> : vector<128x128xf32>
    %260 = tpu.matmul %257, %259, %cst_175 {dimension_numbers = #tpu.dot_dimension_numbers<[1], [0], [0], [1], [0, 0, 1, 1], [], []>} : vector<128x128xf32>, vector<128x128xf32>, vector<128x128xf32> -> vector<128x128xf32>
    %261 = arith.addf %253, %260 : vector<128x128xf32>
    %c7_176 = arith.constant 7 : index
    %c0_177 = arith.constant 0 : index
    %c0_178 = arith.constant 0 : index
    %262 = vector.load %arg3[%c7_176, %c0_177, %c0_178] : memref<9x128x128xf32, #tpu.memory_space<vmem>>, vector<1x128x128xf32>
    %263 = vector.shape_cast %262 : vector<1x128x128xf32> to vector<128x128xf32>
    %cst_179 = arith.constant dense<0.000000e+00> : vector<128x128xf32>
    %264 = tpu.matmul %254, %263, %cst_179 {dimension_numbers = #tpu.dot_dimension_numbers<[1], [0], [0], [1], [0, 0, 1, 1], [], []>} : vector<128x128xf32>, vector<128x128xf32>, vector<128x128xf32> -> vector<128x128xf32>
    %265 = arith.addf %261, %264 : vector<128x128xf32>
    %c127_i32_180 = arith.constant 127 : i32
    %266 = tpu.dynamic_rotate %254 by %c127_i32_180 dim 0 : vector<128x128xf32>, i32 -> vector<128x128xf32>
    %267 = vector.broadcast %20 : vector<128x1xf32> to vector<128x128xf32>
    %268 = arith.mulf %266, %267 : vector<128x128xf32>
    %c8_181 = arith.constant 8 : index
    %c0_182 = arith.constant 0 : index
    %c0_183 = arith.constant 0 : index
    %269 = vector.load %arg3[%c8_181, %c0_182, %c0_183] : memref<9x128x128xf32, #tpu.memory_space<vmem>>, vector<1x128x128xf32>
    %270 = vector.shape_cast %269 : vector<1x128x128xf32> to vector<128x128xf32>
    %cst_184 = arith.constant dense<0.000000e+00> : vector<128x128xf32>
    %271 = tpu.matmul %268, %270, %cst_184 {dimension_numbers = #tpu.dot_dimension_numbers<[1], [0], [0], [1], [0, 0, 1, 1], [], []>} : vector<128x128xf32>, vector<128x128xf32>, vector<128x128xf32> -> vector<128x128xf32>
    %272 = arith.addf %265, %271 : vector<128x128xf32>
    %273 = vector.broadcast %37 : vector<1x128xf32> to vector<128x128xf32>
    %274 = arith.addf %272, %273 : vector<128x128xf32>
    %c0_185 = arith.constant 0 : index
    %c0_186 = arith.constant 0 : index
    %c0_187 = arith.constant 0 : index
    %275 = vector.load %arg5[%c0_185, %c0_186, %c0_187] : memref<1x256x128xf32, #tpu.memory_space<vmem>>, vector<1x128x128xf32>
    %276 = vector.shape_cast %275 : vector<1x128x128xf32> to vector<128x128xf32>
    %277 = vector.shape_cast %274 : vector<128x128xf32> to vector<1x128x128xf32>
    tpu.vector_store %arg5[%c0_185, %c0_186, %c0_187], %277 {strides = array<i32>} : memref<1x256x128xf32, #tpu.memory_space<vmem>>, vector<1x128x128xf32>,
    %278 = vector.shape_cast %274 : vector<128x128xf32> to vector<1x128x128xf32>
    %cst_188 = arith.constant dense<0.000000e+00> : vector<1xf32>
    %279 = vector.multi_reduction <add>, %278, %cst_188 [1, 2] : vector<1x128x128xf32> to vector<1xf32>
    %280 = vector.shape_cast %279 : vector<1xf32> to vector<1x1x1xf32>
    %281 = vector.extract %280[0, 0, 0] : f32 from vector<1x1x1xf32>
    %cst_189 = arith.constant 0.000000e+00 : f32
    %282 = arith.addf %cst_189, %281 : f32
    %283 = arith.mulf %274, %274 : vector<128x128xf32>
    %284 = vector.shape_cast %283 : vector<128x128xf32> to vector<1x128x128xf32>
    %cst_190 = arith.constant dense<0.000000e+00> : vector<1xf32>
    %285 = vector.multi_reduction <add>, %284, %cst_190 [1, 2] : vector<1x128x128xf32> to vector<1xf32>
    %286 = vector.shape_cast %285 : vector<1xf32> to vector<1x1x1xf32>
    %287 = vector.extract %286[0, 0, 0] : f32 from vector<1x1x1xf32>
    %cst_191 = arith.constant 0.000000e+00 : f32
    %288 = arith.addf %cst_191, %287 : f32
    %cst_192 = arith.constant 0.000000e+00 : f32
    %289 = vector.broadcast %cst_192 : f32 to vector<128x128xf32>
    %c128_193 = arith.constant 128 : index
    %c0_194 = arith.constant 0 : index
    %290 = vector.load %arg7[%c128_193, %c0_194] : memref<288x128xf32, #tpu.memory_space<vmem>>, vector<128x128xf32>
    %c1_i32_195 = arith.constant 1 : i32
    %291 = tpu.dynamic_rotate %290 by %c1_i32_195 dim 0 : vector<128x128xf32>, i32 -> vector<128x128xf32>
    %292 = vector.broadcast %24 : vector<128x1xf32> to vector<128x128xf32>
    %293 = arith.mulf %291, %292 : vector<128x128xf32>
    %c0_196 = arith.constant 0 : index
    %c0_197 = arith.constant 0 : index
    %c0_198 = arith.constant 0 : index
    %294 = vector.load %arg3[%c0_196, %c0_197, %c0_198] : memref<9x128x128xf32, #tpu.memory_space<vmem>>, vector<1x128x128xf32>
    %295 = vector.shape_cast %294 : vector<1x128x128xf32> to vector<128x128xf32>
    %cst_199 = arith.constant dense<0.000000e+00> : vector<128x128xf32>
    %296 = tpu.matmul %293, %295, %cst_199 {dimension_numbers = #tpu.dot_dimension_numbers<[1], [0], [0], [1], [0, 0, 1, 1], [], []>} : vector<128x128xf32>, vector<128x128xf32>, vector<128x128xf32> -> vector<128x128xf32>
    %297 = arith.addf %289, %296 : vector<128x128xf32>
    %c1_200 = arith.constant 1 : index
    %c0_201 = arith.constant 0 : index
    %c0_202 = arith.constant 0 : index
    %298 = vector.load %arg3[%c1_200, %c0_201, %c0_202] : memref<9x128x128xf32, #tpu.memory_space<vmem>>, vector<1x128x128xf32>
    %299 = vector.shape_cast %298 : vector<1x128x128xf32> to vector<128x128xf32>
    %cst_203 = arith.constant dense<0.000000e+00> : vector<128x128xf32>
    %300 = tpu.matmul %290, %299, %cst_203 {dimension_numbers = #tpu.dot_dimension_numbers<[1], [0], [0], [1], [0, 0, 1, 1], [], []>} : vector<128x128xf32>, vector<128x128xf32>, vector<128x128xf32> -> vector<128x128xf32>
    %301 = arith.addf %297, %300 : vector<128x128xf32>
    %c127_i32_204 = arith.constant 127 : i32
    %302 = tpu.dynamic_rotate %290 by %c127_i32_204 dim 0 : vector<128x128xf32>, i32 -> vector<128x128xf32>
    %303 = vector.broadcast %20 : vector<128x1xf32> to vector<128x128xf32>
    %304 = arith.mulf %302, %303 : vector<128x128xf32>
    %c2_205 = arith.constant 2 : index
    %c0_206 = arith.constant 0 : index
    %c0_207 = arith.constant 0 : index
    %305 = vector.load %arg3[%c2_205, %c0_206, %c0_207] : memref<9x128x128xf32, #tpu.memory_space<vmem>>, vector<1x128x128xf32>
    %306 = vector.shape_cast %305 : vector<1x128x128xf32> to vector<128x128xf32>
    %cst_208 = arith.constant dense<0.000000e+00> : vector<128x128xf32>
    %307 = tpu.matmul %304, %306, %cst_208 {dimension_numbers = #tpu.dot_dimension_numbers<[1], [0], [0], [1], [0, 0, 1, 1], [], []>} : vector<128x128xf32>, vector<128x128xf32>, vector<128x128xf32> -> vector<128x128xf32>
    %308 = arith.addf %301, %307 : vector<128x128xf32>
    %c144_209 = arith.constant 144 : index
    %c0_210 = arith.constant 0 : index
    %309 = vector.load %arg7[%c144_209, %c0_210] : memref<288x128xf32, #tpu.memory_space<vmem>>, vector<128x128xf32>
    %c1_i32_211 = arith.constant 1 : i32
    %310 = tpu.dynamic_rotate %309 by %c1_i32_211 dim 0 : vector<128x128xf32>, i32 -> vector<128x128xf32>
    %311 = vector.broadcast %24 : vector<128x1xf32> to vector<128x128xf32>
    %312 = arith.mulf %310, %311 : vector<128x128xf32>
    %c3_212 = arith.constant 3 : index
    %c0_213 = arith.constant 0 : index
    %c0_214 = arith.constant 0 : index
    %313 = vector.load %arg3[%c3_212, %c0_213, %c0_214] : memref<9x128x128xf32, #tpu.memory_space<vmem>>, vector<1x128x128xf32>
    %314 = vector.shape_cast %313 : vector<1x128x128xf32> to vector<128x128xf32>
    %cst_215 = arith.constant dense<0.000000e+00> : vector<128x128xf32>
    %315 = tpu.matmul %312, %314, %cst_215 {dimension_numbers = #tpu.dot_dimension_numbers<[1], [0], [0], [1], [0, 0, 1, 1], [], []>} : vector<128x128xf32>, vector<128x128xf32>, vector<128x128xf32> -> vector<128x128xf32>
    %316 = arith.addf %308, %315 : vector<128x128xf32>
    %c4_216 = arith.constant 4 : index
    %c0_217 = arith.constant 0 : index
    %c0_218 = arith.constant 0 : index
    %317 = vector.load %arg3[%c4_216, %c0_217, %c0_218] : memref<9x128x128xf32, #tpu.memory_space<vmem>>, vector<1x128x128xf32>
    %318 = vector.shape_cast %317 : vector<1x128x128xf32> to vector<128x128xf32>
    %cst_219 = arith.constant dense<0.000000e+00> : vector<128x128xf32>
    %319 = tpu.matmul %309, %318, %cst_219 {dimension_numbers = #tpu.dot_dimension_numbers<[1], [0], [0], [1], [0, 0, 1, 1], [], []>} : vector<128x128xf32>, vector<128x128xf32>, vector<128x128xf32> -> vector<128x128xf32>
    %320 = arith.addf %316, %319 : vector<128x128xf32>
    %c127_i32_220 = arith.constant 127 : i32
    %321 = tpu.dynamic_rotate %309 by %c127_i32_220 dim 0 : vector<128x128xf32>, i32 -> vector<128x128xf32>
    %322 = vector.broadcast %20 : vector<128x1xf32> to vector<128x128xf32>
    %323 = arith.mulf %321, %322 : vector<128x128xf32>
    %c5_221 = arith.constant 5 : index
    %c0_222 = arith.constant 0 : index
    %c0_223 = arith.constant 0 : index
    %324 = vector.load %arg3[%c5_221, %c0_222, %c0_223] : memref<9x128x128xf32, #tpu.memory_space<vmem>>, vector<1x128x128xf32>
    %325 = vector.shape_cast %324 : vector<1x128x128xf32> to vector<128x128xf32>
    %cst_224 = arith.constant dense<0.000000e+00> : vector<128x128xf32>
    %326 = tpu.matmul %323, %325, %cst_224 {dimension_numbers = #tpu.dot_dimension_numbers<[1], [0], [0], [1], [0, 0, 1, 1], [], []>} : vector<128x128xf32>, vector<128x128xf32>, vector<128x128xf32> -> vector<128x128xf32>
    %327 = arith.addf %320, %326 : vector<128x128xf32>
    %c160_225 = arith.constant 160 : index
    %c0_226 = arith.constant 0 : index
    %328 = vector.load %arg7[%c160_225, %c0_226] : memref<288x128xf32, #tpu.memory_space<vmem>>, vector<128x128xf32>
    %c1_i32_227 = arith.constant 1 : i32
    %329 = tpu.dynamic_rotate %328 by %c1_i32_227 dim 0 : vector<128x128xf32>, i32 -> vector<128x128xf32>
    %330 = vector.broadcast %24 : vector<128x1xf32> to vector<128x128xf32>
    %331 = arith.mulf %329, %330 : vector<128x128xf32>
    %c6_228 = arith.constant 6 : index
    %c0_229 = arith.constant 0 : index
    %c0_230 = arith.constant 0 : index
    %332 = vector.load %arg3[%c6_228, %c0_229, %c0_230] : memref<9x128x128xf32, #tpu.memory_space<vmem>>, vector<1x128x128xf32>
    %333 = vector.shape_cast %332 : vector<1x128x128xf32> to vector<128x128xf32>
    %cst_231 = arith.constant dense<0.000000e+00> : vector<128x128xf32>
    %334 = tpu.matmul %331, %333, %cst_231 {dimension_numbers = #tpu.dot_dimension_numbers<[1], [0], [0], [1], [0, 0, 1, 1], [], []>} : vector<128x128xf32>, vector<128x128xf32>, vector<128x128xf32> -> vector<128x128xf32>
    %335 = arith.addf %327, %334 : vector<128x128xf32>
    %c7_232 = arith.constant 7 : index
    %c0_233 = arith.constant 0 : index
    %c0_234 = arith.constant 0 : index
    %336 = vector.load %arg3[%c7_232, %c0_233, %c0_234] : memref<9x128x128xf32, #tpu.memory_space<vmem>>, vector<1x128x128xf32>
    %337 = vector.shape_cast %336 : vector<1x128x128xf32> to vector<128x128xf32>
    %cst_235 = arith.constant dense<0.000000e+00> : vector<128x128xf32>
    %338 = tpu.matmul %328, %337, %cst_235 {dimension_numbers = #tpu.dot_dimension_numbers<[1], [0], [0], [1], [0, 0, 1, 1], [], []>} : vector<128x128xf32>, vector<128x128xf32>, vector<128x128xf32> -> vector<128x128xf32>
    %339 = arith.addf %335, %338 : vector<128x128xf32>
    %c127_i32_236 = arith.constant 127 : i32
    %340 = tpu.dynamic_rotate %328 by %c127_i32_236 dim 0 : vector<128x128xf32>, i32 -> vector<128x128xf32>
    %341 = vector.broadcast %20 : vector<128x1xf32> to vector<128x128xf32>
    %342 = arith.mulf %340, %341 : vector<128x128xf32>
    %c8_237 = arith.constant 8 : index
    %c0_238 = arith.constant 0 : index
    %c0_239 = arith.constant 0 : index
    %343 = vector.load %arg3[%c8_237, %c0_238, %c0_239] : memref<9x128x128xf32, #tpu.memory_space<vmem>>, vector<1x128x128xf32>
    %344 = vector.shape_cast %343 : vector<1x128x128xf32> to vector<128x128xf32>
    %cst_240 = arith.constant dense<0.000000e+00> : vector<128x128xf32>
    %345 = tpu.matmul %342, %344, %cst_240 {dimension_numbers = #tpu.dot_dimension_numbers<[1], [0], [0], [1], [0, 0, 1, 1], [], []>} : vector<128x128xf32>, vector<128x128xf32>, vector<128x128xf32> -> vector<128x128xf32>
    %346 = arith.addf %339, %345 : vector<128x128xf32>
    %347 = vector.broadcast %37 : vector<1x128xf32> to vector<128x128xf32>
    %348 = arith.addf %346, %347 : vector<128x128xf32>
    %c0_241 = arith.constant 0 : index
    %c128_242 = arith.constant 128 : index
    %c0_243 = arith.constant 0 : index
    %349 = vector.load %arg5[%c0_241, %c128_242, %c0_243] : memref<1x256x128xf32, #tpu.memory_space<vmem>>, vector<1x128x128xf32>
    %350 = vector.shape_cast %349 : vector<1x128x128xf32> to vector<128x128xf32>
    %351 = vector.shape_cast %348 : vector<128x128xf32> to vector<1x128x128xf32>
    tpu.vector_store %arg5[%c0_241, %c128_242, %c0_243], %351 {strides = array<i32>} : memref<1x256x128xf32, #tpu.memory_space<vmem>>, vector<1x128x128xf32>,
    %352 = vector.shape_cast %348 : vector<128x128xf32> to vector<1x128x128xf32>
    %cst_244 = arith.constant dense<0.000000e+00> : vector<1xf32>
    %353 = vector.multi_reduction <add>, %352, %cst_244 [1, 2] : vector<1x128x128xf32> to vector<1xf32>
    %354 = vector.shape_cast %353 : vector<1xf32> to vector<1x1x1xf32>
    %355 = vector.extract %354[0, 0, 0] : f32 from vector<1x1x1xf32>
    %356 = arith.addf %282, %355 : f32
    %357 = arith.mulf %348, %348 : vector<128x128xf32>
    %358 = vector.shape_cast %357 : vector<128x128xf32> to vector<1x128x128xf32>
    %cst_245 = arith.constant dense<0.000000e+00> : vector<1xf32>
    %359 = vector.multi_reduction <add>, %358, %cst_245 [1, 2] : vector<1x128x128xf32> to vector<1xf32>
    %360 = vector.shape_cast %359 : vector<1xf32> to vector<1x1x1xf32>
    %361 = vector.extract %360[0, 0, 0] : f32 from vector<1x1x1xf32>
    %362 = arith.addf %288, %361 : f32
    %cst_246 = arith.constant 2.048000e+03 : f32
    %363 = arith.divf %356, %cst_246 : f32
    %cst_247 = arith.constant 2.048000e+03 : f32
    %364 = arith.divf %362, %cst_247 : f32
    %365 = arith.mulf %363, %363 : f32
    %366 = arith.subf %364, %365 : f32
    %cst_248 = arith.constant 0.000000e+00 : f32
    %367 = arith.maximumf %366, %cst_248 : f32
    %cst_249 = arith.constant 9.99999974E-6 : f32
    %368 = arith.addf %367, %cst_249 : f32
    %369 = math.rsqrt %368 : f32
    %c0_250 = arith.constant 0 : index
    %c0_251 = arith.constant 0 : index
    %c0_252 = arith.constant 0 : index
    %370 = vector.load %arg5[%c0_250, %c0_251, %c0_252] : memref<1x256x128xf32, #tpu.memory_space<vmem>>, vector<1x128x128xf32>
    %371 = vector.shape_cast %370 : vector<1x128x128xf32> to vector<128x128xf32>
    %372 = vector.broadcast %363 : f32 to vector<128x128xf32>
    %373 = arith.subf %371, %372 : vector<128x128xf32>
    %374 = vector.broadcast %369 : f32 to vector<128x128xf32>
    %375 = arith.mulf %373, %374 : vector<128x128xf32>
    %376 = vector.broadcast %38 : vector<1x128xf32> to vector<128x128xf32>
    %377 = arith.mulf %375, %376 : vector<128x128xf32>
    %378 = vector.broadcast %39 : vector<1x128xf32> to vector<128x128xf32>
    %379 = arith.addf %377, %378 : vector<128x128xf32>
    %cst_253 = arith.constant 0.000000e+00 : f32
    %380 = vector.broadcast %cst_253 : f32 to vector<128x128xf32>
    %381 = arith.maximumf %379, %380 : vector<128x128xf32>
    %c0_254 = arith.constant 0 : index
    %c0_255 = arith.constant 0 : index
    %c0_256 = arith.constant 0 : index
    %382 = vector.load %arg5[%c0_254, %c0_255, %c0_256] : memref<1x256x128xf32, #tpu.memory_space<vmem>>, vector<1x128x128xf32>
    %383 = vector.shape_cast %382 : vector<1x128x128xf32> to vector<128x128xf32>
    %384 = vector.shape_cast %381 : vector<128x128xf32> to vector<1x128x128xf32>
    tpu.vector_store %arg5[%c0_254, %c0_255, %c0_256], %384 {strides = array<i32>} : memref<1x256x128xf32, #tpu.memory_space<vmem>>, vector<1x128x128xf32>,
    %c0_257 = arith.constant 0 : index
    %c128_258 = arith.constant 128 : index
    %c0_259 = arith.constant 0 : index
    %385 = vector.load %arg5[%c0_257, %c128_258, %c0_259] : memref<1x256x128xf32, #tpu.memory_space<vmem>>, vector<1x128x128xf32>
    %386 = vector.shape_cast %385 : vector<1x128x128xf32> to vector<128x128xf32>
    %387 = vector.broadcast %363 : f32 to vector<128x128xf32>
    %388 = arith.subf %386, %387 : vector<128x128xf32>
    %389 = vector.broadcast %369 : f32 to vector<128x128xf32>
    %390 = arith.mulf %388, %389 : vector<128x128xf32>
    %391 = vector.broadcast %38 : vector<1x128xf32> to vector<128x128xf32>
    %392 = arith.mulf %390, %391 : vector<128x128xf32>
    %393 = vector.broadcast %39 : vector<1x128xf32> to vector<128x128xf32>
    %394 = arith.addf %392, %393 : vector<128x128xf32>
    %cst_260 = arith.constant 0.000000e+00 : f32
    %395 = vector.broadcast %cst_260 : f32 to vector<128x128xf32>
    %396 = arith.maximumf %394, %395 : vector<128x128xf32>
    %c0_261 = arith.constant 0 : index
    %c128_262 = arith.constant 128 : index
    %c0_263 = arith.constant 0 : index
    %397 = vector.load %arg5[%c0_261, %c128_262, %c0_263] : memref<1x256x128xf32, #tpu.memory_space<vmem>>, vector<1x128x128xf32>
    %398 = vector.shape_cast %397 : vector<1x128x128xf32> to vector<128x128xf32>
    %399 = vector.shape_cast %396 : vector<128x128xf32> to vector<1x128x128xf32>
    tpu.vector_store %arg5[%c0_261, %c128_262, %c0_263], %399 {strides = array<i32>} : memref<1x256x128xf32, #tpu.memory_space<vmem>>, vector<1x128x128xf32>,
    return
  }
  func.func @transform_0(%arg0: i32) -> (i32, i32, i32) {
    %c0_i32 = arith.constant 0 : i32
    %c0_i32_0 = arith.constant 0 : i32
    %c0_i32_1 = arith.constant 0 : i32
    return %arg0, %c0_i32, %c0_i32_0 : i32, i32, i32
  }
  func.func @transform_1(%arg0: i32) -> (i32, i32, i32) {
    %c0_i32 = arith.constant 0 : i32
    %c0_i32_0 = arith.constant 0 : i32
    %c0_i32_1 = arith.constant 0 : i32
    %c0_i32_2 = arith.constant 0 : i32
    return %c0_i32, %c0_i32_0, %c0_i32_1 : i32, i32, i32
  }
  func.func @transform_2(%arg0: i32) -> (i32, i32, i32) {
    %c0_i32 = arith.constant 0 : i32
    %c0_i32_0 = arith.constant 0 : i32
    %c0_i32_1 = arith.constant 0 : i32
    %c0_i32_2 = arith.constant 0 : i32
    return %c0_i32, %c0_i32_0, %c0_i32_1 : i32, i32, i32
  }
  func.func @transform_3(%arg0: i32) -> (i32, i32) {
    %c0_i32 = arith.constant 0 : i32
    %c0_i32_0 = arith.constant 0 : i32
    %c0_i32_1 = arith.constant 0 : i32
    return %c0_i32, %c0_i32_0 : i32, i32
  }
  func.func @transform_4(%arg0: i32) -> (i32, i32, i32) {
    %c0_i32 = arith.constant 0 : i32
    %c0_i32_0 = arith.constant 0 : i32
    %c0_i32_1 = arith.constant 0 : i32
    return %arg0, %c0_i32, %c0_i32_0 : i32, i32, i32
  }
}

</mosaic_0001>

<llo_original>
// kernel: tpu_custom_call.1
$region0: #{tpu_custom_call.1}
  #allocation0 [shape = 'u32[]', space=smem, size = 0x4, offset = 0x4, fixed_abs, tag = 'smem constant byte address 0x4 - core index']
  #allocation1 [shape = 'u32[144,128]{1,0:T(1,128)}', space=vmem, size = 0x12000, scoped, tag = 'internal scratch']
  #allocation2 [shape = 'f32[288,4]{1,0:T(8,128)}', space=vmem, size = 0x24000, scoped, tag = 'scratch operand']
  #allocation3 [shape = 'f32[288,128]{1,0:T(8,128)}', space=vmem, size = 0x24000, scoped, tag = 'scratch operand']
  %s0 = inlined_call_operand.vmem [shape: f32[2,256,4], index: 0, kind: input, shape index: {}]
  %s1 = inlined_call_operand.vmem [shape: f32[9,4,128], index: 1, kind: input, shape index: {}]
  %s2 = inlined_call_operand.hbm [shape: f32[9,128,128], index: 2, kind: input, shape index: {}]
  %s3 = inlined_call_operand.vmem [shape: f32[8,128], index: 3, kind: input, shape index: {}]
  %s4 = inlined_call_operand.hbm [shape: f32[2,256,128], index: 4, kind: output, shape index: {}]
  %s5 = sld [smem:[#allocation0]]
  $region53: #{tpu_custom_call.1} parent=0
    _
  %s7 = ssub.s32 1, %s5
  %s8 = scalar_select 0, %s7, %s5
  $region1: #{tpu_custom_call.1} parent=0
    #allocation4 [shape = 'u8[589824]{0}', space=vmem, size = 0x90000, scoped, tag = 'input window, operand 2, single buffered']
    #allocation5 [shape = 's32[2]{0}', space=sflag, size = 0x8, scoped, tag = 'scoped memory for tpu_custom_call.1']
    #allocation6 [shape = 's32[2]{0}', space=sflag, size = 0x8, scoped, tag = 'scoped memory for tpu_custom_call.1']
    #allocation7 [shape = 'u8[262144]{0}', space=vmem, size = 0x40000, scoped, tag = 'output window, operand 0']
    %9 = vsyncpa [#allocation5], 0
    %10 = vsyncpa [#allocation6], 0
    %s11 = scalar_lea.sflag [#allocation6], 1
    %12 = vsyncpa %s11, 0
    loop: start=0, step=1, limit=4
    $region2: #{tpu_custom_call.1} parent=1 // loop_pre_header
      _
    $region3: #{tpu_custom_call.1} parent=1 // loop_header
      %s14 = sphi 0, %s18
      %p15 = scmp.ge.s32.totalorder %s14, 4
      %s24 = sphi 0, %s26
      %s27 = sphi 0, %s24
      %s28 = sphi 0, %s27
      %s44 = sphi 0, %s28
      %s48 = sphi 0, %s48
      %s50 = sphi 0, %s48
      %s51 = sphi 0, %s50
      %s65 = sphi 0, %s51
      %s69 = sphi 0, %s69
      %s71 = sphi 0, %s69
      %s72 = sphi 0, %s71
      %s86 = sphi 0, %s72
      %s90 = sphi 0, %s90
      %s92 = sphi 0, %s90
      %s93 = sphi 0, %s92
      %s107 = sphi 0, %s93
      %s113 = sphi 0, %s115
      %s116 = sphi 0, %s113
      %s117 = sphi 0, %s116
      %s133 = sphi 0, %s117
    $region4: #{tpu_custom_call.1} parent=1 // loop_header_branch
      %17 = sbr.rel (%p15) target = $region8
    $region5: #{tpu_custom_call.1} parent=1 // loop_body
      %s19 = ssub.s32 %s14, 1
      %s20 = ssub.s32 %s14, 2
      %s21 = sadd.s32 %s14, 1
      %s22 = ssub.s32 %s14, %s21
      %p23 = scmp.eq.s32.totalorder %s22, 0
      %s25 = sadd.s32 %s24, 1
      %s26 = scalar_select %p23, %s24, %s25
      %p29 = pneg %p23
      %p30 = scmp.eq.s32.totalorder %s14, 1
      %p31 = por %p29, %p30
      %p32 = scmp.ne.s32.totalorder %s24, %s27
      %p33 = scmp.eq.s32.totalorder %s14, 0
      %p34 = por %p32, %p33
      %p35 = scmp.ne.s32.totalorder %s24, %s27
      %p36 = scmp.eq.s32.totalorder %s19, 1
      %p37 = por %p35, %p36
      %p38 = scmp.ne.s32.totalorder %s27, %s28
      %p39 = scmp.eq.s32.totalorder %s19, 0
      %p40 = por %p38, %p39
      %p41 = scmp.ne.s32.totalorder %s27, %s28
      %p42 = scmp.eq.s32.totalorder %s20, 1
      %p43 = por %p41, %p42
      %p45 = scmp.ne.s32.totalorder %s28, %s44
      %p46 = scmp.eq.s32.totalorder %s20, 0
      %p47 = por %p45, %p46
      %s49 = sadd.s32 %s48, 1
      %p52 = scmp.eq.s32.totalorder %s14, 1
      %p53 = scmp.ne.s32.totalorder %s48, %s50
      %p54 = scmp.eq.s32.totalorder %s14, 0
      %p55 = por %p53, %p54
      %p56 = scmp.ne.s32.totalorder %s48, %s50
      %p57 = scmp.eq.s32.totalorder %s19, 1
      %p58 = por %p56, %p57
      %p59 = scmp.ne.s32.totalorder %s50, %s51
      %p60 = scmp.eq.s32.totalorder %s19, 0
      %p61 = por %p59, %p60
      %p62 = scmp.ne.s32.totalorder %s50, %s51
      %p63 = scmp.eq.s32.totalorder %s20, 1
      %p64 = por %p62, %p63
      %p66 = scmp.ne.s32.totalorder %s51, %s65
      %p67 = scmp.eq.s32.totalorder %s20, 0
      %p68 = por %p66, %p67
      %s70 = sadd.s32 %s69, 1
      %p73 = scmp.eq.s32.totalorder %s14, 1
      %p74 = scmp.ne.s32.totalorder %s69, %s71
      %p75 = scmp.eq.s32.totalorder %s14, 0
      %p76 = por %p74, %p75
      %p77 = scmp.ne.s32.totalorder %s69, %s71
      %p78 = scmp.eq.s32.totalorder %s19, 1
      %p79 = por %p77, %p78
      %p80 = scmp.ne.s32.totalorder %s71, %s72
      %p81 = scmp.eq.s32.totalorder %s19, 0
      %p82 = por %p80, %p81
      %p83 = scmp.ne.s32.totalorder %s71, %s72
      %p84 = scmp.eq.s32.totalorder %s20, 1
      %p85 = por %p83, %p84
      %p87 = scmp.ne.s32.totalorder %s72, %s86
      %p88 = scmp.eq.s32.totalorder %s20, 0
      %p89 = por %p87, %p88
      %s91 = sadd.s32 %s90, 1
      %p94 = scmp.eq.s32.totalorder %s14, 1
      %p95 = scmp.ne.s32.totalorder %s90, %s92
      %p96 = scmp.eq.s32.totalorder %s14, 0
      %p97 = por %p95, %p96
      %p98 = scmp.ne.s32.totalorder %s90, %s92
      %p99 = scmp.eq.s32.totalorder %s19, 1
      %p100 = por %p98, %p99
      %p101 = scmp.ne.s32.totalorder %s92, %s93
      %p102 = scmp.eq.s32.totalorder %s19, 0
      %p103 = por %p101, %p102
      %p104 = scmp.ne.s32.totalorder %s92, %s93
      %p105 = scmp.eq.s32.totalorder %s20, 1
      %p106 = por %p104, %p105
      %p108 = scmp.ne.s32.totalorder %s93, %s107
      %p109 = scmp.eq.s32.totalorder %s20, 0
      %p110 = por %p108, %p109
      %s111 = ssub.s32 %s14, %s21
      %p112 = scmp.eq.s32.totalorder %s111, 0
      %s114 = sadd.s32 %s113, 1
      %s115 = scalar_select %p112, %s113, %s114
      %p118 = pneg %p112
      %p119 = scmp.eq.s32.totalorder %s14, 1
      %p120 = por %p118, %p119
      %p121 = scmp.ne.s32.totalorder %s113, %s116
      %p122 = scmp.eq.s32.totalorder %s14, 0
      %p123 = por %p121, %p122
      %p124 = scmp.ne.s32.totalorder %s113, %s116
      %p125 = scmp.eq.s32.totalorder %s19, 1
      %p126 = por %p124, %p125
      %p127 = scmp.ne.s32.totalorder %s116, %s117
      %p128 = scmp.eq.s32.totalorder %s19, 0
      %p129 = por %p127, %p128
      %p130 = scmp.ne.s32.totalorder %s116, %s117
      %p131 = scmp.eq.s32.totalorder %s20, 1
      %p132 = por %p130, %p131
      %p134 = scmp.ne.s32.totalorder %s117, %s133
      %p135 = scmp.eq.s32.totalorder %s20, 0
      %p136 = por %p134, %p135
      %p137 = scmp.le.s32.totalorder 1, %s14
      %p138 = scmp.lt.s32.totalorder %s14, 3
      %p139 = pnand %p137, %p138
      %p140 = pneg %p139
      // Predicated region
      $region9: #{tpu_custom_call.1} parent=5 // pred_check
        _
      $region10: #{tpu_custom_call.1} parent=5 // pred_check_branch
        %142 = sbr.rel (%p139) target = $region12
      $region11: #{tpu_custom_call.1} parent=5 // pred_region
        %s143 = ssub.s32 %s14, 1
        // Predicated region
        $region13: #{tpu_custom_call.1} parent=11 // pred_check
          %p144 = pneg %p61
        $region14: #{tpu_custom_call.1} parent=11 // pred_check_branch
          %146 = sbr.rel (%p144) target = $region16
        $region15: #{tpu_custom_call.1} parent=11 // pred_region
          _
        $region16: #{tpu_custom_call.1} parent=11 // pred_fallthru
          _
        // Predicated region
        $region17: #{tpu_custom_call.1} parent=11 // pred_check
          %p147 = pneg %p82
        $region18: #{tpu_custom_call.1} parent=11 // pred_check_branch
          %149 = sbr.rel (%p147) target = $region20
        $region19: #{tpu_custom_call.1} parent=11 // pred_region
          %s151 = ssub.s32 18432, 18432
          %152 = vsyncadd [#allocation5], %s151
          %s153 = sshll.u32 [#allocation4], 4
          %s154 = int_to_ptr.vmem [resolvable:$true] %s153
          %159 = dma.hbm_to_vmem [thread:$0]  %s2, 18432, %s154, [#allocation5], 128, 128, 8
        $region20: #{tpu_custom_call.1} parent=11 // pred_fallthru
          _
        // Predicated region
        $region21: #{tpu_custom_call.1} parent=11 // pred_check
          %p160 = pneg %p103
        $region22: #{tpu_custom_call.1} parent=11 // pred_check_branch
          %162 = sbr.rel (%p160) target = $region24
        $region23: #{tpu_custom_call.1} parent=11 // pred_region
          _
        $region24: #{tpu_custom_call.1} parent=11 // pred_fallthru
          _
      $region12: #{tpu_custom_call.1} parent=5 // pred_fallthru
        _
      %p163 = scmp.lt.s32.totalorder %s14, 2
      // Predicated region
      $region25: #{tpu_custom_call.1} parent=5 // pred_check
        %p164 = pneg %p163
      $region26: #{tpu_custom_call.1} parent=5 // pred_check_branch
        %166 = sbr.rel (%p164) target = $region28
      $region27: #{tpu_custom_call.1} parent=5 // pred_region
        // Predicated region
        $region29: #{tpu_custom_call.1} parent=27 // pred_check
          %p167 = pneg %p34
        $region30: #{tpu_custom_call.1} parent=27 // pred_check_branch
          %169 = sbr.rel (%p167) target = $region32
        $region31: #{tpu_custom_call.1} parent=27 // pred_region
          %p170 = scmp.lt.s32.totalorder %s14, 1
          %s171 = scalar_select %p170, %s14, 1
          %s172 = smul.addr %s171, 32
          %s173 = smul.addr %s172, 8
          %s174 = scalar_lea.vmem %s0, %s173
        $region32: #{tpu_custom_call.1} parent=27 // pred_fallthru
          _
      $region28: #{tpu_custom_call.1} parent=5 // pred_fallthru
        _
      %p175 = scmp.le.s32.totalorder 1, %s14
      %p176 = scmp.lt.s32.totalorder %s14, 3
      %p177 = pnand %p175, %p176
      %p178 = pneg %p177
      // Predicated region
      $region33: #{tpu_custom_call.1} parent=5 // pred_check
        _
      $region34: #{tpu_custom_call.1} parent=5 // pred_check_branch
        %180 = sbr.rel (%p177) target = $region36
      $region35: #{tpu_custom_call.1} parent=5 // pred_region
        %s181 = ssub.s32 %s14, 1
        // Predicated region
        $region37: #{tpu_custom_call.1} parent=35 // pred_check
          %p182 = pneg %p82
        $region38: #{tpu_custom_call.1} parent=35 // pred_check_branch
          %184 = sbr.rel (%p182) target = $region40
        $region39: #{tpu_custom_call.1} parent=35 // pred_region
          %185 = dma.done [#allocation5], 18432
        $region40: #{tpu_custom_call.1} parent=35 // pred_fallthru
          _
        %p186 = scmp.lt.s32.totalorder %s19, 1
        %s187 = scalar_select %p186, %s19, 1
        %s188 = smul.addr %s187, 32
        %s189 = smul.addr %s188, 8
        %s190 = scalar_lea.vmem %s0, %s189
        %p191 = pneg %p40
        %p192 = pneg %p37
        %p193 = pneg %p61
        %p194 = pneg %p58
        %p195 = pneg %p82
        %p196 = pneg %p79
        %p197 = pneg %p103
        %p198 = pneg %p100
        %p199 = pneg %p129
        %p200 = pneg %p126
        %s201 = sand.u32 %s116, 1
        %s202 = scalar_lea.sflag [#allocation6], %s201
        %s203 = sand.u32 %s116, 1
        %s204 = smul.addr %s203, 256
        %s205 = scalar_lea.vmem [#allocation7], %s204
        %p206 = scmp.lt.s32.totalorder %s19, 1
        %s207 = scalar_select %p206, %s19, 1
        %s208 = smul.addr %s207, 32
        %s209 = smul.addr %s208, 8
        %s210 = scalar_lea.vmem %s0, %s209
        %v211 = vlaneseq
        %v212 = vshrl.u32 %v211, 7
        %v213 = vadd.s32 %v212, 8
        %v214 = vadd.s32 %v212, 16
        %v215 = vadd.s32 %v212, 24
        %v216 = vadd.s32 %v212, 32
        %v217 = vadd.s32 %v212, 40
        %v218 = vadd.s32 %v212, 48
        %v219 = vadd.s32 %v212, 56
        %v220 = vadd.s32 %v212, 64
        %v221 = vadd.s32 %v212, 72
        %v222 = vadd.s32 %v212, 80
        %v223 = vadd.s32 %v212, 88
        %v224 = vadd.s32 %v212, 96
        %v225 = vadd.s32 %v212, 104
        %v226 = vadd.s32 %v212, 112
        %v227 = vadd.s32 %v212, 120
        %vm228 = vcmp.lt.s32.totalorder %v212, 0
        %v229 = vsub.s32 0, %v212
        %v230 = vsel %vm228, %v229, %v212
        %v231 = vshrl.u32 %v230, 4
        %v232 = vand.u32 %v230, 15
        %v233 = vsub.s32 0, %v232
        %v234 = vsel %vm228, %v233, %v232
        %vm235 = vcmp.lt.s32.totalorder %v213, 0
        %v236 = vsub.s32 0, %v213
        %v237 = vsel %vm235, %v236, %v213
        %v238 = vshrl.u32 %v237, 4
        %v239 = vand.u32 %v237, 15
        %v240 = vsub.s32 0, %v239
        %v241 = vsel %vm235, %v240, %v239
        %vm242 = vcmp.lt.s32.totalorder %v214, 0
        %v243 = vsub.s32 0, %v214
        %v244 = vsel %vm242, %v243, %v214
        %v245 = vshrl.u32 %v244, 4
        %v246 = vand.u32 %v244, 15
        %v247 = vsub.s32 0, %v246
        %v248 = vsel %vm242, %v247, %v246
        %vm249 = vcmp.lt.s32.totalorder %v215, 0
        %v250 = vsub.s32 0, %v215
        %v251 = vsel %vm249, %v250, %v215
        %v252 = vshrl.u32 %v251, 4
        %v253 = vand.u32 %v251, 15
        %v254 = vsub.s32 0, %v253
        %v255 = vsel %vm249, %v254, %v253
        %vm256 = vcmp.lt.s32.totalorder %v216, 0
        %v257 = vsub.s32 0, %v216
        %v258 = vsel %vm256, %v257, %v216
        %v259 = vshrl.u32 %v258, 4
        %v260 = vand.u32 %v258, 15
        %v261 = vsub.s32 0, %v260
        %v262 = vsel %vm256, %v261, %v260
        %vm263 = vcmp.lt.s32.totalorder %v217, 0
        %v264 = vsub.s32 0, %v217
        %v265 = vsel %vm263, %v264, %v217
        %v266 = vshrl.u32 %v265, 4
        %v267 = vand.u32 %v265, 15
        %v268 = vsub.s32 0, %v267
        %v269 = vsel %vm263, %v268, %v267
        %vm270 = vcmp.lt.s32.totalorder %v218, 0
        %v271 = vsub.s32 0, %v218
        %v272 = vsel %vm270, %v271, %v218
        %v273 = vshrl.u32 %v272, 4
        %v274 = vand.u32 %v272, 15
        %v275 = vsub.s32 0, %v274
        %v276 = vsel %vm270, %v275, %v274
        %vm277 = vcmp.lt.s32.totalorder %v219, 0
        %v278 = vsub.s32 0, %v219
        %v279 = vsel %vm277, %v278, %v219
        %v280 = vshrl.u32 %v279, 4
        %v281 = vand.u32 %v279, 15
        %v282 = vsub.s32 0, %v281
        %v283 = vsel %vm277, %v282, %v281
        %vm284 = vcmp.lt.s32.totalorder %v220, 0
        %v285 = vsub.s32 0, %v220
        %v286 = vsel %vm284, %v285, %v220
        %v287 = vshrl.u32 %v286, 4
        %v288 = vand.u32 %v286, 15
        %v289 = vsub.s32 0, %v288
        %v290 = vsel %vm284, %v289, %v288
        %vm291 = vcmp.lt.s32.totalorder %v221, 0
        %v292 = vsub.s32 0, %v221
        %v293 = vsel %vm291, %v292, %v221
        %v294 = vshrl.u32 %v293, 4
        %v295 = vand.u32 %v293, 15
        %v296 = vsub.s32 0, %v295
        %v297 = vsel %vm291, %v296, %v295
        %vm298 = vcmp.lt.s32.totalorder %v222, 0
        %v299 = vsub.s32 0, %v222
        %v300 = vsel %vm298, %v299, %v222
        %v301 = vshrl.u32 %v300, 4
        %v302 = vand.u32 %v300, 15
        %v303 = vsub.s32 0, %v302
        %v304 = vsel %vm298, %v303, %v302
        %vm305 = vcmp.lt.s32.totalorder %v223, 0
        %v306 = vsub.s32 0, %v223
        %v307 = vsel %vm305, %v306, %v223
        %v308 = vshrl.u32 %v307, 4
        %v309 = vand.u32 %v307, 15
        %v310 = vsub.s32 0, %v309
        %v311 = vsel %vm305, %v310, %v309
        %vm312 = vcmp.lt.s32.totalorder %v224, 0
        %v313 = vsub.s32 0, %v224
        %v314 = vsel %vm312, %v313, %v224
        %v315 = vshrl.u32 %v314, 4
        %v316 = vand.u32 %v314, 15
        %v317 = vsub.s32 0, %v316
        %v318 = vsel %vm312, %v317, %v316
        %vm319 = vcmp.lt.s32.totalorder %v225, 0
        %v320 = vsub.s32 0, %v225
        %v321 = vsel %vm319, %v320, %v225
        %v322 = vshrl.u32 %v321, 4
        %v323 = vand.u32 %v321, 15
        %v324 = vsub.s32 0, %v323
        %v325 = vsel %vm319, %v324, %v323
        %vm326 = vcmp.lt.s32.totalorder %v226, 0
        %v327 = vsub.s32 0, %v226
        %v328 = vsel %vm326, %v327, %v226
        %v329 = vshrl.u32 %v328, 4
        %v330 = vand.u32 %v328, 15
        %v331 = vsub.s32 0, %v330
        %v332 = vsel %vm326, %v331, %v330
        %vm333 = vcmp.lt.s32.totalorder %v227, 0
        %v334 = vsub.s32 0, %v227
        %v335 = vsel %vm333, %v334, %v227
        %v336 = vshrl.u32 %v335, 4
        %v337 = vand.u32 %v335, 15
        %v338 = vsub.s32 0, %v337
        %v339 = vsel %vm333, %v338, %v337
        %vm340 = vcmp.ne.s32.totalorder %v234, 0
        %vm341 = vcmp.ne.s32.totalorder %v241, 0
        %vm342 = vcmp.ne.s32.totalorder %v248, 0
        %vm343 = vcmp.ne.s32.totalorder %v255, 0
        %vm344 = vcmp.ne.s32.totalorder %v262, 0
        %vm345 = vcmp.ne.s32.totalorder %v269, 0
        %vm346 = vcmp.ne.s32.totalorder %v276, 0
        %vm347 = vcmp.ne.s32.totalorder %v283, 0
        %vm348 = vcmp.ne.s32.totalorder %v290, 0
        %vm349 = vcmp.ne.s32.totalorder %v297, 0
        %vm350 = vcmp.ne.s32.totalorder %v304, 0
        %vm351 = vcmp.ne.s32.totalorder %v311, 0
        %vm352 = vcmp.ne.s32.totalorder %v318, 0
        %vm353 = vcmp.ne.s32.totalorder %v325, 0
        %vm354 = vcmp.ne.s32.totalorder %v332, 0
        %vm355 = vcmp.ne.s32.totalorder %v339, 0
        %vm356 = vcmp.lt.s32.totalorder %v234, 0
        %vm357 = vcmp.lt.s32.totalorder %v241, 0
        %vm358 = vcmp.lt.s32.totalorder %v248, 0
        %vm359 = vcmp.lt.s32.totalorder %v255, 0
        %vm360 = vcmp.lt.s32.totalorder %v262, 0
        %vm361 = vcmp.lt.s32.totalorder %v269, 0
        %vm362 = vcmp.lt.s32.totalorder %v276, 0
        %vm363 = vcmp.lt.s32.totalorder %v283, 0
        %vm364 = vcmp.lt.s32.totalorder %v290, 0
        %vm365 = vcmp.lt.s32.totalorder %v297, 0
        %vm366 = vcmp.lt.s32.totalorder %v304, 0
        %vm367 = vcmp.lt.s32.totalorder %v311, 0
        %vm368 = vcmp.lt.s32.totalorder %v318, 0
        %vm369 = vcmp.lt.s32.totalorder %v325, 0
        %vm370 = vcmp.lt.s32.totalorder %v332, 0
        %vm371 = vcmp.lt.s32.totalorder %v339, 0
        %vm372 = vmand %vm356, %vm340
        %vm373 = vmand %vm357, %vm341
        %vm374 = vmand %vm358, %vm342
        %vm375 = vmand %vm359, %vm343
        %vm376 = vmand %vm360, %vm344
        %vm377 = vmand %vm361, %vm345
        %vm378 = vmand %vm362, %vm346
        %vm379 = vmand %vm363, %vm347
        %vm380 = vmand %vm364, %vm348
        %vm381 = vmand %vm365, %vm349
        %vm382 = vmand %vm366, %vm350
        %vm383 = vmand %vm367, %vm351
        %vm384 = vmand %vm368, %vm352
        %vm385 = vmand %vm369, %vm353
        %vm386 = vmand %vm370, %vm354
        %vm387 = vmand %vm371, %vm355
        %v388 = vadd.s32 %v234, 16
        %v389 = vadd.s32 %v241, 16
        %v390 = vadd.s32 %v248, 16
        %v391 = vadd.s32 %v255, 16
        %v392 = vadd.s32 %v262, 16
        %v393 = vadd.s32 %v269, 16
        %v394 = vadd.s32 %v276, 16
        %v395 = vadd.s32 %v283, 16
        %v396 = vadd.s32 %v290, 16
        %v397 = vadd.s32 %v297, 16
        %v398 = vadd.s32 %v304, 16
        %v399 = vadd.s32 %v311, 16
        %v400 = vadd.s32 %v318, 16
        %v401 = vadd.s32 %v325, 16
        %v402 = vadd.s32 %v332, 16
        %v403 = vadd.s32 %v339, 16
        %v404 = vsel %vm372, %v388, %v234
        %v405 = vsel %vm373, %v389, %v241
        %v406 = vsel %vm374, %v390, %v248
        %v407 = vsel %vm375, %v391, %v255
        %v408 = vsel %vm376, %v392, %v262
        %v409 = vsel %vm377, %v393, %v269
        %v410 = vsel %vm378, %v394, %v276
        %v411 = vsel %vm379, %v395, %v283
        %v412 = vsel %vm380, %v396, %v290
        %v413 = vsel %vm381, %v397, %v297
        %v414 = vsel %vm382, %v398, %v304
        %v415 = vsel %vm383, %v399, %v311
        %v416 = vsel %vm384, %v400, %v318
        %v417 = vsel %vm385, %v401, %v325
        %v418 = vsel %vm386, %v402, %v332
        %v419 = vsel %vm387, %v403, %v339
        %vm420 = vcmp.lt.s32.totalorder %v404, 15
        %vm421 = vcmp.lt.s32.totalorder %v405, 15
        %vm422 = vcmp.lt.s32.totalorder %v406, 15
        %vm423 = vcmp.lt.s32.totalorder %v407, 15
        %vm424 = vcmp.lt.s32.totalorder %v408, 15
        %vm425 = vcmp.lt.s32.totalorder %v409, 15
        %vm426 = vcmp.lt.s32.totalorder %v410, 15
        %vm427 = vcmp.lt.s32.totalorder %v411, 15
        %vm428 = vcmp.lt.s32.totalorder %v412, 15
        %vm429 = vcmp.lt.s32.totalorder %v413, 15
        %vm430 = vcmp.lt.s32.totalorder %v414, 15
        %vm431 = vcmp.lt.s32.totalorder %v415, 15
        %vm432 = vcmp.lt.s32.totalorder %v416, 15
        %vm433 = vcmp.lt.s32.totalorder %v417, 15
        %vm434 = vcmp.lt.s32.totalorder %v418, 15
        %vm435 = vcmp.lt.s32.totalorder %v419, 15
        %v436 = vsel %vm420, 1, 0
        %v437 = vsel %vm421, 1, 0
        %v438 = vsel %vm422, 1, 0
        %v439 = vsel %vm423, 1, 0
        %v440 = vsel %vm424, 1, 0
        %v441 = vsel %vm425, 1, 0
        %v442 = vsel %vm426, 1, 0
        %v443 = vsel %vm427, 1, 0
        %v444 = vsel %vm428, 1, 0
        %v445 = vsel %vm429, 1, 0
        %v446 = vsel %vm430, 1, 0
        %v447 = vsel %vm431, 1, 0
        %v448 = vsel %vm432, 1, 0
        %v449 = vsel %vm433, 1, 0
        %v450 = vsel %vm434, 1, 0
        %v451 = vsel %vm435, 1, 0
        %v452 = vcvt.s32.f32 %v436
        %v453 = vcvt.s32.f32 %v437
        %v454 = vcvt.s32.f32 %v438
        %v455 = vcvt.s32.f32 %v439
        %v456 = vcvt.s32.f32 %v440
        %v457 = vcvt.s32.f32 %v441
        %v458 = vcvt.s32.f32 %v442
        %v459 = vcvt.s32.f32 %v443
        %v460 = vcvt.s32.f32 %v444
        %v461 = vcvt.s32.f32 %v445
        %v462 = vcvt.s32.f32 %v446
        %v463 = vcvt.s32.f32 %v447
        %v464 = vcvt.s32.f32 %v448
        %v465 = vcvt.s32.f32 %v449
        %v466 = vcvt.s32.f32 %v450
        %v467 = vcvt.s32.f32 %v451
        %vm468 = vcmp.gt.s32.totalorder %v404, 0
        %vm469 = vcmp.gt.s32.totalorder %v405, 0
        %vm470 = vcmp.gt.s32.totalorder %v406, 0
        %vm471 = vcmp.gt.s32.totalorder %v407, 0
        %vm472 = vcmp.gt.s32.totalorder %v408, 0
        %vm473 = vcmp.gt.s32.totalorder %v409, 0
        %vm474 = vcmp.gt.s32.totalorder %v410, 0
        %vm475 = vcmp.gt.s32.totalorder %v411, 0
        %vm476 = vcmp.gt.s32.totalorder %v412, 0
        %vm477 = vcmp.gt.s32.totalorder %v413, 0
        %vm478 = vcmp.gt.s32.totalorder %v414, 0
        %vm479 = vcmp.gt.s32.totalorder %v415, 0
        %vm480 = vcmp.gt.s32.totalorder %v416, 0
        %vm481 = vcmp.gt.s32.totalorder %v417, 0
        %vm482 = vcmp.gt.s32.totalorder %v418, 0
        %vm483 = vcmp.gt.s32.totalorder %v419, 0
        %v484 = vsel %vm468, 1, 0
        %v485 = vsel %vm469, 1, 0
        %v486 = vsel %vm470, 1, 0
        %v487 = vsel %vm471, 1, 0
        %v488 = vsel %vm472, 1, 0
        %v489 = vsel %vm473, 1, 0
        %v490 = vsel %vm474, 1, 0
        %v491 = vsel %vm475, 1, 0
        %v492 = vsel %vm476, 1, 0
        %v493 = vsel %vm477, 1, 0
        %v494 = vsel %vm478, 1, 0
        %v495 = vsel %vm479, 1, 0
        %v496 = vsel %vm480, 1, 0
        %v497 = vsel %vm481, 1, 0
        %v498 = vsel %vm482, 1, 0
        %v499 = vsel %vm483, 1, 0
        %v500 = vcvt.s32.f32 %v484
        %v501 = vcvt.s32.f32 %v485
        %v502 = vcvt.s32.f32 %v486
        %v503 = vcvt.s32.f32 %v487
        %v504 = vcvt.s32.f32 %v488
        %v505 = vcvt.s32.f32 %v489
        %v506 = vcvt.s32.f32 %v490
        %v507 = vcvt.s32.f32 %v491
        %v508 = vcvt.s32.f32 %v492
        %v509 = vcvt.s32.f32 %v493
        %v510 = vcvt.s32.f32 %v494
        %v511 = vcvt.s32.f32 %v495
        %v512 = vcvt.s32.f32 %v496
        %v513 = vcvt.s32.f32 %v497
        %v514 = vcvt.s32.f32 %v498
        %v515 = vcvt.s32.f32 %v499
        %vm516 = vcmask 31744
        %517 = vst.msk [vmem:[#allocation2] sm:$0xff] %vm516, 0.0
        %518 = vst.msk [vmem:[#allocation2 + $0x8] sm:$0xff] %vm516, 0.0
        %519 = vst.msk [vmem:[#allocation2 + $0x110] sm:$0xff] %vm516, 0.0
        %520 = vst.msk [vmem:[#allocation2 + $0x118] sm:$0xff] %vm516, 0.0
        %v521 = vld [vmem:[%s210] sm:$0xff]
        %v522 = vld [vmem:[%s210 + $0x8] sm:$0xff]
        %v523 = vld [vmem:[%s210 + $0x10] sm:$0xff]
        %v524 = vld [vmem:[%s210 + $0x18] sm:$0xff]
        %v525 = vld [vmem:[%s210 + $0x20] sm:$0xff]
        %v526 = vld [vmem:[%s210 + $0x28] sm:$0xff]
        %v527 = vld [vmem:[%s210 + $0x30] sm:$0xff]
        %v528 = vld [vmem:[%s210 + $0x38] sm:$0xff]
        %v529 = vld [vmem:[%s210 + $0x40] sm:$0xff]
        %v530 = vld [vmem:[%s210 + $0x48] sm:$0xff]
        %v531 = vld [vmem:[%s210 + $0x50] sm:$0xff]
        %v532 = vld [vmem:[%s210 + $0x58] sm:$0xff]
        %v533 = vld [vmem:[%s210 + $0x60] sm:$0xff]
        %v534 = vld [vmem:[%s210 + $0x68] sm:$0xff]
        %v535 = vld [vmem:[%s210 + $0x70] sm:$0xff]
        %v536 = vld [vmem:[%s210 + $0x78] sm:$0xff]
        %v537 = vld [vmem:[%s210 + $0x80] sm:$0xff]
        %v538 = vld [vmem:[%s210 + $0x88] sm:$0xff]
        %v539 = vld [vmem:[%s210 + $0x90] sm:$0xff]
        %v540 = vld [vmem:[%s210 + $0x98] sm:$0xff]
        %v541 = vld [vmem:[%s210 + $0xa0] sm:$0xff]
        %v542 = vld [vmem:[%s210 + $0xa8] sm:$0xff]
        %v543 = vld [vmem:[%s210 + $0xb0] sm:$0xff]
        %v544 = vld [vmem:[%s210 + $0xb8] sm:$0xff]
        %v545 = vld [vmem:[%s210 + $0xc0] sm:$0xff]
        %v546 = vld [vmem:[%s210 + $0xc8] sm:$0xff]
        %v547 = vld [vmem:[%s210 + $0xd0] sm:$0xff]
        %v548 = vld [vmem:[%s210 + $0xd8] sm:$0xff]
        %v549 = vld [vmem:[%s210 + $0xe0] sm:$0xff]
        %v550 = vld [vmem:[%s210 + $0xe8] sm:$0xff]
        %v551 = vld [vmem:[%s210 + $0xf0] sm:$0xff]
        %v552 = vld [vmem:[%s210 + $0xf8] sm:$0xff]
        %553 = vst.msk [vmem:[#allocation2 + $0x10] sm:$0xff] %vm516, %v521
        %554 = vst.msk [vmem:[#allocation2 + $0x18] sm:$0xff] %vm516, %v522
        %555 = vst.msk [vmem:[#allocation2 + $0x20] sm:$0xff] %vm516, %v523
        %556 = vst.msk [vmem:[#allocation2 + $0x28] sm:$0xff] %vm516, %v524
        %557 = vst.msk [vmem:[#allocation2 + $0x30] sm:$0xff] %vm516, %v525
        %558 = vst.msk [vmem:[#allocation2 + $0x38] sm:$0xff] %vm516, %v526
        %559 = vst.msk [vmem:[#allocation2 + $0x40] sm:$0xff] %vm516, %v527
        %560 = vst.msk [vmem:[#allocation2 + $0x48] sm:$0xff] %vm516, %v528
        %561 = vst.msk [vmem:[#allocation2 + $0x50] sm:$0xff] %vm516, %v529
        %562 = vst.msk [vmem:[#allocation2 + $0x58] sm:$0xff] %vm516, %v530
        %563 = vst.msk [vmem:[#allocation2 + $0x60] sm:$0xff] %vm516, %v531
        %564 = vst.msk [vmem:[#allocation2 + $0x68] sm:$0xff] %vm516, %v532
        %565 = vst.msk [vmem:[#allocation2 + $0x70] sm:$0xff] %vm516, %v533
        %566 = vst.msk [vmem:[#allocation2 + $0x78] sm:$0xff] %vm516, %v534
        %567 = vst.msk [vmem:[#allocation2 + $0x80] sm:$0xff] %vm516, %v535
        %568 = vst.msk [vmem:[#allocation2 + $0x88] sm:$0xff] %vm516, %v536
        %569 = vst.msk [vmem:[#allocation2 + $0x90] sm:$0xff] %vm516, %v537
        %570 = vst.msk [vmem:[#allocation2 + $0x98] sm:$0xff] %vm516, %v538
        %571 = vst.msk [vmem:[#allocation2 + $0xa0] sm:$0xff] %vm516, %v539
        %572 = vst.msk [vmem:[#allocation2 + $0xa8] sm:$0xff] %vm516, %v540
        %573 = vst.msk [vmem:[#allocation2 + $0xb0] sm:$0xff] %vm516, %v541
        %574 = vst.msk [vmem:[#allocation2 + $0xb8] sm:$0xff] %vm516, %v542
        %575 = vst.msk [vmem:[#allocation2 + $0xc0] sm:$0xff] %vm516, %v543
        %576 = vst.msk [vmem:[#allocation2 + $0xc8] sm:$0xff] %vm516, %v544
        %577 = vst.msk [vmem:[#allocation2 + $0xd0] sm:$0xff] %vm516, %v545
        %578 = vst.msk [vmem:[#allocation2 + $0xd8] sm:$0xff] %vm516, %v546
        %579 = vst.msk [vmem:[#allocation2 + $0xe0] sm:$0xff] %vm516, %v547
        %580 = vst.msk [vmem:[#allocation2 + $0xe8] sm:$0xff] %vm516, %v548
        %581 = vst.msk [vmem:[#allocation2 + $0xf0] sm:$0xff] %vm516, %v549
        %582 = vst.msk [vmem:[#allocation2 + $0xf8] sm:$0xff] %vm516, %v550
        %583 = vst.msk [vmem:[#allocation2 + $0x100] sm:$0xff] %vm516, %v551
        %584 = vst.msk [vmem:[#allocation2 + $0x108] sm:$0xff] %vm516, %v552
        %585 = vst [vmem:[#allocation3] sm:$0xff] 0.0
        %586 = vst [vmem:[#allocation3 + $0x8] sm:$0xff] 0.0
        %587 = vst [vmem:[#allocation3 + $0x110] sm:$0xff] 0.0
        %588 = vst [vmem:[#allocation3 + $0x118] sm:$0xff] 0.0
        %v589 = vld [vmem:[%s3] sm:$0x1]
        %v590 = vld [vmem:[%s3 + $0x1] sm:$0x1]
        %v591 = vld [vmem:[%s3 + $0x2] sm:$0x1]
        %v592 = vld [vmem:[%s3 + $0x3] sm:$0x1]
        %v593 = vld [vmem:[%s3 + $0x4] sm:$0x1]
        %v594 = vld [vmem:[%s3 + $0x5] sm:$0x1]
        %v595 = vld [vmem:[#allocation2] sm:$0xff]
        %v596 = vld [vmem:[#allocation2 + $0x8] sm:$0xff]
        %v597 = vld [vmem:[#allocation2 + $0x10] sm:$0xff]
        %v598 = vld [vmem:[#allocation2 + $0x18] sm:$0xff]
        %v599 = vld [vmem:[#allocation2 + $0x20] sm:$0xff]
        %v600 = vld [vmem:[#allocation2 + $0x28] sm:$0xff]
        %v601 = vld [vmem:[#allocation2 + $0x30] sm:$0xff]
        %v602 = vld [vmem:[#allocation2 + $0x38] sm:$0xff]
        %v603 = vld [vmem:[#allocation2 + $0x40] sm:$0xff]
        %v604 = vld [vmem:[#allocation2 + $0x48] sm:$0xff]
        %v605 = vld [vmem:[#allocation2 + $0x50] sm:$0xff]
        %v606 = vld [vmem:[#allocation2 + $0x58] sm:$0xff]
        %v607 = vld [vmem:[#allocation2 + $0x60] sm:$0xff]
        %v608 = vld [vmem:[#allocation2 + $0x68] sm:$0xff]
        %v609 = vld [vmem:[#allocation2 + $0x70] sm:$0xff]
        %v610 = vld [vmem:[#allocation2 + $0x78] sm:$0xff]
        %v611 = vrot.slane %v595, 7
        %v612 = vrot.slane %v596, 7
        %v613 = vrot.slane %v597, 7
        %v614 = vrot.slane %v598, 7
        %v615 = vrot.slane %v599, 7
        %v616 = vrot.slane %v600, 7
        %v617 = vrot.slane %v601, 7
        %v618 = vrot.slane %v602, 7
        %v619 = vrot.slane %v603, 7
        %v620 = vrot.slane %v604, 7
        %v621 = vrot.slane %v605, 7
        %v622 = vrot.slane %v606, 7
        %v623 = vrot.slane %v607, 7
        %v624 = vrot.slane %v608, 7
        %v625 = vrot.slane %v609, 7
        %v626 = vrot.slane %v610, 7
        %vm627 = vcmp.lt.s32.totalorder %v212, 1
        %v628 = vsel %vm627, %v625, %v626
        %v629 = vsel %vm627, %v624, %v625
        %v630 = vsel %vm627, %v623, %v624
        %v631 = vsel %vm627, %v622, %v623
        %v632 = vsel %vm627, %v621, %v622
        %v633 = vsel %vm627, %v620, %v621
        %v634 = vsel %vm627, %v619, %v620
        %v635 = vsel %vm627, %v618, %v619
        %v636 = vsel %vm627, %v617, %v618
        %v637 = vsel %vm627, %v616, %v617
        %v638 = vsel %vm627, %v615, %v616
        %v639 = vsel %vm627, %v614, %v615
        %v640 = vsel %vm627, %v613, %v614
        %v641 = vsel %vm627, %v612, %v613
        %v642 = vsel %vm627, %v611, %v612
        %v643 = vsel %vm627, %v626, %v611
        %v644 = vmul.f32 %v643, %v500
        %v645 = vmul.f32 %v642, %v501
        %v646 = vmul.f32 %v641, %v502
        %v647 = vmul.f32 %v640, %v503
        %v648 = vmul.f32 %v639, %v504
        %v649 = vmul.f32 %v638, %v505
        %v650 = vmul.f32 %v637, %v506
        %v651 = vmul.f32 %v636, %v507
        %v652 = vmul.f32 %v635, %v508
        %v653 = vmul.f32 %v634, %v509
        %v654 = vmul.f32 %v633, %v510
        %v655 = vmul.f32 %v632, %v511
        %v656 = vmul.f32 %v631, %v512
        %v657 = vmul.f32 %v630, %v513
        %v658 = vmul.f32 %v629, %v514
        %v659 = vmul.f32 %v628, %v515
        %v660 = vld [vmem:[%s1] sm:$0xf]
        %s661 = scalar_lea.vmem %s1, 4
        %v662 = vld [vmem:[%s661] sm:$0xf]
        %v664 = vsel %vm516, %v595, 0
        %v667 = vsel %vm516, %v596, 0
        %v670 = vsel %vm516, %v597, 0
        %v673 = vsel %vm516, %v598, 0
        %v676 = vsel %vm516, %v599, 0
        %v679 = vsel %vm516, %v600, 0
        %v682 = vsel %vm516, %v601, 0
        %v685 = vsel %vm516, %v602, 0
        %v688 = vsel %vm516, %v603, 0
        %v691 = vsel %vm516, %v604, 0
        %v694 = vsel %vm516, %v605, 0
        %v697 = vsel %vm516, %v606, 0
        %v700 = vsel %vm516, %v607, 0
        %v703 = vsel %vm516, %v608, 0
        %v706 = vsel %vm516, %v609, 0
        %v709 = vsel %vm516, %v610, 0
        %vm711 = vcmask 1043456
        %v713 = vsel %vm711, %v662, 0
        %715 = vmatprep.subr.mxu0 0.0
        %716 = vmatpush1.msra.mxu0 %v713
        %717 = vmatprep.subr.mxu0 0.0
        %718 = vmatpush1.msra.mxu0 0.0
        %719 = vmatprep.subr.mxu0 0.0
        %720 = vmatpush1.msra.mxu0 0.0
        %721 = vmatprep.subr.mxu0 0.0
        %722 = vmatpush1.msra.mxu0 0.0
        %723 = vmatprep.subr.mxu0 0.0
        %724 = vmatpush1.msra.mxu0 0.0
        %725 = vmatprep.subr.mxu0 0.0
        %726 = vmatpush1.msra.mxu0 0.0
        %727 = vmatprep.subr.mxu0 0.0
        %728 = vmatpush1.msra.mxu0 0.0
        %729 = vmatprep.subr.mxu0 0.0
        %730 = vmatpush1.msra.mxu0 0.0
        %731 = vmatprep.subr.mxu0 0.0
        %732 = vmatpush1.msra.mxu0 0.0
        %733 = vmatprep.subr.mxu0 0.0
        %734 = vmatpush1.msra.mxu0 0.0
        %735 = vmatprep.subr.mxu0 0.0
        %736 = vmatpush1.msra.mxu0 0.0
        %737 = vmatprep.subr.mxu0 0.0
        %738 = vmatpush1.msra.mxu0 0.0
        %739 = vmatprep.subr.mxu0 0.0
        %740 = vmatpush1.msra.mxu0 0.0
        %741 = vmatprep.subr.mxu0 0.0
        %742 = vmatpush1.msra.mxu0 0.0
        %743 = vmatprep.subr.mxu0 0.0
        %744 = vmatpush1.msra.mxu0 0.0
        %745 = vmatprep.subr.mxu0 0.0
        %746 = vmatpush1.msra.mxu0 0.0
        %747 = vmatprep.subr.mxu0 0.0
        %748 = vmatpush1.msra.mxu0 0.0
        %749 = vmatprep.subr.mxu0 0.0
        %750 = vmatpush1.msra.mxu0 0.0
        %751 = vmatprep.subr.mxu0 0.0
        %752 = vmatpush1.msra.mxu0 0.0
        %753 = vmatprep.subr.mxu0 0.0
        %754 = vmatpush1.msra.mxu0 0.0
        %755 = vmatprep.subr.mxu0 0.0
        %756 = vmatpush1.msra.mxu0 0.0
        %757 = vmatprep.subr.mxu0 0.0
        %758 = vmatpush1.msra.mxu0 0.0
        %759 = vmatprep.subr.mxu0 0.0
        %760 = vmatpush1.msra.mxu0 0.0
        %761 = vmatprep.subr.mxu0 0.0
        %762 = vmatpush1.msra.mxu0 0.0
        %763 = vmatprep.subr.mxu0 0.0
        %764 = vmatpush1.msra.mxu0 0.0
        %765 = vmatprep.subr.mxu0 0.0
        %766 = vmatpush1.msra.mxu0 0.0
        %767 = vmatprep.subr.mxu0 0.0
        %768 = vmatpush1.msra.mxu0 0.0
        %769 = vmatprep.subr.mxu0 0.0
        %770 = vmatpush1.msra.mxu0 0.0
        %771 = vmatprep.subr.mxu0 0.0
        %772 = vmatpush1.msra.mxu0 0.0
        %773 = vmatprep.subr.mxu0 0.0
        %774 = vmatpush1.msra.mxu0 0.0
        %775 = vmatprep.subr.mxu0 0.0
        %776 = vmatpush1.msra.mxu0 0.0
        %777 = vmatprep.subr.mxu0 0.0
        %778 = vmatpush1.msra.mxu0 0.0
        %779 = vmatprep.mubr.f32.mxu0 0.0
        %780 = vmatmul.mubr.f32.gmra.mrb[0].mxu0 %v664
        %v781 = vpop.f32.mrb[0].mxu0
        %v782 = vadd.f32 0.0, %v781
        %v783 = vpop.f32.mrb[0].mxu0
        %784 = vmatprep.mubr.f32.mxu0 0.0
        %785 = vmatmul.mubr.f32.gmra.mrb[0].mxu0 %v667
        %v786 = vpop.f32.mrb[0].mxu0
        %v787 = vadd.f32 0.0, %v786
        %v788 = vpop.f32.mrb[0].mxu0
        %789 = vmatprep.mubr.f32.mxu0 0.0
        %790 = vmatmul.mubr.f32.gmra.mrb[0].mxu0 %v670
        %v791 = vpop.f32.mrb[0].mxu0
        %v792 = vadd.f32 0.0, %v791
        %v793 = vpop.f32.mrb[0].mxu0
        %794 = vmatprep.mubr.f32.mxu0 0.0
        %795 = vmatmul.mubr.f32.gmra.mrb[0].mxu0 %v673
        %v796 = vpop.f32.mrb[0].mxu0
        %v797 = vadd.f32 0.0, %v796
        %v798 = vpop.f32.mrb[0].mxu0
        %799 = vmatprep.mubr.f32.mxu0 0.0
        %800 = vmatmul.mubr.f32.gmra.mrb[0].mxu0 %v676
        %v801 = vpop.f32.mrb[0].mxu0
        %v802 = vadd.f32 0.0, %v801
        %v803 = vpop.f32.mrb[0].mxu0
        %804 = vmatprep.mubr.f32.mxu0 0.0
        %805 = vmatmul.mubr.f32.gmra.mrb[0].mxu0 %v679
        %v806 = vpop.f32.mrb[0].mxu0
        %v807 = vadd.f32 0.0, %v806
        %v808 = vpop.f32.mrb[0].mxu0
        %809 = vmatprep.mubr.f32.mxu0 0.0
        %810 = vmatmul.mubr.f32.gmra.mrb[0].mxu0 %v682
        %v811 = vpop.f32.mrb[0].mxu0
        %v812 = vadd.f32 0.0, %v811
        %v813 = vpop.f32.mrb[0].mxu0
        %814 = vmatprep.mubr.f32.mxu0 0.0
        %815 = vmatmul.mubr.f32.gmra.mrb[0].mxu0 %v685
        %v816 = vpop.f32.mrb[0].mxu0
        %v817 = vadd.f32 0.0, %v816
        %v818 = vpop.f32.mrb[0].mxu0
        %819 = vmatprep.mubr.f32.mxu0 0.0
        %820 = vmatmul.mubr.f32.gmra.mrb[0].mxu0 %v688
        %v821 = vpop.f32.mrb[0].mxu0
        %v822 = vadd.f32 0.0, %v821
        %v823 = vpop.f32.mrb[0].mxu0
        %824 = vmatprep.mubr.f32.mxu0 0.0
        %825 = vmatmul.mubr.f32.gmra.mrb[0].mxu0 %v691
        %v826 = vpop.f32.mrb[0].mxu0
        %v827 = vadd.f32 0.0, %v826
        %v828 = vpop.f32.mrb[0].mxu0
        %829 = vmatprep.mubr.f32.mxu0 0.0
        %830 = vmatmul.mubr.f32.gmra.mrb[0].mxu0 %v694
        %v831 = vpop.f32.mrb[0].mxu0
        %v832 = vadd.f32 0.0, %v831
        %v833 = vpop.f32.mrb[0].mxu0
        %834 = vmatprep.mubr.f32.mxu0 0.0
        %835 = vmatmul.mubr.f32.gmra.mrb[0].mxu0 %v697
        %v836 = vpop.f32.mrb[0].mxu0
        %v837 = vadd.f32 0.0, %v836
        %v838 = vpop.f32.mrb[0].mxu0
        %839 = vmatprep.mubr.f32.mxu0 0.0
        %840 = vmatmul.mubr.f32.gmra.mrb[0].mxu0 %v700
        %v841 = vpop.f32.mrb[0].mxu0
        %v842 = vadd.f32 0.0, %v841
        %v843 = vpop.f32.mrb[0].mxu0
        %844 = vmatprep.mubr.f32.mxu0 0.0
        %845 = vmatmul.mubr.f32.gmra.mrb[0].mxu0 %v703
        %v846 = vpop.f32.mrb[0].mxu0
        %v847 = vadd.f32 0.0, %v846
        %v848 = vpop.f32.mrb[0].mxu0
        %849 = vmatprep.mubr.f32.mxu0 0.0
        %850 = vmatmul.mubr.f32.gmra.mrb[0].mxu0 %v706
        %v851 = vpop.f32.mrb[0].mxu0
        %v852 = vadd.f32 0.0, %v851
        %v853 = vpop.f32.mrb[0].mxu0
        %854 = vmatprep.mubr.f32.mxu0 0.0
        %855 = vmatmul.mubr.f32.gmra.mrb[0].mxu0 %v709
        %v856 = vpop.f32.mrb[0].mxu0
        %v857 = vadd.f32 0.0, %v856
        %v858 = vpop.f32.mrb[0].mxu0
        %859 = vdwg.mxu0
        %v861 = vsel %vm516, %v644, 0
        %v864 = vsel %vm516, %v645, 0
        %v867 = vsel %vm516, %v646, 0
        %v870 = vsel %vm516, %v647, 0
        %v873 = vsel %vm516, %v648, 0
        %v876 = vsel %vm516, %v649, 0
        %v879 = vsel %vm516, %v650, 0
        %v882 = vsel %vm516, %v651, 0
        %v885 = vsel %vm516, %v652, 0
        %v888 = vsel %vm516, %v653, 0
        %v891 = vsel %vm516, %v654, 0
        %v894 = vsel %vm516, %v655, 0
        %v897 = vsel %vm516, %v656, 0
        %v900 = vsel %vm516, %v657, 0
        %v903 = vsel %vm516, %v658, 0
        %v906 = vsel %vm516, %v659, 0
        %v909 = vsel %vm711, %v660, 0
        %911 = vmatprep.subr.mxu0 0.0
        %912 = vmatpush1.msra.mxu0 %v909
        %913 = vmatprep.subr.mxu0 0.0
        %914 = vmatpush1.msra.mxu0 0.0
        %915 = vmatprep.subr.mxu0 0.0
        %916 = vmatpush1.msra.mxu0 0.0
        %917 = vmatprep.subr.mxu0 0.0
        %918 = vmatpush1.msra.mxu0 0.0
        %919 = vmatprep.subr.mxu0 0.0
        %920 = vmatpush1.msra.mxu0 0.0
        %921 = vmatprep.subr.mxu0 0.0
        %922 = vmatpush1.msra.mxu0 0.0
        %923 = vmatprep.subr.mxu0 0.0
        %924 = vmatpush1.msra.mxu0 0.0
        %925 = vmatprep.subr.mxu0 0.0
        %926 = vmatpush1.msra.mxu0 0.0
        %927 = vmatprep.subr.mxu0 0.0
        %928 = vmatpush1.msra.mxu0 0.0
        %929 = vmatprep.subr.mxu0 0.0
        %930 = vmatpush1.msra.mxu0 0.0
        %931 = vmatprep.subr.mxu0 0.0
        %932 = vmatpush1.msra.mxu0 0.0
        %933 = vmatprep.subr.mxu0 0.0
        %934 = vmatpush1.msra.mxu0 0.0
        %935 = vmatprep.subr.mxu0 0.0
        %936 = vmatpush1.msra.mxu0 0.0
        %937 = vmatprep.subr.mxu0 0.0
        %938 = vmatpush1.msra.mxu0 0.0
        %939 = vmatprep.subr.mxu0 0.0
        %940 = vmatpush1.msra.mxu0 0.0
        %941 = vmatprep.subr.mxu0 0.0
        %942 = vmatpush1.msra.mxu0 0.0
        %943 = vmatprep.subr.mxu0 0.0
        %944 = vmatpush1.msra.mxu0 0.0
        %945 = vmatprep.subr.mxu0 0.0
        %946 = vmatpush1.msra.mxu0 0.0
        %947 = vmatprep.subr.mxu0 0.0
        %948 = vmatpush1.msra.mxu0 0.0
        %949 = vmatprep.subr.mxu0 0.0
        %950 = vmatpush1.msra.mxu0 0.0
        %951 = vmatprep.subr.mxu0 0.0
        %952 = vmatpush1.msra.mxu0 0.0
        %953 = vmatprep.subr.mxu0 0.0
        %954 = vmatpush1.msra.mxu0 0.0
        %955 = vmatprep.subr.mxu0 0.0
        %956 = vmatpush1.msra.mxu0 0.0
        %957 = vmatprep.subr.mxu0 0.0
        %958 = vmatpush1.msra.mxu0 0.0
        %959 = vmatprep.subr.mxu0 0.0
        %960 = vmatpush1.msra.mxu0 0.0
        %961 = vmatprep.subr.mxu0 0.0
        %962 = vmatpush1.msra.mxu0 0.0
        %963 = vmatprep.subr.mxu0 0.0
        %964 = vmatpush1.msra.mxu0 0.0
        %965 = vmatprep.subr.mxu0 0.0
        %966 = vmatpush1.msra.mxu0 0.0
        %967 = vmatprep.subr.mxu0 0.0
        %968 = vmatpush1.msra.mxu0 0.0
        %969 = vmatprep.subr.mxu0 0.0
        %970 = vmatpush1.msra.mxu0 0.0
        %971 = vmatprep.subr.mxu0 0.0
        %972 = vmatpush1.msra.mxu0 0.0
        %973 = vmatprep.subr.mxu0 0.0
        %974 = vmatpush1.msra.mxu0 0.0
        %975 = vmatprep.mubr.f32.mxu0 0.0
        %976 = vmatmul.mubr.f32.gmra.mrb[0].mxu0 %v861
        %v977 = vpop.f32.mrb[0].mxu0
        %v978 = vadd.f32 %v782, %v977
        %v979 = vpop.f32.mrb[0].mxu0
        %980 = vmatprep.mubr.f32.mxu0 0.0
        %981 = vmatmul.mubr.f32.gmra.mrb[0].mxu0 %v864
        %v982 = vpop.f32.mrb[0].mxu0
        %v983 = vadd.f32 %v787, %v982
        %v984 = vpop.f32.mrb[0].mxu0
        %985 = vmatprep.mubr.f32.mxu0 0.0
        %986 = vmatmul.mubr.f32.gmra.mrb[0].mxu0 %v867
        %v987 = vpop.f32.mrb[0].mxu0
        %v988 = vadd.f32 %v792, %v987
        %v989 = vpop.f32.mrb[0].mxu0
        %990 = vmatprep.mubr.f32.mxu0 0.0
        %991 = vmatmul.mubr.f32.gmra.mrb[0].mxu0 %v870
        %v992 = vpop.f32.mrb[0].mxu0
        %v993 = vadd.f32 %v797, %v992
        %v994 = vpop.f32.mrb[0].mxu0
        %995 = vmatprep.mubr.f32.mxu0 0.0
        %996 = vmatmul.mubr.f32.gmra.mrb[0].mxu0 %v873
        %v997 = vpop.f32.mrb[0].mxu0
        %v998 = vadd.f32 %v802, %v997
        %v999 = vpop.f32.mrb[0].mxu0
        %1000 = vmatprep.mubr.f32.mxu0 0.0
        %1001 = vmatmul.mubr.f32.gmra.mrb[0].mxu0 %v876
        %v1002 = vpop.f32.mrb[0].mxu0
        %v1003 = vadd.f32 %v807, %v1002
        %v1004 = vpop.f32.mrb[0].mxu0
        %1005 = vmatprep.mubr.f32.mxu0 0.0
        %1006 = vmatmul.mubr.f32.gmra.mrb[0].mxu0 %v879
        %v1007 = vpop.f32.mrb[0].mxu0
        %v1008 = vadd.f32 %v812, %v1007
        %v1009 = vpop.f32.mrb[0].mxu0
        %1010 = vmatprep.mubr.f32.mxu0 0.0
        %1011 = vmatmul.mubr.f32.gmra.mrb[0].mxu0 %v882
        %v1012 = vpop.f32.mrb[0].mxu0
        %v1013 = vadd.f32 %v817, %v1012
        %v1014 = vpop.f32.mrb[0].mxu0
        %1015 = vmatprep.mubr.f32.mxu0 0.0
        %1016 = vmatmul.mubr.f32.gmra.mrb[0].mxu0 %v885
        %v1017 = vpop.f32.mrb[0].mxu0
        %v1018 = vadd.f32 %v822, %v1017
        %v1019 = vpop.f32.mrb[0].mxu0
        %1020 = vmatprep.mubr.f32.mxu0 0.0
        %1021 = vmatmul.mubr.f32.gmra.mrb[0].mxu0 %v888
        %v1022 = vpop.f32.mrb[0].mxu0
        %v1023 = vadd.f32 %v827, %v1022
        %v1024 = vpop.f32.mrb[0].mxu0
        %1025 = vmatprep.mubr.f32.mxu0 0.0
        %1026 = vmatmul.mubr.f32.gmra.mrb[0].mxu0 %v891
        %v1027 = vpop.f32.mrb[0].mxu0
        %v1028 = vadd.f32 %v832, %v1027
        %v1029 = vpop.f32.mrb[0].mxu0
        %1030 = vmatprep.mubr.f32.mxu0 0.0
        %1031 = vmatmul.mubr.f32.gmra.mrb[0].mxu0 %v894
        %v1032 = vpop.f32.mrb[0].mxu0
        %v1033 = vadd.f32 %v837, %v1032
        %v1034 = vpop.f32.mrb[0].mxu0
        %1035 = vmatprep.mubr.f32.mxu0 0.0
        %1036 = vmatmul.mubr.f32.gmra.mrb[0].mxu0 %v897
        %v1037 = vpop.f32.mrb[0].mxu0
        %v1038 = vadd.f32 %v842, %v1037
        %v1039 = vpop.f32.mrb[0].mxu0
        %1040 = vmatprep.mubr.f32.mxu0 0.0
        %1041 = vmatmul.mubr.f32.gmra.mrb[0].mxu0 %v900
        %v1042 = vpop.f32.mrb[0].mxu0
        %v1043 = vadd.f32 %v847, %v1042
        %v1044 = vpop.f32.mrb[0].mxu0
        %1045 = vmatprep.mubr.f32.mxu0 0.0
        %1046 = vmatmul.mubr.f32.gmra.mrb[0].mxu0 %v903
        %v1047 = vpop.f32.mrb[0].mxu0
        %v1048 = vadd.f32 %v852, %v1047
        %v1049 = vpop.f32.mrb[0].mxu0
        %1050 = vmatprep.mubr.f32.mxu0 0.0
        %1051 = vmatmul.mubr.f32.gmra.mrb[0].mxu0 %v906
        %v1052 = vpop.f32.mrb[0].mxu0
        %v1053 = vadd.f32 %v857, %v1052
        %v1054 = vpop.f32.mrb[0].mxu0
        %1055 = vdwg.mxu0
        %v1056 = vrot.slane %v595, 1
        %v1057 = vrot.slane %v596, 1
        %v1058 = vrot.slane %v597, 1
        %v1059 = vrot.slane %v598, 1
        %v1060 = vrot.slane %v599, 1
        %v1061 = vrot.slane %v600, 1
        %v1062 = vrot.slane %v601, 1
        %v1063 = vrot.slane %v602, 1
        %v1064 = vrot.slane %v603, 1
        %v1065 = vrot.slane %v604, 1
        %v1066 = vrot.slane %v605, 1
        %v1067 = vrot.slane %v606, 1
        %v1068 = vrot.slane %v607, 1
        %v1069 = vrot.slane %v608, 1
        %v1070 = vrot.slane %v609, 1
        %v1071 = vrot.slane %v610, 1
        %vm1072 = vcmp.lt.s32.totalorder %v212, 7
        %v1073 = vsel %vm1072, %v1070, %v1071
        %v1074 = vsel %vm1072, %v1069, %v1070
        %v1075 = vsel %vm1072, %v1068, %v1069
        %v1076 = vsel %vm1072, %v1067, %v1068
        %v1077 = vsel %vm1072, %v1066, %v1067
        %v1078 = vsel %vm1072, %v1065, %v1066
        %v1079 = vsel %vm1072, %v1064, %v1065
        %v1080 = vsel %vm1072, %v1063, %v1064
        %v1081 = vsel %vm1072, %v1062, %v1063
        %v1082 = vsel %vm1072, %v1061, %v1062
        %v1083 = vsel %vm1072, %v1060, %v1061
        %v1084 = vsel %vm1072, %v1059, %v1060
        %v1085 = vsel %vm1072, %v1058, %v1059
        %v1086 = vsel %vm1072, %v1057, %v1058
        %v1087 = vsel %vm1072, %v1056, %v1057
        %v1088 = vsel %vm1072, %v1071, %v1056
        %v1089 = vmul.f32 %v1087, %v452
        %v1090 = vmul.f32 %v1086, %v453
        %v1091 = vmul.f32 %v1085, %v454
        %v1092 = vmul.f32 %v1084, %v455
        %v1093 = vmul.f32 %v1083, %v456
        %v1094 = vmul.f32 %v1082, %v457
        %v1095 = vmul.f32 %v1081, %v458
        %v1096 = vmul.f32 %v1080, %v459
        %v1097 = vmul.f32 %v1079, %v460
        %v1098 = vmul.f32 %v1078, %v461
        %v1099 = vmul.f32 %v1077, %v462
        %v1100 = vmul.f32 %v1076, %v463
        %v1101 = vmul.f32 %v1075, %v464
        %v1102 = vmul.f32 %v1074, %v465
        %v1103 = vmul.f32 %v1073, %v466
        %v1104 = vmul.f32 %v1088, %v467
        %s1105 = scalar_lea.vmem %s1, 8
        %v1106 = vld [vmem:[%s1105] sm:$0xf]
        %v1108 = vsel %vm516, %v1089, 0
        %v1111 = vsel %vm516, %v1090, 0
        %v1114 = vsel %vm516, %v1091, 0
        %v1117 = vsel %vm516, %v1092, 0
        %v1120 = vsel %vm516, %v1093, 0
        %v1123 = vsel %vm516, %v1094, 0
        %v1126 = vsel %vm516, %v1095, 0
        %v1129 = vsel %vm516, %v1096, 0
        %v1132 = vsel %vm516, %v1097, 0
        %v1135 = vsel %vm516, %v1098, 0
        %v1138 = vsel %vm516, %v1099, 0
        %v1141 = vsel %vm516, %v1100, 0
        %v1144 = vsel %vm516, %v1101, 0
        %v1147 = vsel %vm516, %v1102, 0
        %v1150 = vsel %vm516, %v1103, 0
        %v1153 = vsel %vm516, %v1104, 0
        %v1156 = vsel %vm711, %v1106, 0
        %1158 = vmatprep.subr.mxu0 0.0
        %1159 = vmatpush1.msra.mxu0 %v1156
        %1160 = vmatprep.subr.mxu0 0.0
        %1161 = vmatpush1.msra.mxu0 0.0
        %1162 = vmatprep.subr.mxu0 0.0
        %1163 = vmatpush1.msra.mxu0 0.0
        %1164 = vmatprep.subr.mxu0 0.0
        %1165 = vmatpush1.msra.mxu0 0.0
        %1166 = vmatprep.subr.mxu0 0.0
        %1167 = vmatpush1.msra.mxu0 0.0
        %1168 = vmatprep.subr.mxu0 0.0
        %1169 = vmatpush1.msra.mxu0 0.0
        %1170 = vmatprep.subr.mxu0 0.0
        %1171 = vmatpush1.msra.mxu0 0.0
        %1172 = vmatprep.subr.mxu0 0.0
        %1173 = vmatpush1.msra.mxu0 0.0
        %1174 = vmatprep.subr.mxu0 0.0
        %1175 = vmatpush1.msra.mxu0 0.0
        %1176 = vmatprep.subr.mxu0 0.0
        %1177 = vmatpush1.msra.mxu0 0.0
        %1178 = vmatprep.subr.mxu0 0.0
        %1179 = vmatpush1.msra.mxu0 0.0
        %1180 = vmatprep.subr.mxu0 0.0
        %1181 = vmatpush1.msra.mxu0 0.0
        %1182 = vmatprep.subr.mxu0 0.0
        %1183 = vmatpush1.msra.mxu0 0.0
        %1184 = vmatprep.subr.mxu0 0.0
        %1185 = vmatpush1.msra.mxu0 0.0
        %1186 = vmatprep.subr.mxu0 0.0
        %1187 = vmatpush1.msra.mxu0 0.0
        %1188 = vmatprep.subr.mxu0 0.0
        %1189 = vmatpush1.msra.mxu0 0.0
        %1190 = vmatprep.subr.mxu0 0.0
        %1191 = vmatpush1.msra.mxu0 0.0
        %1192 = vmatprep.subr.mxu0 0.0
        %1193 = vmatpush1.msra.mxu0 0.0
        %1194 = vmatprep.subr.mxu0 0.0
        %1195 = vmatpush1.msra.mxu0 0.0
        %1196 = vmatprep.subr.mxu0 0.0
        %1197 = vmatpush1.msra.mxu0 0.0
        %1198 = vmatprep.subr.mxu0 0.0
        %1199 = vmatpush1.msra.mxu0 0.0
        %1200 = vmatprep.subr.mxu0 0.0
        %1201 = vmatpush1.msra.mxu0 0.0
        %1202 = vmatprep.subr.mxu0 0.0
        %1203 = vmatpush1.msra.mxu0 0.0
        %1204 = vmatprep.subr.mxu0 0.0
        %1205 = vmatpush1.msra.mxu0 0.0
        %1206 = vmatprep.subr.mxu0 0.0
        %1207 = vmatpush1.msra.mxu0 0.0
        %1208 = vmatprep.subr.mxu0 0.0
        %1209 = vmatpush1.msra.mxu0 0.0
        %1210 = vmatprep.subr.mxu0 0.0
        %1211 = vmatpush1.msra.mxu0 0.0
        %1212 = vmatprep.subr.mxu0 0.0
        %1213 = vmatpush1.msra.mxu0 0.0
        %1214 = vmatprep.subr.mxu0 0.0
        %1215 = vmatpush1.msra.mxu0 0.0
        %1216 = vmatprep.subr.mxu0 0.0
        %1217 = vmatpush1.msra.mxu0 0.0
        %1218 = vmatprep.subr.mxu0 0.0
        %1219 = vmatpush1.msra.mxu0 0.0
        %1220 = vmatprep.subr.mxu0 0.0
        %1221 = vmatpush1.msra.mxu0 0.0
        %1222 = vmatprep.mubr.f32.mxu0 0.0
        %1223 = vmatmul.mubr.f32.gmra.mrb[0].mxu0 %v1108
        %v1224 = vpop.f32.mrb[0].mxu0
        %v1225 = vadd.f32 0.0, %v1224
        %v1226 = vpop.f32.mrb[0].mxu0
        %1227 = vmatprep.mubr.f32.mxu0 0.0
        %1228 = vmatmul.mubr.f32.gmra.mrb[0].mxu0 %v1111
        %v1229 = vpop.f32.mrb[0].mxu0
        %v1230 = vadd.f32 0.0, %v1229
        %v1231 = vpop.f32.mrb[0].mxu0
        %1232 = vmatprep.mubr.f32.mxu0 0.0
        %1233 = vmatmul.mubr.f32.gmra.mrb[0].mxu0 %v1114
        %v1234 = vpop.f32.mrb[0].mxu0
        %v1235 = vadd.f32 0.0, %v1234
        %v1236 = vpop.f32.mrb[0].mxu0
        %1237 = vmatprep.mubr.f32.mxu0 0.0
        %1238 = vmatmul.mubr.f32.gmra.mrb[0].mxu0 %v1117
        %v1239 = vpop.f32.mrb[0].mxu0
        %v1240 = vadd.f32 0.0, %v1239
        %v1241 = vpop.f32.mrb[0].mxu0
        %1242 = vmatprep.mubr.f32.mxu0 0.0
        %1243 = vmatmul.mubr.f32.gmra.mrb[0].mxu0 %v1120
        %v1244 = vpop.f32.mrb[0].mxu0
        %v1245 = vadd.f32 0.0, %v1244
        %v1246 = vpop.f32.mrb[0].mxu0
        %1247 = vmatprep.mubr.f32.mxu0 0.0
        %1248 = vmatmul.mubr.f32.gmra.mrb[0].mxu0 %v1123
        %v1249 = vpop.f32.mrb[0].mxu0
        %v1250 = vadd.f32 0.0, %v1249
        %v1251 = vpop.f32.mrb[0].mxu0
        %1252 = vmatprep.mubr.f32.mxu0 0.0
        %1253 = vmatmul.mubr.f32.gmra.mrb[0].mxu0 %v1126
        %v1254 = vpop.f32.mrb[0].mxu0
        %v1255 = vadd.f32 0.0, %v1254
        %v1256 = vpop.f32.mrb[0].mxu0
        %1257 = vmatprep.mubr.f32.mxu0 0.0
        %1258 = vmatmul.mubr.f32.gmra.mrb[0].mxu0 %v1129
        %v1259 = vpop.f32.mrb[0].mxu0
        %v1260 = vadd.f32 0.0, %v1259
        %v1261 = vpop.f32.mrb[0].mxu0
        %1262 = vmatprep.mubr.f32.mxu0 0.0
        %1263 = vmatmul.mubr.f32.gmra.mrb[0].mxu0 %v1132
        %v1264 = vpop.f32.mrb[0].mxu0
        %v1265 = vadd.f32 0.0, %v1264
        %v1266 = vpop.f32.mrb[0].mxu0
        %1267 = vmatprep.mubr.f32.mxu0 0.0
        %1268 = vmatmul.mubr.f32.gmra.mrb[0].mxu0 %v1135
        %v1269 = vpop.f32.mrb[0].mxu0
        %v1270 = vadd.f32 0.0, %v1269
        %v1271 = vpop.f32.mrb[0].mxu0
        %1272 = vmatprep.mubr.f32.mxu0 0.0
        %1273 = vmatmul.mubr.f32.gmra.mrb[0].mxu0 %v1138
        %v1274 = vpop.f32.mrb[0].mxu0
        %v1275 = vadd.f32 0.0, %v1274
        %v1276 = vpop.f32.mrb[0].mxu0
        %1277 = vmatprep.mubr.f32.mxu0 0.0
        %1278 = vmatmul.mubr.f32.gmra.mrb[0].mxu0 %v1141
        %v1279 = vpop.f32.mrb[0].mxu0
        %v1280 = vadd.f32 0.0, %v1279
        %v1281 = vpop.f32.mrb[0].mxu0
        %1282 = vmatprep.mubr.f32.mxu0 0.0
        %1283 = vmatmul.mubr.f32.gmra.mrb[0].mxu0 %v1144
        %v1284 = vpop.f32.mrb[0].mxu0
        %v1285 = vadd.f32 0.0, %v1284
        %v1286 = vpop.f32.mrb[0].mxu0
        %1287 = vmatprep.mubr.f32.mxu0 0.0
        %1288 = vmatmul.mubr.f32.gmra.mrb[0].mxu0 %v1147
        %v1289 = vpop.f32.mrb[0].mxu0
        %v1290 = vadd.f32 0.0, %v1289
        %v1291 = vpop.f32.mrb[0].mxu0
        %1292 = vmatprep.mubr.f32.mxu0 0.0
        %1293 = vmatmul.mubr.f32.gmra.mrb[0].mxu0 %v1150
        %v1294 = vpop.f32.mrb[0].mxu0
        %v1295 = vadd.f32 0.0, %v1294
        %v1296 = vpop.f32.mrb[0].mxu0
        %1297 = vmatprep.mubr.f32.mxu0 0.0
        %1298 = vmatmul.mubr.f32.gmra.mrb[0].mxu0 %v1153
        %v1299 = vpop.f32.mrb[0].mxu0
        %v1300 = vadd.f32 0.0, %v1299
        %v1301 = vpop.f32.mrb[0].mxu0
        %1302 = vdwg.mxu0
        %v1303 = vadd.f32 %v978, %v1225
        %v1304 = vadd.f32 %v983, %v1230
        %v1305 = vadd.f32 %v988, %v1235
        %v1306 = vadd.f32 %v993, %v1240
        %v1307 = vadd.f32 %v998, %v1245
        %v1308 = vadd.f32 %v1003, %v1250
        %v1309 = vadd.f32 %v1008, %v1255
        %v1310 = vadd.f32 %v1013, %v1260
        %v1311 = vadd.f32 %v1018, %v1265
        %v1312 = vadd.f32 %v1023, %v1270
        %v1313 = vadd.f32 %v1028, %v1275
        %v1314 = vadd.f32 %v1033, %v1280
        %v1315 = vadd.f32 %v1038, %v1285
        %v1316 = vadd.f32 %v1043, %v1290
        %v1317 = vadd.f32 %v1048, %v1295
        %v1318 = vadd.f32 %v1053, %v1300
        %v1319 = vld [vmem:[#allocation2 + $0x10] sm:$0xff]
        %v1320 = vld [vmem:[#allocation2 + $0x18] sm:$0xff]
        %v1321 = vld [vmem:[#allocation2 + $0x20] sm:$0xff]
        %v1322 = vld [vmem:[#allocation2 + $0x28] sm:$0xff]
        %v1323 = vld [vmem:[#allocation2 + $0x30] sm:$0xff]
        %v1324 = vld [vmem:[#allocation2 + $0x38] sm:$0xff]
        %v1325 = vld [vmem:[#allocation2 + $0x40] sm:$0xff]
        %v1326 = vld [vmem:[#allocation2 + $0x48] sm:$0xff]
        %v1327 = vld [vmem:[#allocation2 + $0x50] sm:$0xff]
        %v1328 = vld [vmem:[#allocation2 + $0x58] sm:$0xff]
        %v1329 = vld [vmem:[#allocation2 + $0x60] sm:$0xff]
        %v1330 = vld [vmem:[#allocation2 + $0x68] sm:$0xff]
        %v1331 = vld [vmem:[#allocation2 + $0x70] sm:$0xff]
        %v1332 = vld [vmem:[#allocation2 + $0x78] sm:$0xff]
        %v1333 = vld [vmem:[#allocation2 + $0x80] sm:$0xff]
        %v1334 = vld [vmem:[#allocation2 + $0x88] sm:$0xff]
        %v1335 = vrot.slane %v1319, 7
        %v1336 = vrot.slane %v1320, 7
        %v1337 = vrot.slane %v1321, 7
        %v1338 = vrot.slane %v1322, 7
        %v1339 = vrot.slane %v1323, 7
        %v1340 = vrot.slane %v1324, 7
        %v1341 = vrot.slane %v1325, 7
        %v1342 = vrot.slane %v1326, 7
        %v1343 = vrot.slane %v1327, 7
        %v1344 = vrot.slane %v1328, 7
        %v1345 = vrot.slane %v1329, 7
        %v1346 = vrot.slane %v1330, 7
        %v1347 = vrot.slane %v1331, 7
        %v1348 = vrot.slane %v1332, 7
        %v1349 = vrot.slane %v1333, 7
        %v1350 = vrot.slane %v1334, 7
        %v1351 = vsel %vm627, %v1349, %v1350
        %v1352 = vsel %vm627, %v1348, %v1349
        %v1353 = vsel %vm627, %v1347, %v1348
        %v1354 = vsel %vm627, %v1346, %v1347
        %v1355 = vsel %vm627, %v1345, %v1346
        %v1356 = vsel %vm627, %v1344, %v1345
        %v1357 = vsel %vm627, %v1343, %v1344
        %v1358 = vsel %vm627, %v1342, %v1343
        %v1359 = vsel %vm627, %v1341, %v1342
        %v1360 = vsel %vm627, %v1340, %v1341
        %v1361 = vsel %vm627, %v1339, %v1340
        %v1362 = vsel %vm627, %v1338, %v1339
        %v1363 = vsel %vm627, %v1337, %v1338
        %v1364 = vsel %vm627, %v1336, %v1337
        %v1365 = vsel %vm627, %v1335, %v1336
        %v1366 = vsel %vm627, %v1350, %v1335
        %v1367 = vmul.f32 %v1366, %v500
        %v1368 = vmul.f32 %v1365, %v501
        %v1369 = vmul.f32 %v1364, %v502
        %v1370 = vmul.f32 %v1363, %v503
        %v1371 = vmul.f32 %v1362, %v504
        %v1372 = vmul.f32 %v1361, %v505
        %v1373 = vmul.f32 %v1360, %v506
        %v1374 = vmul.f32 %v1359, %v507
        %v1375 = vmul.f32 %v1358, %v508
        %v1376 = vmul.f32 %v1357, %v509
        %v1377 = vmul.f32 %v1356, %v510
        %v1378 = vmul.f32 %v1355, %v511
        %v1379 = vmul.f32 %v1354, %v512
        %v1380 = vmul.f32 %v1353, %v513
        %v1381 = vmul.f32 %v1352, %v514
        %v1382 = vmul.f32 %v1351, %v515
        %s1383 = scalar_lea.vmem %s1, 12
        %v1384 = vld [vmem:[%s1383] sm:$0xf]
        %v1386 = vsel %vm516, %v1367, 0
        %v1389 = vsel %vm516, %v1368, 0
        %v1392 = vsel %vm516, %v1369, 0
        %v1395 = vsel %vm516, %v1370, 0
        %v1398 = vsel %vm516, %v1371, 0
        %v1401 = vsel %vm516, %v1372, 0
        %v1404 = vsel %vm516, %v1373, 0
        %v1407 = vsel %vm516, %v1374, 0
        %v1410 = vsel %vm516, %v1375, 0
        %v1413 = vsel %vm516, %v1376, 0
        %v1416 = vsel %vm516, %v1377, 0
        %v1419 = vsel %vm516, %v1378, 0
        %v1422 = vsel %vm516, %v1379, 0
        %v1425 = vsel %vm516, %v1380, 0
        %v1428 = vsel %vm516, %v1381, 0
        %v1431 = vsel %vm516, %v1382, 0
        %v1434 = vsel %vm711, %v1384, 0
        %1436 = vmatprep.subr.mxu0 0.0
        %1437 = vmatpush1.msra.mxu0 %v1434
        %1438 = vmatprep.subr.mxu0 0.0
        %1439 = vmatpush1.msra.mxu0 0.0
        %1440 = vmatprep.subr.mxu0 0.0
        %1441 = vmatpush1.msra.mxu0 0.0
        %1442 = vmatprep.subr.mxu0 0.0
        %1443 = vmatpush1.msra.mxu0 0.0
        %1444 = vmatprep.subr.mxu0 0.0
        %1445 = vmatpush1.msra.mxu0 0.0
        %1446 = vmatprep.subr.mxu0 0.0
        %1447 = vmatpush1.msra.mxu0 0.0
        %1448 = vmatprep.subr.mxu0 0.0
        %1449 = vmatpush1.msra.mxu0 0.0
        %1450 = vmatprep.subr.mxu0 0.0
        %1451 = vmatpush1.msra.mxu0 0.0
        %1452 = vmatprep.subr.mxu0 0.0
        %1453 = vmatpush1.msra.mxu0 0.0
        %1454 = vmatprep.subr.mxu0 0.0
        %1455 = vmatpush1.msra.mxu0 0.0
        %1456 = vmatprep.subr.mxu0 0.0
        %1457 = vmatpush1.msra.mxu0 0.0
        %1458 = vmatprep.subr.mxu0 0.0
        %1459 = vmatpush1.msra.mxu0 0.0
        %1460 = vmatprep.subr.mxu0 0.0
        %1461 = vmatpush1.msra.mxu0 0.0
        %1462 = vmatprep.subr.mxu0 0.0
        %1463 = vmatpush1.msra.mxu0 0.0
        %1464 = vmatprep.subr.mxu0 0.0
        %1465 = vmatpush1.msra.mxu0 0.0
        %1466 = vmatprep.subr.mxu0 0.0
        %1467 = vmatpush1.msra.mxu0 0.0
        %1468 = vmatprep.subr.mxu0 0.0
        %1469 = vmatpush1.msra.mxu0 0.0
        %1470 = vmatprep.subr.mxu0 0.0
        %1471 = vmatpush1.msra.mxu0 0.0
        %1472 = vmatprep.subr.mxu0 0.0
        %1473 = vmatpush1.msra.mxu0 0.0
        %1474 = vmatprep.subr.mxu0 0.0
        %1475 = vmatpush1.msra.mxu0 0.0
        %1476 = vmatprep.subr.mxu0 0.0
        %1477 = vmatpush1.msra.mxu0 0.0
        %1478 = vmatprep.subr.mxu0 0.0
        %1479 = vmatpush1.msra.mxu0 0.0
        %1480 = vmatprep.subr.mxu0 0.0
        %1481 = vmatpush1.msra.mxu0 0.0
        %1482 = vmatprep.subr.mxu0 0.0
        %1483 = vmatpush1.msra.mxu0 0.0
        %1484 = vmatprep.subr.mxu0 0.0
        %1485 = vmatpush1.msra.mxu0 0.0
        %1486 = vmatprep.subr.mxu0 0.0
        %1487 = vmatpush1.msra.mxu0 0.0
        %1488 = vmatprep.subr.mxu0 0.0
        %1489 = vmatpush1.msra.mxu0 0.0
        %1490 = vmatprep.subr.mxu0 0.0
        %1491 = vmatpush1.msra.mxu0 0.0
        %1492 = vmatprep.subr.mxu0 0.0
        %1493 = vmatpush1.msra.mxu0 0.0
        %1494 = vmatprep.subr.mxu0 0.0
        %1495 = vmatpush1.msra.mxu0 0.0
        %1496 = vmatprep.subr.mxu0 0.0
        %1497 = vmatpush1.msra.mxu0 0.0
        %1498 = vmatprep.subr.mxu0 0.0
        %1499 = vmatpush1.msra.mxu0 0.0
        %1500 = vmatprep.mubr.f32.mxu0 0.0
        %1501 = vmatmul.mubr.f32.gmra.mrb[0].mxu0 %v1386
        %v1502 = vpop.f32.mrb[0].mxu0
        %v1503 = vadd.f32 0.0, %v1502
        %v1504 = vpop.f32.mrb[0].mxu0
        %1505 = vmatprep.mubr.f32.mxu0 0.0
        %1506 = vmatmul.mubr.f32.gmra.mrb[0].mxu0 %v1389
        %v1507 = vpop.f32.mrb[0].mxu0
        %v1508 = vadd.f32 0.0, %v1507
        %v1509 = vpop.f32.mrb[0].mxu0
        %1510 = vmatprep.mubr.f32.mxu0 0.0
        %1511 = vmatmul.mubr.f32.gmra.mrb[0].mxu0 %v1392
        %v1512 = vpop.f32.mrb[0].mxu0
        %v1513 = vadd.f32 0.0, %v1512
        %v1514 = vpop.f32.mrb[0].mxu0
        %1515 = vmatprep.mubr.f32.mxu0 0.0
        %1516 = vmatmul.mubr.f32.gmra.mrb[0].mxu0 %v1395
        %v1517 = vpop.f32.mrb[0].mxu0
        %v1518 = vadd.f32 0.0, %v1517
        %v1519 = vpop.f32.mrb[0].mxu0
        %1520 = vmatprep.mubr.f32.mxu0 0.0
        %1521 = vmatmul.mubr.f32.gmra.mrb[0].mxu0 %v1398
        %v1522 = vpop.f32.mrb[0].mxu0
        %v1523 = vadd.f32 0.0, %v1522
        %v1524 = vpop.f32.mrb[0].mxu0
        %1525 = vmatprep.mubr.f32.mxu0 0.0
        %1526 = vmatmul.mubr.f32.gmra.mrb[0].mxu0 %v1401
        %v1527 = vpop.f32.mrb[0].mxu0
        %v1528 = vadd.f32 0.0, %v1527
        %v1529 = vpop.f32.mrb[0].mxu0
        %1530 = vmatprep.mubr.f32.mxu0 0.0
        %1531 = vmatmul.mubr.f32.gmra.mrb[0].mxu0 %v1404
        %v1532 = vpop.f32.mrb[0].mxu0
        %v1533 = vadd.f32 0.0, %v1532
        %v1534 = vpop.f32.mrb[0].mxu0
        %1535 = vmatprep.mubr.f32.mxu0 0.0
        %1536 = vmatmul.mubr.f32.gmra.mrb[0].mxu0 %v1407
        %v1537 = vpop.f32.mrb[0].mxu0
        %v1538 = vadd.f32 0.0, %v1537
        %v1539 = vpop.f32.mrb[0].mxu0
        %1540 = vmatprep.mubr.f32.mxu0 0.0
        %1541 = vmatmul.mubr.f32.gmra.mrb[0].mxu0 %v1410
        %v1542 = vpop.f32.mrb[0].mxu0
        %v1543 = vadd.f32 0.0, %v1542
        %v1544 = vpop.f32.mrb[0].mxu0
        %1545 = vmatprep.mubr.f32.mxu0 0.0
        %1546 = vmatmul.mubr.f32.gmra.mrb[0].mxu0 %v1413
        %v1547 = vpop.f32.mrb[0].mxu0
        %v1548 = vadd.f32 0.0, %v1547
        %v1549 = vpop.f32.mrb[0].mxu0
        %1550 = vmatprep.mubr.f32.mxu0 0.0
        %1551 = vmatmul.mubr.f32.gmra.mrb[0].mxu0 %v1416
        %v1552 = vpop.f32.mrb[0].mxu0
        %v1553 = vadd.f32 0.0, %v1552
        %v1554 = vpop.f32.mrb[0].mxu0
        %1555 = vmatprep.mubr.f32.mxu0 0.0
        %1556 = vmatmul.mubr.f32.gmra.mrb[0].mxu0 %v1419
        %v1557 = vpop.f32.mrb[0].mxu0
        %v1558 = vadd.f32 0.0, %v1557
        %v1559 = vpop.f32.mrb[0].mxu0
        %1560 = vmatprep.mubr.f32.mxu0 0.0
        %1561 = vmatmul.mubr.f32.gmra.mrb[0].mxu0 %v1422
        %v1562 = vpop.f32.mrb[0].mxu0
        %v1563 = vadd.f32 0.0, %v1562
        %v1564 = vpop.f32.mrb[0].mxu0
        %1565 = vmatprep.mubr.f32.mxu0 0.0
        %1566 = vmatmul.mubr.f32.gmra.mrb[0].mxu0 %v1425
        %v1567 = vpop.f32.mrb[0].mxu0
        %v1568 = vadd.f32 0.0, %v1567
        %v1569 = vpop.f32.mrb[0].mxu0
        %1570 = vmatprep.mubr.f32.mxu0 0.0
        %1571 = vmatmul.mubr.f32.gmra.mrb[0].mxu0 %v1428
        %v1572 = vpop.f32.mrb[0].mxu0
        %v1573 = vadd.f32 0.0, %v1572
        %v1574 = vpop.f32.mrb[0].mxu0
        %1575 = vmatprep.mubr.f32.mxu0 0.0
        %1576 = vmatmul.mubr.f32.gmra.mrb[0].mxu0 %v1431
        %v1577 = vpop.f32.mrb[0].mxu0
        %v1578 = vadd.f32 0.0, %v1577
        %v1579 = vpop.f32.mrb[0].mxu0
        %1580 = vdwg.mxu0
        %v1581 = vadd.f32 %v1303, %v1503
        %v1582 = vadd.f32 %v1304, %v1508
        %v1583 = vadd.f32 %v1305, %v1513
        %v1584 = vadd.f32 %v1306, %v1518
        %v1585 = vadd.f32 %v1307, %v1523
        %v1586 = vadd.f32 %v1308, %v1528
        %v1587 = vadd.f32 %v1309, %v1533
        %v1588 = vadd.f32 %v1310, %v1538
        %v1589 = vadd.f32 %v1311, %v1543
        %v1590 = vadd.f32 %v1312, %v1548
        %v1591 = vadd.f32 %v1313, %v1553
        %v1592 = vadd.f32 %v1314, %v1558
        %v1593 = vadd.f32 %v1315, %v1563
        %v1594 = vadd.f32 %v1316, %v1568
        %v1595 = vadd.f32 %v1317, %v1573
        %v1596 = vadd.f32 %v1318, %v1578
        %s1597 = scalar_lea.vmem %s1, 16
        %v1598 = vld [vmem:[%s1597] sm:$0xf]
        %v1600 = vsel %vm516, %v1319, 0
        %v1603 = vsel %vm516, %v1320, 0
        %v1606 = vsel %vm516, %v1321, 0
        %v1609 = vsel %vm516, %v1322, 0
        %v1612 = vsel %vm516, %v1323, 0
        %v1615 = vsel %vm516, %v1324, 0
        %v1618 = vsel %vm516, %v1325, 0
        %v1621 = vsel %vm516, %v1326, 0
        %v1624 = vsel %vm516, %v1327, 0
        %v1627 = vsel %vm516, %v1328, 0
        %v1630 = vsel %vm516, %v1329, 0
        %v1633 = vsel %vm516, %v1330, 0
        %v1636 = vsel %vm516, %v1331, 0
        %v1639 = vsel %vm516, %v1332, 0
        %v1642 = vsel %vm516, %v1333, 0
        %v1645 = vsel %vm516, %v1334, 0
        %v1648 = vsel %vm711, %v1598, 0
        %1650 = vmatprep.subr.mxu0 0.0
        %1651 = vmatpush1.msra.mxu0 %v1648
        %1652 = vmatprep.subr.mxu0 0.0
        %1653 = vmatpush1.msra.mxu0 0.0
        %1654 = vmatprep.subr.mxu0 0.0
        %1655 = vmatpush1.msra.mxu0 0.0
        %1656 = vmatprep.subr.mxu0 0.0
        %1657 = vmatpush1.msra.mxu0 0.0
        %1658 = vmatprep.subr.mxu0 0.0
        %1659 = vmatpush1.msra.mxu0 0.0
        %1660 = vmatprep.subr.mxu0 0.0
        %1661 = vmatpush1.msra.mxu0 0.0
        %1662 = vmatprep.subr.mxu0 0.0
        %1663 = vmatpush1.msra.mxu0 0.0
        %1664 = vmatprep.subr.mxu0 0.0
        %1665 = vmatpush1.msra.mxu0 0.0
        %1666 = vmatprep.subr.mxu0 0.0
        %1667 = vmatpush1.msra.mxu0 0.0
        %1668 = vmatprep.subr.mxu0 0.0
        %1669 = vmatpush1.msra.mxu0 0.0
        %1670 = vmatprep.subr.mxu0 0.0
        %1671 = vmatpush1.msra.mxu0 0.0
        %1672 = vmatprep.subr.mxu0 0.0
        %1673 = vmatpush1.msra.mxu0 0.0
        %1674 = vmatprep.subr.mxu0 0.0
        %1675 = vmatpush1.msra.mxu0 0.0
        %1676 = vmatprep.subr.mxu0 0.0
        %1677 = vmatpush1.msra.mxu0 0.0
        %1678 = vmatprep.subr.mxu0 0.0
        %1679 = vmatpush1.msra.mxu0 0.0
        %1680 = vmatprep.subr.mxu0 0.0
        %1681 = vmatpush1.msra.mxu0 0.0
        %1682 = vmatprep.subr.mxu0 0.0
        %1683 = vmatpush1.msra.mxu0 0.0
        %1684 = vmatprep.subr.mxu0 0.0
        %1685 = vmatpush1.msra.mxu0 0.0
        %1686 = vmatprep.subr.mxu0 0.0
        %1687 = vmatpush1.msra.mxu0 0.0
        %1688 = vmatprep.subr.mxu0 0.0
        %1689 = vmatpush1.msra.mxu0 0.0
        %1690 = vmatprep.subr.mxu0 0.0
        %1691 = vmatpush1.msra.mxu0 0.0
        %1692 = vmatprep.subr.mxu0 0.0
        %1693 = vmatpush1.msra.mxu0 0.0
        %1694 = vmatprep.subr.mxu0 0.0
        %1695 = vmatpush1.msra.mxu0 0.0
        %1696 = vmatprep.subr.mxu0 0.0
        %1697 = vmatpush1.msra.mxu0 0.0
        %1698 = vmatprep.subr.mxu0 0.0
        %1699 = vmatpush1.msra.mxu0 0.0
        %1700 = vmatprep.subr.mxu0 0.0
        %1701 = vmatpush1.msra.mxu0 0.0
        %1702 = vmatprep.subr.mxu0 0.0
        %1703 = vmatpush1.msra.mxu0 0.0
        %1704 = vmatprep.subr.mxu0 0.0
        %1705 = vmatpush1.msra.mxu0 0.0
        %1706 = vmatprep.subr.mxu0 0.0
        %1707 = vmatpush1.msra.mxu0 0.0
        %1708 = vmatprep.subr.mxu0 0.0
        %1709 = vmatpush1.msra.mxu0 0.0
        %1710 = vmatprep.subr.mxu0 0.0
        %1711 = vmatpush1.msra.mxu0 0.0
        %1712 = vmatprep.subr.mxu0 0.0
        %1713 = vmatpush1.msra.mxu0 0.0
        %1714 = vmatprep.mubr.f32.mxu0 0.0
        %1715 = vmatmul.mubr.f32.gmra.mrb[0].mxu0 %v1600
        %v1716 = vpop.f32.mrb[0].mxu0
        %v1717 = vadd.f32 0.0, %v1716
        %v1718 = vpop.f32.mrb[0].mxu0
        %1719 = vmatprep.mubr.f32.mxu0 0.0
        %1720 = vmatmul.mubr.f32.gmra.mrb[0].mxu0 %v1603
        %v1721 = vpop.f32.mrb[0].mxu0
        %v1722 = vadd.f32 0.0, %v1721
        %v1723 = vpop.f32.mrb[0].mxu0
        %1724 = vmatprep.mubr.f32.mxu0 0.0
        %1725 = vmatmul.mubr.f32.gmra.mrb[0].mxu0 %v1606
        %v1726 = vpop.f32.mrb[0].mxu0
        %v1727 = vadd.f32 0.0, %v1726
        %v1728 = vpop.f32.mrb[0].mxu0
        %1729 = vmatprep.mubr.f32.mxu0 0.0
        %1730 = vmatmul.mubr.f32.gmra.mrb[0].mxu0 %v1609
        %v1731 = vpop.f32.mrb[0].mxu0
        %v1732 = vadd.f32 0.0, %v1731
        %v1733 = vpop.f32.mrb[0].mxu0
        %1734 = vmatprep.mubr.f32.mxu0 0.0
        %1735 = vmatmul.mubr.f32.gmra.mrb[0].mxu0 %v1612
        %v1736 = vpop.f32.mrb[0].mxu0
        %v1737 = vadd.f32 0.0, %v1736
        %v1738 = vpop.f32.mrb[0].mxu0
        %1739 = vmatprep.mubr.f32.mxu0 0.0
        %1740 = vmatmul.mubr.f32.gmra.mrb[0].mxu0 %v1615
        %v1741 = vpop.f32.mrb[0].mxu0
        %v1742 = vadd.f32 0.0, %v1741
        %v1743 = vpop.f32.mrb[0].mxu0
        %1744 = vmatprep.mubr.f32.mxu0 0.0
        %1745 = vmatmul.mubr.f32.gmra.mrb[0].mxu0 %v1618
        %v1746 = vpop.f32.mrb[0].mxu0
        %v1747 = vadd.f32 0.0, %v1746
        %v1748 = vpop.f32.mrb[0].mxu0
        %1749 = vmatprep.mubr.f32.mxu0 0.0
        %1750 = vmatmul.mubr.f32.gmra.mrb[0].mxu0 %v1621
        %v1751 = vpop.f32.mrb[0].mxu0
        %v1752 = vadd.f32 0.0, %v1751
        %v1753 = vpop.f32.mrb[0].mxu0
        %1754 = vmatprep.mubr.f32.mxu0 0.0
        %1755 = vmatmul.mubr.f32.gmra.mrb[0].mxu0 %v1624
        %v1756 = vpop.f32.mrb[0].mxu0
        %v1757 = vadd.f32 0.0, %v1756
        %v1758 = vpop.f32.mrb[0].mxu0
        %1759 = vmatprep.mubr.f32.mxu0 0.0
        %1760 = vmatmul.mubr.f32.gmra.mrb[0].mxu0 %v1627
        %v1761 = vpop.f32.mrb[0].mxu0
        %v1762 = vadd.f32 0.0, %v1761
        %v1763 = vpop.f32.mrb[0].mxu0
        %1764 = vmatprep.mubr.f32.mxu0 0.0
        %1765 = vmatmul.mubr.f32.gmra.mrb[0].mxu0 %v1630
        %v1766 = vpop.f32.mrb[0].mxu0
        %v1767 = vadd.f32 0.0, %v1766
        %v1768 = vpop.f32.mrb[0].mxu0
        %1769 = vmatprep.mubr.f32.mxu0 0.0
        %1770 = vmatmul.mubr.f32.gmra.mrb[0].mxu0 %v1633
        %v1771 = vpop.f32.mrb[0].mxu0
        %v1772 = vadd.f32 0.0, %v1771
        %v1773 = vpop.f32.mrb[0].mxu0
        %1774 = vmatprep.mubr.f32.mxu0 0.0
        %1775 = vmatmul.mubr.f32.gmra.mrb[0].mxu0 %v1636
        %v1776 = vpop.f32.mrb[0].mxu0
        %v1777 = vadd.f32 0.0, %v1776
        %v1778 = vpop.f32.mrb[0].mxu0
        %1779 = vmatprep.mubr.f32.mxu0 0.0
        %1780 = vmatmul.mubr.f32.gmra.mrb[0].mxu0 %v1639
        %v1781 = vpop.f32.mrb[0].mxu0
        %v1782 = vadd.f32 0.0, %v1781
        %v1783 = vpop.f32.mrb[0].mxu0
        %1784 = vmatprep.mubr.f32.mxu0 0.0
        %1785 = vmatmul.mubr.f32.gmra.mrb[0].mxu0 %v1642
        %v1786 = vpop.f32.mrb[0].mxu0
        %v1787 = vadd.f32 0.0, %v1786
        %v1788 = vpop.f32.mrb[0].mxu0
        %1789 = vmatprep.mubr.f32.mxu0 0.0
        %1790 = vmatmul.mubr.f32.gmra.mrb[0].mxu0 %v1645
        %v1791 = vpop.f32.mrb[0].mxu0
        %v1792 = vadd.f32 0.0, %v1791
        %v1793 = vpop.f32.mrb[0].mxu0
        %1794 = vdwg.mxu0
        %v1795 = vadd.f32 %v1581, %v1717
        %v1796 = vadd.f32 %v1582, %v1722
        %v1797 = vadd.f32 %v1583, %v1727
        %v1798 = vadd.f32 %v1584, %v1732
        %v1799 = vadd.f32 %v1585, %v1737
        %v1800 = vadd.f32 %v1586, %v1742
        %v1801 = vadd.f32 %v1587, %v1747
        %v1802 = vadd.f32 %v1588, %v1752
        %v1803 = vadd.f32 %v1589, %v1757
        %v1804 = vadd.f32 %v1590, %v1762
        %v1805 = vadd.f32 %v1591, %v1767
        %v1806 = vadd.f32 %v1592, %v1772
        %v1807 = vadd.f32 %v1593, %v1777
        %v1808 = vadd.f32 %v1594, %v1782
        %v1809 = vadd.f32 %v1595, %v1787
        %v1810 = vadd.f32 %v1596, %v1792
        %v1811 = vrot.slane %v1319, 1
        %v1812 = vrot.slane %v1320, 1
        %v1813 = vrot.slane %v1321, 1
        %v1814 = vrot.slane %v1322, 1
        %v1815 = vrot.slane %v1323, 1
        %v1816 = vrot.slane %v1324, 1
        %v1817 = vrot.slane %v1325, 1
        %v1818 = vrot.slane %v1326, 1
        %v1819 = vrot.slane %v1327, 1
        %v1820 = vrot.slane %v1328, 1
        %v1821 = vrot.slane %v1329, 1
        %v1822 = vrot.slane %v1330, 1
        %v1823 = vrot.slane %v1331, 1
        %v1824 = vrot.slane %v1332, 1
        %v1825 = vrot.slane %v1333, 1
        %v1826 = vrot.slane %v1334, 1
        %v1827 = vsel %vm1072, %v1825, %v1826
        %v1828 = vsel %vm1072, %v1824, %v1825
        %v1829 = vsel %vm1072, %v1823, %v1824
        %v1830 = vsel %vm1072, %v1822, %v1823
        %v1831 = vsel %vm1072, %v1821, %v1822
        %v1832 = vsel %vm1072, %v1820, %v1821
        %v1833 = vsel %vm1072, %v1819, %v1820
        %v1834 = vsel %vm1072, %v1818, %v1819
        %v1835 = vsel %vm1072, %v1817, %v1818
        %v1836 = vsel %vm1072, %v1816, %v1817
        %v1837 = vsel %vm1072, %v1815, %v1816
        %v1838 = vsel %vm1072, %v1814, %v1815
        %v1839 = vsel %vm1072, %v1813, %v1814
        %v1840 = vsel %vm1072, %v1812, %v1813
        %v1841 = vsel %vm1072, %v1811, %v1812
        %v1842 = vsel %vm1072, %v1826, %v1811
        %v1843 = vmul.f32 %v1841, %v452
        %v1844 = vmul.f32 %v1840, %v453
        %v1845 = vmul.f32 %v1839, %v454
        %v1846 = vmul.f32 %v1838, %v455
        %v1847 = vmul.f32 %v1837, %v456
        %v1848 = vmul.f32 %v1836, %v457
        %v1849 = vmul.f32 %v1835, %v458
        %v1850 = vmul.f32 %v1834, %v459
        %v1851 = vmul.f32 %v1833, %v460
        %v1852 = vmul.f32 %v1832, %v461
        %v1853 = vmul.f32 %v1831, %v462
        %v1854 = vmul.f32 %v1830, %v463
        %v1855 = vmul.f32 %v1829, %v464
        %v1856 = vmul.f32 %v1828, %v465
        %v1857 = vmul.f32 %v1827, %v466
        %v1858 = vmul.f32 %v1842, %v467
        %s1859 = scalar_lea.vmem %s1, 20
        %v1860 = vld [vmem:[%s1859] sm:$0xf]
        %v1862 = vsel %vm516, %v1843, 0
        %v1865 = vsel %vm516, %v1844, 0
        %v1868 = vsel %vm516, %v1845, 0
        %v1871 = vsel %vm516, %v1846, 0
        %v1874 = vsel %vm516, %v1847, 0
        %v1877 = vsel %vm516, %v1848, 0
        %v1880 = vsel %vm516, %v1849, 0
        %v1883 = vsel %vm516, %v1850, 0
        %v1886 = vsel %vm516, %v1851, 0
        %v1889 = vsel %vm516, %v1852, 0
        %v1892 = vsel %vm516, %v1853, 0
        %v1895 = vsel %vm516, %v1854, 0
        %v1898 = vsel %vm516, %v1855, 0
        %v1901 = vsel %vm516, %v1856, 0
        %v1904 = vsel %vm516, %v1857, 0
        %v1907 = vsel %vm516, %v1858, 0
        %v1910 = vsel %vm711, %v1860, 0
        %1912 = vmatprep.subr.mxu0 0.0
        %1913 = vmatpush1.msra.mxu0 %v1910
        %1914 = vmatprep.subr.mxu0 0.0
        %1915 = vmatpush1.msra.mxu0 0.0
        %1916 = vmatprep.subr.mxu0 0.0
        %1917 = vmatpush1.msra.mxu0 0.0
        %1918 = vmatprep.subr.mxu0 0.0
        %1919 = vmatpush1.msra.mxu0 0.0
        %1920 = vmatprep.subr.mxu0 0.0
        %1921 = vmatpush1.msra.mxu0 0.0
        %1922 = vmatprep.subr.mxu0 0.0
        %1923 = vmatpush1.msra.mxu0 0.0
        %1924 = vmatprep.subr.mxu0 0.0
        %1925 = vmatpush1.msra.mxu0 0.0
        %1926 = vmatprep.subr.mxu0 0.0
        %1927 = vmatpush1.msra.mxu0 0.0
        %1928 = vmatprep.subr.mxu0 0.0
        %1929 = vmatpush1.msra.mxu0 0.0
        %1930 = vmatprep.subr.mxu0 0.0
        %1931 = vmatpush1.msra.mxu0 0.0
        %1932 = vmatprep.subr.mxu0 0.0
        %1933 = vmatpush1.msra.mxu0 0.0
        %1934 = vmatprep.subr.mxu0 0.0
        %1935 = vmatpush1.msra.mxu0 0.0
        %1936 = vmatprep.subr.mxu0 0.0
        %1937 = vmatpush1.msra.mxu0 0.0
        %1938 = vmatprep.subr.mxu0 0.0
        %1939 = vmatpush1.msra.mxu0 0.0
        %1940 = vmatprep.subr.mxu0 0.0
        %1941 = vmatpush1.msra.mxu0 0.0
        %1942 = vmatprep.subr.mxu0 0.0
        %1943 = vmatpush1.msra.mxu0 0.0
        %1944 = vmatprep.subr.mxu0 0.0
        %1945 = vmatpush1.msra.mxu0 0.0
        %1946 = vmatprep.subr.mxu0 0.0
        %1947 = vmatpush1.msra.mxu0 0.0
        %1948 = vmatprep.subr.mxu0 0.0
        %1949 = vmatpush1.msra.mxu0 0.0
        %1950 = vmatprep.subr.mxu0 0.0
        %1951 = vmatpush1.msra.mxu0 0.0
        %1952 = vmatprep.subr.mxu0 0.0
        %1953 = vmatpush1.msra.mxu0 0.0
        %1954 = vmatprep.subr.mxu0 0.0
        %1955 = vmatpush1.msra.mxu0 0.0
        %1956 = vmatprep.subr.mxu0 0.0
        %1957 = vmatpush1.msra.mxu0 0.0
        %1958 = vmatprep.subr.mxu0 0.0
        %1959 = vmatpush1.msra.mxu0 0.0
        %1960 = vmatprep.subr.mxu0 0.0
        %1961 = vmatpush1.msra.mxu0 0.0
        %1962 = vmatprep.subr.mxu0 0.0
        %1963 = vmatpush1.msra.mxu0 0.0
        %1964 = vmatprep.subr.mxu0 0.0
        %1965 = vmatpush1.msra.mxu0 0.0
        %1966 = vmatprep.subr.mxu0 0.0
        %1967 = vmatpush1.msra.mxu0 0.0
        %1968 = vmatprep.subr.mxu0 0.0
        %1969 = vmatpush1.msra.mxu0 0.0
        %1970 = vmatprep.subr.mxu0 0.0
        %1971 = vmatpush1.msra.mxu0 0.0
        %1972 = vmatprep.subr.mxu0 0.0
        %1973 = vmatpush1.msra.mxu0 0.0
        %1974 = vmatprep.subr.mxu0 0.0
        %1975 = vmatpush1.msra.mxu0 0.0
        %1976 = vmatprep.mubr.f32.mxu0 0.0
        %1977 = vmatmul.mubr.f32.gmra.mrb[0].mxu0 %v1862
        %v1978 = vpop.f32.mrb[0].mxu0
        %v1979 = vadd.f32 0.0, %v1978
        %v1980 = vpop.f32.mrb[0].mxu0
        %1981 = vmatprep.mubr.f32.mxu0 0.0
        %1982 = vmatmul.mubr.f32.gmra.mrb[0].mxu0 %v1865
        %v1983 = vpop.f32.mrb[0].mxu0
        %v1984 = vadd.f32 0.0, %v1983
        %v1985 = vpop.f32.mrb[0].mxu0
        %1986 = vmatprep.mubr.f32.mxu0 0.0
        %1987 = vmatmul.mubr.f32.gmra.mrb[0].mxu0 %v1868
        %v1988 = vpop.f32.mrb[0].mxu0
        %v1989 = vadd.f32 0.0, %v1988
        %v1990 = vpop.f32.mrb[0].mxu0
        %1991 = vmatprep.mubr.f32.mxu0 0.0
        %1992 = vmatmul.mubr.f32.gmra.mrb[0].mxu0 %v1871
        %v1993 = vpop.f32.mrb[0].mxu0
        %v1994 = vadd.f32 0.0, %v1993
        %v1995 = vpop.f32.mrb[0].mxu0
        %1996 = vmatprep.mubr.f32.mxu0 0.0
        %1997 = vmatmul.mubr.f32.gmra.mrb[0].mxu0 %v1874
        %v1998 = vpop.f32.mrb[0].mxu0
        %v1999 = vadd.f32 0.0, %v1998
        %v2000 = vpop.f32.mrb[0].mxu0
        %2001 = vmatprep.mubr.f32.mxu0 0.0
        %2002 = vmatmul.mubr.f32.gmra.mrb[0].mxu0 %v1877
        %v2003 = vpop.f32.mrb[0].mxu0
        %v2004 = vadd.f32 0.0, %v2003
        %v2005 = vpop.f32.mrb[0].mxu0
        %2006 = vmatprep.mubr.f32.mxu0 0.0
        %2007 = vmatmul.mubr.f32.gmra.mrb[0].mxu0 %v1880
        %v2008 = vpop.f32.mrb[0].mxu0
        %v2009 = vadd.f32 0.0, %v2008
        %v2010 = vpop.f32.mrb[0].mxu0
        %2011 = vmatprep.mubr.f32.mxu0 0.0
        %2012 = vmatmul.mubr.f32.gmra.mrb[0].mxu0 %v1883
        %v2013 = vpop.f32.mrb[0].mxu0
        %v2014 = vadd.f32 0.0, %v2013
        %v2015 = vpop.f32.mrb[0].mxu0
        %2016 = vmatprep.mubr.f32.mxu0 0.0
        %2017 = vmatmul.mubr.f32.gmra.mrb[0].mxu0 %v1886
        %v2018 = vpop.f32.mrb[0].mxu0
        %v2019 = vadd.f32 0.0, %v2018
        %v2020 = vpop.f32.mrb[0].mxu0
        %2021 = vmatprep.mubr.f32.mxu0 0.0
        %2022 = vmatmul.mubr.f32.gmra.mrb[0].mxu0 %v1889
        %v2023 = vpop.f32.mrb[0].mxu0
        %v2024 = vadd.f32 0.0, %v2023
        %v2025 = vpop.f32.mrb[0].mxu0
        %2026 = vmatprep.mubr.f32.mxu0 0.0
        %2027 = vmatmul.mubr.f32.gmra.mrb[0].mxu0 %v1892
        %v2028 = vpop.f32.mrb[0].mxu0
        %v2029 = vadd.f32 0.0, %v2028
        %v2030 = vpop.f32.mrb[0].mxu0
        %2031 = vmatprep.mubr.f32.mxu0 0.0
        %2032 = vmatmul.mubr.f32.gmra.mrb[0].mxu0 %v1895
        %v2033 = vpop.f32.mrb[0].mxu0
        %v2034 = vadd.f32 0.0, %v2033
        %v2035 = vpop.f32.mrb[0].mxu0
        %2036 = vmatprep.mubr.f32.mxu0 0.0
        %2037 = vmatmul.mubr.f32.gmra.mrb[0].mxu0 %v1898
        %v2038 = vpop.f32.mrb[0].mxu0
        %v2039 = vadd.f32 0.0, %v2038
        %v2040 = vpop.f32.mrb[0].mxu0
        %2041 = vmatprep.mubr.f32.mxu0 0.0
        %2042 = vmatmul.mubr.f32.gmra.mrb[0].mxu0 %v1901
        %v2043 = vpop.f32.mrb[0].mxu0
        %v2044 = vadd.f32 0.0, %v2043
        %v2045 = vpop.f32.mrb[0].mxu0
        %2046 = vmatprep.mubr.f32.mxu0 0.0
        %2047 = vmatmul.mubr.f32.gmra.mrb[0].mxu0 %v1904
        %v2048 = vpop.f32.mrb[0].mxu0
        %v2049 = vadd.f32 0.0, %v2048
        %v2050 = vpop.f32.mrb[0].mxu0
        %2051 = vmatprep.mubr.f32.mxu0 0.0
        %2052 = vmatmul.mubr.f32.gmra.mrb[0].mxu0 %v1907
        %v2053 = vpop.f32.mrb[0].mxu0
        %v2054 = vadd.f32 0.0, %v2053
        %v2055 = vpop.f32.mrb[0].mxu0
        %2056 = vdwg.mxu0
        %v2057 = vadd.f32 %v1795, %v1979
        %v2058 = vadd.f32 %v1796, %v1984
        %v2059 = vadd.f32 %v1797, %v1989
        %v2060 = vadd.f32 %v1798, %v1994
        %v2061 = vadd.f32 %v1799, %v1999
        %v2062 = vadd.f32 %v1800, %v2004
        %v2063 = vadd.f32 %v1801, %v2009
        %v2064 = vadd.f32 %v1802, %v2014
        %v2065 = vadd.f32 %v1803, %v2019
        %v2066 = vadd.f32 %v1804, %v2024
        %v2067 = vadd.f32 %v1805, %v2029
        %v2068 = vadd.f32 %v1806, %v2034
        %v2069 = vadd.f32 %v1807, %v2039
        %v2070 = vadd.f32 %v1808, %v2044
        %v2071 = vadd.f32 %v1809, %v2049
        %v2072 = vadd.f32 %v1810, %v2054
        %v2073 = vld [vmem:[#allocation2 + $0x20] sm:$0xff]
        %v2074 = vld [vmem:[#allocation2 + $0x28] sm:$0xff]
        %v2075 = vld [vmem:[#allocation2 + $0x30] sm:$0xff]
        %v2076 = vld [vmem:[#allocation2 + $0x38] sm:$0xff]
        %v2077 = vld [vmem:[#allocation2 + $0x40] sm:$0xff]
        %v2078 = vld [vmem:[#allocation2 + $0x48] sm:$0xff]
        %v2079 = vld [vmem:[#allocation2 + $0x50] sm:$0xff]
        %v2080 = vld [vmem:[#allocation2 + $0x58] sm:$0xff]
        %v2081 = vld [vmem:[#allocation2 + $0x60] sm:$0xff]
        %v2082 = vld [vmem:[#allocation2 + $0x68] sm:$0xff]
        %v2083 = vld [vmem:[#allocation2 + $0x70] sm:$0xff]
        %v2084 = vld [vmem:[#allocation2 + $0x78] sm:$0xff]
        %v2085 = vld [vmem:[#allocation2 + $0x80] sm:$0xff]
        %v2086 = vld [vmem:[#allocation2 + $0x88] sm:$0xff]
        %v2087 = vld [vmem:[#allocation2 + $0x90] sm:$0xff]
        %v2088 = vld [vmem:[#allocation2 + $0x98] sm:$0xff]
        %v2089 = vrot.slane %v2073, 7
        %v2090 = vrot.slane %v2074, 7
        %v2091 = vrot.slane %v2075, 7
        %v2092 = vrot.slane %v2076, 7
        %v2093 = vrot.slane %v2077, 7
        %v2094 = vrot.slane %v2078, 7
        %v2095 = vrot.slane %v2079, 7
        %v2096 = vrot.slane %v2080, 7
        %v2097 = vrot.slane %v2081, 7
        %v2098 = vrot.slane %v2082, 7
        %v2099 = vrot.slane %v2083, 7
        %v2100 = vrot.slane %v2084, 7
        %v2101 = vrot.slane %v2085, 7
        %v2102 = vrot.slane %v2086, 7
        %v2103 = vrot.slane %v2087, 7
        %v2104 = vrot.slane %v2088, 7
        %v2105 = vsel %vm627, %v2103, %v2104
        %v2106 = vsel %vm627, %v2102, %v2103
        %v2107 = vsel %vm627, %v2101, %v2102
        %v2108 = vsel %vm627, %v2100, %v2101
        %v2109 = vsel %vm627, %v2099, %v2100
        %v2110 = vsel %vm627, %v2098, %v2099
        %v2111 = vsel %vm627, %v2097, %v2098
        %v2112 = vsel %vm627, %v2096, %v2097
        %v2113 = vsel %vm627, %v2095, %v2096
        %v2114 = vsel %vm627, %v2094, %v2095
        %v2115 = vsel %vm627, %v2093, %v2094
        %v2116 = vsel %vm627, %v2092, %v2093
        %v2117 = vsel %vm627, %v2091, %v2092
        %v2118 = vsel %vm627, %v2090, %v2091
        %v2119 = vsel %vm627, %v2089, %v2090
        %v2120 = vsel %vm627, %v2104, %v2089
        %v2121 = vmul.f32 %v2120, %v500
        %v2122 = vmul.f32 %v2119, %v501
        %v2123 = vmul.f32 %v2118, %v502
        %v2124 = vmul.f32 %v2117, %v503
        %v2125 = vmul.f32 %v2116, %v504
        %v2126 = vmul.f32 %v2115, %v505
        %v2127 = vmul.f32 %v2114, %v506
        %v2128 = vmul.f32 %v2113, %v507
        %v2129 = vmul.f32 %v2112, %v508
        %v2130 = vmul.f32 %v2111, %v509
        %v2131 = vmul.f32 %v2110, %v510
        %v2132 = vmul.f32 %v2109, %v511
        %v2133 = vmul.f32 %v2108, %v512
        %v2134 = vmul.f32 %v2107, %v513
        %v2135 = vmul.f32 %v2106, %v514
        %v2136 = vmul.f32 %v2105, %v515
        %s2137 = scalar_lea.vmem %s1, 24
        %v2138 = vld [vmem:[%s2137] sm:$0xf]
        %v2140 = vsel %vm516, %v2121, 0
        %v2143 = vsel %vm516, %v2122, 0
        %v2146 = vsel %vm516, %v2123, 0
        %v2149 = vsel %vm516, %v2124, 0
        %v2152 = vsel %vm516, %v2125, 0
        %v2155 = vsel %vm516, %v2126, 0
        %v2158 = vsel %vm516, %v2127, 0
        %v2161 = vsel %vm516, %v2128, 0
        %v2164 = vsel %vm516, %v2129, 0
        %v2167 = vsel %vm516, %v2130, 0
        %v2170 = vsel %vm516, %v2131, 0
        %v2173 = vsel %vm516, %v2132, 0
        %v2176 = vsel %vm516, %v2133, 0
        %v2179 = vsel %vm516, %v2134, 0
        %v2182 = vsel %vm516, %v2135, 0
        %v2185 = vsel %vm516, %v2136, 0
        %v2188 = vsel %vm711, %v2138, 0
        %2190 = vmatprep.subr.mxu0 0.0
        %2191 = vmatpush1.msra.mxu0 %v2188
        %2192 = vmatprep.subr.mxu0 0.0
        %2193 = vmatpush1.msra.mxu0 0.0
        %2194 = vmatprep.subr.mxu0 0.0
        %2195 = vmatpush1.msra.mxu0 0.0
        %2196 = vmatprep.subr.mxu0 0.0
        %2197 = vmatpush1.msra.mxu0 0.0
        %2198 = vmatprep.subr.mxu0 0.0
        %2199 = vmatpush1.msra.mxu0 0.0
        %2200 = vmatprep.subr.mxu0 0.0
        %2201 = vmatpush1.msra.mxu0 0.0
        %2202 = vmatprep.subr.mxu0 0.0
        %2203 = vmatpush1.msra.mxu0 0.0
        %2204 = vmatprep.subr.mxu0 0.0
        %2205 = vmatpush1.msra.mxu0 0.0
        %2206 = vmatprep.subr.mxu0 0.0
        %2207 = vmatpush1.msra.mxu0 0.0
        %2208 = vmatprep.subr.mxu0 0.0
        %2209 = vmatpush1.msra.mxu0 0.0
        %2210 = vmatprep.subr.mxu0 0.0
        %2211 = vmatpush1.msra.mxu0 0.0
        %2212 = vmatprep.subr.mxu0 0.0
        %2213 = vmatpush1.msra.mxu0 0.0
        %2214 = vmatprep.subr.mxu0 0.0
        %2215 = vmatpush1.msra.mxu0 0.0
        %2216 = vmatprep.subr.mxu0 0.0
        %2217 = vmatpush1.msra.mxu0 0.0
        %2218 = vmatprep.subr.mxu0 0.0
        %2219 = vmatpush1.msra.mxu0 0.0
        %2220 = vmatprep.subr.mxu0 0.0
        %2221 = vmatpush1.msra.mxu0 0.0
        %2222 = vmatprep.subr.mxu0 0.0
        %2223 = vmatpush1.msra.mxu0 0.0
        %2224 = vmatprep.subr.mxu0 0.0
        %2225 = vmatpush1.msra.mxu0 0.0
        %2226 = vmatprep.subr.mxu0 0.0
        %2227 = vmatpush1.msra.mxu0 0.0
        %2228 = vmatprep.subr.mxu0 0.0
        %2229 = vmatpush1.msra.mxu0 0.0
        %2230 = vmatprep.subr.mxu0 0.0
        %2231 = vmatpush1.msra.mxu0 0.0
        %2232 = vmatprep.subr.mxu0 0.0
        %2233 = vmatpush1.msra.mxu0 0.0
        %2234 = vmatprep.subr.mxu0 0.0
        %2235 = vmatpush1.msra.mxu0 0.0
        %2236 = vmatprep.subr.mxu0 0.0
        %2237 = vmatpush1.msra.mxu0 0.0
        %2238 = vmatprep.subr.mxu0 0.0
        %2239 = vmatpush1.msra.mxu0 0.0
        %2240 = vmatprep.subr.mxu0 0.0
        %2241 = vmatpush1.msra.mxu0 0.0
        %2242 = vmatprep.subr.mxu0 0.0
        %2243 = vmatpush1.msra.mxu0 0.0
        %2244 = vmatprep.subr.mxu0 0.0
        %2245 = vmatpush1.msra.mxu0 0.0
        %2246 = vmatprep.subr.mxu0 0.0
        %2247 = vmatpush1.msra.mxu0 0.0
        %2248 = vmatprep.subr.mxu0 0.0
        %2249 = vmatpush1.msra.mxu0 0.0
        %2250 = vmatprep.subr.mxu0 0.0
        %2251 = vmatpush1.msra.mxu0 0.0
        %2252 = vmatprep.subr.mxu0 0.0
        %2253 = vmatpush1.msra.mxu0 0.0
        %2254 = vmatprep.mubr.f32.mxu0 0.0
        %2255 = vmatmul.mubr.f32.gmra.mrb[0].mxu0 %v2140
        %v2256 = vpop.f32.mrb[0].mxu0
        %v2257 = vadd.f32 0.0, %v2256
        %v2258 = vpop.f32.mrb[0].mxu0
        %2259 = vmatprep.mubr.f32.mxu0 0.0
        %2260 = vmatmul.mubr.f32.gmra.mrb[0].mxu0 %v2143
        %v2261 = vpop.f32.mrb[0].mxu0
        %v2262 = vadd.f32 0.0, %v2261
        %v2263 = vpop.f32.mrb[0].mxu0
        %2264 = vmatprep.mubr.f32.mxu0 0.0
        %2265 = vmatmul.mubr.f32.gmra.mrb[0].mxu0 %v2146
        %v2266 = vpop.f32.mrb[0].mxu0
        %v2267 = vadd.f32 0.0, %v2266
        %v2268 = vpop.f32.mrb[0].mxu0
        %2269 = vmatprep.mubr.f32.mxu0 0.0
        %2270 = vmatmul.mubr.f32.gmra.mrb[0].mxu0 %v2149
        %v2271 = vpop.f32.mrb[0].mxu0
        %v2272 = vadd.f32 0.0, %v2271
        %v2273 = vpop.f32.mrb[0].mxu0
        %2274 = vmatprep.mubr.f32.mxu0 0.0
        %2275 = vmatmul.mubr.f32.gmra.mrb[0].mxu0 %v2152
        %v2276 = vpop.f32.mrb[0].mxu0
        %v2277 = vadd.f32 0.0, %v2276
        %v2278 = vpop.f32.mrb[0].mxu0
        %2279 = vmatprep.mubr.f32.mxu0 0.0
        %2280 = vmatmul.mubr.f32.gmra.mrb[0].mxu0 %v2155
        %v2281 = vpop.f32.mrb[0].mxu0
        %v2282 = vadd.f32 0.0, %v2281
        %v2283 = vpop.f32.mrb[0].mxu0
        %2284 = vmatprep.mubr.f32.mxu0 0.0
        %2285 = vmatmul.mubr.f32.gmra.mrb[0].mxu0 %v2158
        %v2286 = vpop.f32.mrb[0].mxu0
        %v2287 = vadd.f32 0.0, %v2286
        %v2288 = vpop.f32.mrb[0].mxu0
        %2289 = vmatprep.mubr.f32.mxu0 0.0
        %2290 = vmatmul.mubr.f32.gmra.mrb[0].mxu0 %v2161
        %v2291 = vpop.f32.mrb[0].mxu0
        %v2292 = vadd.f32 0.0, %v2291
        %v2293 = vpop.f32.mrb[0].mxu0
        %2294 = vmatprep.mubr.f32.mxu0 0.0
        %2295 = vmatmul.mubr.f32.gmra.mrb[0].mxu0 %v2164
        %v2296 = vpop.f32.mrb[0].mxu0
        %v2297 = vadd.f32 0.0, %v2296
        %v2298 = vpop.f32.mrb[0].mxu0
        %2299 = vmatprep.mubr.f32.mxu0 0.0
        %2300 = vmatmul.mubr.f32.gmra.mrb[0].mxu0 %v2167
        %v2301 = vpop.f32.mrb[0].mxu0
        %v2302 = vadd.f32 0.0, %v2301
        %v2303 = vpop.f32.mrb[0].mxu0
        %2304 = vmatprep.mubr.f32.mxu0 0.0
        %2305 = vmatmul.mubr.f32.gmra.mrb[0].mxu0 %v2170
        %v2306 = vpop.f32.mrb[0].mxu0
        %v2307 = vadd.f32 0.0, %v2306
        %v2308 = vpop.f32.mrb[0].mxu0
        %2309 = vmatprep.mubr.f32.mxu0 0.0
        %2310 = vmatmul.mubr.f32.gmra.mrb[0].mxu0 %v2173
        %v2311 = vpop.f32.mrb[0].mxu0
        %v2312 = vadd.f32 0.0, %v2311
        %v2313 = vpop.f32.mrb[0].mxu0
        %2314 = vmatprep.mubr.f32.mxu0 0.0
        %2315 = vmatmul.mubr.f32.gmra.mrb[0].mxu0 %v2176
        %v2316 = vpop.f32.mrb[0].mxu0
        %v2317 = vadd.f32 0.0, %v2316
        %v2318 = vpop.f32.mrb[0].mxu0
        %2319 = vmatprep.mubr.f32.mxu0 0.0
        %2320 = vmatmul.mubr.f32.gmra.mrb[0].mxu0 %v2179
        %v2321 = vpop.f32.mrb[0].mxu0
        %v2322 = vadd.f32 0.0, %v2321
        %v2323 = vpop.f32.mrb[0].mxu0
        %2324 = vmatprep.mubr.f32.mxu0 0.0
        %2325 = vmatmul.mubr.f32.gmra.mrb[0].mxu0 %v2182
        %v2326 = vpop.f32.mrb[0].mxu0
        %v2327 = vadd.f32 0.0, %v2326
        %v2328 = vpop.f32.mrb[0].mxu0
        %2329 = vmatprep.mubr.f32.mxu0 0.0
        %2330 = vmatmul.mubr.f32.gmra.mrb[0].mxu0 %v2185
        %v2331 = vpop.f32.mrb[0].mxu0
        %v2332 = vadd.f32 0.0, %v2331
        %v2333 = vpop.f32.mrb[0].mxu0
        %2334 = vdwg.mxu0
        %v2335 = vadd.f32 %v2057, %v2257
        %v2336 = vadd.f32 %v2058, %v2262
        %v2337 = vadd.f32 %v2059, %v2267
        %v2338 = vadd.f32 %v2060, %v2272
        %v2339 = vadd.f32 %v2061, %v2277
        %v2340 = vadd.f32 %v2062, %v2282
        %v2341 = vadd.f32 %v2063, %v2287
        %v2342 = vadd.f32 %v2064, %v2292
        %v2343 = vadd.f32 %v2065, %v2297
        %v2344 = vadd.f32 %v2066, %v2302
        %v2345 = vadd.f32 %v2067, %v2307
        %v2346 = vadd.f32 %v2068, %v2312
        %v2347 = vadd.f32 %v2069, %v2317
        %v2348 = vadd.f32 %v2070, %v2322
        %v2349 = vadd.f32 %v2071, %v2327
        %v2350 = vadd.f32 %v2072, %v2332
        %s2351 = scalar_lea.vmem %s1, 28
        %v2352 = vld [vmem:[%s2351] sm:$0xf]
        %v2354 = vsel %vm516, %v2073, 0
        %v2357 = vsel %vm516, %v2074, 0
        %v2360 = vsel %vm516, %v2075, 0
        %v2363 = vsel %vm516, %v2076, 0
        %v2366 = vsel %vm516, %v2077, 0
        %v2369 = vsel %vm516, %v2078, 0
        %v2372 = vsel %vm516, %v2079, 0
        %v2375 = vsel %vm516, %v2080, 0
        %v2378 = vsel %vm516, %v2081, 0
        %v2381 = vsel %vm516, %v2082, 0
        %v2384 = vsel %vm516, %v2083, 0
        %v2387 = vsel %vm516, %v2084, 0
        %v2390 = vsel %vm516, %v2085, 0
        %v2393 = vsel %vm516, %v2086, 0
        %v2396 = vsel %vm516, %v2087, 0
        %v2399 = vsel %vm516, %v2088, 0
        %v2402 = vsel %vm711, %v2352, 0
        %2404 = vmatprep.subr.mxu0 0.0
        %2405 = vmatpush1.msra.mxu0 %v2402
        %2406 = vmatprep.subr.mxu0 0.0
        %2407 = vmatpush1.msra.mxu0 0.0
        %2408 = vmatprep.subr.mxu0 0.0
        %2409 = vmatpush1.msra.mxu0 0.0
        %2410 = vmatprep.subr.mxu0 0.0
        %2411 = vmatpush1.msra.mxu0 0.0
        %2412 = vmatprep.subr.mxu0 0.0
        %2413 = vmatpush1.msra.mxu0 0.0
        %2414 = vmatprep.subr.mxu0 0.0
        %2415 = vmatpush1.msra.mxu0 0.0
        %2416 = vmatprep.subr.mxu0 0.0
        %2417 = vmatpush1.msra.mxu0 0.0
        %2418 = vmatprep.subr.mxu0 0.0
        %2419 = vmatpush1.msra.mxu0 0.0
        %2420 = vmatprep.subr.mxu0 0.0
        %2421 = vmatpush1.msra.mxu0 0.0
        %2422 = vmatprep.subr.mxu0 0.0
        %2423 = vmatpush1.msra.mxu0 0.0
        %2424 = vmatprep.subr.mxu0 0.0
        %2425 = vmatpush1.msra.mxu0 0.0
        %2426 = vmatprep.subr.mxu0 0.0
        %2427 = vmatpush1.msra.mxu0 0.0
        %2428 = vmatprep.subr.mxu0 0.0
        %2429 = vmatpush1.msra.mxu0 0.0
        %2430 = vmatprep.subr.mxu0 0.0
        %2431 = vmatpush1.msra.mxu0 0.0
        %2432 = vmatprep.subr.mxu0 0.0
        %2433 = vmatpush1.msra.mxu0 0.0
        %2434 = vmatprep.subr.mxu0 0.0
        %2435 = vmatpush1.msra.mxu0 0.0
        %2436 = vmatprep.subr.mxu0 0.0
        %2437 = vmatpush1.msra.mxu0 0.0
        %2438 = vmatprep.subr.mxu0 0.0
        %2439 = vmatpush1.msra.mxu0 0.0
        %2440 = vmatprep.subr.mxu0 0.0
        %2441 = vmatpush1.msra.mxu0 0.0
        %2442 = vmatprep.subr.mxu0 0.0
        %2443 = vmatpush1.msra.mxu0 0.0
        %2444 = vmatprep.subr.mxu0 0.0
        %2445 = vmatpush1.msra.mxu0 0.0
        %2446 = vmatprep.subr.mxu0 0.0
        %2447 = vmatpush1.msra.mxu0 0.0
        %2448 = vmatprep.subr.mxu0 0.0
        %2449 = vmatpush1.msra.mxu0 0.0
        %2450 = vmatprep.subr.mxu0 0.0
        %2451 = vmatpush1.msra.mxu0 0.0
        %2452 = vmatprep.subr.mxu0 0.0
        %2453 = vmatpush1.msra.mxu0 0.0
        %2454 = vmatprep.subr.mxu0 0.0
        %2455 = vmatpush1.msra.mxu0 0.0
        %2456 = vmatprep.subr.mxu0 0.0
        %2457 = vmatpush1.msra.mxu0 0.0
        %2458 = vmatprep.subr.mxu0 0.0
        %2459 = vmatpush1.msra.mxu0 0.0
        %2460 = vmatprep.subr.mxu0 0.0
        %2461 = vmatpush1.msra.mxu0 0.0
        %2462 = vmatprep.subr.mxu0 0.0
        %2463 = vmatpush1.msra.mxu0 0.0
        %2464 = vmatprep.subr.mxu0 0.0
        %2465 = vmatpush1.msra.mxu0 0.0
        %2466 = vmatprep.subr.mxu0 0.0
        %2467 = vmatpush1.msra.mxu0 0.0
        %2468 = vmatprep.mubr.f32.mxu0 0.0
        %2469 = vmatmul.mubr.f32.gmra.mrb[0].mxu0 %v2354
        %v2470 = vpop.f32.mrb[0].mxu0
        %v2471 = vadd.f32 0.0, %v2470
        %v2472 = vpop.f32.mrb[0].mxu0
        %2473 = vmatprep.mubr.f32.mxu0 0.0
        %2474 = vmatmul.mubr.f32.gmra.mrb[0].mxu0 %v2357
        %v2475 = vpop.f32.mrb[0].mxu0
        %v2476 = vadd.f32 0.0, %v2475
        %v2477 = vpop.f32.mrb[0].mxu0
        %2478 = vmatprep.mubr.f32.mxu0 0.0
        %2479 = vmatmul.mubr.f32.gmra.mrb[0].mxu0 %v2360
        %v2480 = vpop.f32.mrb[0].mxu0
        %v2481 = vadd.f32 0.0, %v2480
        %v2482 = vpop.f32.mrb[0].mxu0
        %2483 = vmatprep.mubr.f32.mxu0 0.0
        %2484 = vmatmul.mubr.f32.gmra.mrb[0].mxu0 %v2363
        %v2485 = vpop.f32.mrb[0].mxu0
        %v2486 = vadd.f32 0.0, %v2485
        %v2487 = vpop.f32.mrb[0].mxu0
        %2488 = vmatprep.mubr.f32.mxu0 0.0
        %2489 = vmatmul.mubr.f32.gmra.mrb[0].mxu0 %v2366
        %v2490 = vpop.f32.mrb[0].mxu0
        %v2491 = vadd.f32 0.0, %v2490
        %v2492 = vpop.f32.mrb[0].mxu0
        %2493 = vmatprep.mubr.f32.mxu0 0.0
        %2494 = vmatmul.mubr.f32.gmra.mrb[0].mxu0 %v2369
        %v2495 = vpop.f32.mrb[0].mxu0
        %v2496 = vadd.f32 0.0, %v2495
        %v2497 = vpop.f32.mrb[0].mxu0
        %2498 = vmatprep.mubr.f32.mxu0 0.0
        %2499 = vmatmul.mubr.f32.gmra.mrb[0].mxu0 %v2372
        %v2500 = vpop.f32.mrb[0].mxu0
        %v2501 = vadd.f32 0.0, %v2500
        %v2502 = vpop.f32.mrb[0].mxu0
        %2503 = vmatprep.mubr.f32.mxu0 0.0
        %2504 = vmatmul.mubr.f32.gmra.mrb[0].mxu0 %v2375
        %v2505 = vpop.f32.mrb[0].mxu0
        %v2506 = vadd.f32 0.0, %v2505
        %v2507 = vpop.f32.mrb[0].mxu0
        %2508 = vmatprep.mubr.f32.mxu0 0.0
        %2509 = vmatmul.mubr.f32.gmra.mrb[0].mxu0 %v2378
        %v2510 = vpop.f32.mrb[0].mxu0
        %v2511 = vadd.f32 0.0, %v2510
        %v2512 = vpop.f32.mrb[0].mxu0
        %2513 = vmatprep.mubr.f32.mxu0 0.0
        %2514 = vmatmul.mubr.f32.gmra.mrb[0].mxu0 %v2381
        %v2515 = vpop.f32.mrb[0].mxu0
        %v2516 = vadd.f32 0.0, %v2515
        %v2517 = vpop.f32.mrb[0].mxu0
        %2518 = vmatprep.mubr.f32.mxu0 0.0
        %2519 = vmatmul.mubr.f32.gmra.mrb[0].mxu0 %v2384
        %v2520 = vpop.f32.mrb[0].mxu0
        %v2521 = vadd.f32 0.0, %v2520
        %v2522 = vpop.f32.mrb[0].mxu0
        %2523 = vmatprep.mubr.f32.mxu0 0.0
        %2524 = vmatmul.mubr.f32.gmra.mrb[0].mxu0 %v2387
        %v2525 = vpop.f32.mrb[0].mxu0
        %v2526 = vadd.f32 0.0, %v2525
        %v2527 = vpop.f32.mrb[0].mxu0
        %2528 = vmatprep.mubr.f32.mxu0 0.0
        %2529 = vmatmul.mubr.f32.gmra.mrb[0].mxu0 %v2390
        %v2530 = vpop.f32.mrb[0].mxu0
        %v2531 = vadd.f32 0.0, %v2530
        %v2532 = vpop.f32.mrb[0].mxu0
        %2533 = vmatprep.mubr.f32.mxu0 0.0
        %2534 = vmatmul.mubr.f32.gmra.mrb[0].mxu0 %v2393
        %v2535 = vpop.f32.mrb[0].mxu0
        %v2536 = vadd.f32 0.0, %v2535
        %v2537 = vpop.f32.mrb[0].mxu0
        %2538 = vmatprep.mubr.f32.mxu0 0.0
        %2539 = vmatmul.mubr.f32.gmra.mrb[0].mxu0 %v2396
        %v2540 = vpop.f32.mrb[0].mxu0
        %v2541 = vadd.f32 0.0, %v2540
        %v2542 = vpop.f32.mrb[0].mxu0
        %2543 = vmatprep.mubr.f32.mxu0 0.0
        %2544 = vmatmul.mubr.f32.gmra.mrb[0].mxu0 %v2399
        %v2545 = vpop.f32.mrb[0].mxu0
        %v2546 = vadd.f32 0.0, %v2545
        %v2547 = vpop.f32.mrb[0].mxu0
        %2548 = vdwg.mxu0
        %v2549 = vadd.f32 %v2335, %v2471
        %v2550 = vadd.f32 %v2336, %v2476
        %v2551 = vadd.f32 %v2337, %v2481
        %v2552 = vadd.f32 %v2338, %v2486
        %v2553 = vadd.f32 %v2339, %v2491
        %v2554 = vadd.f32 %v2340, %v2496
        %v2555 = vadd.f32 %v2341, %v2501
        %v2556 = vadd.f32 %v2342, %v2506
        %v2557 = vadd.f32 %v2343, %v2511
        %v2558 = vadd.f32 %v2344, %v2516
        %v2559 = vadd.f32 %v2345, %v2521
        %v2560 = vadd.f32 %v2346, %v2526
        %v2561 = vadd.f32 %v2347, %v2531
        %v2562 = vadd.f32 %v2348, %v2536
        %v2563 = vadd.f32 %v2349, %v2541
        %v2564 = vadd.f32 %v2350, %v2546
        %v2565 = vrot.slane %v2073, 1
        %v2566 = vrot.slane %v2074, 1
        %v2567 = vrot.slane %v2075, 1
        %v2568 = vrot.slane %v2076, 1
        %v2569 = vrot.slane %v2077, 1
        %v2570 = vrot.slane %v2078, 1
        %v2571 = vrot.slane %v2079, 1
        %v2572 = vrot.slane %v2080, 1
        %v2573 = vrot.slane %v2081, 1
        %v2574 = vrot.slane %v2082, 1
        %v2575 = vrot.slane %v2083, 1
        %v2576 = vrot.slane %v2084, 1
        %v2577 = vrot.slane %v2085, 1
        %v2578 = vrot.slane %v2086, 1
        %v2579 = vrot.slane %v2087, 1
        %v2580 = vrot.slane %v2088, 1
        %v2581 = vsel %vm1072, %v2579, %v2580
        %v2582 = vsel %vm1072, %v2578, %v2579
        %v2583 = vsel %vm1072, %v2577, %v2578
        %v2584 = vsel %vm1072, %v2576, %v2577
        %v2585 = vsel %vm1072, %v2575, %v2576
        %v2586 = vsel %vm1072, %v2574, %v2575
        %v2587 = vsel %vm1072, %v2573, %v2574
        %v2588 = vsel %vm1072, %v2572, %v2573
        %v2589 = vsel %vm1072, %v2571, %v2572
        %v2590 = vsel %vm1072, %v2570, %v2571
        %v2591 = vsel %vm1072, %v2569, %v2570
        %v2592 = vsel %vm1072, %v2568, %v2569
        %v2593 = vsel %vm1072, %v2567, %v2568
        %v2594 = vsel %vm1072, %v2566, %v2567
        %v2595 = vsel %vm1072, %v2565, %v2566
        %v2596 = vsel %vm1072, %v2580, %v2565
        %v2597 = vmul.f32 %v2595, %v452
        %v2598 = vmul.f32 %v2594, %v453
        %v2599 = vmul.f32 %v2593, %v454
        %v2600 = vmul.f32 %v2592, %v455
        %v2601 = vmul.f32 %v2591, %v456
        %v2602 = vmul.f32 %v2590, %v457
        %v2603 = vmul.f32 %v2589, %v458
        %v2604 = vmul.f32 %v2588, %v459
        %v2605 = vmul.f32 %v2587, %v460
        %v2606 = vmul.f32 %v2586, %v461
        %v2607 = vmul.f32 %v2585, %v462
        %v2608 = vmul.f32 %v2584, %v463
        %v2609 = vmul.f32 %v2583, %v464
        %v2610 = vmul.f32 %v2582, %v465
        %v2611 = vmul.f32 %v2581, %v466
        %v2612 = vmul.f32 %v2596, %v467
        %s2613 = scalar_lea.vmem %s1, 32
        %v2614 = vld [vmem:[%s2613] sm:$0xf]
        %v2616 = vsel %vm516, %v2597, 0
        %v2619 = vsel %vm516, %v2598, 0
        %v2622 = vsel %vm516, %v2599, 0
        %v2625 = vsel %vm516, %v2600, 0
        %v2628 = vsel %vm516, %v2601, 0
        %v2631 = vsel %vm516, %v2602, 0
        %v2634 = vsel %vm516, %v2603, 0
        %v2637 = vsel %vm516, %v2604, 0
        %v2640 = vsel %vm516, %v2605, 0
        %v2643 = vsel %vm516, %v2606, 0
        %v2646 = vsel %vm516, %v2607, 0
        %v2649 = vsel %vm516, %v2608, 0
        %v2652 = vsel %vm516, %v2609, 0
        %v2655 = vsel %vm516, %v2610, 0
        %v2658 = vsel %vm516, %v2611, 0
        %v2661 = vsel %vm516, %v2612, 0
        %v2664 = vsel %vm711, %v2614, 0
        %2666 = vmatprep.subr.mxu0 0.0
        %2667 = vmatpush1.msra.mxu0 %v2664
        %2668 = vmatprep.subr.mxu0 0.0
        %2669 = vmatpush1.msra.mxu0 0.0
        %2670 = vmatprep.subr.mxu0 0.0
        %2671 = vmatpush1.msra.mxu0 0.0
        %2672 = vmatprep.subr.mxu0 0.0
        %2673 = vmatpush1.msra.mxu0 0.0
        %2674 = vmatprep.subr.mxu0 0.0
        %2675 = vmatpush1.msra.mxu0 0.0
        %2676 = vmatprep.subr.mxu0 0.0
        %2677 = vmatpush1.msra.mxu0 0.0
        %2678 = vmatprep.subr.mxu0 0.0
        %2679 = vmatpush1.msra.mxu0 0.0
        %2680 = vmatprep.subr.mxu0 0.0
        %2681 = vmatpush1.msra.mxu0 0.0
        %2682 = vmatprep.subr.mxu0 0.0
        %2683 = vmatpush1.msra.mxu0 0.0
        %2684 = vmatprep.subr.mxu0 0.0
        %2685 = vmatpush1.msra.mxu0 0.0
        %2686 = vmatprep.subr.mxu0 0.0
        %2687 = vmatpush1.msra.mxu0 0.0
        %2688 = vmatprep.subr.mxu0 0.0
        %2689 = vmatpush1.msra.mxu0 0.0
        %2690 = vmatprep.subr.mxu0 0.0
        %2691 = vmatpush1.msra.mxu0 0.0
        %2692 = vmatprep.subr.mxu0 0.0
        %2693 = vmatpush1.msra.mxu0 0.0
        %2694 = vmatprep.subr.mxu0 0.0
        %2695 = vmatpush1.msra.mxu0 0.0
        %2696 = vmatprep.subr.mxu0 0.0
        %2697 = vmatpush1.msra.mxu0 0.0
        %2698 = vmatprep.subr.mxu0 0.0
        %2699 = vmatpush1.msra.mxu0 0.0
        %2700 = vmatprep.subr.mxu0 0.0
        %2701 = vmatpush1.msra.mxu0 0.0
        %2702 = vmatprep.subr.mxu0 0.0
        %2703 = vmatpush1.msra.mxu0 0.0
        %2704 = vmatprep.subr.mxu0 0.0
        %2705 = vmatpush1.msra.mxu0 0.0
        %2706 = vmatprep.subr.mxu0 0.0
        %2707 = vmatpush1.msra.mxu0 0.0
        %2708 = vmatprep.subr.mxu0 0.0
        %2709 = vmatpush1.msra.mxu0 0.0
        %2710 = vmatprep.subr.mxu0 0.0
        %2711 = vmatpush1.msra.mxu0 0.0
        %2712 = vmatprep.subr.mxu0 0.0
        %2713 = vmatpush1.msra.mxu0 0.0
        %2714 = vmatprep.subr.mxu0 0.0
        %2715 = vmatpush1.msra.mxu0 0.0
        %2716 = vmatprep.subr.mxu0 0.0
        %2717 = vmatpush1.msra.mxu0 0.0
        %2718 = vmatprep.subr.mxu0 0.0
        %2719 = vmatpush1.msra.mxu0 0.0
        %2720 = vmatprep.subr.mxu0 0.0
        %2721 = vmatpush1.msra.mxu0 0.0
        %2722 = vmatprep.subr.mxu0 0.0
        %2723 = vmatpush1.msra.mxu0 0.0
        %2724 = vmatprep.subr.mxu0 0.0
        %2725 = vmatpush1.msra.mxu0 0.0
        %2726 = vmatprep.subr.mxu0 0.0
        %2727 = vmatpush1.msra.mxu0 0.0
        %2728 = vmatprep.subr.mxu0 0.0
        %2729 = vmatpush1.msra.mxu0 0.0
        %2730 = vmatprep.mubr.f32.mxu0 0.0
        %2731 = vmatmul.mubr.f32.gmra.mrb[0].mxu0 %v2616
        %v2732 = vpop.f32.mrb[0].mxu0
        %v2733 = vadd.f32 0.0, %v2732
        %v2734 = vpop.f32.mrb[0].mxu0
        %2735 = vmatprep.mubr.f32.mxu0 0.0
        %2736 = vmatmul.mubr.f32.gmra.mrb[0].mxu0 %v2619
        %v2737 = vpop.f32.mrb[0].mxu0
        %v2738 = vadd.f32 0.0, %v2737
        %v2739 = vpop.f32.mrb[0].mxu0
        %2740 = vmatprep.mubr.f32.mxu0 0.0
        %2741 = vmatmul.mubr.f32.gmra.mrb[0].mxu0 %v2622
        %v2742 = vpop.f32.mrb[0].mxu0
        %v2743 = vadd.f32 0.0, %v2742
        %v2744 = vpop.f32.mrb[0].mxu0
        %2745 = vmatprep.mubr.f32.mxu0 0.0
        %2746 = vmatmul.mubr.f32.gmra.mrb[0].mxu0 %v2625
        %v2747 = vpop.f32.mrb[0].mxu0
        %v2748 = vadd.f32 0.0, %v2747
        %v2749 = vpop.f32.mrb[0].mxu0
        %2750 = vmatprep.mubr.f32.mxu0 0.0
        %2751 = vmatmul.mubr.f32.gmra.mrb[0].mxu0 %v2628
        %v2752 = vpop.f32.mrb[0].mxu0
        %v2753 = vadd.f32 0.0, %v2752
        %v2754 = vpop.f32.mrb[0].mxu0
        %2755 = vmatprep.mubr.f32.mxu0 0.0
        %2756 = vmatmul.mubr.f32.gmra.mrb[0].mxu0 %v2631
        %v2757 = vpop.f32.mrb[0].mxu0
        %v2758 = vadd.f32 0.0, %v2757
        %v2759 = vpop.f32.mrb[0].mxu0
        %2760 = vmatprep.mubr.f32.mxu0 0.0
        %2761 = vmatmul.mubr.f32.gmra.mrb[0].mxu0 %v2634
        %v2762 = vpop.f32.mrb[0].mxu0
        %v2763 = vadd.f32 0.0, %v2762
        %v2764 = vpop.f32.mrb[0].mxu0
        %2765 = vmatprep.mubr.f32.mxu0 0.0
        %2766 = vmatmul.mubr.f32.gmra.mrb[0].mxu0 %v2637
        %v2767 = vpop.f32.mrb[0].mxu0
        %v2768 = vadd.f32 0.0, %v2767
        %v2769 = vpop.f32.mrb[0].mxu0
        %2770 = vmatprep.mubr.f32.mxu0 0.0
        %2771 = vmatmul.mubr.f32.gmra.mrb[0].mxu0 %v2640
        %v2772 = vpop.f32.mrb[0].mxu0
        %v2773 = vadd.f32 0.0, %v2772
        %v2774 = vpop.f32.mrb[0].mxu0
        %2775 = vmatprep.mubr.f32.mxu0 0.0
        %2776 = vmatmul.mubr.f32.gmra.mrb[0].mxu0 %v2643
        %v2777 = vpop.f32.mrb[0].mxu0
        %v2778 = vadd.f32 0.0, %v2777
        %v2779 = vpop.f32.mrb[0].mxu0
        %2780 = vmatprep.mubr.f32.mxu0 0.0
        %2781 = vmatmul.mubr.f32.gmra.mrb[0].mxu0 %v2646
        %v2782 = vpop.f32.mrb[0].mxu0
        %v2783 = vadd.f32 0.0, %v2782
        %v2784 = vpop.f32.mrb[0].mxu0
        %2785 = vmatprep.mubr.f32.mxu0 0.0
        %2786 = vmatmul.mubr.f32.gmra.mrb[0].mxu0 %v2649
        %v2787 = vpop.f32.mrb[0].mxu0
        %v2788 = vadd.f32 0.0, %v2787
        %v2789 = vpop.f32.mrb[0].mxu0
        %2790 = vmatprep.mubr.f32.mxu0 0.0
        %2791 = vmatmul.mubr.f32.gmra.mrb[0].mxu0 %v2652
        %v2792 = vpop.f32.mrb[0].mxu0
        %v2793 = vadd.f32 0.0, %v2792
        %v2794 = vpop.f32.mrb[0].mxu0
        %2795 = vmatprep.mubr.f32.mxu0 0.0
        %2796 = vmatmul.mubr.f32.gmra.mrb[0].mxu0 %v2655
        %v2797 = vpop.f32.mrb[0].mxu0
        %v2798 = vadd.f32 0.0, %v2797
        %v2799 = vpop.f32.mrb[0].mxu0
        %2800 = vmatprep.mubr.f32.mxu0 0.0
        %2801 = vmatmul.mubr.f32.gmra.mrb[0].mxu0 %v2658
        %v2802 = vpop.f32.mrb[0].mxu0
        %v2803 = vadd.f32 0.0, %v2802
        %v2804 = vpop.f32.mrb[0].mxu0
        %2805 = vmatprep.mubr.f32.mxu0 0.0
        %2806 = vmatmul.mubr.f32.gmra.mrb[0].mxu0 %v2661
        %v2807 = vpop.f32.mrb[0].mxu0
        %v2808 = vadd.f32 0.0, %v2807
        %v2809 = vpop.f32.mrb[0].mxu0
        %2810 = vdwg.mxu0
        %v2811 = vadd.f32 %v2549, %v2733
        %v2812 = vadd.f32 %v2550, %v2738
        %v2813 = vadd.f32 %v2551, %v2743
        %v2814 = vadd.f32 %v2552, %v2748
        %v2815 = vadd.f32 %v2553, %v2753
        %v2816 = vadd.f32 %v2554, %v2758
        %v2817 = vadd.f32 %v2555, %v2763
        %v2818 = vadd.f32 %v2556, %v2768
        %v2819 = vadd.f32 %v2557, %v2773
        %v2820 = vadd.f32 %v2558, %v2778
        %v2821 = vadd.f32 %v2559, %v2783
        %v2822 = vadd.f32 %v2560, %v2788
        %v2823 = vadd.f32 %v2561, %v2793
        %v2824 = vadd.f32 %v2562, %v2798
        %v2825 = vadd.f32 %v2563, %v2803
        %v2826 = vadd.f32 %v2564, %v2808
        %v2827 = vlaneseq
        %v2828 = vshrl.u32 %v2827, 7
        %v2829 = vsub.s32 0, %v2828
        %v2830 = vrot.slane %v589, %v2829
        %v2831 = vadd.f32 %v2811, %v2830
        %v2832 = vadd.f32 %v2812, %v2830
        %v2833 = vadd.f32 %v2813, %v2830
        %v2834 = vadd.f32 %v2814, %v2830
        %v2835 = vadd.f32 %v2815, %v2830
        %v2836 = vadd.f32 %v2816, %v2830
        %v2837 = vadd.f32 %v2817, %v2830
        %v2838 = vadd.f32 %v2818, %v2830
        %v2839 = vadd.f32 %v2819, %v2830
        %v2840 = vadd.f32 %v2820, %v2830
        %v2841 = vadd.f32 %v2821, %v2830
        %v2842 = vadd.f32 %v2822, %v2830
        %v2843 = vadd.f32 %v2823, %v2830
        %v2844 = vadd.f32 %v2824, %v2830
        %v2845 = vadd.f32 %v2825, %v2830
        %v2846 = vadd.f32 %v2826, %v2830
        %2847 = vst [vmem:[#allocation3 + $0x10] sm:$0xff] %v2831
        %2848 = vst [vmem:[#allocation3 + $0x18] sm:$0xff] %v2832
        %2849 = vst [vmem:[#allocation3 + $0x20] sm:$0xff] %v2833
        %2850 = vst [vmem:[#allocation3 + $0x28] sm:$0xff] %v2834
        %2851 = vst [vmem:[#allocation3 + $0x30] sm:$0xff] %v2835
        %2852 = vst [vmem:[#allocation3 + $0x38] sm:$0xff] %v2836
        %2853 = vst [vmem:[#allocation3 + $0x40] sm:$0xff] %v2837
        %2854 = vst [vmem:[#allocation3 + $0x48] sm:$0xff] %v2838
        %2855 = vst [vmem:[#allocation3 + $0x50] sm:$0xff] %v2839
        %2856 = vst [vmem:[#allocation3 + $0x58] sm:$0xff] %v2840
        %2857 = vst [vmem:[#allocation3 + $0x60] sm:$0xff] %v2841
        %2858 = vst [vmem:[#allocation3 + $0x68] sm:$0xff] %v2842
        %2859 = vst [vmem:[#allocation3 + $0x70] sm:$0xff] %v2843
        %2860 = vst [vmem:[#allocation3 + $0x78] sm:$0xff] %v2844
        %2861 = vst [vmem:[#allocation3 + $0x80] sm:$0xff] %v2845
        %2862 = vst [vmem:[#allocation3 + $0x88] sm:$0xff] %v2846
        %v2863 = vadd.f32 %v2831, %v2832
        %v2864 = vadd.f32 %v2863, %v2833
        %v2865 = vadd.f32 %v2864, %v2834
        %v2866 = vadd.f32 %v2865, %v2835
        %v2867 = vadd.f32 %v2866, %v2836
        %v2868 = vadd.f32 %v2867, %v2837
        %v2869 = vadd.f32 %v2868, %v2838
        %v2870 = vadd.f32 %v2869, %v2839
        %v2871 = vadd.f32 %v2870, %v2840
        %v2872 = vadd.f32 %v2871, %v2841
        %v2873 = vadd.f32 %v2872, %v2842
        %v2874 = vadd.f32 %v2873, %v2843
        %v2875 = vadd.f32 %v2874, %v2844
        %v2876 = vadd.f32 %v2875, %v2845
        %v2877 = vadd.f32 %v2876, %v2846
        %2878 = vadd.xlane.f32.xlu0 %v2877
        %v2879 = vpop.xlane.xlu0 %2878
        %v2880 = vrot.slane %v2879, 4
        %v2881 = vadd.f32 %v2879, %v2880
        %v2882 = vrot.slane %v2881, 2
        %v2883 = vadd.f32 %v2881, %v2882
        %v2884 = vrot.slane %v2883, 1
        %v2885 = vadd.f32 %v2883, %v2884
        %s2886 = vtos %v2885
        %s2887 = sadd.f32 %s2886, 0.0
        %v2888 = vmul.f32 %v2831, %v2831
        %v2889 = vmul.f32 %v2832, %v2832
        %v2890 = vmul.f32 %v2833, %v2833
        %v2891 = vmul.f32 %v2834, %v2834
        %v2892 = vmul.f32 %v2835, %v2835
        %v2893 = vmul.f32 %v2836, %v2836
        %v2894 = vmul.f32 %v2837, %v2837
        %v2895 = vmul.f32 %v2838, %v2838
        %v2896 = vmul.f32 %v2839, %v2839
        %v2897 = vmul.f32 %v2840, %v2840
        %v2898 = vmul.f32 %v2841, %v2841
        %v2899 = vmul.f32 %v2842, %v2842
        %v2900 = vmul.f32 %v2843, %v2843
        %v2901 = vmul.f32 %v2844, %v2844
        %v2902 = vmul.f32 %v2845, %v2845
        %v2903 = vmul.f32 %v2846, %v2846
        %v2904 = vadd.f32 %v2888, %v2889
        %v2905 = vadd.f32 %v2904, %v2890
        %v2906 = vadd.f32 %v2905, %v2891
        %v2907 = vadd.f32 %v2906, %v2892
        %v2908 = vadd.f32 %v2907, %v2893
        %v2909 = vadd.f32 %v2908, %v2894
        %v2910 = vadd.f32 %v2909, %v2895
        %v2911 = vadd.f32 %v2910, %v2896
        %v2912 = vadd.f32 %v2911, %v2897
        %v2913 = vadd.f32 %v2912, %v2898
        %v2914 = vadd.f32 %v2913, %v2899
        %v2915 = vadd.f32 %v2914, %v2900
        %v2916 = vadd.f32 %v2915, %v2901
        %v2917 = vadd.f32 %v2916, %v2902
        %v2918 = vadd.f32 %v2917, %v2903
        %2919 = vadd.xlane.f32.xlu0 %v2918
        %v2920 = vpop.xlane.xlu0 %2919
        %v2921 = vrot.slane %v2920, 4
        %v2922 = vadd.f32 %v2920, %v2921
        %v2923 = vrot.slane %v2922, 2
        %v2924 = vadd.f32 %v2922, %v2923
        %v2925 = vrot.slane %v2924, 1
        %v2926 = vadd.f32 %v2924, %v2925
        %s2927 = vtos %v2926
        %s2928 = sadd.f32 %s2927, 0.0
        %v2929 = vld [vmem:[#allocation2 + $0x80] sm:$0xff]
        %v2930 = vld [vmem:[#allocation2 + $0x88] sm:$0xff]
        %v2931 = vld [vmem:[#allocation2 + $0x90] sm:$0xff]
        %v2932 = vld [vmem:[#allocation2 + $0x98] sm:$0xff]
        %v2933 = vld [vmem:[#allocation2 + $0xa0] sm:$0xff]
        %v2934 = vld [vmem:[#allocation2 + $0xa8] sm:$0xff]
        %v2935 = vld [vmem:[#allocation2 + $0xb0] sm:$0xff]
        %v2936 = vld [vmem:[#allocation2 + $0xb8] sm:$0xff]
        %v2937 = vld [vmem:[#allocation2 + $0xc0] sm:$0xff]
        %v2938 = vld [vmem:[#allocation2 + $0xc8] sm:$0xff]
        %v2939 = vld [vmem:[#allocation2 + $0xd0] sm:$0xff]
        %v2940 = vld [vmem:[#allocation2 + $0xd8] sm:$0xff]
        %v2941 = vld [vmem:[#allocation2 + $0xe0] sm:$0xff]
        %v2942 = vld [vmem:[#allocation2 + $0xe8] sm:$0xff]
        %v2943 = vld [vmem:[#allocation2 + $0xf0] sm:$0xff]
        %v2944 = vld [vmem:[#allocation2 + $0xf8] sm:$0xff]
        %v2945 = vrot.slane %v2929, 7
        %v2946 = vrot.slane %v2930, 7
        %v2947 = vrot.slane %v2931, 7
        %v2948 = vrot.slane %v2932, 7
        %v2949 = vrot.slane %v2933, 7
        %v2950 = vrot.slane %v2934, 7
        %v2951 = vrot.slane %v2935, 7
        %v2952 = vrot.slane %v2936, 7
        %v2953 = vrot.slane %v2937, 7
        %v2954 = vrot.slane %v2938, 7
        %v2955 = vrot.slane %v2939, 7
        %v2956 = vrot.slane %v2940, 7
        %v2957 = vrot.slane %v2941, 7
        %v2958 = vrot.slane %v2942, 7
        %v2959 = vrot.slane %v2943, 7
        %v2960 = vrot.slane %v2944, 7
        %v2961 = vsel %vm627, %v2959, %v2960
        %v2962 = vsel %vm627, %v2958, %v2959
        %v2963 = vsel %vm627, %v2957, %v2958
        %v2964 = vsel %vm627, %v2956, %v2957
        %v2965 = vsel %vm627, %v2955, %v2956
        %v2966 = vsel %vm627, %v2954, %v2955
        %v2967 = vsel %vm627, %v2953, %v2954
        %v2968 = vsel %vm627, %v2952, %v2953
        %v2969 = vsel %vm627, %v2951, %v2952
        %v2970 = vsel %vm627, %v2950, %v2951
        %v2971 = vsel %vm627, %v2949, %v2950
        %v2972 = vsel %vm627, %v2948, %v2949
        %v2973 = vsel %vm627, %v2947, %v2948
        %v2974 = vsel %vm627, %v2946, %v2947
        %v2975 = vsel %vm627, %v2945, %v2946
        %v2976 = vsel %vm627, %v2960, %v2945
        %v2977 = vmul.f32 %v2976, %v500
        %v2978 = vmul.f32 %v2975, %v501
        %v2979 = vmul.f32 %v2974, %v502
        %v2980 = vmul.f32 %v2973, %v503
        %v2981 = vmul.f32 %v2972, %v504
        %v2982 = vmul.f32 %v2971, %v505
        %v2983 = vmul.f32 %v2970, %v506
        %v2984 = vmul.f32 %v2969, %v507
        %v2985 = vmul.f32 %v2968, %v508
        %v2986 = vmul.f32 %v2967, %v509
        %v2987 = vmul.f32 %v2966, %v510
        %v2988 = vmul.f32 %v2965, %v511
        %v2989 = vmul.f32 %v2964, %v512
        %v2990 = vmul.f32 %v2963, %v513
        %v2991 = vmul.f32 %v2962, %v514
        %v2992 = vmul.f32 %v2961, %v515
        %v2993 = vld [vmem:[%s1] sm:$0xf]
        %v2994 = vld [vmem:[%s661] sm:$0xf]
        %v2996 = vsel %vm516, %v2929, 0
        %v2999 = vsel %vm516, %v2930, 0
        %v3002 = vsel %vm516, %v2931, 0
        %v3005 = vsel %vm516, %v2932, 0
        %v3008 = vsel %vm516, %v2933, 0
        %v3011 = vsel %vm516, %v2934, 0
        %v3014 = vsel %vm516, %v2935, 0
        %v3017 = vsel %vm516, %v2936, 0
        %v3020 = vsel %vm516, %v2937, 0
        %v3023 = vsel %vm516, %v2938, 0
        %v3026 = vsel %vm516, %v2939, 0
        %v3029 = vsel %vm516, %v2940, 0
        %v3032 = vsel %vm516, %v2941, 0
        %v3035 = vsel %vm516, %v2942, 0
        %v3038 = vsel %vm516, %v2943, 0
        %v3041 = vsel %vm516, %v2944, 0
        %v3044 = vsel %vm711, %v2994, 0
        %3046 = vmatprep.subr.mxu0 0.0
        %3047 = vmatpush1.msra.mxu0 %v3044
        %3048 = vmatprep.subr.mxu0 0.0
        %3049 = vmatpush1.msra.mxu0 0.0
        %3050 = vmatprep.subr.mxu0 0.0
        %3051 = vmatpush1.msra.mxu0 0.0
        %3052 = vmatprep.subr.mxu0 0.0
        %3053 = vmatpush1.msra.mxu0 0.0
        %3054 = vmatprep.subr.mxu0 0.0
        %3055 = vmatpush1.msra.mxu0 0.0
        %3056 = vmatprep.subr.mxu0 0.0
        %3057 = vmatpush1.msra.mxu0 0.0
        %3058 = vmatprep.subr.mxu0 0.0
        %3059 = vmatpush1.msra.mxu0 0.0
        %3060 = vmatprep.subr.mxu0 0.0
        %3061 = vmatpush1.msra.mxu0 0.0
        %3062 = vmatprep.subr.mxu0 0.0
        %3063 = vmatpush1.msra.mxu0 0.0
        %3064 = vmatprep.subr.mxu0 0.0
        %3065 = vmatpush1.msra.mxu0 0.0
        %3066 = vmatprep.subr.mxu0 0.0
        %3067 = vmatpush1.msra.mxu0 0.0
        %3068 = vmatprep.subr.mxu0 0.0
        %3069 = vmatpush1.msra.mxu0 0.0
        %3070 = vmatprep.subr.mxu0 0.0
        %3071 = vmatpush1.msra.mxu0 0.0
        %3072 = vmatprep.subr.mxu0 0.0
        %3073 = vmatpush1.msra.mxu0 0.0
        %3074 = vmatprep.subr.mxu0 0.0
        %3075 = vmatpush1.msra.mxu0 0.0
        %3076 = vmatprep.subr.mxu0 0.0
        %3077 = vmatpush1.msra.mxu0 0.0
        %3078 = vmatprep.subr.mxu0 0.0
        %3079 = vmatpush1.msra.mxu0 0.0
        %3080 = vmatprep.subr.mxu0 0.0
        %3081 = vmatpush1.msra.mxu0 0.0
        %3082 = vmatprep.subr.mxu0 0.0
        %3083 = vmatpush1.msra.mxu0 0.0
        %3084 = vmatprep.subr.mxu0 0.0
        %3085 = vmatpush1.msra.mxu0 0.0
        %3086 = vmatprep.subr.mxu0 0.0
        %3087 = vmatpush1.msra.mxu0 0.0
        %3088 = vmatprep.subr.mxu0 0.0
        %3089 = vmatpush1.msra.mxu0 0.0
        %3090 = vmatprep.subr.mxu0 0.0
        %3091 = vmatpush1.msra.mxu0 0.0
        %3092 = vmatprep.subr.mxu0 0.0
        %3093 = vmatpush1.msra.mxu0 0.0
        %3094 = vmatprep.subr.mxu0 0.0
        %3095 = vmatpush1.msra.mxu0 0.0
        %3096 = vmatprep.subr.mxu0 0.0
        %3097 = vmatpush1.msra.mxu0 0.0
        %3098 = vmatprep.subr.mxu0 0.0
        %3099 = vmatpush1.msra.mxu0 0.0
        %3100 = vmatprep.subr.mxu0 0.0
        %3101 = vmatpush1.msra.mxu0 0.0
        %3102 = vmatprep.subr.mxu0 0.0
        %3103 = vmatpush1.msra.mxu0 0.0
        %3104 = vmatprep.subr.mxu0 0.0
        %3105 = vmatpush1.msra.mxu0 0.0
        %3106 = vmatprep.subr.mxu0 0.0
        %3107 = vmatpush1.msra.mxu0 0.0
        %3108 = vmatprep.subr.mxu0 0.0
        %3109 = vmatpush1.msra.mxu0 0.0
        %3110 = vmatprep.mubr.f32.mxu0 0.0
        %3111 = vmatmul.mubr.f32.gmra.mrb[0].mxu0 %v2996
        %v3112 = vpop.f32.mrb[0].mxu0
        %v3113 = vadd.f32 0.0, %v3112
        %v3114 = vpop.f32.mrb[0].mxu0
        %3115 = vmatprep.mubr.f32.mxu0 0.0
        %3116 = vmatmul.mubr.f32.gmra.mrb[0].mxu0 %v2999
        %v3117 = vpop.f32.mrb[0].mxu0
        %v3118 = vadd.f32 0.0, %v3117
        %v3119 = vpop.f32.mrb[0].mxu0
        %3120 = vmatprep.mubr.f32.mxu0 0.0
        %3121 = vmatmul.mubr.f32.gmra.mrb[0].mxu0 %v3002
        %v3122 = vpop.f32.mrb[0].mxu0
        %v3123 = vadd.f32 0.0, %v3122
        %v3124 = vpop.f32.mrb[0].mxu0
        %3125 = vmatprep.mubr.f32.mxu0 0.0
        %3126 = vmatmul.mubr.f32.gmra.mrb[0].mxu0 %v3005
        %v3127 = vpop.f32.mrb[0].mxu0
        %v3128 = vadd.f32 0.0, %v3127
        %v3129 = vpop.f32.mrb[0].mxu0
        %3130 = vmatprep.mubr.f32.mxu0 0.0
        %3131 = vmatmul.mubr.f32.gmra.mrb[0].mxu0 %v3008
        %v3132 = vpop.f32.mrb[0].mxu0
        %v3133 = vadd.f32 0.0, %v3132
        %v3134 = vpop.f32.mrb[0].mxu0
        %3135 = vmatprep.mubr.f32.mxu0 0.0
        %3136 = vmatmul.mubr.f32.gmra.mrb[0].mxu0 %v3011
        %v3137 = vpop.f32.mrb[0].mxu0
        %v3138 = vadd.f32 0.0, %v3137
        %v3139 = vpop.f32.mrb[0].mxu0
        %3140 = vmatprep.mubr.f32.mxu0 0.0
        %3141 = vmatmul.mubr.f32.gmra.mrb[0].mxu0 %v3014
        %v3142 = vpop.f32.mrb[0].mxu0
        %v3143 = vadd.f32 0.0, %v3142
        %v3144 = vpop.f32.mrb[0].mxu0
        %3145 = vmatprep.mubr.f32.mxu0 0.0
        %3146 = vmatmul.mubr.f32.gmra.mrb[0].mxu0 %v3017
        %v3147 = vpop.f32.mrb[0].mxu0
        %v3148 = vadd.f32 0.0, %v3147
        %v3149 = vpop.f32.mrb[0].mxu0
        %3150 = vmatprep.mubr.f32.mxu0 0.0
        %3151 = vmatmul.mubr.f32.gmra.mrb[0].mxu0 %v3020
        %v3152 = vpop.f32.mrb[0].mxu0
        %v3153 = vadd.f32 0.0, %v3152
        %v3154 = vpop.f32.mrb[0].mxu0
        %3155 = vmatprep.mubr.f32.mxu0 0.0
        %3156 = vmatmul.mubr.f32.gmra.mrb[0].mxu0 %v3023
        %v3157 = vpop.f32.mrb[0].mxu0
        %v3158 = vadd.f32 0.0, %v3157
        %v3159 = vpop.f32.mrb[0].mxu0
        %3160 = vmatprep.mubr.f32.mxu0 0.0
        %3161 = vmatmul.mubr.f32.gmra.mrb[0].mxu0 %v3026
        %v3162 = vpop.f32.mrb[0].mxu0
        %v3163 = vadd.f32 0.0, %v3162
        %v3164 = vpop.f32.mrb[0].mxu0
        %3165 = vmatprep.mubr.f32.mxu0 0.0
        %3166 = vmatmul.mubr.f32.gmra.mrb[0].mxu0 %v3029
        %v3167 = vpop.f32.mrb[0].mxu0
        %v3168 = vadd.f32 0.0, %v3167
        %v3169 = vpop.f32.mrb[0].mxu0
        %3170 = vmatprep.mubr.f32.mxu0 0.0
        %3171 = vmatmul.mubr.f32.gmra.mrb[0].mxu0 %v3032
        %v3172 = vpop.f32.mrb[0].mxu0
        %v3173 = vadd.f32 0.0, %v3172
        %v3174 = vpop.f32.mrb[0].mxu0
        %3175 = vmatprep.mubr.f32.mxu0 0.0
        %3176 = vmatmul.mubr.f32.gmra.mrb[0].mxu0 %v3035
        %v3177 = vpop.f32.mrb[0].mxu0
        %v3178 = vadd.f32 0.0, %v3177
        %v3179 = vpop.f32.mrb[0].mxu0
        %3180 = vmatprep.mubr.f32.mxu0 0.0
        %3181 = vmatmul.mubr.f32.gmra.mrb[0].mxu0 %v3038
        %v3182 = vpop.f32.mrb[0].mxu0
        %v3183 = vadd.f32 0.0, %v3182
        %v3184 = vpop.f32.mrb[0].mxu0
        %3185 = vmatprep.mubr.f32.mxu0 0.0
        %3186 = vmatmul.mubr.f32.gmra.mrb[0].mxu0 %v3041
        %v3187 = vpop.f32.mrb[0].mxu0
        %v3188 = vadd.f32 0.0, %v3187
        %v3189 = vpop.f32.mrb[0].mxu0
        %3190 = vdwg.mxu0
        %v3192 = vsel %vm516, %v2977, 0
        %v3195 = vsel %vm516, %v2978, 0
        %v3198 = vsel %vm516, %v2979, 0
        %v3201 = vsel %vm516, %v2980, 0
        %v3204 = vsel %vm516, %v2981, 0
        %v3207 = vsel %vm516, %v2982, 0
        %v3210 = vsel %vm516, %v2983, 0
        %v3213 = vsel %vm516, %v2984, 0
        %v3216 = vsel %vm516, %v2985, 0
        %v3219 = vsel %vm516, %v2986, 0
        %v3222 = vsel %vm516, %v2987, 0
        %v3225 = vsel %vm516, %v2988, 0
        %v3228 = vsel %vm516, %v2989, 0
        %v3231 = vsel %vm516, %v2990, 0
        %v3234 = vsel %vm516, %v2991, 0
        %v3237 = vsel %vm516, %v2992, 0
        %v3240 = vsel %vm711, %v2993, 0
        %3242 = vmatprep.subr.mxu0 0.0
        %3243 = vmatpush1.msra.mxu0 %v3240
        %3244 = vmatprep.subr.mxu0 0.0
        %3245 = vmatpush1.msra.mxu0 0.0
        %3246 = vmatprep.subr.mxu0 0.0
        %3247 = vmatpush1.msra.mxu0 0.0
        %3248 = vmatprep.subr.mxu0 0.0
        %3249 = vmatpush1.msra.mxu0 0.0
        %3250 = vmatprep.subr.mxu0 0.0
        %3251 = vmatpush1.msra.mxu0 0.0
        %3252 = vmatprep.subr.mxu0 0.0
        %3253 = vmatpush1.msra.mxu0 0.0
        %3254 = vmatprep.subr.mxu0 0.0
        %3255 = vmatpush1.msra.mxu0 0.0
        %3256 = vmatprep.subr.mxu0 0.0
        %3257 = vmatpush1.msra.mxu0 0.0
        %3258 = vmatprep.subr.mxu0 0.0
        %3259 = vmatpush1.msra.mxu0 0.0
        %3260 = vmatprep.subr.mxu0 0.0
        %3261 = vmatpush1.msra.mxu0 0.0
        %3262 = vmatprep.subr.mxu0 0.0
        %3263 = vmatpush1.msra.mxu0 0.0
        %3264 = vmatprep.subr.mxu0 0.0
        %3265 = vmatpush1.msra.mxu0 0.0
        %3266 = vmatprep.subr.mxu0 0.0
        %3267 = vmatpush1.msra.mxu0 0.0
        %3268 = vmatprep.subr.mxu0 0.0
        %3269 = vmatpush1.msra.mxu0 0.0
        %3270 = vmatprep.subr.mxu0 0.0
        %3271 = vmatpush1.msra.mxu0 0.0
        %3272 = vmatprep.subr.mxu0 0.0
        %3273 = vmatpush1.msra.mxu0 0.0
        %3274 = vmatprep.subr.mxu0 0.0
        %3275 = vmatpush1.msra.mxu0 0.0
        %3276 = vmatprep.subr.mxu0 0.0
        %3277 = vmatpush1.msra.mxu0 0.0
        %3278 = vmatprep.subr.mxu0 0.0
        %3279 = vmatpush1.msra.mxu0 0.0
        %3280 = vmatprep.subr.mxu0 0.0
        %3281 = vmatpush1.msra.mxu0 0.0
        %3282 = vmatprep.subr.mxu0 0.0
        %3283 = vmatpush1.msra.mxu0 0.0
        %3284 = vmatprep.subr.mxu0 0.0
        %3285 = vmatpush1.msra.mxu0 0.0
        %3286 = vmatprep.subr.mxu0 0.0
        %3287 = vmatpush1.msra.mxu0 0.0
        %3288 = vmatprep.subr.mxu0 0.0
        %3289 = vmatpush1.msra.mxu0 0.0
        %3290 = vmatprep.subr.mxu0 0.0
        %3291 = vmatpush1.msra.mxu0 0.0
        %3292 = vmatprep.subr.mxu0 0.0
        %3293 = vmatpush1.msra.mxu0 0.0
        %3294 = vmatprep.subr.mxu0 0.0
        %3295 = vmatpush1.msra.mxu0 0.0
        %3296 = vmatprep.subr.mxu0 0.0
        %3297 = vmatpush1.msra.mxu0 0.0
        %3298 = vmatprep.subr.mxu0 0.0
        %3299 = vmatpush1.msra.mxu0 0.0
        %3300 = vmatprep.subr.mxu0 0.0
        %3301 = vmatpush1.msra.mxu0 0.0
        %3302 = vmatprep.subr.mxu0 0.0
        %3303 = vmatpush1.msra.mxu0 0.0
        %3304 = vmatprep.subr.mxu0 0.0
        %3305 = vmatpush1.msra.mxu0 0.0
        %3306 = vmatprep.mubr.f32.mxu0 0.0
        %3307 = vmatmul.mubr.f32.gmra.mrb[0].mxu0 %v3192
        %v3308 = vpop.f32.mrb[0].mxu0
        %v3309 = vadd.f32 %v3113, %v3308
        %v3310 = vpop.f32.mrb[0].mxu0
        %3311 = vmatprep.mubr.f32.mxu0 0.0
        %3312 = vmatmul.mubr.f32.gmra.mrb[0].mxu0 %v3195
        %v3313 = vpop.f32.mrb[0].mxu0
        %v3314 = vadd.f32 %v3118, %v3313
        %v3315 = vpop.f32.mrb[0].mxu0
        %3316 = vmatprep.mubr.f32.mxu0 0.0
        %3317 = vmatmul.mubr.f32.gmra.mrb[0].mxu0 %v3198
        %v3318 = vpop.f32.mrb[0].mxu0
        %v3319 = vadd.f32 %v3123, %v3318
        %v3320 = vpop.f32.mrb[0].mxu0
        %3321 = vmatprep.mubr.f32.mxu0 0.0
        %3322 = vmatmul.mubr.f32.gmra.mrb[0].mxu0 %v3201
        %v3323 = vpop.f32.mrb[0].mxu0
        %v3324 = vadd.f32 %v3128, %v3323
        %v3325 = vpop.f32.mrb[0].mxu0
        %3326 = vmatprep.mubr.f32.mxu0 0.0
        %3327 = vmatmul.mubr.f32.gmra.mrb[0].mxu0 %v3204
        %v3328 = vpop.f32.mrb[0].mxu0
        %v3329 = vadd.f32 %v3133, %v3328
        %v3330 = vpop.f32.mrb[0].mxu0
        %3331 = vmatprep.mubr.f32.mxu0 0.0
        %3332 = vmatmul.mubr.f32.gmra.mrb[0].mxu0 %v3207
        %v3333 = vpop.f32.mrb[0].mxu0
        %v3334 = vadd.f32 %v3138, %v3333
        %v3335 = vpop.f32.mrb[0].mxu0
        %3336 = vmatprep.mubr.f32.mxu0 0.0
        %3337 = vmatmul.mubr.f32.gmra.mrb[0].mxu0 %v3210
        %v3338 = vpop.f32.mrb[0].mxu0
        %v3339 = vadd.f32 %v3143, %v3338
        %v3340 = vpop.f32.mrb[0].mxu0
        %3341 = vmatprep.mubr.f32.mxu0 0.0
        %3342 = vmatmul.mubr.f32.gmra.mrb[0].mxu0 %v3213
        %v3343 = vpop.f32.mrb[0].mxu0
        %v3344 = vadd.f32 %v3148, %v3343
        %v3345 = vpop.f32.mrb[0].mxu0
        %3346 = vmatprep.mubr.f32.mxu0 0.0
        %3347 = vmatmul.mubr.f32.gmra.mrb[0].mxu0 %v3216
        %v3348 = vpop.f32.mrb[0].mxu0
        %v3349 = vadd.f32 %v3153, %v3348
        %v3350 = vpop.f32.mrb[0].mxu0
        %3351 = vmatprep.mubr.f32.mxu0 0.0
        %3352 = vmatmul.mubr.f32.gmra.mrb[0].mxu0 %v3219
        %v3353 = vpop.f32.mrb[0].mxu0
        %v3354 = vadd.f32 %v3158, %v3353
        %v3355 = vpop.f32.mrb[0].mxu0
        %3356 = vmatprep.mubr.f32.mxu0 0.0
        %3357 = vmatmul.mubr.f32.gmra.mrb[0].mxu0 %v3222
        %v3358 = vpop.f32.mrb[0].mxu0
        %v3359 = vadd.f32 %v3163, %v3358
        %v3360 = vpop.f32.mrb[0].mxu0
        %3361 = vmatprep.mubr.f32.mxu0 0.0
        %3362 = vmatmul.mubr.f32.gmra.mrb[0].mxu0 %v3225
        %v3363 = vpop.f32.mrb[0].mxu0
        %v3364 = vadd.f32 %v3168, %v3363
        %v3365 = vpop.f32.mrb[0].mxu0
        %3366 = vmatprep.mubr.f32.mxu0 0.0
        %3367 = vmatmul.mubr.f32.gmra.mrb[0].mxu0 %v3228
        %v3368 = vpop.f32.mrb[0].mxu0
        %v3369 = vadd.f32 %v3173, %v3368
        %v3370 = vpop.f32.mrb[0].mxu0
        %3371 = vmatprep.mubr.f32.mxu0 0.0
        %3372 = vmatmul.mubr.f32.gmra.mrb[0].mxu0 %v3231
        %v3373 = vpop.f32.mrb[0].mxu0
        %v3374 = vadd.f32 %v3178, %v3373
        %v3375 = vpop.f32.mrb[0].mxu0
        %3376 = vmatprep.mubr.f32.mxu0 0.0
        %3377 = vmatmul.mubr.f32.gmra.mrb[0].mxu0 %v3234
        %v3378 = vpop.f32.mrb[0].mxu0
        %v3379 = vadd.f32 %v3183, %v3378
        %v3380 = vpop.f32.mrb[0].mxu0
        %3381 = vmatprep.mubr.f32.mxu0 0.0
        %3382 = vmatmul.mubr.f32.gmra.mrb[0].mxu0 %v3237
        %v3383 = vpop.f32.mrb[0].mxu0
        %v3384 = vadd.f32 %v3188, %v3383
        %v3385 = vpop.f32.mrb[0].mxu0
        %3386 = vdwg.mxu0
        %v3387 = vrot.slane %v2929, 1
        %v3388 = vrot.slane %v2930, 1
        %v3389 = vrot.slane %v2931, 1
        %v3390 = vrot.slane %v2932, 1
        %v3391 = vrot.slane %v2933, 1
        %v3392 = vrot.slane %v2934, 1
        %v3393 = vrot.slane %v2935, 1
        %v3394 = vrot.slane %v2936, 1
        %v3395 = vrot.slane %v2937, 1
        %v3396 = vrot.slane %v2938, 1
        %v3397 = vrot.slane %v2939, 1
        %v3398 = vrot.slane %v2940, 1
        %v3399 = vrot.slane %v2941, 1
        %v3400 = vrot.slane %v2942, 1
        %v3401 = vrot.slane %v2943, 1
        %v3402 = vrot.slane %v2944, 1
        %v3403 = vsel %vm1072, %v3401, %v3402
        %v3404 = vsel %vm1072, %v3400, %v3401
        %v3405 = vsel %vm1072, %v3399, %v3400
        %v3406 = vsel %vm1072, %v3398, %v3399
        %v3407 = vsel %vm1072, %v3397, %v3398
        %v3408 = vsel %vm1072, %v3396, %v3397
        %v3409 = vsel %vm1072, %v3395, %v3396
        %v3410 = vsel %vm1072, %v3394, %v3395
        %v3411 = vsel %vm1072, %v3393, %v3394
        %v3412 = vsel %vm1072, %v3392, %v3393
        %v3413 = vsel %vm1072, %v3391, %v3392
        %v3414 = vsel %vm1072, %v3390, %v3391
        %v3415 = vsel %vm1072, %v3389, %v3390
        %v3416 = vsel %vm1072, %v3388, %v3389
        %v3417 = vsel %vm1072, %v3387, %v3388
        %v3418 = vsel %vm1072, %v3402, %v3387
        %v3419 = vmul.f32 %v3417, %v452
        %v3420 = vmul.f32 %v3416, %v453
        %v3421 = vmul.f32 %v3415, %v454
        %v3422 = vmul.f32 %v3414, %v455
        %v3423 = vmul.f32 %v3413, %v456
        %v3424 = vmul.f32 %v3412, %v457
        %v3425 = vmul.f32 %v3411, %v458
        %v3426 = vmul.f32 %v3410, %v459
        %v3427 = vmul.f32 %v3409, %v460
        %v3428 = vmul.f32 %v3408, %v461
        %v3429 = vmul.f32 %v3407, %v462
        %v3430 = vmul.f32 %v3406, %v463
        %v3431 = vmul.f32 %v3405, %v464
        %v3432 = vmul.f32 %v3404, %v465
        %v3433 = vmul.f32 %v3403, %v466
        %v3434 = vmul.f32 %v3418, %v467
        %v3435 = vld [vmem:[%s1105] sm:$0xf]
        %v3437 = vsel %vm516, %v3419, 0
        %v3440 = vsel %vm516, %v3420, 0
        %v3443 = vsel %vm516, %v3421, 0
        %v3446 = vsel %vm516, %v3422, 0
        %v3449 = vsel %vm516, %v3423, 0
        %v3452 = vsel %vm516, %v3424, 0
        %v3455 = vsel %vm516, %v3425, 0
        %v3458 = vsel %vm516, %v3426, 0
        %v3461 = vsel %vm516, %v3427, 0
        %v3464 = vsel %vm516, %v3428, 0
        %v3467 = vsel %vm516, %v3429, 0
        %v3470 = vsel %vm516, %v3430, 0
        %v3473 = vsel %vm516, %v3431, 0
        %v3476 = vsel %vm516, %v3432, 0
        %v3479 = vsel %vm516, %v3433, 0
        %v3482 = vsel %vm516, %v3434, 0
        %v3485 = vsel %vm711, %v3435, 0
        %3487 = vmatprep.subr.mxu0 0.0
        %3488 = vmatpush1.msra.mxu0 %v3485
        %3489 = vmatprep.subr.mxu0 0.0
        %3490 = vmatpush1.msra.mxu0 0.0
        %3491 = vmatprep.subr.mxu0 0.0
        %3492 = vmatpush1.msra.mxu0 0.0
        %3493 = vmatprep.subr.mxu0 0.0
        %3494 = vmatpush1.msra.mxu0 0.0
        %3495 = vmatprep.subr.mxu0 0.0
        %3496 = vmatpush1.msra.mxu0 0.0
        %3497 = vmatprep.subr.mxu0 0.0
        %3498 = vmatpush1.msra.mxu0 0.0
        %3499 = vmatprep.subr.mxu0 0.0
        %3500 = vmatpush1.msra.mxu0 0.0
        %3501 = vmatprep.subr.mxu0 0.0
        %3502 = vmatpush1.msra.mxu0 0.0
        %3503 = vmatprep.subr.mxu0 0.0
        %3504 = vmatpush1.msra.mxu0 0.0
        %3505 = vmatprep.subr.mxu0 0.0
        %3506 = vmatpush1.msra.mxu0 0.0
        %3507 = vmatprep.subr.mxu0 0.0
        %3508 = vmatpush1.msra.mxu0 0.0
        %3509 = vmatprep.subr.mxu0 0.0
        %3510 = vmatpush1.msra.mxu0 0.0
        %3511 = vmatprep.subr.mxu0 0.0
        %3512 = vmatpush1.msra.mxu0 0.0
        %3513 = vmatprep.subr.mxu0 0.0
        %3514 = vmatpush1.msra.mxu0 0.0
        %3515 = vmatprep.subr.mxu0 0.0
        %3516 = vmatpush1.msra.mxu0 0.0
        %3517 = vmatprep.subr.mxu0 0.0
        %3518 = vmatpush1.msra.mxu0 0.0
        %3519 = vmatprep.subr.mxu0 0.0
        %3520 = vmatpush1.msra.mxu0 0.0
        %3521 = vmatprep.subr.mxu0 0.0
        %3522 = vmatpush1.msra.mxu0 0.0
        %3523 = vmatprep.subr.mxu0 0.0
        %3524 = vmatpush1.msra.mxu0 0.0
        %3525 = vmatprep.subr.mxu0 0.0
        %3526 = vmatpush1.msra.mxu0 0.0
        %3527 = vmatprep.subr.mxu0 0.0
        %3528 = vmatpush1.msra.mxu0 0.0
        %3529 = vmatprep.subr.mxu0 0.0
        %3530 = vmatpush1.msra.mxu0 0.0
        %3531 = vmatprep.subr.mxu0 0.0
        %3532 = vmatpush1.msra.mxu0 0.0
        %3533 = vmatprep.subr.mxu0 0.0
        %3534 = vmatpush1.msra.mxu0 0.0
        %3535 = vmatprep.subr.mxu0 0.0
        %3536 = vmatpush1.msra.mxu0 0.0
        %3537 = vmatprep.subr.mxu0 0.0
        %3538 = vmatpush1.msra.mxu0 0.0
        %3539 = vmatprep.subr.mxu0 0.0
        %3540 = vmatpush1.msra.mxu0 0.0
        %3541 = vmatprep.subr.mxu0 0.0
        %3542 = vmatpush1.msra.mxu0 0.0
        %3543 = vmatprep.subr.mxu0 0.0
        %3544 = vmatpush1.msra.mxu0 0.0
        %3545 = vmatprep.subr.mxu0 0.0
        %3546 = vmatpush1.msra.mxu0 0.0
        %3547 = vmatprep.subr.mxu0 0.0
        %3548 = vmatpush1.msra.mxu0 0.0
        %3549 = vmatprep.subr.mxu0 0.0
        %3550 = vmatpush1.msra.mxu0 0.0
        %3551 = vmatprep.mubr.f32.mxu0 0.0
        %3552 = vmatmul.mubr.f32.gmra.mrb[0].mxu0 %v3437
        %v3553 = vpop.f32.mrb[0].mxu0
        %v3554 = vadd.f32 0.0, %v3553
        %v3555 = vpop.f32.mrb[0].mxu0
        %3556 = vmatprep.mubr.f32.mxu0 0.0
        %3557 = vmatmul.mubr.f32.gmra.mrb[0].mxu0 %v3440
        %v3558 = vpop.f32.mrb[0].mxu0
        %v3559 = vadd.f32 0.0, %v3558
        %v3560 = vpop.f32.mrb[0].mxu0
        %3561 = vmatprep.mubr.f32.mxu0 0.0
        %3562 = vmatmul.mubr.f32.gmra.mrb[0].mxu0 %v3443
        %v3563 = vpop.f32.mrb[0].mxu0
        %v3564 = vadd.f32 0.0, %v3563
        %v3565 = vpop.f32.mrb[0].mxu0
        %3566 = vmatprep.mubr.f32.mxu0 0.0
        %3567 = vmatmul.mubr.f32.gmra.mrb[0].mxu0 %v3446
        %v3568 = vpop.f32.mrb[0].mxu0
        %v3569 = vadd.f32 0.0, %v3568
        %v3570 = vpop.f32.mrb[0].mxu0
        %3571 = vmatprep.mubr.f32.mxu0 0.0
        %3572 = vmatmul.mubr.f32.gmra.mrb[0].mxu0 %v3449
        %v3573 = vpop.f32.mrb[0].mxu0
        %v3574 = vadd.f32 0.0, %v3573
        %v3575 = vpop.f32.mrb[0].mxu0
        %3576 = vmatprep.mubr.f32.mxu0 0.0
        %3577 = vmatmul.mubr.f32.gmra.mrb[0].mxu0 %v3452
        %v3578 = vpop.f32.mrb[0].mxu0
        %v3579 = vadd.f32 0.0, %v3578
        %v3580 = vpop.f32.mrb[0].mxu0
        %3581 = vmatprep.mubr.f32.mxu0 0.0
        %3582 = vmatmul.mubr.f32.gmra.mrb[0].mxu0 %v3455
        %v3583 = vpop.f32.mrb[0].mxu0
        %v3584 = vadd.f32 0.0, %v3583
        %v3585 = vpop.f32.mrb[0].mxu0
        %3586 = vmatprep.mubr.f32.mxu0 0.0
        %3587 = vmatmul.mubr.f32.gmra.mrb[0].mxu0 %v3458
        %v3588 = vpop.f32.mrb[0].mxu0
        %v3589 = vadd.f32 0.0, %v3588
        %v3590 = vpop.f32.mrb[0].mxu0
        %3591 = vmatprep.mubr.f32.mxu0 0.0
        %3592 = vmatmul.mubr.f32.gmra.mrb[0].mxu0 %v3461
        %v3593 = vpop.f32.mrb[0].mxu0
        %v3594 = vadd.f32 0.0, %v3593
        %v3595 = vpop.f32.mrb[0].mxu0
        %3596 = vmatprep.mubr.f32.mxu0 0.0
        %3597 = vmatmul.mubr.f32.gmra.mrb[0].mxu0 %v3464
        %v3598 = vpop.f32.mrb[0].mxu0
        %v3599 = vadd.f32 0.0, %v3598
        %v3600 = vpop.f32.mrb[0].mxu0
        %3601 = vmatprep.mubr.f32.mxu0 0.0
        %3602 = vmatmul.mubr.f32.gmra.mrb[0].mxu0 %v3467
        %v3603 = vpop.f32.mrb[0].mxu0
        %v3604 = vadd.f32 0.0, %v3603
        %v3605 = vpop.f32.mrb[0].mxu0
        %3606 = vmatprep.mubr.f32.mxu0 0.0
        %3607 = vmatmul.mubr.f32.gmra.mrb[0].mxu0 %v3470
        %v3608 = vpop.f32.mrb[0].mxu0
        %v3609 = vadd.f32 0.0, %v3608
        %v3610 = vpop.f32.mrb[0].mxu0
        %3611 = vmatprep.mubr.f32.mxu0 0.0
        %3612 = vmatmul.mubr.f32.gmra.mrb[0].mxu0 %v3473
        %v3613 = vpop.f32.mrb[0].mxu0
        %v3614 = vadd.f32 0.0, %v3613
        %v3615 = vpop.f32.mrb[0].mxu0
        %3616 = vmatprep.mubr.f32.mxu0 0.0
        %3617 = vmatmul.mubr.f32.gmra.mrb[0].mxu0 %v3476
        %v3618 = vpop.f32.mrb[0].mxu0
        %v3619 = vadd.f32 0.0, %v3618
        %v3620 = vpop.f32.mrb[0].mxu0
        %3621 = vmatprep.mubr.f32.mxu0 0.0
        %3622 = vmatmul.mubr.f32.gmra.mrb[0].mxu0 %v3479
        %v3623 = vpop.f32.mrb[0].mxu0
        %v3624 = vadd.f32 0.0, %v3623
        %v3625 = vpop.f32.mrb[0].mxu0
        %3626 = vmatprep.mubr.f32.mxu0 0.0
        %3627 = vmatmul.mubr.f32.gmra.mrb[0].mxu0 %v3482
        %v3628 = vpop.f32.mrb[0].mxu0
        %v3629 = vadd.f32 0.0, %v3628
        %v3630 = vpop.f32.mrb[0].mxu0
        %3631 = vdwg.mxu0
        %v3632 = vadd.f32 %v3309, %v3554
        %v3633 = vadd.f32 %v3314, %v3559
        %v3634 = vadd.f32 %v3319, %v3564
        %v3635 = vadd.f32 %v3324, %v3569
        %v3636 = vadd.f32 %v3329, %v3574
        %v3637 = vadd.f32 %v3334, %v3579
        %v3638 = vadd.f32 %v3339, %v3584
        %v3639 = vadd.f32 %v3344, %v3589
        %v3640 = vadd.f32 %v3349, %v3594
        %v3641 = vadd.f32 %v3354, %v3599
        %v3642 = vadd.f32 %v3359, %v3604
        %v3643 = vadd.f32 %v3364, %v3609
        %v3644 = vadd.f32 %v3369, %v3614
        %v3645 = vadd.f32 %v3374, %v3619
        %v3646 = vadd.f32 %v3379, %v3624
        %v3647 = vadd.f32 %v3384, %v3629
        %v3648 = vld [vmem:[#allocation2 + $0x90] sm:$0xff]
        %v3649 = vld [vmem:[#allocation2 + $0x98] sm:$0xff]
        %v3650 = vld [vmem:[#allocation2 + $0xa0] sm:$0xff]
        %v3651 = vld [vmem:[#allocation2 + $0xa8] sm:$0xff]
        %v3652 = vld [vmem:[#allocation2 + $0xb0] sm:$0xff]
        %v3653 = vld [vmem:[#allocation2 + $0xb8] sm:$0xff]
        %v3654 = vld [vmem:[#allocation2 + $0xc0] sm:$0xff]
        %v3655 = vld [vmem:[#allocation2 + $0xc8] sm:$0xff]
        %v3656 = vld [vmem:[#allocation2 + $0xd0] sm:$0xff]
        %v3657 = vld [vmem:[#allocation2 + $0xd8] sm:$0xff]
        %v3658 = vld [vmem:[#allocation2 + $0xe0] sm:$0xff]
        %v3659 = vld [vmem:[#allocation2 + $0xe8] sm:$0xff]
        %v3660 = vld [vmem:[#allocation2 + $0xf0] sm:$0xff]
        %v3661 = vld [vmem:[#allocation2 + $0xf8] sm:$0xff]
        %v3662 = vld [vmem:[#allocation2 + $0x100] sm:$0xff]
        %v3663 = vld [vmem:[#allocation2 + $0x108] sm:$0xff]
        %v3664 = vrot.slane %v3648, 7
        %v3665 = vrot.slane %v3649, 7
        %v3666 = vrot.slane %v3650, 7
        %v3667 = vrot.slane %v3651, 7
        %v3668 = vrot.slane %v3652, 7
        %v3669 = vrot.slane %v3653, 7
        %v3670 = vrot.slane %v3654, 7
        %v3671 = vrot.slane %v3655, 7
        %v3672 = vrot.slane %v3656, 7
        %v3673 = vrot.slane %v3657, 7
        %v3674 = vrot.slane %v3658, 7
        %v3675 = vrot.slane %v3659, 7
        %v3676 = vrot.slane %v3660, 7
        %v3677 = vrot.slane %v3661, 7
        %v3678 = vrot.slane %v3662, 7
        %v3679 = vrot.slane %v3663, 7
        %v3680 = vsel %vm627, %v3678, %v3679
        %v3681 = vsel %vm627, %v3677, %v3678
        %v3682 = vsel %vm627, %v3676, %v3677
        %v3683 = vsel %vm627, %v3675, %v3676
        %v3684 = vsel %vm627, %v3674, %v3675
        %v3685 = vsel %vm627, %v3673, %v3674
        %v3686 = vsel %vm627, %v3672, %v3673
        %v3687 = vsel %vm627, %v3671, %v3672
        %v3688 = vsel %vm627, %v3670, %v3671
        %v3689 = vsel %vm627, %v3669, %v3670
        %v3690 = vsel %vm627, %v3668, %v3669
        %v3691 = vsel %vm627, %v3667, %v3668
        %v3692 = vsel %vm627, %v3666, %v3667
        %v3693 = vsel %vm627, %v3665, %v3666
        %v3694 = vsel %vm627, %v3664, %v3665
        %v3695 = vsel %vm627, %v3679, %v3664
        %v3696 = vmul.f32 %v3695, %v500
        %v3697 = vmul.f32 %v3694, %v501
        %v3698 = vmul.f32 %v3693, %v502
        %v3699 = vmul.f32 %v3692, %v503
        %v3700 = vmul.f32 %v3691, %v504
        %v3701 = vmul.f32 %v3690, %v505
        %v3702 = vmul.f32 %v3689, %v506
        %v3703 = vmul.f32 %v3688, %v507
        %v3704 = vmul.f32 %v3687, %v508
        %v3705 = vmul.f32 %v3686, %v509
        %v3706 = vmul.f32 %v3685, %v510
        %v3707 = vmul.f32 %v3684, %v511
        %v3708 = vmul.f32 %v3683, %v512
        %v3709 = vmul.f32 %v3682, %v513
        %v3710 = vmul.f32 %v3681, %v514
        %v3711 = vmul.f32 %v3680, %v515
        %v3712 = vld [vmem:[%s1383] sm:$0xf]
        %v3714 = vsel %vm516, %v3696, 0
        %v3717 = vsel %vm516, %v3697, 0
        %v3720 = vsel %vm516, %v3698, 0
        %v3723 = vsel %vm516, %v3699, 0
        %v3726 = vsel %vm516, %v3700, 0
        %v3729 = vsel %vm516, %v3701, 0
        %v3732 = vsel %vm516, %v3702, 0
        %v3735 = vsel %vm516, %v3703, 0
        %v3738 = vsel %vm516, %v3704, 0
        %v3741 = vsel %vm516, %v3705, 0
        %v3744 = vsel %vm516, %v3706, 0
        %v3747 = vsel %vm516, %v3707, 0
        %v3750 = vsel %vm516, %v3708, 0
        %v3753 = vsel %vm516, %v3709, 0
        %v3756 = vsel %vm516, %v3710, 0
        %v3759 = vsel %vm516, %v3711, 0
        %v3762 = vsel %vm711, %v3712, 0
        %3764 = vmatprep.subr.mxu0 0.0
        %3765 = vmatpush1.msra.mxu0 %v3762
        %3766 = vmatprep.subr.mxu0 0.0
        %3767 = vmatpush1.msra.mxu0 0.0
        %3768 = vmatprep.subr.mxu0 0.0
        %3769 = vmatpush1.msra.mxu0 0.0
        %3770 = vmatprep.subr.mxu0 0.0
        %3771 = vmatpush1.msra.mxu0 0.0
        %3772 = vmatprep.subr.mxu0 0.0
        %3773 = vmatpush1.msra.mxu0 0.0
        %3774 = vmatprep.subr.mxu0 0.0
        %3775 = vmatpush1.msra.mxu0 0.0
        %3776 = vmatprep.subr.mxu0 0.0
        %3777 = vmatpush1.msra.mxu0 0.0
        %3778 = vmatprep.subr.mxu0 0.0
        %3779 = vmatpush1.msra.mxu0 0.0
        %3780 = vmatprep.subr.mxu0 0.0
        %3781 = vmatpush1.msra.mxu0 0.0
        %3782 = vmatprep.subr.mxu0 0.0
        %3783 = vmatpush1.msra.mxu0 0.0
        %3784 = vmatprep.subr.mxu0 0.0
        %3785 = vmatpush1.msra.mxu0 0.0
        %3786 = vmatprep.subr.mxu0 0.0
        %3787 = vmatpush1.msra.mxu0 0.0
        %3788 = vmatprep.subr.mxu0 0.0
        %3789 = vmatpush1.msra.mxu0 0.0
        %3790 = vmatprep.subr.mxu0 0.0
        %3791 = vmatpush1.msra.mxu0 0.0
        %3792 = vmatprep.subr.mxu0 0.0
        %3793 = vmatpush1.msra.mxu0 0.0
        %3794 = vmatprep.subr.mxu0 0.0
        %3795 = vmatpush1.msra.mxu0 0.0
        %3796 = vmatprep.subr.mxu0 0.0
        %3797 = vmatpush1.msra.mxu0 0.0
        %3798 = vmatprep.subr.mxu0 0.0
        %3799 = vmatpush1.msra.mxu0 0.0
        %3800 = vmatprep.subr.mxu0 0.0
        %3801 = vmatpush1.msra.mxu0 0.0
        %3802 = vmatprep.subr.mxu0 0.0
        %3803 = vmatpush1.msra.mxu0 0.0
        %3804 = vmatprep.subr.mxu0 0.0
        %3805 = vmatpush1.msra.mxu0 0.0
        %3806 = vmatprep.subr.mxu0 0.0
        %3807 = vmatpush1.msra.mxu0 0.0
        %3808 = vmatprep.subr.mxu0 0.0
        %3809 = vmatpush1.msra.mxu0 0.0
        %3810 = vmatprep.subr.mxu0 0.0
        %3811 = vmatpush1.msra.mxu0 0.0
        %3812 = vmatprep.subr.mxu0 0.0
        %3813 = vmatpush1.msra.mxu0 0.0
        %3814 = vmatprep.subr.mxu0 0.0
        %3815 = vmatpush1.msra.mxu0 0.0
        %3816 = vmatprep.subr.mxu0 0.0
        %3817 = vmatpush1.msra.mxu0 0.0
        %3818 = vmatprep.subr.mxu0 0.0
        %3819 = vmatpush1.msra.mxu0 0.0
        %3820 = vmatprep.subr.mxu0 0.0
        %3821 = vmatpush1.msra.mxu0 0.0
        %3822 = vmatprep.subr.mxu0 0.0
        %3823 = vmatpush1.msra.mxu0 0.0
        %3824 = vmatprep.subr.mxu0 0.0
        %3825 = vmatpush1.msra.mxu0 0.0
        %3826 = vmatprep.subr.mxu0 0.0
        %3827 = vmatpush1.msra.mxu0 0.0
        %3828 = vmatprep.mubr.f32.mxu0 0.0
        %3829 = vmatmul.mubr.f32.gmra.mrb[0].mxu0 %v3714
        %v3830 = vpop.f32.mrb[0].mxu0
        %v3831 = vadd.f32 0.0, %v3830
        %v3832 = vpop.f32.mrb[0].mxu0
        %3833 = vmatprep.mubr.f32.mxu0 0.0
        %3834 = vmatmul.mubr.f32.gmra.mrb[0].mxu0 %v3717
        %v3835 = vpop.f32.mrb[0].mxu0
        %v3836 = vadd.f32 0.0, %v3835
        %v3837 = vpop.f32.mrb[0].mxu0
        %3838 = vmatprep.mubr.f32.mxu0 0.0
        %3839 = vmatmul.mubr.f32.gmra.mrb[0].mxu0 %v3720
        %v3840 = vpop.f32.mrb[0].mxu0
        %v3841 = vadd.f32 0.0, %v3840
        %v3842 = vpop.f32.mrb[0].mxu0
        %3843 = vmatprep.mubr.f32.mxu0 0.0
        %3844 = vmatmul.mubr.f32.gmra.mrb[0].mxu0 %v3723
        %v3845 = vpop.f32.mrb[0].mxu0
        %v3846 = vadd.f32 0.0, %v3845
        %v3847 = vpop.f32.mrb[0].mxu0
        %3848 = vmatprep.mubr.f32.mxu0 0.0
        %3849 = vmatmul.mubr.f32.gmra.mrb[0].mxu0 %v3726
        %v3850 = vpop.f32.mrb[0].mxu0
        %v3851 = vadd.f32 0.0, %v3850
        %v3852 = vpop.f32.mrb[0].mxu0
        %3853 = vmatprep.mubr.f32.mxu0 0.0
        %3854 = vmatmul.mubr.f32.gmra.mrb[0].mxu0 %v3729
        %v3855 = vpop.f32.mrb[0].mxu0
        %v3856 = vadd.f32 0.0, %v3855
        %v3857 = vpop.f32.mrb[0].mxu0
        %3858 = vmatprep.mubr.f32.mxu0 0.0
        %3859 = vmatmul.mubr.f32.gmra.mrb[0].mxu0 %v3732
        %v3860 = vpop.f32.mrb[0].mxu0
        %v3861 = vadd.f32 0.0, %v3860
        %v3862 = vpop.f32.mrb[0].mxu0
        %3863 = vmatprep.mubr.f32.mxu0 0.0
        %3864 = vmatmul.mubr.f32.gmra.mrb[0].mxu0 %v3735
        %v3865 = vpop.f32.mrb[0].mxu0
        %v3866 = vadd.f32 0.0, %v3865
        %v3867 = vpop.f32.mrb[0].mxu0
        %3868 = vmatprep.mubr.f32.mxu0 0.0
        %3869 = vmatmul.mubr.f32.gmra.mrb[0].mxu0 %v3738
        %v3870 = vpop.f32.mrb[0].mxu0
        %v3871 = vadd.f32 0.0, %v3870
        %v3872 = vpop.f32.mrb[0].mxu0
        %3873 = vmatprep.mubr.f32.mxu0 0.0
        %3874 = vmatmul.mubr.f32.gmra.mrb[0].mxu0 %v3741
        %v3875 = vpop.f32.mrb[0].mxu0
        %v3876 = vadd.f32 0.0, %v3875
        %v3877 = vpop.f32.mrb[0].mxu0
        %3878 = vmatprep.mubr.f32.mxu0 0.0
        %3879 = vmatmul.mubr.f32.gmra.mrb[0].mxu0 %v3744
        %v3880 = vpop.f32.mrb[0].mxu0
        %v3881 = vadd.f32 0.0, %v3880
        %v3882 = vpop.f32.mrb[0].mxu0
        %3883 = vmatprep.mubr.f32.mxu0 0.0
        %3884 = vmatmul.mubr.f32.gmra.mrb[0].mxu0 %v3747
        %v3885 = vpop.f32.mrb[0].mxu0
        %v3886 = vadd.f32 0.0, %v3885
        %v3887 = vpop.f32.mrb[0].mxu0
        %3888 = vmatprep.mubr.f32.mxu0 0.0
        %3889 = vmatmul.mubr.f32.gmra.mrb[0].mxu0 %v3750
        %v3890 = vpop.f32.mrb[0].mxu0
        %v3891 = vadd.f32 0.0, %v3890
        %v3892 = vpop.f32.mrb[0].mxu0
        %3893 = vmatprep.mubr.f32.mxu0 0.0
        %3894 = vmatmul.mubr.f32.gmra.mrb[0].mxu0 %v3753
        %v3895 = vpop.f32.mrb[0].mxu0
        %v3896 = vadd.f32 0.0, %v3895
        %v3897 = vpop.f32.mrb[0].mxu0
        %3898 = vmatprep.mubr.f32.mxu0 0.0
        %3899 = vmatmul.mubr.f32.gmra.mrb[0].mxu0 %v3756
        %v3900 = vpop.f32.mrb[0].mxu0
        %v3901 = vadd.f32 0.0, %v3900
        %v3902 = vpop.f32.mrb[0].mxu0
        %3903 = vmatprep.mubr.f32.mxu0 0.0
        %3904 = vmatmul.mubr.f32.gmra.mrb[0].mxu0 %v3759
        %v3905 = vpop.f32.mrb[0].mxu0
        %v3906 = vadd.f32 0.0, %v3905
        %v3907 = vpop.f32.mrb[0].mxu0
        %3908 = vdwg.mxu0
        %v3909 = vadd.f32 %v3632, %v3831
        %v3910 = vadd.f32 %v3633, %v3836
        %v3911 = vadd.f32 %v3634, %v3841
        %v3912 = vadd.f32 %v3635, %v3846
        %v3913 = vadd.f32 %v3636, %v3851
        %v3914 = vadd.f32 %v3637, %v3856
        %v3915 = vadd.f32 %v3638, %v3861
        %v3916 = vadd.f32 %v3639, %v3866
        %v3917 = vadd.f32 %v3640, %v3871
        %v3918 = vadd.f32 %v3641, %v3876
        %v3919 = vadd.f32 %v3642, %v3881
        %v3920 = vadd.f32 %v3643, %v3886
        %v3921 = vadd.f32 %v3644, %v3891
        %v3922 = vadd.f32 %v3645, %v3896
        %v3923 = vadd.f32 %v3646, %v3901
        %v3924 = vadd.f32 %v3647, %v3906
        %v3925 = vld [vmem:[%s1597] sm:$0xf]
        %v3927 = vsel %vm516, %v3648, 0
        %v3930 = vsel %vm516, %v3649, 0
        %v3933 = vsel %vm516, %v3650, 0
        %v3936 = vsel %vm516, %v3651, 0
        %v3939 = vsel %vm516, %v3652, 0
        %v3942 = vsel %vm516, %v3653, 0
        %v3945 = vsel %vm516, %v3654, 0
        %v3948 = vsel %vm516, %v3655, 0
        %v3951 = vsel %vm516, %v3656, 0
        %v3954 = vsel %vm516, %v3657, 0
        %v3957 = vsel %vm516, %v3658, 0
        %v3960 = vsel %vm516, %v3659, 0
        %v3963 = vsel %vm516, %v3660, 0
        %v3966 = vsel %vm516, %v3661, 0
        %v3969 = vsel %vm516, %v3662, 0
        %v3972 = vsel %vm516, %v3663, 0
        %v3975 = vsel %vm711, %v3925, 0
        %3977 = vmatprep.subr.mxu0 0.0
        %3978 = vmatpush1.msra.mxu0 %v3975
        %3979 = vmatprep.subr.mxu0 0.0
        %3980 = vmatpush1.msra.mxu0 0.0
        %3981 = vmatprep.subr.mxu0 0.0
        %3982 = vmatpush1.msra.mxu0 0.0
        %3983 = vmatprep.subr.mxu0 0.0
        %3984 = vmatpush1.msra.mxu0 0.0
        %3985 = vmatprep.subr.mxu0 0.0
        %3986 = vmatpush1.msra.mxu0 0.0
        %3987 = vmatprep.subr.mxu0 0.0
        %3988 = vmatpush1.msra.mxu0 0.0
        %3989 = vmatprep.subr.mxu0 0.0
        %3990 = vmatpush1.msra.mxu0 0.0
        %3991 = vmatprep.subr.mxu0 0.0
        %3992 = vmatpush1.msra.mxu0 0.0
        %3993 = vmatprep.subr.mxu0 0.0
        %3994 = vmatpush1.msra.mxu0 0.0
        %3995 = vmatprep.subr.mxu0 0.0
        %3996 = vmatpush1.msra.mxu0 0.0
        %3997 = vmatprep.subr.mxu0 0.0
        %3998 = vmatpush1.msra.mxu0 0.0
        %3999 = vmatprep.subr.mxu0 0.0
        %4000 = vmatpush1.msra.mxu0 0.0
        %4001 = vmatprep.subr.mxu0 0.0
        %4002 = vmatpush1.msra.mxu0 0.0
        %4003 = vmatprep.subr.mxu0 0.0
        %4004 = vmatpush1.msra.mxu0 0.0
        %4005 = vmatprep.subr.mxu0 0.0
        %4006 = vmatpush1.msra.mxu0 0.0
        %4007 = vmatprep.subr.mxu0 0.0
        %4008 = vmatpush1.msra.mxu0 0.0
        %4009 = vmatprep.subr.mxu0 0.0
        %4010 = vmatpush1.msra.mxu0 0.0
        %4011 = vmatprep.subr.mxu0 0.0
        %4012 = vmatpush1.msra.mxu0 0.0
        %4013 = vmatprep.subr.mxu0 0.0
        %4014 = vmatpush1.msra.mxu0 0.0
        %4015 = vmatprep.subr.mxu0 0.0
        %4016 = vmatpush1.msra.mxu0 0.0
        %4017 = vmatprep.subr.mxu0 0.0
        %4018 = vmatpush1.msra.mxu0 0.0
        %4019 = vmatprep.subr.mxu0 0.0
        %4020 = vmatpush1.msra.mxu0 0.0
        %4021 = vmatprep.subr.mxu0 0.0
        %4022 = vmatpush1.msra.mxu0 0.0
        %4023 = vmatprep.subr.mxu0 0.0
        %4024 = vmatpush1.msra.mxu0 0.0
        %4025 = vmatprep.subr.mxu0 0.0
        %4026 = vmatpush1.msra.mxu0 0.0
        %4027 = vmatprep.subr.mxu0 0.0
        %4028 = vmatpush1.msra.mxu0 0.0
        %4029 = vmatprep.subr.mxu0 0.0
        %4030 = vmatpush1.msra.mxu0 0.0
        %4031 = vmatprep.subr.mxu0 0.0
        %4032 = vmatpush1.msra.mxu0 0.0
        %4033 = vmatprep.subr.mxu0 0.0
        %4034 = vmatpush1.msra.mxu0 0.0
        %4035 = vmatprep.subr.mxu0 0.0
        %4036 = vmatpush1.msra.mxu0 0.0
        %4037 = vmatprep.subr.mxu0 0.0
        %4038 = vmatpush1.msra.mxu0 0.0
        %4039 = vmatprep.subr.mxu0 0.0
        %4040 = vmatpush1.msra.mxu0 0.0
        %4041 = vmatprep.mubr.f32.mxu0 0.0
        %4042 = vmatmul.mubr.f32.gmra.mrb[0].mxu0 %v3927
        %v4043 = vpop.f32.mrb[0].mxu0
        %v4044 = vadd.f32 0.0, %v4043
        %v4045 = vpop.f32.mrb[0].mxu0
        %4046 = vmatprep.mubr.f32.mxu0 0.0
        %4047 = vmatmul.mubr.f32.gmra.mrb[0].mxu0 %v3930
        %v4048 = vpop.f32.mrb[0].mxu0
        %v4049 = vadd.f32 0.0, %v4048
        %v4050 = vpop.f32.mrb[0].mxu0
        %4051 = vmatprep.mubr.f32.mxu0 0.0
        %4052 = vmatmul.mubr.f32.gmra.mrb[0].mxu0 %v3933
        %v4053 = vpop.f32.mrb[0].mxu0
        %v4054 = vadd.f32 0.0, %v4053
        %v4055 = vpop.f32.mrb[0].mxu0
        %4056 = vmatprep.mubr.f32.mxu0 0.0
        %4057 = vmatmul.mubr.f32.gmra.mrb[0].mxu0 %v3936
        %v4058 = vpop.f32.mrb[0].mxu0
        %v4059 = vadd.f32 0.0, %v4058
        %v4060 = vpop.f32.mrb[0].mxu0
        %4061 = vmatprep.mubr.f32.mxu0 0.0
        %4062 = vmatmul.mubr.f32.gmra.mrb[0].mxu0 %v3939
        %v4063 = vpop.f32.mrb[0].mxu0
        %v4064 = vadd.f32 0.0, %v4063
        %v4065 = vpop.f32.mrb[0].mxu0
        %4066 = vmatprep.mubr.f32.mxu0 0.0
        %4067 = vmatmul.mubr.f32.gmra.mrb[0].mxu0 %v3942
        %v4068 = vpop.f32.mrb[0].mxu0
        %v4069 = vadd.f32 0.0, %v4068
        %v4070 = vpop.f32.mrb[0].mxu0
        %4071 = vmatprep.mubr.f32.mxu0 0.0
        %4072 = vmatmul.mubr.f32.gmra.mrb[0].mxu0 %v3945
        %v4073 = vpop.f32.mrb[0].mxu0
        %v4074 = vadd.f32 0.0, %v4073
        %v4075 = vpop.f32.mrb[0].mxu0
        %4076 = vmatprep.mubr.f32.mxu0 0.0
        %4077 = vmatmul.mubr.f32.gmra.mrb[0].mxu0 %v3948
        %v4078 = vpop.f32.mrb[0].mxu0
        %v4079 = vadd.f32 0.0, %v4078
        %v4080 = vpop.f32.mrb[0].mxu0
        %4081 = vmatprep.mubr.f32.mxu0 0.0
        %4082 = vmatmul.mubr.f32.gmra.mrb[0].mxu0 %v3951
        %v4083 = vpop.f32.mrb[0].mxu0
        %v4084 = vadd.f32 0.0, %v4083
        %v4085 = vpop.f32.mrb[0].mxu0
        %4086 = vmatprep.mubr.f32.mxu0 0.0
        %4087 = vmatmul.mubr.f32.gmra.mrb[0].mxu0 %v3954
        %v4088 = vpop.f32.mrb[0].mxu0
        %v4089 = vadd.f32 0.0, %v4088
        %v4090 = vpop.f32.mrb[0].mxu0
        %4091 = vmatprep.mubr.f32.mxu0 0.0
        %4092 = vmatmul.mubr.f32.gmra.mrb[0].mxu0 %v3957
        %v4093 = vpop.f32.mrb[0].mxu0
        %v4094 = vadd.f32 0.0, %v4093
        %v4095 = vpop.f32.mrb[0].mxu0
        %4096 = vmatprep.mubr.f32.mxu0 0.0
        %4097 = vmatmul.mubr.f32.gmra.mrb[0].mxu0 %v3960
        %v4098 = vpop.f32.mrb[0].mxu0
        %v4099 = vadd.f32 0.0, %v4098
        %v4100 = vpop.f32.mrb[0].mxu0
        %4101 = vmatprep.mubr.f32.mxu0 0.0
        %4102 = vmatmul.mubr.f32.gmra.mrb[0].mxu0 %v3963
        %v4103 = vpop.f32.mrb[0].mxu0
        %v4104 = vadd.f32 0.0, %v4103
        %v4105 = vpop.f32.mrb[0].mxu0
        %4106 = vmatprep.mubr.f32.mxu0 0.0
        %4107 = vmatmul.mubr.f32.gmra.mrb[0].mxu0 %v3966
        %v4108 = vpop.f32.mrb[0].mxu0
        %v4109 = vadd.f32 0.0, %v4108
        %v4110 = vpop.f32.mrb[0].mxu0
        %4111 = vmatprep.mubr.f32.mxu0 0.0
        %4112 = vmatmul.mubr.f32.gmra.mrb[0].mxu0 %v3969
        %v4113 = vpop.f32.mrb[0].mxu0
        %v4114 = vadd.f32 0.0, %v4113
        %v4115 = vpop.f32.mrb[0].mxu0
        %4116 = vmatprep.mubr.f32.mxu0 0.0
        %4117 = vmatmul.mubr.f32.gmra.mrb[0].mxu0 %v3972
        %v4118 = vpop.f32.mrb[0].mxu0
        %v4119 = vadd.f32 0.0, %v4118
        %v4120 = vpop.f32.mrb[0].mxu0
        %4121 = vdwg.mxu0
        %v4122 = vadd.f32 %v3909, %v4044
        %v4123 = vadd.f32 %v3910, %v4049
        %v4124 = vadd.f32 %v3911, %v4054
        %v4125 = vadd.f32 %v3912, %v4059
        %v4126 = vadd.f32 %v3913, %v4064
        %v4127 = vadd.f32 %v3914, %v4069
        %v4128 = vadd.f32 %v3915, %v4074
        %v4129 = vadd.f32 %v3916, %v4079
        %v4130 = vadd.f32 %v3917, %v4084
        %v4131 = vadd.f32 %v3918, %v4089
        %v4132 = vadd.f32 %v3919, %v4094
        %v4133 = vadd.f32 %v3920, %v4099
        %v4134 = vadd.f32 %v3921, %v4104
        %v4135 = vadd.f32 %v3922, %v4109
        %v4136 = vadd.f32 %v3923, %v4114
        %v4137 = vadd.f32 %v3924, %v4119
        %v4138 = vrot.slane %v3648, 1
        %v4139 = vrot.slane %v3649, 1
        %v4140 = vrot.slane %v3650, 1
        %v4141 = vrot.slane %v3651, 1
        %v4142 = vrot.slane %v3652, 1
        %v4143 = vrot.slane %v3653, 1
        %v4144 = vrot.slane %v3654, 1
        %v4145 = vrot.slane %v3655, 1
        %v4146 = vrot.slane %v3656, 1
        %v4147 = vrot.slane %v3657, 1
        %v4148 = vrot.slane %v3658, 1
        %v4149 = vrot.slane %v3659, 1
        %v4150 = vrot.slane %v3660, 1
        %v4151 = vrot.slane %v3661, 1
        %v4152 = vrot.slane %v3662, 1
        %v4153 = vrot.slane %v3663, 1
        %v4154 = vsel %vm1072, %v4152, %v4153
        %v4155 = vsel %vm1072, %v4151, %v4152
        %v4156 = vsel %vm1072, %v4150, %v4151
        %v4157 = vsel %vm1072, %v4149, %v4150
        %v4158 = vsel %vm1072, %v4148, %v4149
        %v4159 = vsel %vm1072, %v4147, %v4148
        %v4160 = vsel %vm1072, %v4146, %v4147
        %v4161 = vsel %vm1072, %v4145, %v4146
        %v4162 = vsel %vm1072, %v4144, %v4145
        %v4163 = vsel %vm1072, %v4143, %v4144
        %v4164 = vsel %vm1072, %v4142, %v4143
        %v4165 = vsel %vm1072, %v4141, %v4142
        %v4166 = vsel %vm1072, %v4140, %v4141
        %v4167 = vsel %vm1072, %v4139, %v4140
        %v4168 = vsel %vm1072, %v4138, %v4139
        %v4169 = vsel %vm1072, %v4153, %v4138
        %v4170 = vmul.f32 %v4168, %v452
        %v4171 = vmul.f32 %v4167, %v453
        %v4172 = vmul.f32 %v4166, %v454
        %v4173 = vmul.f32 %v4165, %v455
        %v4174 = vmul.f32 %v4164, %v456
        %v4175 = vmul.f32 %v4163, %v457
        %v4176 = vmul.f32 %v4162, %v458
        %v4177 = vmul.f32 %v4161, %v459
        %v4178 = vmul.f32 %v4160, %v460
        %v4179 = vmul.f32 %v4159, %v461
        %v4180 = vmul.f32 %v4158, %v462
        %v4181 = vmul.f32 %v4157, %v463
        %v4182 = vmul.f32 %v4156, %v464
        %v4183 = vmul.f32 %v4155, %v465
        %v4184 = vmul.f32 %v4154, %v466
        %v4185 = vmul.f32 %v4169, %v467
        %v4186 = vld [vmem:[%s1859] sm:$0xf]
        %v4188 = vsel %vm516, %v4170, 0
        %v4191 = vsel %vm516, %v4171, 0
        %v4194 = vsel %vm516, %v4172, 0
        %v4197 = vsel %vm516, %v4173, 0
        %v4200 = vsel %vm516, %v4174, 0
        %v4203 = vsel %vm516, %v4175, 0
        %v4206 = vsel %vm516, %v4176, 0
        %v4209 = vsel %vm516, %v4177, 0
        %v4212 = vsel %vm516, %v4178, 0
        %v4215 = vsel %vm516, %v4179, 0
        %v4218 = vsel %vm516, %v4180, 0
        %v4221 = vsel %vm516, %v4181, 0
        %v4224 = vsel %vm516, %v4182, 0
        %v4227 = vsel %vm516, %v4183, 0
        %v4230 = vsel %vm516, %v4184, 0
        %v4233 = vsel %vm516, %v4185, 0
        %v4236 = vsel %vm711, %v4186, 0
        %4238 = vmatprep.subr.mxu0 0.0
        %4239 = vmatpush1.msra.mxu0 %v4236
        %4240 = vmatprep.subr.mxu0 0.0
        %4241 = vmatpush1.msra.mxu0 0.0
        %4242 = vmatprep.subr.mxu0 0.0
        %4243 = vmatpush1.msra.mxu0 0.0
        %4244 = vmatprep.subr.mxu0 0.0
        %4245 = vmatpush1.msra.mxu0 0.0
        %4246 = vmatprep.subr.mxu0 0.0
        %4247 = vmatpush1.msra.mxu0 0.0
        %4248 = vmatprep.subr.mxu0 0.0
        %4249 = vmatpush1.msra.mxu0 0.0
        %4250 = vmatprep.subr.mxu0 0.0
        %4251 = vmatpush1.msra.mxu0 0.0
        %4252 = vmatprep.subr.mxu0 0.0
        %4253 = vmatpush1.msra.mxu0 0.0
        %4254 = vmatprep.subr.mxu0 0.0
        %4255 = vmatpush1.msra.mxu0 0.0
        %4256 = vmatprep.subr.mxu0 0.0
        %4257 = vmatpush1.msra.mxu0 0.0
        %4258 = vmatprep.subr.mxu0 0.0
        %4259 = vmatpush1.msra.mxu0 0.0
        %4260 = vmatprep.subr.mxu0 0.0
        %4261 = vmatpush1.msra.mxu0 0.0
        %4262 = vmatprep.subr.mxu0 0.0
        %4263 = vmatpush1.msra.mxu0 0.0
        %4264 = vmatprep.subr.mxu0 0.0
        %4265 = vmatpush1.msra.mxu0 0.0
        %4266 = vmatprep.subr.mxu0 0.0
        %4267 = vmatpush1.msra.mxu0 0.0
        %4268 = vmatprep.subr.mxu0 0.0
        %4269 = vmatpush1.msra.mxu0 0.0
        %4270 = vmatprep.subr.mxu0 0.0
        %4271 = vmatpush1.msra.mxu0 0.0
        %4272 = vmatprep.subr.mxu0 0.0
        %4273 = vmatpush1.msra.mxu0 0.0
        %4274 = vmatprep.subr.mxu0 0.0
        %4275 = vmatpush1.msra.mxu0 0.0
        %4276 = vmatprep.subr.mxu0 0.0
        %4277 = vmatpush1.msra.mxu0 0.0
        %4278 = vmatprep.subr.mxu0 0.0
        %4279 = vmatpush1.msra.mxu0 0.0
        %4280 = vmatprep.subr.mxu0 0.0
        %4281 = vmatpush1.msra.mxu0 0.0
        %4282 = vmatprep.subr.mxu0 0.0
        %4283 = vmatpush1.msra.mxu0 0.0
        %4284 = vmatprep.subr.mxu0 0.0
        %4285 = vmatpush1.msra.mxu0 0.0
        %4286 = vmatprep.subr.mxu0 0.0
        %4287 = vmatpush1.msra.mxu0 0.0
        %4288 = vmatprep.subr.mxu0 0.0
        %4289 = vmatpush1.msra.mxu0 0.0
        %4290 = vmatprep.subr.mxu0 0.0
        %4291 = vmatpush1.msra.mxu0 0.0
        %4292 = vmatprep.subr.mxu0 0.0
        %4293 = vmatpush1.msra.mxu0 0.0
        %4294 = vmatprep.subr.mxu0 0.0
        %4295 = vmatpush1.msra.mxu0 0.0
        %4296 = vmatprep.subr.mxu0 0.0
        %4297 = vmatpush1.msra.mxu0 0.0
        %4298 = vmatprep.subr.mxu0 0.0
        %4299 = vmatpush1.msra.mxu0 0.0
        %4300 = vmatprep.subr.mxu0 0.0
        %4301 = vmatpush1.msra.mxu0 0.0
        %4302 = vmatprep.mubr.f32.mxu0 0.0
        %4303 = vmatmul.mubr.f32.gmra.mrb[0].mxu0 %v4188
        %v4304 = vpop.f32.mrb[0].mxu0
        %v4305 = vadd.f32 0.0, %v4304
        %v4306 = vpop.f32.mrb[0].mxu0
        %4307 = vmatprep.mubr.f32.mxu0 0.0
        %4308 = vmatmul.mubr.f32.gmra.mrb[0].mxu0 %v4191
        %v4309 = vpop.f32.mrb[0].mxu0
        %v4310 = vadd.f32 0.0, %v4309
        %v4311 = vpop.f32.mrb[0].mxu0
        %4312 = vmatprep.mubr.f32.mxu0 0.0
        %4313 = vmatmul.mubr.f32.gmra.mrb[0].mxu0 %v4194
        %v4314 = vpop.f32.mrb[0].mxu0
        %v4315 = vadd.f32 0.0, %v4314
        %v4316 = vpop.f32.mrb[0].mxu0
        %4317 = vmatprep.mubr.f32.mxu0 0.0
        %4318 = vmatmul.mubr.f32.gmra.mrb[0].mxu0 %v4197
        %v4319 = vpop.f32.mrb[0].mxu0
        %v4320 = vadd.f32 0.0, %v4319
        %v4321 = vpop.f32.mrb[0].mxu0
        %4322 = vmatprep.mubr.f32.mxu0 0.0
        %4323 = vmatmul.mubr.f32.gmra.mrb[0].mxu0 %v4200
        %v4324 = vpop.f32.mrb[0].mxu0
        %v4325 = vadd.f32 0.0, %v4324
        %v4326 = vpop.f32.mrb[0].mxu0
        %4327 = vmatprep.mubr.f32.mxu0 0.0
        %4328 = vmatmul.mubr.f32.gmra.mrb[0].mxu0 %v4203
        %v4329 = vpop.f32.mrb[0].mxu0
        %v4330 = vadd.f32 0.0, %v4329
        %v4331 = vpop.f32.mrb[0].mxu0
        %4332 = vmatprep.mubr.f32.mxu0 0.0
        %4333 = vmatmul.mubr.f32.gmra.mrb[0].mxu0 %v4206
        %v4334 = vpop.f32.mrb[0].mxu0
        %v4335 = vadd.f32 0.0, %v4334
        %v4336 = vpop.f32.mrb[0].mxu0
        %4337 = vmatprep.mubr.f32.mxu0 0.0
        %4338 = vmatmul.mubr.f32.gmra.mrb[0].mxu0 %v4209
        %v4339 = vpop.f32.mrb[0].mxu0
        %v4340 = vadd.f32 0.0, %v4339
        %v4341 = vpop.f32.mrb[0].mxu0
        %4342 = vmatprep.mubr.f32.mxu0 0.0
        %4343 = vmatmul.mubr.f32.gmra.mrb[0].mxu0 %v4212
        %v4344 = vpop.f32.mrb[0].mxu0
        %v4345 = vadd.f32 0.0, %v4344
        %v4346 = vpop.f32.mrb[0].mxu0
        %4347 = vmatprep.mubr.f32.mxu0 0.0
        %4348 = vmatmul.mubr.f32.gmra.mrb[0].mxu0 %v4215
        %v4349 = vpop.f32.mrb[0].mxu0
        %v4350 = vadd.f32 0.0, %v4349
        %v4351 = vpop.f32.mrb[0].mxu0
        %4352 = vmatprep.mubr.f32.mxu0 0.0
        %4353 = vmatmul.mubr.f32.gmra.mrb[0].mxu0 %v4218
        %v4354 = vpop.f32.mrb[0].mxu0
        %v4355 = vadd.f32 0.0, %v4354
        %v4356 = vpop.f32.mrb[0].mxu0
        %4357 = vmatprep.mubr.f32.mxu0 0.0
        %4358 = vmatmul.mubr.f32.gmra.mrb[0].mxu0 %v4221
        %v4359 = vpop.f32.mrb[0].mxu0
        %v4360 = vadd.f32 0.0, %v4359
        %v4361 = vpop.f32.mrb[0].mxu0
        %4362 = vmatprep.mubr.f32.mxu0 0.0
        %4363 = vmatmul.mubr.f32.gmra.mrb[0].mxu0 %v4224
        %v4364 = vpop.f32.mrb[0].mxu0
        %v4365 = vadd.f32 0.0, %v4364
        %v4366 = vpop.f32.mrb[0].mxu0
        %4367 = vmatprep.mubr.f32.mxu0 0.0
        %4368 = vmatmul.mubr.f32.gmra.mrb[0].mxu0 %v4227
        %v4369 = vpop.f32.mrb[0].mxu0
        %v4370 = vadd.f32 0.0, %v4369
        %v4371 = vpop.f32.mrb[0].mxu0
        %4372 = vmatprep.mubr.f32.mxu0 0.0
        %4373 = vmatmul.mubr.f32.gmra.mrb[0].mxu0 %v4230
        %v4374 = vpop.f32.mrb[0].mxu0
        %v4375 = vadd.f32 0.0, %v4374
        %v4376 = vpop.f32.mrb[0].mxu0
        %4377 = vmatprep.mubr.f32.mxu0 0.0
        %4378 = vmatmul.mubr.f32.gmra.mrb[0].mxu0 %v4233
        %v4379 = vpop.f32.mrb[0].mxu0
        %v4380 = vadd.f32 0.0, %v4379
        %v4381 = vpop.f32.mrb[0].mxu0
        %4382 = vdwg.mxu0
        %v4383 = vadd.f32 %v4122, %v4305
        %v4384 = vadd.f32 %v4123, %v4310
        %v4385 = vadd.f32 %v4124, %v4315
        %v4386 = vadd.f32 %v4125, %v4320
        %v4387 = vadd.f32 %v4126, %v4325
        %v4388 = vadd.f32 %v4127, %v4330
        %v4389 = vadd.f32 %v4128, %v4335
        %v4390 = vadd.f32 %v4129, %v4340
        %v4391 = vadd.f32 %v4130, %v4345
        %v4392 = vadd.f32 %v4131, %v4350
        %v4393 = vadd.f32 %v4132, %v4355
        %v4394 = vadd.f32 %v4133, %v4360
        %v4395 = vadd.f32 %v4134, %v4365
        %v4396 = vadd.f32 %v4135, %v4370
        %v4397 = vadd.f32 %v4136, %v4375
        %v4398 = vadd.f32 %v4137, %v4380
        %v4399 = vld [vmem:[#allocation2 + $0xa0] sm:$0xff]
        %v4400 = vld [vmem:[#allocation2 + $0xa8] sm:$0xff]
        %v4401 = vld [vmem:[#allocation2 + $0xb0] sm:$0xff]
        %v4402 = vld [vmem:[#allocation2 + $0xb8] sm:$0xff]
        %v4403 = vld [vmem:[#allocation2 + $0xc0] sm:$0xff]
        %v4404 = vld [vmem:[#allocation2 + $0xc8] sm:$0xff]
        %v4405 = vld [vmem:[#allocation2 + $0xd0] sm:$0xff]
        %v4406 = vld [vmem:[#allocation2 + $0xd8] sm:$0xff]
        %v4407 = vld [vmem:[#allocation2 + $0xe0] sm:$0xff]
        %v4408 = vld [vmem:[#allocation2 + $0xe8] sm:$0xff]
        %v4409 = vld [vmem:[#allocation2 + $0xf0] sm:$0xff]
        %v4410 = vld [vmem:[#allocation2 + $0xf8] sm:$0xff]
        %v4411 = vld [vmem:[#allocation2 + $0x100] sm:$0xff]
        %v4412 = vld [vmem:[#allocation2 + $0x108] sm:$0xff]
        %v4413 = vld [vmem:[#allocation2 + $0x110] sm:$0xff]
        %v4414 = vld [vmem:[#allocation2 + $0x118] sm:$0xff]
        %v4415 = vrot.slane %v4399, 7
        %v4416 = vrot.slane %v4400, 7
        %v4417 = vrot.slane %v4401, 7
        %v4418 = vrot.slane %v4402, 7
        %v4419 = vrot.slane %v4403, 7
        %v4420 = vrot.slane %v4404, 7
        %v4421 = vrot.slane %v4405, 7
        %v4422 = vrot.slane %v4406, 7
        %v4423 = vrot.slane %v4407, 7
        %v4424 = vrot.slane %v4408, 7
        %v4425 = vrot.slane %v4409, 7
        %v4426 = vrot.slane %v4410, 7
        %v4427 = vrot.slane %v4411, 7
        %v4428 = vrot.slane %v4412, 7
        %v4429 = vrot.slane %v4413, 7
        %v4430 = vrot.slane %v4414, 7
        %v4431 = vsel %vm627, %v4429, %v4430
        %v4432 = vsel %vm627, %v4428, %v4429
        %v4433 = vsel %vm627, %v4427, %v4428
        %v4434 = vsel %vm627, %v4426, %v4427
        %v4435 = vsel %vm627, %v4425, %v4426
        %v4436 = vsel %vm627, %v4424, %v4425
        %v4437 = vsel %vm627, %v4423, %v4424
        %v4438 = vsel %vm627, %v4422, %v4423
        %v4439 = vsel %vm627, %v4421, %v4422
        %v4440 = vsel %vm627, %v4420, %v4421
        %v4441 = vsel %vm627, %v4419, %v4420
        %v4442 = vsel %vm627, %v4418, %v4419
        %v4443 = vsel %vm627, %v4417, %v4418
        %v4444 = vsel %vm627, %v4416, %v4417
        %v4445 = vsel %vm627, %v4415, %v4416
        %v4446 = vsel %vm627, %v4430, %v4415
        %v4447 = vmul.f32 %v4446, %v500
        %v4448 = vmul.f32 %v4445, %v501
        %v4449 = vmul.f32 %v4444, %v502
        %v4450 = vmul.f32 %v4443, %v503
        %v4451 = vmul.f32 %v4442, %v504
        %v4452 = vmul.f32 %v4441, %v505
        %v4453 = vmul.f32 %v4440, %v506
        %v4454 = vmul.f32 %v4439, %v507
        %v4455 = vmul.f32 %v4438, %v508
        %v4456 = vmul.f32 %v4437, %v509
        %v4457 = vmul.f32 %v4436, %v510
        %v4458 = vmul.f32 %v4435, %v511
        %v4459 = vmul.f32 %v4434, %v512
        %v4460 = vmul.f32 %v4433, %v513
        %v4461 = vmul.f32 %v4432, %v514
        %v4462 = vmul.f32 %v4431, %v515
        %v4463 = vld [vmem:[%s2137] sm:$0xf]
        %v4465 = vsel %vm516, %v4447, 0
        %v4468 = vsel %vm516, %v4448, 0
        %v4471 = vsel %vm516, %v4449, 0
        %v4474 = vsel %vm516, %v4450, 0
        %v4477 = vsel %vm516, %v4451, 0
        %v4480 = vsel %vm516, %v4452, 0
        %v4483 = vsel %vm516, %v4453, 0
        %v4486 = vsel %vm516, %v4454, 0
        %v4489 = vsel %vm516, %v4455, 0
        %v4492 = vsel %vm516, %v4456, 0
        %v4495 = vsel %vm516, %v4457, 0
        %v4498 = vsel %vm516, %v4458, 0
        %v4501 = vsel %vm516, %v4459, 0
        %v4504 = vsel %vm516, %v4460, 0
        %v4507 = vsel %vm516, %v4461, 0
        %v4510 = vsel %vm516, %v4462, 0
        %v4513 = vsel %vm711, %v4463, 0
        %4515 = vmatprep.subr.mxu0 0.0
        %4516 = vmatpush1.msra.mxu0 %v4513
        %4517 = vmatprep.subr.mxu0 0.0
        %4518 = vmatpush1.msra.mxu0 0.0
        %4519 = vmatprep.subr.mxu0 0.0
        %4520 = vmatpush1.msra.mxu0 0.0
        %4521 = vmatprep.subr.mxu0 0.0
        %4522 = vmatpush1.msra.mxu0 0.0
        %4523 = vmatprep.subr.mxu0 0.0
        %4524 = vmatpush1.msra.mxu0 0.0
        %4525 = vmatprep.subr.mxu0 0.0
        %4526 = vmatpush1.msra.mxu0 0.0
        %4527 = vmatprep.subr.mxu0 0.0
        %4528 = vmatpush1.msra.mxu0 0.0
        %4529 = vmatprep.subr.mxu0 0.0
        %4530 = vmatpush1.msra.mxu0 0.0
        %4531 = vmatprep.subr.mxu0 0.0
        %4532 = vmatpush1.msra.mxu0 0.0
        %4533 = vmatprep.subr.mxu0 0.0
        %4534 = vmatpush1.msra.mxu0 0.0
        %4535 = vmatprep.subr.mxu0 0.0
        %4536 = vmatpush1.msra.mxu0 0.0
        %4537 = vmatprep.subr.mxu0 0.0
        %4538 = vmatpush1.msra.mxu0 0.0
        %4539 = vmatprep.subr.mxu0 0.0
        %4540 = vmatpush1.msra.mxu0 0.0
        %4541 = vmatprep.subr.mxu0 0.0
        %4542 = vmatpush1.msra.mxu0 0.0
        %4543 = vmatprep.subr.mxu0 0.0
        %4544 = vmatpush1.msra.mxu0 0.0
        %4545 = vmatprep.subr.mxu0 0.0
        %4546 = vmatpush1.msra.mxu0 0.0
        %4547 = vmatprep.subr.mxu0 0.0
        %4548 = vmatpush1.msra.mxu0 0.0
        %4549 = vmatprep.subr.mxu0 0.0
        %4550 = vmatpush1.msra.mxu0 0.0
        %4551 = vmatprep.subr.mxu0 0.0
        %4552 = vmatpush1.msra.mxu0 0.0
        %4553 = vmatprep.subr.mxu0 0.0
        %4554 = vmatpush1.msra.mxu0 0.0
        %4555 = vmatprep.subr.mxu0 0.0
        %4556 = vmatpush1.msra.mxu0 0.0
        %4557 = vmatprep.subr.mxu0 0.0
        %4558 = vmatpush1.msra.mxu0 0.0
        %4559 = vmatprep.subr.mxu0 0.0
        %4560 = vmatpush1.msra.mxu0 0.0
        %4561 = vmatprep.subr.mxu0 0.0
        %4562 = vmatpush1.msra.mxu0 0.0
        %4563 = vmatprep.subr.mxu0 0.0
        %4564 = vmatpush1.msra.mxu0 0.0
        %4565 = vmatprep.subr.mxu0 0.0
        %4566 = vmatpush1.msra.mxu0 0.0
        %4567 = vmatprep.subr.mxu0 0.0
        %4568 = vmatpush1.msra.mxu0 0.0
        %4569 = vmatprep.subr.mxu0 0.0
        %4570 = vmatpush1.msra.mxu0 0.0
        %4571 = vmatprep.subr.mxu0 0.0
        %4572 = vmatpush1.msra.mxu0 0.0
        %4573 = vmatprep.subr.mxu0 0.0
        %4574 = vmatpush1.msra.mxu0 0.0
        %4575 = vmatprep.subr.mxu0 0.0
        %4576 = vmatpush1.msra.mxu0 0.0
        %4577 = vmatprep.subr.mxu0 0.0
        %4578 = vmatpush1.msra.mxu0 0.0
        %4579 = vmatprep.mubr.f32.mxu0 0.0
        %4580 = vmatmul.mubr.f32.gmra.mrb[0].mxu0 %v4465
        %v4581 = vpop.f32.mrb[0].mxu0
        %v4582 = vadd.f32 0.0, %v4581
        %v4583 = vpop.f32.mrb[0].mxu0
        %4584 = vmatprep.mubr.f32.mxu0 0.0
        %4585 = vmatmul.mubr.f32.gmra.mrb[0].mxu0 %v4468
        %v4586 = vpop.f32.mrb[0].mxu0
        %v4587 = vadd.f32 0.0, %v4586
        %v4588 = vpop.f32.mrb[0].mxu0
        %4589 = vmatprep.mubr.f32.mxu0 0.0
        %4590 = vmatmul.mubr.f32.gmra.mrb[0].mxu0 %v4471
        %v4591 = vpop.f32.mrb[0].mxu0
        %v4592 = vadd.f32 0.0, %v4591
        %v4593 = vpop.f32.mrb[0].mxu0
        %4594 = vmatprep.mubr.f32.mxu0 0.0
        %4595 = vmatmul.mubr.f32.gmra.mrb[0].mxu0 %v4474
        %v4596 = vpop.f32.mrb[0].mxu0
        %v4597 = vadd.f32 0.0, %v4596
        %v4598 = vpop.f32.mrb[0].mxu0
        %4599 = vmatprep.mubr.f32.mxu0 0.0
        %4600 = vmatmul.mubr.f32.gmra.mrb[0].mxu0 %v4477
        %v4601 = vpop.f32.mrb[0].mxu0
        %v4602 = vadd.f32 0.0, %v4601
        %v4603 = vpop.f32.mrb[0].mxu0
        %4604 = vmatprep.mubr.f32.mxu0 0.0
        %4605 = vmatmul.mubr.f32.gmra.mrb[0].mxu0 %v4480
        %v4606 = vpop.f32.mrb[0].mxu0
        %v4607 = vadd.f32 0.0, %v4606
        %v4608 = vpop.f32.mrb[0].mxu0
        %4609 = vmatprep.mubr.f32.mxu0 0.0
        %4610 = vmatmul.mubr.f32.gmra.mrb[0].mxu0 %v4483
        %v4611 = vpop.f32.mrb[0].mxu0
        %v4612 = vadd.f32 0.0, %v4611
        %v4613 = vpop.f32.mrb[0].mxu0
        %4614 = vmatprep.mubr.f32.mxu0 0.0
        %4615 = vmatmul.mubr.f32.gmra.mrb[0].mxu0 %v4486
        %v4616 = vpop.f32.mrb[0].mxu0
        %v4617 = vadd.f32 0.0, %v4616
        %v4618 = vpop.f32.mrb[0].mxu0
        %4619 = vmatprep.mubr.f32.mxu0 0.0
        %4620 = vmatmul.mubr.f32.gmra.mrb[0].mxu0 %v4489
        %v4621 = vpop.f32.mrb[0].mxu0
        %v4622 = vadd.f32 0.0, %v4621
        %v4623 = vpop.f32.mrb[0].mxu0
        %4624 = vmatprep.mubr.f32.mxu0 0.0
        %4625 = vmatmul.mubr.f32.gmra.mrb[0].mxu0 %v4492
        %v4626 = vpop.f32.mrb[0].mxu0
        %v4627 = vadd.f32 0.0, %v4626
        %v4628 = vpop.f32.mrb[0].mxu0
        %4629 = vmatprep.mubr.f32.mxu0 0.0
        %4630 = vmatmul.mubr.f32.gmra.mrb[0].mxu0 %v4495
        %v4631 = vpop.f32.mrb[0].mxu0
        %v4632 = vadd.f32 0.0, %v4631
        %v4633 = vpop.f32.mrb[0].mxu0
        %4634 = vmatprep.mubr.f32.mxu0 0.0
        %4635 = vmatmul.mubr.f32.gmra.mrb[0].mxu0 %v4498
        %v4636 = vpop.f32.mrb[0].mxu0
        %v4637 = vadd.f32 0.0, %v4636
        %v4638 = vpop.f32.mrb[0].mxu0
        %4639 = vmatprep.mubr.f32.mxu0 0.0
        %4640 = vmatmul.mubr.f32.gmra.mrb[0].mxu0 %v4501
        %v4641 = vpop.f32.mrb[0].mxu0
        %v4642 = vadd.f32 0.0, %v4641
        %v4643 = vpop.f32.mrb[0].mxu0
        %4644 = vmatprep.mubr.f32.mxu0 0.0
        %4645 = vmatmul.mubr.f32.gmra.mrb[0].mxu0 %v4504
        %v4646 = vpop.f32.mrb[0].mxu0
        %v4647 = vadd.f32 0.0, %v4646
        %v4648 = vpop.f32.mrb[0].mxu0
        %4649 = vmatprep.mubr.f32.mxu0 0.0
        %4650 = vmatmul.mubr.f32.gmra.mrb[0].mxu0 %v4507
        %v4651 = vpop.f32.mrb[0].mxu0
        %v4652 = vadd.f32 0.0, %v4651
        %v4653 = vpop.f32.mrb[0].mxu0
        %4654 = vmatprep.mubr.f32.mxu0 0.0
        %4655 = vmatmul.mubr.f32.gmra.mrb[0].mxu0 %v4510
        %v4656 = vpop.f32.mrb[0].mxu0
        %v4657 = vadd.f32 0.0, %v4656
        %v4658 = vpop.f32.mrb[0].mxu0
        %4659 = vdwg.mxu0
        %v4660 = vadd.f32 %v4383, %v4582
        %v4661 = vadd.f32 %v4384, %v4587
        %v4662 = vadd.f32 %v4385, %v4592
        %v4663 = vadd.f32 %v4386, %v4597
        %v4664 = vadd.f32 %v4387, %v4602
        %v4665 = vadd.f32 %v4388, %v4607
        %v4666 = vadd.f32 %v4389, %v4612
        %v4667 = vadd.f32 %v4390, %v4617
        %v4668 = vadd.f32 %v4391, %v4622
        %v4669 = vadd.f32 %v4392, %v4627
        %v4670 = vadd.f32 %v4393, %v4632
        %v4671 = vadd.f32 %v4394, %v4637
        %v4672 = vadd.f32 %v4395, %v4642
        %v4673 = vadd.f32 %v4396, %v4647
        %v4674 = vadd.f32 %v4397, %v4652
        %v4675 = vadd.f32 %v4398, %v4657
        %v4676 = vld [vmem:[%s2351] sm:$0xf]
        %v4678 = vsel %vm516, %v4399, 0
        %v4681 = vsel %vm516, %v4400, 0
        %v4684 = vsel %vm516, %v4401, 0
        %v4687 = vsel %vm516, %v4402, 0
        %v4690 = vsel %vm516, %v4403, 0
        %v4693 = vsel %vm516, %v4404, 0
        %v4696 = vsel %vm516, %v4405, 0
        %v4699 = vsel %vm516, %v4406, 0
        %v4702 = vsel %vm516, %v4407, 0
        %v4705 = vsel %vm516, %v4408, 0
        %v4708 = vsel %vm516, %v4409, 0
        %v4711 = vsel %vm516, %v4410, 0
        %v4714 = vsel %vm516, %v4411, 0
        %v4717 = vsel %vm516, %v4412, 0
        %v4720 = vsel %vm516, %v4413, 0
        %v4723 = vsel %vm516, %v4414, 0
        %v4726 = vsel %vm711, %v4676, 0
        %4728 = vmatprep.subr.mxu0 0.0
        %4729 = vmatpush1.msra.mxu0 %v4726
        %4730 = vmatprep.subr.mxu0 0.0
        %4731 = vmatpush1.msra.mxu0 0.0
        %4732 = vmatprep.subr.mxu0 0.0
        %4733 = vmatpush1.msra.mxu0 0.0
        %4734 = vmatprep.subr.mxu0 0.0
        %4735 = vmatpush1.msra.mxu0 0.0
        %4736 = vmatprep.subr.mxu0 0.0
        %4737 = vmatpush1.msra.mxu0 0.0
        %4738 = vmatprep.subr.mxu0 0.0
        %4739 = vmatpush1.msra.mxu0 0.0
        %4740 = vmatprep.subr.mxu0 0.0
        %4741 = vmatpush1.msra.mxu0 0.0
        %4742 = vmatprep.subr.mxu0 0.0
        %4743 = vmatpush1.msra.mxu0 0.0
        %4744 = vmatprep.subr.mxu0 0.0
        %4745 = vmatpush1.msra.mxu0 0.0
        %4746 = vmatprep.subr.mxu0 0.0
        %4747 = vmatpush1.msra.mxu0 0.0
        %4748 = vmatprep.subr.mxu0 0.0
        %4749 = vmatpush1.msra.mxu0 0.0
        %4750 = vmatprep.subr.mxu0 0.0
        %4751 = vmatpush1.msra.mxu0 0.0
        %4752 = vmatprep.subr.mxu0 0.0
        %4753 = vmatpush1.msra.mxu0 0.0
        %4754 = vmatprep.subr.mxu0 0.0
        %4755 = vmatpush1.msra.mxu0 0.0
        %4756 = vmatprep.subr.mxu0 0.0
        %4757 = vmatpush1.msra.mxu0 0.0
        %4758 = vmatprep.subr.mxu0 0.0
        %4759 = vmatpush1.msra.mxu0 0.0
        %4760 = vmatprep.subr.mxu0 0.0
        %4761 = vmatpush1.msra.mxu0 0.0
        %4762 = vmatprep.subr.mxu0 0.0
        %4763 = vmatpush1.msra.mxu0 0.0
        %4764 = vmatprep.subr.mxu0 0.0
        %4765 = vmatpush1.msra.mxu0 0.0
        %4766 = vmatprep.subr.mxu0 0.0
        %4767 = vmatpush1.msra.mxu0 0.0
        %4768 = vmatprep.subr.mxu0 0.0
        %4769 = vmatpush1.msra.mxu0 0.0
        %4770 = vmatprep.subr.mxu0 0.0
        %4771 = vmatpush1.msra.mxu0 0.0
        %4772 = vmatprep.subr.mxu0 0.0
        %4773 = vmatpush1.msra.mxu0 0.0
        %4774 = vmatprep.subr.mxu0 0.0
        %4775 = vmatpush1.msra.mxu0 0.0
        %4776 = vmatprep.subr.mxu0 0.0
        %4777 = vmatpush1.msra.mxu0 0.0
        %4778 = vmatprep.subr.mxu0 0.0
        %4779 = vmatpush1.msra.mxu0 0.0
        %4780 = vmatprep.subr.mxu0 0.0
        %4781 = vmatpush1.msra.mxu0 0.0
        %4782 = vmatprep.subr.mxu0 0.0
        %4783 = vmatpush1.msra.mxu0 0.0
        %4784 = vmatprep.subr.mxu0 0.0
        %4785 = vmatpush1.msra.mxu0 0.0
        %4786 = vmatprep.subr.mxu0 0.0
        %4787 = vmatpush1.msra.mxu0 0.0
        %4788 = vmatprep.subr.mxu0 0.0
        %4789 = vmatpush1.msra.mxu0 0.0
        %4790 = vmatprep.subr.mxu0 0.0
        %4791 = vmatpush1.msra.mxu0 0.0
        %4792 = vmatprep.mubr.f32.mxu0 0.0
        %4793 = vmatmul.mubr.f32.gmra.mrb[0].mxu0 %v4678
        %v4794 = vpop.f32.mrb[0].mxu0
        %v4795 = vadd.f32 0.0, %v4794
        %v4796 = vpop.f32.mrb[0].mxu0
        %4797 = vmatprep.mubr.f32.mxu0 0.0
        %4798 = vmatmul.mubr.f32.gmra.mrb[0].mxu0 %v4681
        %v4799 = vpop.f32.mrb[0].mxu0
        %v4800 = vadd.f32 0.0, %v4799
        %v4801 = vpop.f32.mrb[0].mxu0
        %4802 = vmatprep.mubr.f32.mxu0 0.0
        %4803 = vmatmul.mubr.f32.gmra.mrb[0].mxu0 %v4684
        %v4804 = vpop.f32.mrb[0].mxu0
        %v4805 = vadd.f32 0.0, %v4804
        %v4806 = vpop.f32.mrb[0].mxu0
        %4807 = vmatprep.mubr.f32.mxu0 0.0
        %4808 = vmatmul.mubr.f32.gmra.mrb[0].mxu0 %v4687
        %v4809 = vpop.f32.mrb[0].mxu0
        %v4810 = vadd.f32 0.0, %v4809
        %v4811 = vpop.f32.mrb[0].mxu0
        %4812 = vmatprep.mubr.f32.mxu0 0.0
        %4813 = vmatmul.mubr.f32.gmra.mrb[0].mxu0 %v4690
        %v4814 = vpop.f32.mrb[0].mxu0
        %v4815 = vadd.f32 0.0, %v4814
        %v4816 = vpop.f32.mrb[0].mxu0
        %4817 = vmatprep.mubr.f32.mxu0 0.0
        %4818 = vmatmul.mubr.f32.gmra.mrb[0].mxu0 %v4693
        %v4819 = vpop.f32.mrb[0].mxu0
        %v4820 = vadd.f32 0.0, %v4819
        %v4821 = vpop.f32.mrb[0].mxu0
        %4822 = vmatprep.mubr.f32.mxu0 0.0
        %4823 = vmatmul.mubr.f32.gmra.mrb[0].mxu0 %v4696
        %v4824 = vpop.f32.mrb[0].mxu0
        %v4825 = vadd.f32 0.0, %v4824
        %v4826 = vpop.f32.mrb[0].mxu0
        %4827 = vmatprep.mubr.f32.mxu0 0.0
        %4828 = vmatmul.mubr.f32.gmra.mrb[0].mxu0 %v4699
        %v4829 = vpop.f32.mrb[0].mxu0
        %v4830 = vadd.f32 0.0, %v4829
        %v4831 = vpop.f32.mrb[0].mxu0
        %4832 = vmatprep.mubr.f32.mxu0 0.0
        %4833 = vmatmul.mubr.f32.gmra.mrb[0].mxu0 %v4702
        %v4834 = vpop.f32.mrb[0].mxu0
        %v4835 = vadd.f32 0.0, %v4834
        %v4836 = vpop.f32.mrb[0].mxu0
        %4837 = vmatprep.mubr.f32.mxu0 0.0
        %4838 = vmatmul.mubr.f32.gmra.mrb[0].mxu0 %v4705
        %v4839 = vpop.f32.mrb[0].mxu0
        %v4840 = vadd.f32 0.0, %v4839
        %v4841 = vpop.f32.mrb[0].mxu0
        %4842 = vmatprep.mubr.f32.mxu0 0.0
        %4843 = vmatmul.mubr.f32.gmra.mrb[0].mxu0 %v4708
        %v4844 = vpop.f32.mrb[0].mxu0
        %v4845 = vadd.f32 0.0, %v4844
        %v4846 = vpop.f32.mrb[0].mxu0
        %4847 = vmatprep.mubr.f32.mxu0 0.0
        %4848 = vmatmul.mubr.f32.gmra.mrb[0].mxu0 %v4711
        %v4849 = vpop.f32.mrb[0].mxu0
        %v4850 = vadd.f32 0.0, %v4849
        %v4851 = vpop.f32.mrb[0].mxu0
        %4852 = vmatprep.mubr.f32.mxu0 0.0
        %4853 = vmatmul.mubr.f32.gmra.mrb[0].mxu0 %v4714
        %v4854 = vpop.f32.mrb[0].mxu0
        %v4855 = vadd.f32 0.0, %v4854
        %v4856 = vpop.f32.mrb[0].mxu0
        %4857 = vmatprep.mubr.f32.mxu0 0.0
        %4858 = vmatmul.mubr.f32.gmra.mrb[0].mxu0 %v4717
        %v4859 = vpop.f32.mrb[0].mxu0
        %v4860 = vadd.f32 0.0, %v4859
        %v4861 = vpop.f32.mrb[0].mxu0
        %4862 = vmatprep.mubr.f32.mxu0 0.0
        %4863 = vmatmul.mubr.f32.gmra.mrb[0].mxu0 %v4720
        %v4864 = vpop.f32.mrb[0].mxu0
        %v4865 = vadd.f32 0.0, %v4864
        %v4866 = vpop.f32.mrb[0].mxu0
        %4867 = vmatprep.mubr.f32.mxu0 0.0
        %4868 = vmatmul.mubr.f32.gmra.mrb[0].mxu0 %v4723
        %v4869 = vpop.f32.mrb[0].mxu0
        %v4870 = vadd.f32 0.0, %v4869
        %v4871 = vpop.f32.mrb[0].mxu0
        %4872 = vdwg.mxu0
        %v4873 = vadd.f32 %v4660, %v4795
        %v4874 = vadd.f32 %v4661, %v4800
        %v4875 = vadd.f32 %v4662, %v4805
        %v4876 = vadd.f32 %v4663, %v4810
        %v4877 = vadd.f32 %v4664, %v4815
        %v4878 = vadd.f32 %v4665, %v4820
        %v4879 = vadd.f32 %v4666, %v4825
        %v4880 = vadd.f32 %v4667, %v4830
        %v4881 = vadd.f32 %v4668, %v4835
        %v4882 = vadd.f32 %v4669, %v4840
        %v4883 = vadd.f32 %v4670, %v4845
        %v4884 = vadd.f32 %v4671, %v4850
        %v4885 = vadd.f32 %v4672, %v4855
        %v4886 = vadd.f32 %v4673, %v4860
        %v4887 = vadd.f32 %v4674, %v4865
        %v4888 = vadd.f32 %v4675, %v4870
        %v4889 = vrot.slane %v4399, 1
        %v4890 = vrot.slane %v4400, 1
        %v4891 = vrot.slane %v4401, 1
        %v4892 = vrot.slane %v4402, 1
        %v4893 = vrot.slane %v4403, 1
        %v4894 = vrot.slane %v4404, 1
        %v4895 = vrot.slane %v4405, 1
        %v4896 = vrot.slane %v4406, 1
        %v4897 = vrot.slane %v4407, 1
        %v4898 = vrot.slane %v4408, 1
        %v4899 = vrot.slane %v4409, 1
        %v4900 = vrot.slane %v4410, 1
        %v4901 = vrot.slane %v4411, 1
        %v4902 = vrot.slane %v4412, 1
        %v4903 = vrot.slane %v4413, 1
        %v4904 = vrot.slane %v4414, 1
        %v4905 = vsel %vm1072, %v4903, %v4904
        %v4906 = vsel %vm1072, %v4902, %v4903
        %v4907 = vsel %vm1072, %v4901, %v4902
        %v4908 = vsel %vm1072, %v4900, %v4901
        %v4909 = vsel %vm1072, %v4899, %v4900
        %v4910 = vsel %vm1072, %v4898, %v4899
        %v4911 = vsel %vm1072, %v4897, %v4898
        %v4912 = vsel %vm1072, %v4896, %v4897
        %v4913 = vsel %vm1072, %v4895, %v4896
        %v4914 = vsel %vm1072, %v4894, %v4895
        %v4915 = vsel %vm1072, %v4893, %v4894
        %v4916 = vsel %vm1072, %v4892, %v4893
        %v4917 = vsel %vm1072, %v4891, %v4892
        %v4918 = vsel %vm1072, %v4890, %v4891
        %v4919 = vsel %vm1072, %v4889, %v4890
        %v4920 = vsel %vm1072, %v4904, %v4889
        %v4921 = vmul.f32 %v4919, %v452
        %v4922 = vmul.f32 %v4918, %v453
        %v4923 = vmul.f32 %v4917, %v454
        %v4924 = vmul.f32 %v4916, %v455
        %v4925 = vmul.f32 %v4915, %v456
        %v4926 = vmul.f32 %v4914, %v457
        %v4927 = vmul.f32 %v4913, %v458
        %v4928 = vmul.f32 %v4912, %v459
        %v4929 = vmul.f32 %v4911, %v460
        %v4930 = vmul.f32 %v4910, %v461
        %v4931 = vmul.f32 %v4909, %v462
        %v4932 = vmul.f32 %v4908, %v463
        %v4933 = vmul.f32 %v4907, %v464
        %v4934 = vmul.f32 %v4906, %v465
        %v4935 = vmul.f32 %v4905, %v466
        %v4936 = vmul.f32 %v4920, %v467
        %v4937 = vld [vmem:[%s2613] sm:$0xf]
        %v4939 = vsel %vm516, %v4921, 0
        %v4942 = vsel %vm516, %v4922, 0
        %v4945 = vsel %vm516, %v4923, 0
        %v4948 = vsel %vm516, %v4924, 0
        %v4951 = vsel %vm516, %v4925, 0
        %v4954 = vsel %vm516, %v4926, 0
        %v4957 = vsel %vm516, %v4927, 0
        %v4960 = vsel %vm516, %v4928, 0
        %v4963 = vsel %vm516, %v4929, 0
        %v4966 = vsel %vm516, %v4930, 0
        %v4969 = vsel %vm516, %v4931, 0
        %v4972 = vsel %vm516, %v4932, 0
        %v4975 = vsel %vm516, %v4933, 0
        %v4978 = vsel %vm516, %v4934, 0
        %v4981 = vsel %vm516, %v4935, 0
        %v4984 = vsel %vm516, %v4936, 0
        %v4987 = vsel %vm711, %v4937, 0
        %4989 = vmatprep.subr.mxu0 0.0
        %4990 = vmatpush1.msra.mxu0 %v4987
        %4991 = vmatprep.subr.mxu0 0.0
        %4992 = vmatpush1.msra.mxu0 0.0
        %4993 = vmatprep.subr.mxu0 0.0
        %4994 = vmatpush1.msra.mxu0 0.0
        %4995 = vmatprep.subr.mxu0 0.0
        %4996 = vmatpush1.msra.mxu0 0.0
        %4997 = vmatprep.subr.mxu0 0.0
        %4998 = vmatpush1.msra.mxu0 0.0
        %4999 = vmatprep.subr.mxu0 0.0
        %5000 = vmatpush1.msra.mxu0 0.0
        %5001 = vmatprep.subr.mxu0 0.0
        %5002 = vmatpush1.msra.mxu0 0.0
        %5003 = vmatprep.subr.mxu0 0.0
        %5004 = vmatpush1.msra.mxu0 0.0
        %5005 = vmatprep.subr.mxu0 0.0
        %5006 = vmatpush1.msra.mxu0 0.0
        %5007 = vmatprep.subr.mxu0 0.0
        %5008 = vmatpush1.msra.mxu0 0.0
        %5009 = vmatprep.subr.mxu0 0.0
        %5010 = vmatpush1.msra.mxu0 0.0
        %5011 = vmatprep.subr.mxu0 0.0
        %5012 = vmatpush1.msra.mxu0 0.0
        %5013 = vmatprep.subr.mxu0 0.0
        %5014 = vmatpush1.msra.mxu0 0.0
        %5015 = vmatprep.subr.mxu0 0.0
        %5016 = vmatpush1.msra.mxu0 0.0
        %5017 = vmatprep.subr.mxu0 0.0
        %5018 = vmatpush1.msra.mxu0 0.0
        %5019 = vmatprep.subr.mxu0 0.0
        %5020 = vmatpush1.msra.mxu0 0.0
        %5021 = vmatprep.subr.mxu0 0.0
        %5022 = vmatpush1.msra.mxu0 0.0
        %5023 = vmatprep.subr.mxu0 0.0
        %5024 = vmatpush1.msra.mxu0 0.0
        %5025 = vmatprep.subr.mxu0 0.0
        %5026 = vmatpush1.msra.mxu0 0.0
        %5027 = vmatprep.subr.mxu0 0.0
        %5028 = vmatpush1.msra.mxu0 0.0
        %5029 = vmatprep.subr.mxu0 0.0
        %5030 = vmatpush1.msra.mxu0 0.0
        %5031 = vmatprep.subr.mxu0 0.0
        %5032 = vmatpush1.msra.mxu0 0.0
        %5033 = vmatprep.subr.mxu0 0.0
        %5034 = vmatpush1.msra.mxu0 0.0
        %5035 = vmatprep.subr.mxu0 0.0
        %5036 = vmatpush1.msra.mxu0 0.0
        %5037 = vmatprep.subr.mxu0 0.0
        %5038 = vmatpush1.msra.mxu0 0.0
        %5039 = vmatprep.subr.mxu0 0.0
        %5040 = vmatpush1.msra.mxu0 0.0
        %5041 = vmatprep.subr.mxu0 0.0
        %5042 = vmatpush1.msra.mxu0 0.0
        %5043 = vmatprep.subr.mxu0 0.0
        %5044 = vmatpush1.msra.mxu0 0.0
        %5045 = vmatprep.subr.mxu0 0.0
        %5046 = vmatpush1.msra.mxu0 0.0
        %5047 = vmatprep.subr.mxu0 0.0
        %5048 = vmatpush1.msra.mxu0 0.0
        %5049 = vmatprep.subr.mxu0 0.0
        %5050 = vmatpush1.msra.mxu0 0.0
        %5051 = vmatprep.subr.mxu0 0.0
        %5052 = vmatpush1.msra.mxu0 0.0
        %5053 = vmatprep.mubr.f32.mxu0 0.0
        %5054 = vmatmul.mubr.f32.gmra.mrb[0].mxu0 %v4939
        %v5055 = vpop.f32.mrb[0].mxu0
        %v5056 = vadd.f32 0.0, %v5055
        %v5057 = vpop.f32.mrb[0].mxu0
        %5058 = vmatprep.mubr.f32.mxu0 0.0
        %5059 = vmatmul.mubr.f32.gmra.mrb[0].mxu0 %v4942
        %v5060 = vpop.f32.mrb[0].mxu0
        %v5061 = vadd.f32 0.0, %v5060
        %v5062 = vpop.f32.mrb[0].mxu0
        %5063 = vmatprep.mubr.f32.mxu0 0.0
        %5064 = vmatmul.mubr.f32.gmra.mrb[0].mxu0 %v4945
        %v5065 = vpop.f32.mrb[0].mxu0
        %v5066 = vadd.f32 0.0, %v5065
        %v5067 = vpop.f32.mrb[0].mxu0
        %5068 = vmatprep.mubr.f32.mxu0 0.0
        %5069 = vmatmul.mubr.f32.gmra.mrb[0].mxu0 %v4948
        %v5070 = vpop.f32.mrb[0].mxu0
        %v5071 = vadd.f32 0.0, %v5070
        %v5072 = vpop.f32.mrb[0].mxu0
        %5073 = vmatprep.mubr.f32.mxu0 0.0
        %5074 = vmatmul.mubr.f32.gmra.mrb[0].mxu0 %v4951
        %v5075 = vpop.f32.mrb[0].mxu0
        %v5076 = vadd.f32 0.0, %v5075
        %v5077 = vpop.f32.mrb[0].mxu0
        %5078 = vmatprep.mubr.f32.mxu0 0.0
        %5079 = vmatmul.mubr.f32.gmra.mrb[0].mxu0 %v4954
        %v5080 = vpop.f32.mrb[0].mxu0
        %v5081 = vadd.f32 0.0, %v5080
        %v5082 = vpop.f32.mrb[0].mxu0
        %5083 = vmatprep.mubr.f32.mxu0 0.0
        %5084 = vmatmul.mubr.f32.gmra.mrb[0].mxu0 %v4957
        %v5085 = vpop.f32.mrb[0].mxu0
        %v5086 = vadd.f32 0.0, %v5085
        %v5087 = vpop.f32.mrb[0].mxu0
        %5088 = vmatprep.mubr.f32.mxu0 0.0
        %5089 = vmatmul.mubr.f32.gmra.mrb[0].mxu0 %v4960
        %v5090 = vpop.f32.mrb[0].mxu0
        %v5091 = vadd.f32 0.0, %v5090
        %v5092 = vpop.f32.mrb[0].mxu0
        %5093 = vmatprep.mubr.f32.mxu0 0.0
        %5094 = vmatmul.mubr.f32.gmra.mrb[0].mxu0 %v4963
        %v5095 = vpop.f32.mrb[0].mxu0
        %v5096 = vadd.f32 0.0, %v5095
        %v5097 = vpop.f32.mrb[0].mxu0
        %5098 = vmatprep.mubr.f32.mxu0 0.0
        %5099 = vmatmul.mubr.f32.gmra.mrb[0].mxu0 %v4966
        %v5100 = vpop.f32.mrb[0].mxu0
        %v5101 = vadd.f32 0.0, %v5100
        %v5102 = vpop.f32.mrb[0].mxu0
        %5103 = vmatprep.mubr.f32.mxu0 0.0
        %5104 = vmatmul.mubr.f32.gmra.mrb[0].mxu0 %v4969
        %v5105 = vpop.f32.mrb[0].mxu0
        %v5106 = vadd.f32 0.0, %v5105
        %v5107 = vpop.f32.mrb[0].mxu0
        %5108 = vmatprep.mubr.f32.mxu0 0.0
        %5109 = vmatmul.mubr.f32.gmra.mrb[0].mxu0 %v4972
        %v5110 = vpop.f32.mrb[0].mxu0
        %v5111 = vadd.f32 0.0, %v5110
        %v5112 = vpop.f32.mrb[0].mxu0
        %5113 = vmatprep.mubr.f32.mxu0 0.0
        %5114 = vmatmul.mubr.f32.gmra.mrb[0].mxu0 %v4975
        %v5115 = vpop.f32.mrb[0].mxu0
        %v5116 = vadd.f32 0.0, %v5115
        %v5117 = vpop.f32.mrb[0].mxu0
        %5118 = vmatprep.mubr.f32.mxu0 0.0
        %5119 = vmatmul.mubr.f32.gmra.mrb[0].mxu0 %v4978
        %v5120 = vpop.f32.mrb[0].mxu0
        %v5121 = vadd.f32 0.0, %v5120
        %v5122 = vpop.f32.mrb[0].mxu0
        %5123 = vmatprep.mubr.f32.mxu0 0.0
        %5124 = vmatmul.mubr.f32.gmra.mrb[0].mxu0 %v4981
        %v5125 = vpop.f32.mrb[0].mxu0
        %v5126 = vadd.f32 0.0, %v5125
        %v5127 = vpop.f32.mrb[0].mxu0
        %5128 = vmatprep.mubr.f32.mxu0 0.0
        %5129 = vmatmul.mubr.f32.gmra.mrb[0].mxu0 %v4984
        %v5130 = vpop.f32.mrb[0].mxu0
        %v5131 = vadd.f32 0.0, %v5130
        %v5132 = vpop.f32.mrb[0].mxu0
        %5133 = vdwg.mxu0
        %v5134 = vadd.f32 %v4873, %v5056
        %v5135 = vadd.f32 %v4874, %v5061
        %v5136 = vadd.f32 %v4875, %v5066
        %v5137 = vadd.f32 %v4876, %v5071
        %v5138 = vadd.f32 %v4877, %v5076
        %v5139 = vadd.f32 %v4878, %v5081
        %v5140 = vadd.f32 %v4879, %v5086
        %v5141 = vadd.f32 %v4880, %v5091
        %v5142 = vadd.f32 %v4881, %v5096
        %v5143 = vadd.f32 %v4882, %v5101
        %v5144 = vadd.f32 %v4883, %v5106
        %v5145 = vadd.f32 %v4884, %v5111
        %v5146 = vadd.f32 %v4885, %v5116
        %v5147 = vadd.f32 %v4886, %v5121
        %v5148 = vadd.f32 %v4887, %v5126
        %v5149 = vadd.f32 %v4888, %v5131
        %v5150 = vadd.f32 %v5134, %v2830
        %v5151 = vadd.f32 %v5135, %v2830
        %v5152 = vadd.f32 %v5136, %v2830
        %v5153 = vadd.f32 %v5137, %v2830
        %v5154 = vadd.f32 %v5138, %v2830
        %v5155 = vadd.f32 %v5139, %v2830
        %v5156 = vadd.f32 %v5140, %v2830
        %v5157 = vadd.f32 %v5141, %v2830
        %v5158 = vadd.f32 %v5142, %v2830
        %v5159 = vadd.f32 %v5143, %v2830
        %v5160 = vadd.f32 %v5144, %v2830
        %v5161 = vadd.f32 %v5145, %v2830
        %v5162 = vadd.f32 %v5146, %v2830
        %v5163 = vadd.f32 %v5147, %v2830
        %v5164 = vadd.f32 %v5148, %v2830
        %v5165 = vadd.f32 %v5149, %v2830
        %5166 = vst [vmem:[#allocation3 + $0x90] sm:$0xff] %v5150
        %5167 = vst [vmem:[#allocation3 + $0x98] sm:$0xff] %v5151
        %5168 = vst [vmem:[#allocation3 + $0xa0] sm:$0xff] %v5152
        %5169 = vst [vmem:[#allocation3 + $0xa8] sm:$0xff] %v5153
        %5170 = vst [vmem:[#allocation3 + $0xb0] sm:$0xff] %v5154
        %5171 = vst [vmem:[#allocation3 + $0xb8] sm:$0xff] %v5155
        %5172 = vst [vmem:[#allocation3 + $0xc0] sm:$0xff] %v5156
        %5173 = vst [vmem:[#allocation3 + $0xc8] sm:$0xff] %v5157
        %5174 = vst [vmem:[#allocation3 + $0xd0] sm:$0xff] %v5158
        %5175 = vst [vmem:[#allocation3 + $0xd8] sm:$0xff] %v5159
        %5176 = vst [vmem:[#allocation3 + $0xe0] sm:$0xff] %v5160
        %5177 = vst [vmem:[#allocation3 + $0xe8] sm:$0xff] %v5161
        %5178 = vst [vmem:[#allocation3 + $0xf0] sm:$0xff] %v5162
        %5179 = vst [vmem:[#allocation3 + $0xf8] sm:$0xff] %v5163
        %5180 = vst [vmem:[#allocation3 + $0x100] sm:$0xff] %v5164
        %5181 = vst [vmem:[#allocation3 + $0x108] sm:$0xff] %v5165
        %v5182 = vadd.f32 %v5150, %v5151
        %v5183 = vadd.f32 %v5182, %v5152
        %v5184 = vadd.f32 %v5183, %v5153
        %v5185 = vadd.f32 %v5184, %v5154
        %v5186 = vadd.f32 %v5185, %v5155
        %v5187 = vadd.f32 %v5186, %v5156
        %v5188 = vadd.f32 %v5187, %v5157
        %v5189 = vadd.f32 %v5188, %v5158
        %v5190 = vadd.f32 %v5189, %v5159
        %v5191 = vadd.f32 %v5190, %v5160
        %v5192 = vadd.f32 %v5191, %v5161
        %v5193 = vadd.f32 %v5192, %v5162
        %v5194 = vadd.f32 %v5193, %v5163
        %v5195 = vadd.f32 %v5194, %v5164
        %v5196 = vadd.f32 %v5195, %v5165
        %5197 = vadd.xlane.f32.xlu0 %v5196
        %v5198 = vpop.xlane.xlu0 %5197
        %v5199 = vrot.slane %v5198, 4
        %v5200 = vadd.f32 %v5198, %v5199
        %v5201 = vrot.slane %v5200, 2
        %v5202 = vadd.f32 %v5200, %v5201
        %v5203 = vrot.slane %v5202, 1
        %v5204 = vadd.f32 %v5202, %v5203
        %s5205 = vtos %v5204
        %s5206 = sadd.f32 %s2887, %s5205
        %v5207 = vmul.f32 %v5150, %v5150
        %v5208 = vmul.f32 %v5151, %v5151
        %v5209 = vmul.f32 %v5152, %v5152
        %v5210 = vmul.f32 %v5153, %v5153
        %v5211 = vmul.f32 %v5154, %v5154
        %v5212 = vmul.f32 %v5155, %v5155
        %v5213 = vmul.f32 %v5156, %v5156
        %v5214 = vmul.f32 %v5157, %v5157
        %v5215 = vmul.f32 %v5158, %v5158
        %v5216 = vmul.f32 %v5159, %v5159
        %v5217 = vmul.f32 %v5160, %v5160
        %v5218 = vmul.f32 %v5161, %v5161
        %v5219 = vmul.f32 %v5162, %v5162
        %v5220 = vmul.f32 %v5163, %v5163
        %v5221 = vmul.f32 %v5164, %v5164
        %v5222 = vmul.f32 %v5165, %v5165
        %v5223 = vadd.f32 %v5207, %v5208
        %v5224 = vadd.f32 %v5223, %v5209
        %v5225 = vadd.f32 %v5224, %v5210
        %v5226 = vadd.f32 %v5225, %v5211
        %v5227 = vadd.f32 %v5226, %v5212
        %v5228 = vadd.f32 %v5227, %v5213
        %v5229 = vadd.f32 %v5228, %v5214
        %v5230 = vadd.f32 %v5229, %v5215
        %v5231 = vadd.f32 %v5230, %v5216
        %v5232 = vadd.f32 %v5231, %v5217
        %v5233 = vadd.f32 %v5232, %v5218
        %v5234 = vadd.f32 %v5233, %v5219
        %v5235 = vadd.f32 %v5234, %v5220
        %v5236 = vadd.f32 %v5235, %v5221
        %v5237 = vadd.f32 %v5236, %v5222
        %5238 = vadd.xlane.f32.xlu0 %v5237
        %v5239 = vpop.xlane.xlu0 %5238
        %v5240 = vrot.slane %v5239, 4
        %v5241 = vadd.f32 %v5239, %v5240
        %v5242 = vrot.slane %v5241, 2
        %v5243 = vadd.f32 %v5241, %v5242
        %v5244 = vrot.slane %v5243, 1
        %v5245 = vadd.f32 %v5243, %v5244
        %s5246 = vtos %v5245
        %s5247 = sadd.f32 %s2928, %s5246
        %v5248 = vrcp.pop 2048.0
        %s5249 = vtos %v5248
        %s5250 = smul.f32 %s5206, %s5249
        %v5251 = vrcp.pop 2048.0
        %s5252 = vtos %v5251
        %s5253 = smul.f32 %s5247, %s5252
        %s5254 = smul.f32 %s5250, %s5250
        %s5255 = ssub.f32 %s5253, %s5254
        %s5256 = smax.f32 %s5255, 0.0
        %s5257 = sadd.f32 %s5256, 1e-05
        %v5258 = vstv %s5257
        %v5259 = vrsqrt.pop %v5258
        %s5260 = vtos %v5259
        %v5261 = vld [vmem:[#allocation3 + $0x10] sm:$0xff]
        %v5262 = vld [vmem:[#allocation3 + $0x18] sm:$0xff]
        %v5263 = vld [vmem:[#allocation3 + $0x20] sm:$0xff]
        %v5264 = vld [vmem:[#allocation3 + $0x28] sm:$0xff]
        %v5265 = vld [vmem:[#allocation3 + $0x30] sm:$0xff]
        %v5266 = vld [vmem:[#allocation3 + $0x38] sm:$0xff]
        %v5267 = vld [vmem:[#allocation3 + $0x40] sm:$0xff]
        %v5268 = vld [vmem:[#allocation3 + $0x48] sm:$0xff]
        %v5269 = vld [vmem:[#allocation3 + $0x50] sm:$0xff]
        %v5270 = vld [vmem:[#allocation3 + $0x58] sm:$0xff]
        %v5271 = vld [vmem:[#allocation3 + $0x60] sm:$0xff]
        %v5272 = vld [vmem:[#allocation3 + $0x68] sm:$0xff]
        %v5273 = vld [vmem:[#allocation3 + $0x70] sm:$0xff]
        %v5274 = vld [vmem:[#allocation3 + $0x78] sm:$0xff]
        %v5275 = vld [vmem:[#allocation3 + $0x80] sm:$0xff]
        %v5276 = vld [vmem:[#allocation3 + $0x88] sm:$0xff]
        %v5277 = vstv %s5250
        %v5278 = vsub.f32 %v5261, %v5277
        %v5279 = vsub.f32 %v5262, %v5277
        %v5280 = vsub.f32 %v5263, %v5277
        %v5281 = vsub.f32 %v5264, %v5277
        %v5282 = vsub.f32 %v5265, %v5277
        %v5283 = vsub.f32 %v5266, %v5277
        %v5284 = vsub.f32 %v5267, %v5277
        %v5285 = vsub.f32 %v5268, %v5277
        %v5286 = vsub.f32 %v5269, %v5277
        %v5287 = vsub.f32 %v5270, %v5277
        %v5288 = vsub.f32 %v5271, %v5277
        %v5289 = vsub.f32 %v5272, %v5277
        %v5290 = vsub.f32 %v5273, %v5277
        %v5291 = vsub.f32 %v5274, %v5277
        %v5292 = vsub.f32 %v5275, %v5277
        %v5293 = vsub.f32 %v5276, %v5277
        %v5294 = vstv %s5260
        %v5295 = vmul.f32 %v5278, %v5294
        %v5296 = vmul.f32 %v5279, %v5294
        %v5297 = vmul.f32 %v5280, %v5294
        %v5298 = vmul.f32 %v5281, %v5294
        %v5299 = vmul.f32 %v5282, %v5294
        %v5300 = vmul.f32 %v5283, %v5294
        %v5301 = vmul.f32 %v5284, %v5294
        %v5302 = vmul.f32 %v5285, %v5294
        %v5303 = vmul.f32 %v5286, %v5294
        %v5304 = vmul.f32 %v5287, %v5294
        %v5305 = vmul.f32 %v5288, %v5294
        %v5306 = vmul.f32 %v5289, %v5294
        %v5307 = vmul.f32 %v5290, %v5294
        %v5308 = vmul.f32 %v5291, %v5294
        %v5309 = vmul.f32 %v5292, %v5294
        %v5310 = vmul.f32 %v5293, %v5294
        %v5311 = vlaneseq
        %v5312 = vshrl.u32 %v5311, 7
        %v5313 = vsub.s32 0, %v5312
        %v5314 = vrot.slane %v590, %v5313
        %v5315 = vmul.f32 %v5295, %v5314
        %v5316 = vmul.f32 %v5296, %v5314
        %v5317 = vmul.f32 %v5297, %v5314
        %v5318 = vmul.f32 %v5298, %v5314
        %v5319 = vmul.f32 %v5299, %v5314
        %v5320 = vmul.f32 %v5300, %v5314
        %v5321 = vmul.f32 %v5301, %v5314
        %v5322 = vmul.f32 %v5302, %v5314
        %v5323 = vmul.f32 %v5303, %v5314
        %v5324 = vmul.f32 %v5304, %v5314
        %v5325 = vmul.f32 %v5305, %v5314
        %v5326 = vmul.f32 %v5306, %v5314
        %v5327 = vmul.f32 %v5307, %v5314
        %v5328 = vmul.f32 %v5308, %v5314
        %v5329 = vmul.f32 %v5309, %v5314
        %v5330 = vmul.f32 %v5310, %v5314
        %v5331 = vlaneseq
        %v5332 = vshrl.u32 %v5331, 7
        %v5333 = vsub.s32 0, %v5332
        %v5334 = vrot.slane %v591, %v5333
        %v5335 = vadd.f32 %v5315, %v5334
        %v5336 = vadd.f32 %v5316, %v5334
        %v5337 = vadd.f32 %v5317, %v5334
        %v5338 = vadd.f32 %v5318, %v5334
        %v5339 = vadd.f32 %v5319, %v5334
        %v5340 = vadd.f32 %v5320, %v5334
        %v5341 = vadd.f32 %v5321, %v5334
        %v5342 = vadd.f32 %v5322, %v5334
        %v5343 = vadd.f32 %v5323, %v5334
        %v5344 = vadd.f32 %v5324, %v5334
        %v5345 = vadd.f32 %v5325, %v5334
        %v5346 = vadd.f32 %v5326, %v5334
        %v5347 = vadd.f32 %v5327, %v5334
        %v5348 = vadd.f32 %v5328, %v5334
        %v5349 = vadd.f32 %v5329, %v5334
        %v5350 = vadd.f32 %v5330, %v5334
        %v5351 = vmax.f32 %v5335, 0.0
        %v5352 = vmax.f32 %v5336, 0.0
        %v5353 = vmax.f32 %v5337, 0.0
        %v5354 = vmax.f32 %v5338, 0.0
        %v5355 = vmax.f32 %v5339, 0.0
        %v5356 = vmax.f32 %v5340, 0.0
        %v5357 = vmax.f32 %v5341, 0.0
        %v5358 = vmax.f32 %v5342, 0.0
        %v5359 = vmax.f32 %v5343, 0.0
        %v5360 = vmax.f32 %v5344, 0.0
        %v5361 = vmax.f32 %v5345, 0.0
        %v5362 = vmax.f32 %v5346, 0.0
        %v5363 = vmax.f32 %v5347, 0.0
        %v5364 = vmax.f32 %v5348, 0.0
        %v5365 = vmax.f32 %v5349, 0.0
        %v5366 = vmax.f32 %v5350, 0.0
        %5367 = vst [vmem:[#allocation3 + $0x10] sm:$0xff] %v5351
        %5368 = vst [vmem:[#allocation3 + $0x18] sm:$0xff] %v5352
        %5369 = vst [vmem:[#allocation3 + $0x20] sm:$0xff] %v5353
        %5370 = vst [vmem:[#allocation3 + $0x28] sm:$0xff] %v5354
        %5371 = vst [vmem:[#allocation3 + $0x30] sm:$0xff] %v5355
        %5372 = vst [vmem:[#allocation3 + $0x38] sm:$0xff] %v5356
        %5373 = vst [vmem:[#allocation3 + $0x40] sm:$0xff] %v5357
        %5374 = vst [vmem:[#allocation3 + $0x48] sm:$0xff] %v5358
        %5375 = vst [vmem:[#allocation3 + $0x50] sm:$0xff] %v5359
        %5376 = vst [vmem:[#allocation3 + $0x58] sm:$0xff] %v5360
        %5377 = vst [vmem:[#allocation3 + $0x60] sm:$0xff] %v5361
        %5378 = vst [vmem:[#allocation3 + $0x68] sm:$0xff] %v5362
        %5379 = vst [vmem:[#allocation3 + $0x70] sm:$0xff] %v5363
        %5380 = vst [vmem:[#allocation3 + $0x78] sm:$0xff] %v5364
        %5381 = vst [vmem:[#allocation3 + $0x80] sm:$0xff] %v5365
        %5382 = vst [vmem:[#allocation3 + $0x88] sm:$0xff] %v5366
        %v5383 = vld [vmem:[#allocation3 + $0x90] sm:$0xff]
        %v5384 = vld [vmem:[#allocation3 + $0x98] sm:$0xff]
        %v5385 = vld [vmem:[#allocation3 + $0xa0] sm:$0xff]
        %v5386 = vld [vmem:[#allocation3 + $0xa8] sm:$0xff]
        %v5387 = vld [vmem:[#allocation3 + $0xb0] sm:$0xff]
        %v5388 = vld [vmem:[#allocation3 + $0xb8] sm:$0xff]
        %v5389 = vld [vmem:[#allocation3 + $0xc0] sm:$0xff]
        %v5390 = vld [vmem:[#allocation3 + $0xc8] sm:$0xff]
        %v5391 = vld [vmem:[#allocation3 + $0xd0] sm:$0xff]
        %v5392 = vld [vmem:[#allocation3 + $0xd8] sm:$0xff]
        %v5393 = vld [vmem:[#allocation3 + $0xe0] sm:$0xff]
        %v5394 = vld [vmem:[#allocation3 + $0xe8] sm:$0xff]
        %v5395 = vld [vmem:[#allocation3 + $0xf0] sm:$0xff]
        %v5396 = vld [vmem:[#allocation3 + $0xf8] sm:$0xff]
        %v5397 = vld [vmem:[#allocation3 + $0x100] sm:$0xff]
        %v5398 = vld [vmem:[#allocation3 + $0x108] sm:$0xff]
        %v5399 = vsub.f32 %v5383, %v5277
        %v5400 = vsub.f32 %v5384, %v5277
        %v5401 = vsub.f32 %v5385, %v5277
        %v5402 = vsub.f32 %v5386, %v5277
        %v5403 = vsub.f32 %v5387, %v5277
        %v5404 = vsub.f32 %v5388, %v5277
        %v5405 = vsub.f32 %v5389, %v5277
        %v5406 = vsub.f32 %v5390, %v5277
        %v5407 = vsub.f32 %v5391, %v5277
        %v5408 = vsub.f32 %v5392, %v5277
        %v5409 = vsub.f32 %v5393, %v5277
        %v5410 = vsub.f32 %v5394, %v5277
        %v5411 = vsub.f32 %v5395, %v5277
        %v5412 = vsub.f32 %v5396, %v5277
        %v5413 = vsub.f32 %v5397, %v5277
        %v5414 = vsub.f32 %v5398, %v5277
        %v5415 = vmul.f32 %v5399, %v5294
        %v5416 = vmul.f32 %v5400, %v5294
        %v5417 = vmul.f32 %v5401, %v5294
        %v5418 = vmul.f32 %v5402, %v5294
        %v5419 = vmul.f32 %v5403, %v5294
        %v5420 = vmul.f32 %v5404, %v5294
        %v5421 = vmul.f32 %v5405, %v5294
        %v5422 = vmul.f32 %v5406, %v5294
        %v5423 = vmul.f32 %v5407, %v5294
        %v5424 = vmul.f32 %v5408, %v5294
        %v5425 = vmul.f32 %v5409, %v5294
        %v5426 = vmul.f32 %v5410, %v5294
        %v5427 = vmul.f32 %v5411, %v5294
        %v5428 = vmul.f32 %v5412, %v5294
        %v5429 = vmul.f32 %v5413, %v5294
        %v5430 = vmul.f32 %v5414, %v5294
        %v5431 = vmul.f32 %v5415, %v5314
        %v5432 = vmul.f32 %v5416, %v5314
        %v5433 = vmul.f32 %v5417, %v5314
        %v5434 = vmul.f32 %v5418, %v5314
        %v5435 = vmul.f32 %v5419, %v5314
        %v5436 = vmul.f32 %v5420, %v5314
        %v5437 = vmul.f32 %v5421, %v5314
        %v5438 = vmul.f32 %v5422, %v5314
        %v5439 = vmul.f32 %v5423, %v5314
        %v5440 = vmul.f32 %v5424, %v5314
        %v5441 = vmul.f32 %v5425, %v5314
        %v5442 = vmul.f32 %v5426, %v5314
        %v5443 = vmul.f32 %v5427, %v5314
        %v5444 = vmul.f32 %v5428, %v5314
        %v5445 = vmul.f32 %v5429, %v5314
        %v5446 = vmul.f32 %v5430, %v5314
        %v5447 = vadd.f32 %v5431, %v5334
        %v5448 = vadd.f32 %v5432, %v5334
        %v5449 = vadd.f32 %v5433, %v5334
        %v5450 = vadd.f32 %v5434, %v5334
        %v5451 = vadd.f32 %v5435, %v5334
        %v5452 = vadd.f32 %v5436, %v5334
        %v5453 = vadd.f32 %v5437, %v5334
        %v5454 = vadd.f32 %v5438, %v5334
        %v5455 = vadd.f32 %v5439, %v5334
        %v5456 = vadd.f32 %v5440, %v5334
        %v5457 = vadd.f32 %v5441, %v5334
        %v5458 = vadd.f32 %v5442, %v5334
        %v5459 = vadd.f32 %v5443, %v5334
        %v5460 = vadd.f32 %v5444, %v5334
        %v5461 = vadd.f32 %v5445, %v5334
        %v5462 = vadd.f32 %v5446, %v5334
        %v5463 = vmax.f32 %v5447, 0.0
        %v5464 = vmax.f32 %v5448, 0.0
        %v5465 = vmax.f32 %v5449, 0.0
        %v5466 = vmax.f32 %v5450, 0.0
        %v5467 = vmax.f32 %v5451, 0.0
        %v5468 = vmax.f32 %v5452, 0.0
        %v5469 = vmax.f32 %v5453, 0.0
        %v5470 = vmax.f32 %v5454, 0.0
        %v5471 = vmax.f32 %v5455, 0.0
        %v5472 = vmax.f32 %v5456, 0.0
        %v5473 = vmax.f32 %v5457, 0.0
        %v5474 = vmax.f32 %v5458, 0.0
        %v5475 = vmax.f32 %v5459, 0.0
        %v5476 = vmax.f32 %v5460, 0.0
        %v5477 = vmax.f32 %v5461, 0.0
        %v5478 = vmax.f32 %v5462, 0.0
        %5479 = vst [vmem:[#allocation3 + $0x90] sm:$0xff] %v5463
        %5480 = vst [vmem:[#allocation3 + $0x98] sm:$0xff] %v5464
        %5481 = vst [vmem:[#allocation3 + $0xa0] sm:$0xff] %v5465
        %5482 = vst [vmem:[#allocation3 + $0xa8] sm:$0xff] %v5466
        %5483 = vst [vmem:[#allocation3 + $0xb0] sm:$0xff] %v5467
        %5484 = vst [vmem:[#allocation3 + $0xb8] sm:$0xff] %v5468
        %5485 = vst [vmem:[#allocation3 + $0xc0] sm:$0xff] %v5469
        %5486 = vst [vmem:[#allocation3 + $0xc8] sm:$0xff] %v5470
        %5487 = vst [vmem:[#allocation3 + $0xd0] sm:$0xff] %v5471
        %5488 = vst [vmem:[#allocation3 + $0xd8] sm:$0xff] %v5472
        %5489 = vst [vmem:[#allocation3 + $0xe0] sm:$0xff] %v5473
        %5490 = vst [vmem:[#allocation3 + $0xe8] sm:$0xff] %v5474
        %5491 = vst [vmem:[#allocation3 + $0xf0] sm:$0xff] %v5475
        %5492 = vst [vmem:[#allocation3 + $0xf8] sm:$0xff] %v5476
        %5493 = vst [vmem:[#allocation3 + $0x100] sm:$0xff] %v5477
        %5494 = vst [vmem:[#allocation3 + $0x108] sm:$0xff] %v5478
        %v5495 = vld [vmem:[#allocation3] sm:$0xff]
        %v5496 = vld [vmem:[#allocation3 + $0x8] sm:$0xff]
        %v5497 = vld [vmem:[#allocation3 + $0x10] sm:$0xff]
        %v5498 = vld [vmem:[#allocation3 + $0x18] sm:$0xff]
        %v5499 = vld [vmem:[#allocation3 + $0x20] sm:$0xff]
        %v5500 = vld [vmem:[#allocation3 + $0x28] sm:$0xff]
        %v5501 = vld [vmem:[#allocation3 + $0x30] sm:$0xff]
        %v5502 = vld [vmem:[#allocation3 + $0x38] sm:$0xff]
        %v5503 = vld [vmem:[#allocation3 + $0x40] sm:$0xff]
        %v5504 = vld [vmem:[#allocation3 + $0x48] sm:$0xff]
        %v5505 = vld [vmem:[#allocation3 + $0x50] sm:$0xff]
        %v5506 = vld [vmem:[#allocation3 + $0x58] sm:$0xff]
        %v5507 = vld [vmem:[#allocation3 + $0x60] sm:$0xff]
        %v5508 = vld [vmem:[#allocation3 + $0x68] sm:$0xff]
        %v5509 = vld [vmem:[#allocation3 + $0x70] sm:$0xff]
        %v5510 = vld [vmem:[#allocation3 + $0x78] sm:$0xff]
        %v5511 = vrot.slane %v5495, 7
        %v5512 = vrot.slane %v5496, 7
        %v5513 = vrot.slane %v5497, 7
        %v5514 = vrot.slane %v5498, 7
        %v5515 = vrot.slane %v5499, 7
        %v5516 = vrot.slane %v5500, 7
        %v5517 = vrot.slane %v5501, 7
        %v5518 = vrot.slane %v5502, 7
        %v5519 = vrot.slane %v5503, 7
        %v5520 = vrot.slane %v5504, 7
        %v5521 = vrot.slane %v5505, 7
        %v5522 = vrot.slane %v5506, 7
        %v5523 = vrot.slane %v5507, 7
        %v5524 = vrot.slane %v5508, 7
        %v5525 = vrot.slane %v5509, 7
        %v5526 = vrot.slane %v5510, 7
        %v5527 = vsel %vm627, %v5525, %v5526
        %v5528 = vsel %vm627, %v5524, %v5525
        %v5529 = vsel %vm627, %v5523, %v5524
        %v5530 = vsel %vm627, %v5522, %v5523
        %v5531 = vsel %vm627, %v5521, %v5522
        %v5532 = vsel %vm627, %v5520, %v5521
        %v5533 = vsel %vm627, %v5519, %v5520
        %v5534 = vsel %vm627, %v5518, %v5519
        %v5535 = vsel %vm627, %v5517, %v5518
        %v5536 = vsel %vm627, %v5516, %v5517
        %v5537 = vsel %vm627, %v5515, %v5516
        %v5538 = vsel %vm627, %v5514, %v5515
        %v5539 = vsel %vm627, %v5513, %v5514
        %v5540 = vsel %vm627, %v5512, %v5513
        %v5541 = vsel %vm627, %v5511, %v5512
        %v5542 = vsel %vm627, %v5526, %v5511
        %v5543 = vmul.f32 %v5542, %v500
        %v5544 = vmul.f32 %v5541, %v501
        %v5545 = vmul.f32 %v5540, %v502
        %v5546 = vmul.f32 %v5539, %v503
        %v5547 = vmul.f32 %v5538, %v504
        %v5548 = vmul.f32 %v5537, %v505
        %v5549 = vmul.f32 %v5536, %v506
        %v5550 = vmul.f32 %v5535, %v507
        %v5551 = vmul.f32 %v5534, %v508
        %v5552 = vmul.f32 %v5533, %v509
        %v5553 = vmul.f32 %v5532, %v510
        %v5554 = vmul.f32 %v5531, %v511
        %v5555 = vmul.f32 %v5530, %v512
        %v5556 = vmul.f32 %v5529, %v513
        %v5557 = vmul.f32 %v5528, %v514
        %v5558 = vmul.f32 %v5527, %v515
        %v5559 = vld [vmem:[#allocation4] sm:$0xff]
        %v5560 = vld [vmem:[#allocation4 + $0x8] sm:$0xff]
        %v5561 = vld [vmem:[#allocation4 + $0x10] sm:$0xff]
        %v5562 = vld [vmem:[#allocation4 + $0x18] sm:$0xff]
        %v5563 = vld [vmem:[#allocation4 + $0x20] sm:$0xff]
        %v5564 = vld [vmem:[#allocation4 + $0x28] sm:$0xff]
        %v5565 = vld [vmem:[#allocation4 + $0x30] sm:$0xff]
        %v5566 = vld [vmem:[#allocation4 + $0x38] sm:$0xff]
        %v5567 = vld [vmem:[#allocation4 + $0x40] sm:$0xff]
        %v5568 = vld [vmem:[#allocation4 + $0x48] sm:$0xff]
        %v5569 = vld [vmem:[#allocation4 + $0x50] sm:$0xff]
        %v5570 = vld [vmem:[#allocation4 + $0x58] sm:$0xff]
        %v5571 = vld [vmem:[#allocation4 + $0x60] sm:$0xff]
        %v5572 = vld [vmem:[#allocation4 + $0x68] sm:$0xff]
        %v5573 = vld [vmem:[#allocation4 + $0x70] sm:$0xff]
        %v5574 = vld [vmem:[#allocation4 + $0x78] sm:$0xff]
        %s5575 = scalar_lea.vmem [#allocation4], 128
        %v5576 = vld [vmem:[%s5575] sm:$0xff]
        %v5577 = vld [vmem:[%s5575 + $0x8] sm:$0xff]
        %v5578 = vld [vmem:[%s5575 + $0x10] sm:$0xff]
        %v5579 = vld [vmem:[%s5575 + $0x18] sm:$0xff]
        %v5580 = vld [vmem:[%s5575 + $0x20] sm:$0xff]
        %v5581 = vld [vmem:[%s5575 + $0x28] sm:$0xff]
        %v5582 = vld [vmem:[%s5575 + $0x30] sm:$0xff]
        %v5583 = vld [vmem:[%s5575 + $0x38] sm:$0xff]
        %v5584 = vld [vmem:[%s5575 + $0x40] sm:$0xff]
        %v5585 = vld [vmem:[%s5575 + $0x48] sm:$0xff]
        %v5586 = vld [vmem:[%s5575 + $0x50] sm:$0xff]
        %v5587 = vld [vmem:[%s5575 + $0x58] sm:$0xff]
        %v5588 = vld [vmem:[%s5575 + $0x60] sm:$0xff]
        %v5589 = vld [vmem:[%s5575 + $0x68] sm:$0xff]
        %v5590 = vld [vmem:[%s5575 + $0x70] sm:$0xff]
        %v5591 = vld [vmem:[%s5575 + $0x78] sm:$0xff]
        %5592 = vmatprep.subr.mxu0 0.0
        %5593 = vmatpush1.msra.mxu0 %v5576
        %5594 = vmatprep.subr.mxu0 0.0
        %5595 = vmatpush1.msra.mxu0 %v5577
        %5596 = vmatprep.subr.mxu0 0.0
        %5597 = vmatpush1.msra.mxu0 %v5578
        %5598 = vmatprep.subr.mxu0 0.0
        %5599 = vmatpush1.msra.mxu0 %v5579
        %5600 = vmatprep.subr.mxu0 0.0
        %5601 = vmatpush1.msra.mxu0 %v5580
        %5602 = vmatprep.subr.mxu0 0.0
        %5603 = vmatpush1.msra.mxu0 %v5581
        %5604 = vmatprep.subr.mxu0 0.0
        %5605 = vmatpush1.msra.mxu0 %v5582
        %5606 = vmatprep.subr.mxu0 0.0
        %5607 = vmatpush1.msra.mxu0 %v5583
        %5608 = vmatprep.subr.mxu0 0.0
        %5609 = vmatpush1.msra.mxu0 %v5584
        %5610 = vmatprep.subr.mxu0 0.0
        %5611 = vmatpush1.msra.mxu0 %v5585
        %5612 = vmatprep.subr.mxu0 0.0
        %5613 = vmatpush1.msra.mxu0 %v5586
        %5614 = vmatprep.subr.mxu0 0.0
        %5615 = vmatpush1.msra.mxu0 %v5587
        %5616 = vmatprep.subr.mxu0 0.0
        %5617 = vmatpush1.msra.mxu0 %v5588
        %5618 = vmatprep.subr.mxu0 0.0
        %5619 = vmatpush1.msra.mxu0 %v5589
        %5620 = vmatprep.subr.mxu0 0.0
        %5621 = vmatpush1.msra.mxu0 %v5590
        %5622 = vmatprep.subr.mxu0 0.0
        %5623 = vmatpush1.msra.mxu0 %v5591
        %5624 = vmatprep.subr.mxu0 0.0
        %5625 = vmatpush1.msra.mxu0 0.0
        %5626 = vmatprep.subr.mxu0 0.0
        %5627 = vmatpush1.msra.mxu0 0.0
        %5628 = vmatprep.subr.mxu0 0.0
        %5629 = vmatpush1.msra.mxu0 0.0
        %5630 = vmatprep.subr.mxu0 0.0
        %5631 = vmatpush1.msra.mxu0 0.0
        %5632 = vmatprep.subr.mxu0 0.0
        %5633 = vmatpush1.msra.mxu0 0.0
        %5634 = vmatprep.subr.mxu0 0.0
        %5635 = vmatpush1.msra.mxu0 0.0
        %5636 = vmatprep.subr.mxu0 0.0
        %5637 = vmatpush1.msra.mxu0 0.0
        %5638 = vmatprep.subr.mxu0 0.0
        %5639 = vmatpush1.msra.mxu0 0.0
        %5640 = vmatprep.subr.mxu0 0.0
        %5641 = vmatpush1.msra.mxu0 0.0
        %5642 = vmatprep.subr.mxu0 0.0
        %5643 = vmatpush1.msra.mxu0 0.0
        %5644 = vmatprep.subr.mxu0 0.0
        %5645 = vmatpush1.msra.mxu0 0.0
        %5646 = vmatprep.subr.mxu0 0.0
        %5647 = vmatpush1.msra.mxu0 0.0
        %5648 = vmatprep.subr.mxu0 0.0
        %5649 = vmatpush1.msra.mxu0 0.0
        %5650 = vmatprep.subr.mxu0 0.0
        %5651 = vmatpush1.msra.mxu0 0.0
        %5652 = vmatprep.subr.mxu0 0.0
        %5653 = vmatpush1.msra.mxu0 0.0
        %5654 = vmatprep.subr.mxu0 0.0
        %5655 = vmatpush1.msra.mxu0 0.0
        %5656 = vmatprep.mubr.f32.mxu0 0.0
        %5657 = vmatmul.mubr.f32.gmra.mrb[0].mxu0 %v5495
        %v5658 = vpop.f32.mrb[0].mxu0
        %v5659 = vadd.f32 0.0, %v5658
        %v5660 = vpop.f32.mrb[0].mxu0
        %5661 = vmatprep.mubr.f32.mxu0 0.0
        %5662 = vmatmul.mubr.f32.gmra.mrb[0].mxu0 %v5496
        %v5663 = vpop.f32.mrb[0].mxu0
        %v5664 = vadd.f32 0.0, %v5663
        %v5665 = vpop.f32.mrb[0].mxu0
        %5666 = vmatprep.mubr.f32.mxu0 0.0
        %5667 = vmatmul.mubr.f32.gmra.mrb[0].mxu0 %v5497
        %v5668 = vpop.f32.mrb[0].mxu0
        %v5669 = vadd.f32 0.0, %v5668
        %v5670 = vpop.f32.mrb[0].mxu0
        %5671 = vmatprep.mubr.f32.mxu0 0.0
        %5672 = vmatmul.mubr.f32.gmra.mrb[0].mxu0 %v5498
        %v5673 = vpop.f32.mrb[0].mxu0
        %v5674 = vadd.f32 0.0, %v5673
        %v5675 = vpop.f32.mrb[0].mxu0
        %5676 = vmatprep.mubr.f32.mxu0 0.0
        %5677 = vmatmul.mubr.f32.gmra.mrb[0].mxu0 %v5499
        %v5678 = vpop.f32.mrb[0].mxu0
        %v5679 = vadd.f32 0.0, %v5678
        %v5680 = vpop.f32.mrb[0].mxu0
        %5681 = vmatprep.mubr.f32.mxu0 0.0
        %5682 = vmatmul.mubr.f32.gmra.mrb[0].mxu0 %v5500
        %v5683 = vpop.f32.mrb[0].mxu0
        %v5684 = vadd.f32 0.0, %v5683
        %v5685 = vpop.f32.mrb[0].mxu0
        %5686 = vmatprep.mubr.f32.mxu0 0.0
        %5687 = vmatmul.mubr.f32.gmra.mrb[0].mxu0 %v5501
        %v5688 = vpop.f32.mrb[0].mxu0
        %v5689 = vadd.f32 0.0, %v5688
        %v5690 = vpop.f32.mrb[0].mxu0
        %5691 = vmatprep.mubr.f32.mxu0 0.0
        %5692 = vmatmul.mubr.f32.gmra.mrb[0].mxu0 %v5502
        %v5693 = vpop.f32.mrb[0].mxu0
        %v5694 = vadd.f32 0.0, %v5693
        %v5695 = vpop.f32.mrb[0].mxu0
        %5696 = vmatprep.mubr.f32.mxu0 0.0
        %5697 = vmatmul.mubr.f32.gmra.mrb[0].mxu0 %v5503
        %v5698 = vpop.f32.mrb[0].mxu0
        %v5699 = vadd.f32 0.0, %v5698
        %v5700 = vpop.f32.mrb[0].mxu0
        %5701 = vmatprep.mubr.f32.mxu0 0.0
        %5702 = vmatmul.mubr.f32.gmra.mrb[0].mxu0 %v5504
        %v5703 = vpop.f32.mrb[0].mxu0
        %v5704 = vadd.f32 0.0, %v5703
        %v5705 = vpop.f32.mrb[0].mxu0
        %5706 = vmatprep.mubr.f32.mxu0 0.0
        %5707 = vmatmul.mubr.f32.gmra.mrb[0].mxu0 %v5505
        %v5708 = vpop.f32.mrb[0].mxu0
        %v5709 = vadd.f32 0.0, %v5708
        %v5710 = vpop.f32.mrb[0].mxu0
        %5711 = vmatprep.mubr.f32.mxu0 0.0
        %5712 = vmatmul.mubr.f32.gmra.mrb[0].mxu0 %v5506
        %v5713 = vpop.f32.mrb[0].mxu0
        %v5714 = vadd.f32 0.0, %v5713
        %v5715 = vpop.f32.mrb[0].mxu0
        %5716 = vmatprep.mubr.f32.mxu0 0.0
        %5717 = vmatmul.mubr.f32.gmra.mrb[0].mxu0 %v5507
        %v5718 = vpop.f32.mrb[0].mxu0
        %v5719 = vadd.f32 0.0, %v5718
        %v5720 = vpop.f32.mrb[0].mxu0
        %5721 = vmatprep.mubr.f32.mxu0 0.0
        %5722 = vmatmul.mubr.f32.gmra.mrb[0].mxu0 %v5508
        %v5723 = vpop.f32.mrb[0].mxu0
        %v5724 = vadd.f32 0.0, %v5723
        %v5725 = vpop.f32.mrb[0].mxu0
        %5726 = vmatprep.mubr.f32.mxu0 0.0
        %5727 = vmatmul.mubr.f32.gmra.mrb[0].mxu0 %v5509
        %v5728 = vpop.f32.mrb[0].mxu0
        %v5729 = vadd.f32 0.0, %v5728
        %v5730 = vpop.f32.mrb[0].mxu0
        %5731 = vmatprep.mubr.f32.mxu0 0.0
        %5732 = vmatmul.mubr.f32.gmra.mrb[0].mxu0 %v5510
        %v5733 = vpop.f32.mrb[0].mxu0
        %v5734 = vadd.f32 0.0, %v5733
        %v5735 = vpop.f32.mrb[0].mxu0
        %5736 = vdwg.mxu0
        %5737 = vmatprep.subr.mxu0 0.0
        %5738 = vmatpush1.msra.mxu0 %v5559
        %5739 = vmatprep.subr.mxu0 0.0
        %5740 = vmatpush1.msra.mxu0 %v5560
        %5741 = vmatprep.subr.mxu0 0.0
        %5742 = vmatpush1.msra.mxu0 %v5561
        %5743 = vmatprep.subr.mxu0 0.0
        %5744 = vmatpush1.msra.mxu0 %v5562
        %5745 = vmatprep.subr.mxu0 0.0
        %5746 = vmatpush1.msra.mxu0 %v5563
        %5747 = vmatprep.subr.mxu0 0.0
        %5748 = vmatpush1.msra.mxu0 %v5564
        %5749 = vmatprep.subr.mxu0 0.0
        %5750 = vmatpush1.msra.mxu0 %v5565
        %5751 = vmatprep.subr.mxu0 0.0
        %5752 = vmatpush1.msra.mxu0 %v5566
        %5753 = vmatprep.subr.mxu0 0.0
        %5754 = vmatpush1.msra.mxu0 %v5567
        %5755 = vmatprep.subr.mxu0 0.0
        %5756 = vmatpush1.msra.mxu0 %v5568
        %5757 = vmatprep.subr.mxu0 0.0
        %5758 = vmatpush1.msra.mxu0 %v5569
        %5759 = vmatprep.subr.mxu0 0.0
        %5760 = vmatpush1.msra.mxu0 %v5570
        %5761 = vmatprep.subr.mxu0 0.0
        %5762 = vmatpush1.msra.mxu0 %v5571
        %5763 = vmatprep.subr.mxu0 0.0
        %5764 = vmatpush1.msra.mxu0 %v5572
        %5765 = vmatprep.subr.mxu0 0.0
        %5766 = vmatpush1.msra.mxu0 %v5573
        %5767 = vmatprep.subr.mxu0 0.0
        %5768 = vmatpush1.msra.mxu0 %v5574
        %5769 = vmatprep.subr.mxu0 0.0
        %5770 = vmatpush1.msra.mxu0 0.0
        %5771 = vmatprep.subr.mxu0 0.0
        %5772 = vmatpush1.msra.mxu0 0.0
        %5773 = vmatprep.subr.mxu0 0.0
        %5774 = vmatpush1.msra.mxu0 0.0
        %5775 = vmatprep.subr.mxu0 0.0
        %5776 = vmatpush1.msra.mxu0 0.0
        %5777 = vmatprep.subr.mxu0 0.0
        %5778 = vmatpush1.msra.mxu0 0.0
        %5779 = vmatprep.subr.mxu0 0.0
        %5780 = vmatpush1.msra.mxu0 0.0
        %5781 = vmatprep.subr.mxu0 0.0
        %5782 = vmatpush1.msra.mxu0 0.0
        %5783 = vmatprep.subr.mxu0 0.0
        %5784 = vmatpush1.msra.mxu0 0.0
        %5785 = vmatprep.subr.mxu0 0.0
        %5786 = vmatpush1.msra.mxu0 0.0
        %5787 = vmatprep.subr.mxu0 0.0
        %5788 = vmatpush1.msra.mxu0 0.0
        %5789 = vmatprep.subr.mxu0 0.0
        %5790 = vmatpush1.msra.mxu0 0.0
        %5791 = vmatprep.subr.mxu0 0.0
        %5792 = vmatpush1.msra.mxu0 0.0
        %5793 = vmatprep.subr.mxu0 0.0
        %5794 = vmatpush1.msra.mxu0 0.0
        %5795 = vmatprep.subr.mxu0 0.0
        %5796 = vmatpush1.msra.mxu0 0.0
        %5797 = vmatprep.subr.mxu0 0.0
        %5798 = vmatpush1.msra.mxu0 0.0
        %5799 = vmatprep.subr.mxu0 0.0
        %5800 = vmatpush1.msra.mxu0 0.0
        %5801 = vmatprep.mubr.f32.mxu0 0.0
        %5802 = vmatmul.mubr.f32.gmra.mrb[0].mxu0 %v5543
        %v5803 = vpop.f32.mrb[0].mxu0
        %v5804 = vadd.f32 %v5659, %v5803
        %v5805 = vpop.f32.mrb[0].mxu0
        %5806 = vmatprep.mubr.f32.mxu0 0.0
        %5807 = vmatmul.mubr.f32.gmra.mrb[0].mxu0 %v5544
        %v5808 = vpop.f32.mrb[0].mxu0
        %v5809 = vadd.f32 %v5664, %v5808
        %v5810 = vpop.f32.mrb[0].mxu0
        %5811 = vmatprep.mubr.f32.mxu0 0.0
        %5812 = vmatmul.mubr.f32.gmra.mrb[0].mxu0 %v5545
        %v5813 = vpop.f32.mrb[0].mxu0
        %v5814 = vadd.f32 %v5669, %v5813
        %v5815 = vpop.f32.mrb[0].mxu0
        %5816 = vmatprep.mubr.f32.mxu0 0.0
        %5817 = vmatmul.mubr.f32.gmra.mrb[0].mxu0 %v5546
        %v5818 = vpop.f32.mrb[0].mxu0
        %v5819 = vadd.f32 %v5674, %v5818
        %v5820 = vpop.f32.mrb[0].mxu0
        %5821 = vmatprep.mubr.f32.mxu0 0.0
        %5822 = vmatmul.mubr.f32.gmra.mrb[0].mxu0 %v5547
        %v5823 = vpop.f32.mrb[0].mxu0
        %v5824 = vadd.f32 %v5679, %v5823
        %v5825 = vpop.f32.mrb[0].mxu0
        %5826 = vmatprep.mubr.f32.mxu0 0.0
        %5827 = vmatmul.mubr.f32.gmra.mrb[0].mxu0 %v5548
        %v5828 = vpop.f32.mrb[0].mxu0
        %v5829 = vadd.f32 %v5684, %v5828
        %v5830 = vpop.f32.mrb[0].mxu0
        %5831 = vmatprep.mubr.f32.mxu0 0.0
        %5832 = vmatmul.mubr.f32.gmra.mrb[0].mxu0 %v5549
        %v5833 = vpop.f32.mrb[0].mxu0
        %v5834 = vadd.f32 %v5689, %v5833
        %v5835 = vpop.f32.mrb[0].mxu0
        %5836 = vmatprep.mubr.f32.mxu0 0.0
        %5837 = vmatmul.mubr.f32.gmra.mrb[0].mxu0 %v5550
        %v5838 = vpop.f32.mrb[0].mxu0
        %v5839 = vadd.f32 %v5694, %v5838
        %v5840 = vpop.f32.mrb[0].mxu0
        %5841 = vmatprep.mubr.f32.mxu0 0.0
        %5842 = vmatmul.mubr.f32.gmra.mrb[0].mxu0 %v5551
        %v5843 = vpop.f32.mrb[0].mxu0
        %v5844 = vadd.f32 %v5699, %v5843
        %v5845 = vpop.f32.mrb[0].mxu0
        %5846 = vmatprep.mubr.f32.mxu0 0.0
        %5847 = vmatmul.mubr.f32.gmra.mrb[0].mxu0 %v5552
        %v5848 = vpop.f32.mrb[0].mxu0
        %v5849 = vadd.f32 %v5704, %v5848
        %v5850 = vpop.f32.mrb[0].mxu0
        %5851 = vmatprep.mubr.f32.mxu0 0.0
        %5852 = vmatmul.mubr.f32.gmra.mrb[0].mxu0 %v5553
        %v5853 = vpop.f32.mrb[0].mxu0
        %v5854 = vadd.f32 %v5709, %v5853
        %v5855 = vpop.f32.mrb[0].mxu0
        %5856 = vmatprep.mubr.f32.mxu0 0.0
        %5857 = vmatmul.mubr.f32.gmra.mrb[0].mxu0 %v5554
        %v5858 = vpop.f32.mrb[0].mxu0
        %v5859 = vadd.f32 %v5714, %v5858
        %v5860 = vpop.f32.mrb[0].mxu0
        %5861 = vmatprep.mubr.f32.mxu0 0.0
        %5862 = vmatmul.mubr.f32.gmra.mrb[0].mxu0 %v5555
        %v5863 = vpop.f32.mrb[0].mxu0
        %v5864 = vadd.f32 %v5719, %v5863
        %v5865 = vpop.f32.mrb[0].mxu0
        %5866 = vmatprep.mubr.f32.mxu0 0.0
        %5867 = vmatmul.mubr.f32.gmra.mrb[0].mxu0 %v5556
        %v5868 = vpop.f32.mrb[0].mxu0
        %v5869 = vadd.f32 %v5724, %v5868
        %v5870 = vpop.f32.mrb[0].mxu0
        %5871 = vmatprep.mubr.f32.mxu0 0.0
        %5872 = vmatmul.mubr.f32.gmra.mrb[0].mxu0 %v5557
        %v5873 = vpop.f32.mrb[0].mxu0
        %v5874 = vadd.f32 %v5729, %v5873
        %v5875 = vpop.f32.mrb[0].mxu0
        %5876 = vmatprep.mubr.f32.mxu0 0.0
        %5877 = vmatmul.mubr.f32.gmra.mrb[0].mxu0 %v5558
        %v5878 = vpop.f32.mrb[0].mxu0
        %v5879 = vadd.f32 %v5734, %v5878
        %v5880 = vpop.f32.mrb[0].mxu0
        %5881 = vdwg.mxu0
        %v5882 = vrot.slane %v5495, 1
        %v5883 = vrot.slane %v5496, 1
        %v5884 = vrot.slane %v5497, 1
        %v5885 = vrot.slane %v5498, 1
        %v5886 = vrot.slane %v5499, 1
        %v5887 = vrot.slane %v5500, 1
        %v5888 = vrot.slane %v5501, 1
        %v5889 = vrot.slane %v5502, 1
        %v5890 = vrot.slane %v5503, 1
        %v5891 = vrot.slane %v5504, 1
        %v5892 = vrot.slane %v5505, 1
        %v5893 = vrot.slane %v5506, 1
        %v5894 = vrot.slane %v5507, 1
        %v5895 = vrot.slane %v5508, 1
        %v5896 = vrot.slane %v5509, 1
        %v5897 = vrot.slane %v5510, 1
        %v5898 = vsel %vm1072, %v5896, %v5897
        %v5899 = vsel %vm1072, %v5895, %v5896
        %v5900 = vsel %vm1072, %v5894, %v5895
        %v5901 = vsel %vm1072, %v5893, %v5894
        %v5902 = vsel %vm1072, %v5892, %v5893
        %v5903 = vsel %vm1072, %v5891, %v5892
        %v5904 = vsel %vm1072, %v5890, %v5891
        %v5905 = vsel %vm1072, %v5889, %v5890
        %v5906 = vsel %vm1072, %v5888, %v5889
        %v5907 = vsel %vm1072, %v5887, %v5888
        %v5908 = vsel %vm1072, %v5886, %v5887
        %v5909 = vsel %vm1072, %v5885, %v5886
        %v5910 = vsel %vm1072, %v5884, %v5885
        %v5911 = vsel %vm1072, %v5883, %v5884
        %v5912 = vsel %vm1072, %v5882, %v5883
        %v5913 = vsel %vm1072, %v5897, %v5882
        %v5914 = vmul.f32 %v5912, %v452
        %v5915 = vmul.f32 %v5911, %v453
        %v5916 = vmul.f32 %v5910, %v454
        %v5917 = vmul.f32 %v5909, %v455
        %v5918 = vmul.f32 %v5908, %v456
        %v5919 = vmul.f32 %v5907, %v457
        %v5920 = vmul.f32 %v5906, %v458
        %v5921 = vmul.f32 %v5905, %v459
        %v5922 = vmul.f32 %v5904, %v460
        %v5923 = vmul.f32 %v5903, %v461
        %v5924 = vmul.f32 %v5902, %v462
        %v5925 = vmul.f32 %v5901, %v463
        %v5926 = vmul.f32 %v5900, %v464
        %v5927 = vmul.f32 %v5899, %v465
        %v5928 = vmul.f32 %v5898, %v466
        %v5929 = vmul.f32 %v5913, %v467
        %s5930 = scalar_lea.vmem [#allocation4], 256
        %v5931 = vld [vmem:[%s5930] sm:$0xff]
        %v5932 = vld [vmem:[%s5930 + $0x8] sm:$0xff]
        %v5933 = vld [vmem:[%s5930 + $0x10] sm:$0xff]
        %v5934 = vld [vmem:[%s5930 + $0x18] sm:$0xff]
        %v5935 = vld [vmem:[%s5930 + $0x20] sm:$0xff]
        %v5936 = vld [vmem:[%s5930 + $0x28] sm:$0xff]
        %v5937 = vld [vmem:[%s5930 + $0x30] sm:$0xff]
        %v5938 = vld [vmem:[%s5930 + $0x38] sm:$0xff]
        %v5939 = vld [vmem:[%s5930 + $0x40] sm:$0xff]
        %v5940 = vld [vmem:[%s5930 + $0x48] sm:$0xff]
        %v5941 = vld [vmem:[%s5930 + $0x50] sm:$0xff]
        %v5942 = vld [vmem:[%s5930 + $0x58] sm:$0xff]
        %v5943 = vld [vmem:[%s5930 + $0x60] sm:$0xff]
        %v5944 = vld [vmem:[%s5930 + $0x68] sm:$0xff]
        %v5945 = vld [vmem:[%s5930 + $0x70] sm:$0xff]
        %v5946 = vld [vmem:[%s5930 + $0x78] sm:$0xff]
        %5947 = vmatprep.subr.mxu0 0.0
        %5948 = vmatpush1.msra.mxu0 %v5931
        %5949 = vmatprep.subr.mxu0 0.0
        %5950 = vmatpush1.msra.mxu0 %v5932
        %5951 = vmatprep.subr.mxu0 0.0
        %5952 = vmatpush1.msra.mxu0 %v5933
        %5953 = vmatprep.subr.mxu0 0.0
        %5954 = vmatpush1.msra.mxu0 %v5934
        %5955 = vmatprep.subr.mxu0 0.0
        %5956 = vmatpush1.msra.mxu0 %v5935
        %5957 = vmatprep.subr.mxu0 0.0
        %5958 = vmatpush1.msra.mxu0 %v5936
        %5959 = vmatprep.subr.mxu0 0.0
        %5960 = vmatpush1.msra.mxu0 %v5937
        %5961 = vmatprep.subr.mxu0 0.0
        %5962 = vmatpush1.msra.mxu0 %v5938
        %5963 = vmatprep.subr.mxu0 0.0
        %5964 = vmatpush1.msra.mxu0 %v5939
        %5965 = vmatprep.subr.mxu0 0.0
        %5966 = vmatpush1.msra.mxu0 %v5940
        %5967 = vmatprep.subr.mxu0 0.0
        %5968 = vmatpush1.msra.mxu0 %v5941
        %5969 = vmatprep.subr.mxu0 0.0
        %5970 = vmatpush1.msra.mxu0 %v5942
        %5971 = vmatprep.subr.mxu0 0.0
        %5972 = vmatpush1.msra.mxu0 %v5943
        %5973 = vmatprep.subr.mxu0 0.0
        %5974 = vmatpush1.msra.mxu0 %v5944
        %5975 = vmatprep.subr.mxu0 0.0
        %5976 = vmatpush1.msra.mxu0 %v5945
        %5977 = vmatprep.subr.mxu0 0.0
        %5978 = vmatpush1.msra.mxu0 %v5946
        %5979 = vmatprep.subr.mxu0 0.0
        %5980 = vmatpush1.msra.mxu0 0.0
        %5981 = vmatprep.subr.mxu0 0.0
        %5982 = vmatpush1.msra.mxu0 0.0
        %5983 = vmatprep.subr.mxu0 0.0
        %5984 = vmatpush1.msra.mxu0 0.0
        %5985 = vmatprep.subr.mxu0 0.0
        %5986 = vmatpush1.msra.mxu0 0.0
        %5987 = vmatprep.subr.mxu0 0.0
        %5988 = vmatpush1.msra.mxu0 0.0
        %5989 = vmatprep.subr.mxu0 0.0
        %5990 = vmatpush1.msra.mxu0 0.0
        %5991 = vmatprep.subr.mxu0 0.0
        %5992 = vmatpush1.msra.mxu0 0.0
        %5993 = vmatprep.subr.mxu0 0.0
        %5994 = vmatpush1.msra.mxu0 0.0
        %5995 = vmatprep.subr.mxu0 0.0
        %5996 = vmatpush1.msra.mxu0 0.0
        %5997 = vmatprep.subr.mxu0 0.0
        %5998 = vmatpush1.msra.mxu0 0.0
        %5999 = vmatprep.subr.mxu0 0.0
        %6000 = vmatpush1.msra.mxu0 0.0
        %6001 = vmatprep.subr.mxu0 0.0
        %6002 = vmatpush1.msra.mxu0 0.0
        %6003 = vmatprep.subr.mxu0 0.0
        %6004 = vmatpush1.msra.mxu0 0.0
        %6005 = vmatprep.subr.mxu0 0.0
        %6006 = vmatpush1.msra.mxu0 0.0
        %6007 = vmatprep.subr.mxu0 0.0
        %6008 = vmatpush1.msra.mxu0 0.0
        %6009 = vmatprep.subr.mxu0 0.0
        %6010 = vmatpush1.msra.mxu0 0.0
        %6011 = vmatprep.mubr.f32.mxu0 0.0
        %6012 = vmatmul.mubr.f32.gmra.mrb[0].mxu0 %v5914
        %v6013 = vpop.f32.mrb[0].mxu0
        %v6014 = vadd.f32 0.0, %v6013
        %v6015 = vpop.f32.mrb[0].mxu0
        %6016 = vmatprep.mubr.f32.mxu0 0.0
        %6017 = vmatmul.mubr.f32.gmra.mrb[0].mxu0 %v5915
        %v6018 = vpop.f32.mrb[0].mxu0
        %v6019 = vadd.f32 0.0, %v6018
        %v6020 = vpop.f32.mrb[0].mxu0
        %6021 = vmatprep.mubr.f32.mxu0 0.0
        %6022 = vmatmul.mubr.f32.gmra.mrb[0].mxu0 %v5916
        %v6023 = vpop.f32.mrb[0].mxu0
        %v6024 = vadd.f32 0.0, %v6023
        %v6025 = vpop.f32.mrb[0].mxu0
        %6026 = vmatprep.mubr.f32.mxu0 0.0
        %6027 = vmatmul.mubr.f32.gmra.mrb[0].mxu0 %v5917
        %v6028 = vpop.f32.mrb[0].mxu0
        %v6029 = vadd.f32 0.0, %v6028
        %v6030 = vpop.f32.mrb[0].mxu0
        %6031 = vmatprep.mubr.f32.mxu0 0.0
        %6032 = vmatmul.mubr.f32.gmra.mrb[0].mxu0 %v5918
        %v6033 = vpop.f32.mrb[0].mxu0
        %v6034 = vadd.f32 0.0, %v6033
        %v6035 = vpop.f32.mrb[0].mxu0
        %6036 = vmatprep.mubr.f32.mxu0 0.0
        %6037 = vmatmul.mubr.f32.gmra.mrb[0].mxu0 %v5919
        %v6038 = vpop.f32.mrb[0].mxu0
        %v6039 = vadd.f32 0.0, %v6038
        %v6040 = vpop.f32.mrb[0].mxu0
        %6041 = vmatprep.mubr.f32.mxu0 0.0
        %6042 = vmatmul.mubr.f32.gmra.mrb[0].mxu0 %v5920
        %v6043 = vpop.f32.mrb[0].mxu0
        %v6044 = vadd.f32 0.0, %v6043
        %v6045 = vpop.f32.mrb[0].mxu0
        %6046 = vmatprep.mubr.f32.mxu0 0.0
        %6047 = vmatmul.mubr.f32.gmra.mrb[0].mxu0 %v5921
        %v6048 = vpop.f32.mrb[0].mxu0
        %v6049 = vadd.f32 0.0, %v6048
        %v6050 = vpop.f32.mrb[0].mxu0
        %6051 = vmatprep.mubr.f32.mxu0 0.0
        %6052 = vmatmul.mubr.f32.gmra.mrb[0].mxu0 %v5922
        %v6053 = vpop.f32.mrb[0].mxu0
        %v6054 = vadd.f32 0.0, %v6053
        %v6055 = vpop.f32.mrb[0].mxu0
        %6056 = vmatprep.mubr.f32.mxu0 0.0
        %6057 = vmatmul.mubr.f32.gmra.mrb[0].mxu0 %v5923
        %v6058 = vpop.f32.mrb[0].mxu0
        %v6059 = vadd.f32 0.0, %v6058
        %v6060 = vpop.f32.mrb[0].mxu0
        %6061 = vmatprep.mubr.f32.mxu0 0.0
        %6062 = vmatmul.mubr.f32.gmra.mrb[0].mxu0 %v5924
        %v6063 = vpop.f32.mrb[0].mxu0
        %v6064 = vadd.f32 0.0, %v6063
        %v6065 = vpop.f32.mrb[0].mxu0
        %6066 = vmatprep.mubr.f32.mxu0 0.0
        %6067 = vmatmul.mubr.f32.gmra.mrb[0].mxu0 %v5925
        %v6068 = vpop.f32.mrb[0].mxu0
        %v6069 = vadd.f32 0.0, %v6068
        %v6070 = vpop.f32.mrb[0].mxu0
        %6071 = vmatprep.mubr.f32.mxu0 0.0
        %6072 = vmatmul.mubr.f32.gmra.mrb[0].mxu0 %v5926
        %v6073 = vpop.f32.mrb[0].mxu0
        %v6074 = vadd.f32 0.0, %v6073
        %v6075 = vpop.f32.mrb[0].mxu0
        %6076 = vmatprep.mubr.f32.mxu0 0.0
        %6077 = vmatmul.mubr.f32.gmra.mrb[0].mxu0 %v5927
        %v6078 = vpop.f32.mrb[0].mxu0
        %v6079 = vadd.f32 0.0, %v6078
        %v6080 = vpop.f32.mrb[0].mxu0
        %6081 = vmatprep.mubr.f32.mxu0 0.0
        %6082 = vmatmul.mubr.f32.gmra.mrb[0].mxu0 %v5928
        %v6083 = vpop.f32.mrb[0].mxu0
        %v6084 = vadd.f32 0.0, %v6083
        %v6085 = vpop.f32.mrb[0].mxu0
        %6086 = vmatprep.mubr.f32.mxu0 0.0
        %6087 = vmatmul.mubr.f32.gmra.mrb[0].mxu0 %v5929
        %v6088 = vpop.f32.mrb[0].mxu0
        %v6089 = vadd.f32 0.0, %v6088
        %v6090 = vpop.f32.mrb[0].mxu0
        %6091 = vdwg.mxu0
        %v6092 = vadd.f32 %v5804, %v6014
        %v6093 = vadd.f32 %v5809, %v6019
        %v6094 = vadd.f32 %v5814, %v6024
        %v6095 = vadd.f32 %v5819, %v6029
        %v6096 = vadd.f32 %v5824, %v6034
        %v6097 = vadd.f32 %v5829, %v6039
        %v6098 = vadd.f32 %v5834, %v6044
        %v6099 = vadd.f32 %v5839, %v6049
        %v6100 = vadd.f32 %v5844, %v6054
        %v6101 = vadd.f32 %v5849, %v6059
        %v6102 = vadd.f32 %v5854, %v6064
        %v6103 = vadd.f32 %v5859, %v6069
        %v6104 = vadd.f32 %v5864, %v6074
        %v6105 = vadd.f32 %v5869, %v6079
        %v6106 = vadd.f32 %v5874, %v6084
        %v6107 = vadd.f32 %v5879, %v6089
        %v6108 = vld [vmem:[#allocation3 + $0x10] sm:$0xff]
        %v6109 = vld [vmem:[#allocation3 + $0x18] sm:$0xff]
        %v6110 = vld [vmem:[#allocation3 + $0x20] sm:$0xff]
        %v6111 = vld [vmem:[#allocation3 + $0x28] sm:$0xff]
        %v6112 = vld [vmem:[#allocation3 + $0x30] sm:$0xff]
        %v6113 = vld [vmem:[#allocation3 + $0x38] sm:$0xff]
        %v6114 = vld [vmem:[#allocation3 + $0x40] sm:$0xff]
        %v6115 = vld [vmem:[#allocation3 + $0x48] sm:$0xff]
        %v6116 = vld [vmem:[#allocation3 + $0x50] sm:$0xff]
        %v6117 = vld [vmem:[#allocation3 + $0x58] sm:$0xff]
        %v6118 = vld [vmem:[#allocation3 + $0x60] sm:$0xff]
        %v6119 = vld [vmem:[#allocation3 + $0x68] sm:$0xff]
        %v6120 = vld [vmem:[#allocation3 + $0x70] sm:$0xff]
        %v6121 = vld [vmem:[#allocation3 + $0x78] sm:$0xff]
        %v6122 = vld [vmem:[#allocation3 + $0x80] sm:$0xff]
        %v6123 = vld [vmem:[#allocation3 + $0x88] sm:$0xff]
        %v6124 = vrot.slane %v6108, 7
        %v6125 = vrot.slane %v6109, 7
        %v6126 = vrot.slane %v6110, 7
        %v6127 = vrot.slane %v6111, 7
        %v6128 = vrot.slane %v6112, 7
        %v6129 = vrot.slane %v6113, 7
        %v6130 = vrot.slane %v6114, 7
        %v6131 = vrot.slane %v6115, 7
        %v6132 = vrot.slane %v6116, 7
        %v6133 = vrot.slane %v6117, 7
        %v6134 = vrot.slane %v6118, 7
        %v6135 = vrot.slane %v6119, 7
        %v6136 = vrot.slane %v6120, 7
        %v6137 = vrot.slane %v6121, 7
        %v6138 = vrot.slane %v6122, 7
        %v6139 = vrot.slane %v6123, 7
        %v6140 = vsel %vm627, %v6138, %v6139
        %v6141 = vsel %vm627, %v6137, %v6138
        %v6142 = vsel %vm627, %v6136, %v6137
        %v6143 = vsel %vm627, %v6135, %v6136
        %v6144 = vsel %vm627, %v6134, %v6135
        %v6145 = vsel %vm627, %v6133, %v6134
        %v6146 = vsel %vm627, %v6132, %v6133
        %v6147 = vsel %vm627, %v6131, %v6132
        %v6148 = vsel %vm627, %v6130, %v6131
        %v6149 = vsel %vm627, %v6129, %v6130
        %v6150 = vsel %vm627, %v6128, %v6129
        %v6151 = vsel %vm627, %v6127, %v6128
        %v6152 = vsel %vm627, %v6126, %v6127
        %v6153 = vsel %vm627, %v6125, %v6126
        %v6154 = vsel %vm627, %v6124, %v6125
        %v6155 = vsel %vm627, %v6139, %v6124
        %v6156 = vmul.f32 %v6155, %v500
        %v6157 = vmul.f32 %v6154, %v501
        %v6158 = vmul.f32 %v6153, %v502
        %v6159 = vmul.f32 %v6152, %v503
        %v6160 = vmul.f32 %v6151, %v504
        %v6161 = vmul.f32 %v6150, %v505
        %v6162 = vmul.f32 %v6149, %v506
        %v6163 = vmul.f32 %v6148, %v507
        %v6164 = vmul.f32 %v6147, %v508
        %v6165 = vmul.f32 %v6146, %v509
        %v6166 = vmul.f32 %v6145, %v510
        %v6167 = vmul.f32 %v6144, %v511
        %v6168 = vmul.f32 %v6143, %v512
        %v6169 = vmul.f32 %v6142, %v513
        %v6170 = vmul.f32 %v6141, %v514
        %v6171 = vmul.f32 %v6140, %v515
        %s6172 = scalar_lea.vmem [#allocation4], 384
        %v6173 = vld [vmem:[%s6172] sm:$0xff]
        %v6174 = vld [vmem:[%s6172 + $0x8] sm:$0xff]
        %v6175 = vld [vmem:[%s6172 + $0x10] sm:$0xff]
        %v6176 = vld [vmem:[%s6172 + $0x18] sm:$0xff]
        %v6177 = vld [vmem:[%s6172 + $0x20] sm:$0xff]
        %v6178 = vld [vmem:[%s6172 + $0x28] sm:$0xff]
        %v6179 = vld [vmem:[%s6172 + $0x30] sm:$0xff]
        %v6180 = vld [vmem:[%s6172 + $0x38] sm:$0xff]
        %v6181 = vld [vmem:[%s6172 + $0x40] sm:$0xff]
        %v6182 = vld [vmem:[%s6172 + $0x48] sm:$0xff]
        %v6183 = vld [vmem:[%s6172 + $0x50] sm:$0xff]
        %v6184 = vld [vmem:[%s6172 + $0x58] sm:$0xff]
        %v6185 = vld [vmem:[%s6172 + $0x60] sm:$0xff]
        %v6186 = vld [vmem:[%s6172 + $0x68] sm:$0xff]
        %v6187 = vld [vmem:[%s6172 + $0x70] sm:$0xff]
        %v6188 = vld [vmem:[%s6172 + $0x78] sm:$0xff]
        %6189 = vmatprep.subr.mxu0 0.0
        %6190 = vmatpush1.msra.mxu0 %v6173
        %6191 = vmatprep.subr.mxu0 0.0
        %6192 = vmatpush1.msra.mxu0 %v6174
        %6193 = vmatprep.subr.mxu0 0.0
        %6194 = vmatpush1.msra.mxu0 %v6175
        %6195 = vmatprep.subr.mxu0 0.0
        %6196 = vmatpush1.msra.mxu0 %v6176
        %6197 = vmatprep.subr.mxu0 0.0
        %6198 = vmatpush1.msra.mxu0 %v6177
        %6199 = vmatprep.subr.mxu0 0.0
        %6200 = vmatpush1.msra.mxu0 %v6178
        %6201 = vmatprep.subr.mxu0 0.0
        %6202 = vmatpush1.msra.mxu0 %v6179
        %6203 = vmatprep.subr.mxu0 0.0
        %6204 = vmatpush1.msra.mxu0 %v6180
        %6205 = vmatprep.subr.mxu0 0.0
        %6206 = vmatpush1.msra.mxu0 %v6181
        %6207 = vmatprep.subr.mxu0 0.0
        %6208 = vmatpush1.msra.mxu0 %v6182
        %6209 = vmatprep.subr.mxu0 0.0
        %6210 = vmatpush1.msra.mxu0 %v6183
        %6211 = vmatprep.subr.mxu0 0.0
        %6212 = vmatpush1.msra.mxu0 %v6184
        %6213 = vmatprep.subr.mxu0 0.0
        %6214 = vmatpush1.msra.mxu0 %v6185
        %6215 = vmatprep.subr.mxu0 0.0
        %6216 = vmatpush1.msra.mxu0 %v6186
        %6217 = vmatprep.subr.mxu0 0.0
        %6218 = vmatpush1.msra.mxu0 %v6187
        %6219 = vmatprep.subr.mxu0 0.0
        %6220 = vmatpush1.msra.mxu0 %v6188
        %6221 = vmatprep.subr.mxu0 0.0
        %6222 = vmatpush1.msra.mxu0 0.0
        %6223 = vmatprep.subr.mxu0 0.0
        %6224 = vmatpush1.msra.mxu0 0.0
        %6225 = vmatprep.subr.mxu0 0.0
        %6226 = vmatpush1.msra.mxu0 0.0
        %6227 = vmatprep.subr.mxu0 0.0
        %6228 = vmatpush1.msra.mxu0 0.0
        %6229 = vmatprep.subr.mxu0 0.0
        %6230 = vmatpush1.msra.mxu0 0.0
        %6231 = vmatprep.subr.mxu0 0.0
        %6232 = vmatpush1.msra.mxu0 0.0
        %6233 = vmatprep.subr.mxu0 0.0
        %6234 = vmatpush1.msra.mxu0 0.0
        %6235 = vmatprep.subr.mxu0 0.0
        %6236 = vmatpush1.msra.mxu0 0.0
        %6237 = vmatprep.subr.mxu0 0.0
        %6238 = vmatpush1.msra.mxu0 0.0
        %6239 = vmatprep.subr.mxu0 0.0
        %6240 = vmatpush1.msra.mxu0 0.0
        %6241 = vmatprep.subr.mxu0 0.0
        %6242 = vmatpush1.msra.mxu0 0.0
        %6243 = vmatprep.subr.mxu0 0.0
        %6244 = vmatpush1.msra.mxu0 0.0
        %6245 = vmatprep.subr.mxu0 0.0
        %6246 = vmatpush1.msra.mxu0 0.0
        %6247 = vmatprep.subr.mxu0 0.0
        %6248 = vmatpush1.msra.mxu0 0.0
        %6249 = vmatprep.subr.mxu0 0.0
        %6250 = vmatpush1.msra.mxu0 0.0
        %6251 = vmatprep.subr.mxu0 0.0
        %6252 = vmatpush1.msra.mxu0 0.0
        %6253 = vmatprep.mubr.f32.mxu0 0.0
        %6254 = vmatmul.mubr.f32.gmra.mrb[0].mxu0 %v6156
        %v6255 = vpop.f32.mrb[0].mxu0
        %v6256 = vadd.f32 0.0, %v6255
        %v6257 = vpop.f32.mrb[0].mxu0
        %6258 = vmatprep.mubr.f32.mxu0 0.0
        %6259 = vmatmul.mubr.f32.gmra.mrb[0].mxu0 %v6157
        %v6260 = vpop.f32.mrb[0].mxu0
        %v6261 = vadd.f32 0.0, %v6260
        %v6262 = vpop.f32.mrb[0].mxu0
        %6263 = vmatprep.mubr.f32.mxu0 0.0
        %6264 = vmatmul.mubr.f32.gmra.mrb[0].mxu0 %v6158
        %v6265 = vpop.f32.mrb[0].mxu0
        %v6266 = vadd.f32 0.0, %v6265
        %v6267 = vpop.f32.mrb[0].mxu0
        %6268 = vmatprep.mubr.f32.mxu0 0.0
        %6269 = vmatmul.mubr.f32.gmra.mrb[0].mxu0 %v6159
        %v6270 = vpop.f32.mrb[0].mxu0
        %v6271 = vadd.f32 0.0, %v6270
        %v6272 = vpop.f32.mrb[0].mxu0
        %6273 = vmatprep.mubr.f32.mxu0 0.0
        %6274 = vmatmul.mubr.f32.gmra.mrb[0].mxu0 %v6160
        %v6275 = vpop.f32.mrb[0].mxu0
        %v6276 = vadd.f32 0.0, %v6275
        %v6277 = vpop.f32.mrb[0].mxu0
        %6278 = vmatprep.mubr.f32.mxu0 0.0
        %6279 = vmatmul.mubr.f32.gmra.mrb[0].mxu0 %v6161
        %v6280 = vpop.f32.mrb[0].mxu0
        %v6281 = vadd.f32 0.0, %v6280
        %v6282 = vpop.f32.mrb[0].mxu0
        %6283 = vmatprep.mubr.f32.mxu0 0.0
        %6284 = vmatmul.mubr.f32.gmra.mrb[0].mxu0 %v6162
        %v6285 = vpop.f32.mrb[0].mxu0
        %v6286 = vadd.f32 0.0, %v6285
        %v6287 = vpop.f32.mrb[0].mxu0
        %6288 = vmatprep.mubr.f32.mxu0 0.0
        %6289 = vmatmul.mubr.f32.gmra.mrb[0].mxu0 %v6163
        %v6290 = vpop.f32.mrb[0].mxu0
        %v6291 = vadd.f32 0.0, %v6290
        %v6292 = vpop.f32.mrb[0].mxu0
        %6293 = vmatprep.mubr.f32.mxu0 0.0
        %6294 = vmatmul.mubr.f32.gmra.mrb[0].mxu0 %v6164
        %v6295 = vpop.f32.mrb[0].mxu0
        %v6296 = vadd.f32 0.0, %v6295
        %v6297 = vpop.f32.mrb[0].mxu0
        %6298 = vmatprep.mubr.f32.mxu0 0.0
        %6299 = vmatmul.mubr.f32.gmra.mrb[0].mxu0 %v6165
        %v6300 = vpop.f32.mrb[0].mxu0
        %v6301 = vadd.f32 0.0, %v6300
        %v6302 = vpop.f32.mrb[0].mxu0
        %6303 = vmatprep.mubr.f32.mxu0 0.0
        %6304 = vmatmul.mubr.f32.gmra.mrb[0].mxu0 %v6166
        %v6305 = vpop.f32.mrb[0].mxu0
        %v6306 = vadd.f32 0.0, %v6305
        %v6307 = vpop.f32.mrb[0].mxu0
        %6308 = vmatprep.mubr.f32.mxu0 0.0
        %6309 = vmatmul.mubr.f32.gmra.mrb[0].mxu0 %v6167
        %v6310 = vpop.f32.mrb[0].mxu0
        %v6311 = vadd.f32 0.0, %v6310
        %v6312 = vpop.f32.mrb[0].mxu0
        %6313 = vmatprep.mubr.f32.mxu0 0.0
        %6314 = vmatmul.mubr.f32.gmra.mrb[0].mxu0 %v6168
        %v6315 = vpop.f32.mrb[0].mxu0
        %v6316 = vadd.f32 0.0, %v6315
        %v6317 = vpop.f32.mrb[0].mxu0
        %6318 = vmatprep.mubr.f32.mxu0 0.0
        %6319 = vmatmul.mubr.f32.gmra.mrb[0].mxu0 %v6169
        %v6320 = vpop.f32.mrb[0].mxu0
        %v6321 = vadd.f32 0.0, %v6320
        %v6322 = vpop.f32.mrb[0].mxu0
        %6323 = vmatprep.mubr.f32.mxu0 0.0
        %6324 = vmatmul.mubr.f32.gmra.mrb[0].mxu0 %v6170
        %v6325 = vpop.f32.mrb[0].mxu0
        %v6326 = vadd.f32 0.0, %v6325
        %v6327 = vpop.f32.mrb[0].mxu0
        %6328 = vmatprep.mubr.f32.mxu0 0.0
        %6329 = vmatmul.mubr.f32.gmra.mrb[0].mxu0 %v6171
        %v6330 = vpop.f32.mrb[0].mxu0
        %v6331 = vadd.f32 0.0, %v6330
        %v6332 = vpop.f32.mrb[0].mxu0
        %6333 = vdwg.mxu0
        %v6334 = vadd.f32 %v6092, %v6256
        %v6335 = vadd.f32 %v6093, %v6261
        %v6336 = vadd.f32 %v6094, %v6266
        %v6337 = vadd.f32 %v6095, %v6271
        %v6338 = vadd.f32 %v6096, %v6276
        %v6339 = vadd.f32 %v6097, %v6281
        %v6340 = vadd.f32 %v6098, %v6286
        %v6341 = vadd.f32 %v6099, %v6291
        %v6342 = vadd.f32 %v6100, %v6296
        %v6343 = vadd.f32 %v6101, %v6301
        %v6344 = vadd.f32 %v6102, %v6306
        %v6345 = vadd.f32 %v6103, %v6311
        %v6346 = vadd.f32 %v6104, %v6316
        %v6347 = vadd.f32 %v6105, %v6321
        %v6348 = vadd.f32 %v6106, %v6326
        %v6349 = vadd.f32 %v6107, %v6331
        %s6350 = scalar_lea.vmem [#allocation4], 512
        %v6351 = vld [vmem:[%s6350] sm:$0xff]
        %v6352 = vld [vmem:[%s6350 + $0x8] sm:$0xff]
        %v6353 = vld [vmem:[%s6350 + $0x10] sm:$0xff]
        %v6354 = vld [vmem:[%s6350 + $0x18] sm:$0xff]
        %v6355 = vld [vmem:[%s6350 + $0x20] sm:$0xff]
        %v6356 = vld [vmem:[%s6350 + $0x28] sm:$0xff]
        %v6357 = vld [vmem:[%s6350 + $0x30] sm:$0xff]
        %v6358 = vld [vmem:[%s6350 + $0x38] sm:$0xff]
        %v6359 = vld [vmem:[%s6350 + $0x40] sm:$0xff]
        %v6360 = vld [vmem:[%s6350 + $0x48] sm:$0xff]
        %v6361 = vld [vmem:[%s6350 + $0x50] sm:$0xff]
        %v6362 = vld [vmem:[%s6350 + $0x58] sm:$0xff]
        %v6363 = vld [vmem:[%s6350 + $0x60] sm:$0xff]
        %v6364 = vld [vmem:[%s6350 + $0x68] sm:$0xff]
        %v6365 = vld [vmem:[%s6350 + $0x70] sm:$0xff]
        %v6366 = vld [vmem:[%s6350 + $0x78] sm:$0xff]
        %6367 = vmatprep.subr.mxu0 0.0
        %6368 = vmatpush1.msra.mxu0 %v6351
        %6369 = vmatprep.subr.mxu0 0.0
        %6370 = vmatpush1.msra.mxu0 %v6352
        %6371 = vmatprep.subr.mxu0 0.0
        %6372 = vmatpush1.msra.mxu0 %v6353
        %6373 = vmatprep.subr.mxu0 0.0
        %6374 = vmatpush1.msra.mxu0 %v6354
        %6375 = vmatprep.subr.mxu0 0.0
        %6376 = vmatpush1.msra.mxu0 %v6355
        %6377 = vmatprep.subr.mxu0 0.0
        %6378 = vmatpush1.msra.mxu0 %v6356
        %6379 = vmatprep.subr.mxu0 0.0
        %6380 = vmatpush1.msra.mxu0 %v6357
        %6381 = vmatprep.subr.mxu0 0.0
        %6382 = vmatpush1.msra.mxu0 %v6358
        %6383 = vmatprep.subr.mxu0 0.0
        %6384 = vmatpush1.msra.mxu0 %v6359
        %6385 = vmatprep.subr.mxu0 0.0
        %6386 = vmatpush1.msra.mxu0 %v6360
        %6387 = vmatprep.subr.mxu0 0.0
        %6388 = vmatpush1.msra.mxu0 %v6361
        %6389 = vmatprep.subr.mxu0 0.0
        %6390 = vmatpush1.msra.mxu0 %v6362
        %6391 = vmatprep.subr.mxu0 0.0
        %6392 = vmatpush1.msra.mxu0 %v6363
        %6393 = vmatprep.subr.mxu0 0.0
        %6394 = vmatpush1.msra.mxu0 %v6364
        %6395 = vmatprep.subr.mxu0 0.0
        %6396 = vmatpush1.msra.mxu0 %v6365
        %6397 = vmatprep.subr.mxu0 0.0
        %6398 = vmatpush1.msra.mxu0 %v6366
        %6399 = vmatprep.subr.mxu0 0.0
        %6400 = vmatpush1.msra.mxu0 0.0
        %6401 = vmatprep.subr.mxu0 0.0
        %6402 = vmatpush1.msra.mxu0 0.0
        %6403 = vmatprep.subr.mxu0 0.0
        %6404 = vmatpush1.msra.mxu0 0.0
        %6405 = vmatprep.subr.mxu0 0.0
        %6406 = vmatpush1.msra.mxu0 0.0
        %6407 = vmatprep.subr.mxu0 0.0
        %6408 = vmatpush1.msra.mxu0 0.0
        %6409 = vmatprep.subr.mxu0 0.0
        %6410 = vmatpush1.msra.mxu0 0.0
        %6411 = vmatprep.subr.mxu0 0.0
        %6412 = vmatpush1.msra.mxu0 0.0
        %6413 = vmatprep.subr.mxu0 0.0
        %6414 = vmatpush1.msra.mxu0 0.0
        %6415 = vmatprep.subr.mxu0 0.0
        %6416 = vmatpush1.msra.mxu0 0.0
        %6417 = vmatprep.subr.mxu0 0.0
        %6418 = vmatpush1.msra.mxu0 0.0
        %6419 = vmatprep.subr.mxu0 0.0
        %6420 = vmatpush1.msra.mxu0 0.0
        %6421 = vmatprep.subr.mxu0 0.0
        %6422 = vmatpush1.msra.mxu0 0.0
        %6423 = vmatprep.subr.mxu0 0.0
        %6424 = vmatpush1.msra.mxu0 0.0
        %6425 = vmatprep.subr.mxu0 0.0
        %6426 = vmatpush1.msra.mxu0 0.0
        %6427 = vmatprep.subr.mxu0 0.0
        %6428 = vmatpush1.msra.mxu0 0.0
        %6429 = vmatprep.subr.mxu0 0.0
        %6430 = vmatpush1.msra.mxu0 0.0
        %6431 = vmatprep.mubr.f32.mxu0 0.0
        %6432 = vmatmul.mubr.f32.gmra.mrb[0].mxu0 %v6108
        %v6433 = vpop.f32.mrb[0].mxu0
        %v6434 = vadd.f32 0.0, %v6433
        %v6435 = vpop.f32.mrb[0].mxu0
        %6436 = vmatprep.mubr.f32.mxu0 0.0
        %6437 = vmatmul.mubr.f32.gmra.mrb[0].mxu0 %v6109
        %v6438 = vpop.f32.mrb[0].mxu0
        %v6439 = vadd.f32 0.0, %v6438
        %v6440 = vpop.f32.mrb[0].mxu0
        %6441 = vmatprep.mubr.f32.mxu0 0.0
        %6442 = vmatmul.mubr.f32.gmra.mrb[0].mxu0 %v6110
        %v6443 = vpop.f32.mrb[0].mxu0
        %v6444 = vadd.f32 0.0, %v6443
        %v6445 = vpop.f32.mrb[0].mxu0
        %6446 = vmatprep.mubr.f32.mxu0 0.0
        %6447 = vmatmul.mubr.f32.gmra.mrb[0].mxu0 %v6111
        %v6448 = vpop.f32.mrb[0].mxu0
        %v6449 = vadd.f32 0.0, %v6448
        %v6450 = vpop.f32.mrb[0].mxu0
        %6451 = vmatprep.mubr.f32.mxu0 0.0
        %6452 = vmatmul.mubr.f32.gmra.mrb[0].mxu0 %v6112
        %v6453 = vpop.f32.mrb[0].mxu0
        %v6454 = vadd.f32 0.0, %v6453
        %v6455 = vpop.f32.mrb[0].mxu0
        %6456 = vmatprep.mubr.f32.mxu0 0.0
        %6457 = vmatmul.mubr.f32.gmra.mrb[0].mxu0 %v6113
        %v6458 = vpop.f32.mrb[0].mxu0
        %v6459 = vadd.f32 0.0, %v6458
        %v6460 = vpop.f32.mrb[0].mxu0
        %6461 = vmatprep.mubr.f32.mxu0 0.0
        %6462 = vmatmul.mubr.f32.gmra.mrb[0].mxu0 %v6114
        %v6463 = vpop.f32.mrb[0].mxu0
        %v6464 = vadd.f32 0.0, %v6463
        %v6465 = vpop.f32.mrb[0].mxu0
        %6466 = vmatprep.mubr.f32.mxu0 0.0
        %6467 = vmatmul.mubr.f32.gmra.mrb[0].mxu0 %v6115
        %v6468 = vpop.f32.mrb[0].mxu0
        %v6469 = vadd.f32 0.0, %v6468
        %v6470 = vpop.f32.mrb[0].mxu0
        %6471 = vmatprep.mubr.f32.mxu0 0.0
        %6472 = vmatmul.mubr.f32.gmra.mrb[0].mxu0 %v6116
        %v6473 = vpop.f32.mrb[0].mxu0
        %v6474 = vadd.f32 0.0, %v6473
        %v6475 = vpop.f32.mrb[0].mxu0
        %6476 = vmatprep.mubr.f32.mxu0 0.0
        %6477 = vmatmul.mubr.f32.gmra.mrb[0].mxu0 %v6117
        %v6478 = vpop.f32.mrb[0].mxu0
        %v6479 = vadd.f32 0.0, %v6478
        %v6480 = vpop.f32.mrb[0].mxu0
        %6481 = vmatprep.mubr.f32.mxu0 0.0
        %6482 = vmatmul.mubr.f32.gmra.mrb[0].mxu0 %v6118
        %v6483 = vpop.f32.mrb[0].mxu0
        %v6484 = vadd.f32 0.0, %v6483
        %v6485 = vpop.f32.mrb[0].mxu0
        %6486 = vmatprep.mubr.f32.mxu0 0.0
        %6487 = vmatmul.mubr.f32.gmra.mrb[0].mxu0 %v6119
        %v6488 = vpop.f32.mrb[0].mxu0
        %v6489 = vadd.f32 0.0, %v6488
        %v6490 = vpop.f32.mrb[0].mxu0
        %6491 = vmatprep.mubr.f32.mxu0 0.0
        %6492 = vmatmul.mubr.f32.gmra.mrb[0].mxu0 %v6120
        %v6493 = vpop.f32.mrb[0].mxu0
        %v6494 = vadd.f32 0.0, %v6493
        %v6495 = vpop.f32.mrb[0].mxu0
        %6496 = vmatprep.mubr.f32.mxu0 0.0
        %6497 = vmatmul.mubr.f32.gmra.mrb[0].mxu0 %v6121
        %v6498 = vpop.f32.mrb[0].mxu0
        %v6499 = vadd.f32 0.0, %v6498
        %v6500 = vpop.f32.mrb[0].mxu0
        %6501 = vmatprep.mubr.f32.mxu0 0.0
        %6502 = vmatmul.mubr.f32.gmra.mrb[0].mxu0 %v6122
        %v6503 = vpop.f32.mrb[0].mxu0
        %v6504 = vadd.f32 0.0, %v6503
        %v6505 = vpop.f32.mrb[0].mxu0
        %6506 = vmatprep.mubr.f32.mxu0 0.0
        %6507 = vmatmul.mubr.f32.gmra.mrb[0].mxu0 %v6123
        %v6508 = vpop.f32.mrb[0].mxu0
        %v6509 = vadd.f32 0.0, %v6508
        %v6510 = vpop.f32.mrb[0].mxu0
        %6511 = vdwg.mxu0
        %v6512 = vadd.f32 %v6334, %v6434
        %v6513 = vadd.f32 %v6335, %v6439
        %v6514 = vadd.f32 %v6336, %v6444
        %v6515 = vadd.f32 %v6337, %v6449
        %v6516 = vadd.f32 %v6338, %v6454
        %v6517 = vadd.f32 %v6339, %v6459
        %v6518 = vadd.f32 %v6340, %v6464
        %v6519 = vadd.f32 %v6341, %v6469
        %v6520 = vadd.f32 %v6342, %v6474
        %v6521 = vadd.f32 %v6343, %v6479
        %v6522 = vadd.f32 %v6344, %v6484
        %v6523 = vadd.f32 %v6345, %v6489
        %v6524 = vadd.f32 %v6346, %v6494
        %v6525 = vadd.f32 %v6347, %v6499
        %v6526 = vadd.f32 %v6348, %v6504
        %v6527 = vadd.f32 %v6349, %v6509
        %v6528 = vrot.slane %v6108, 1
        %v6529 = vrot.slane %v6109, 1
        %v6530 = vrot.slane %v6110, 1
        %v6531 = vrot.slane %v6111, 1
        %v6532 = vrot.slane %v6112, 1
        %v6533 = vrot.slane %v6113, 1
        %v6534 = vrot.slane %v6114, 1
        %v6535 = vrot.slane %v6115, 1
        %v6536 = vrot.slane %v6116, 1
        %v6537 = vrot.slane %v6117, 1
        %v6538 = vrot.slane %v6118, 1
        %v6539 = vrot.slane %v6119, 1
        %v6540 = vrot.slane %v6120, 1
        %v6541 = vrot.slane %v6121, 1
        %v6542 = vrot.slane %v6122, 1
        %v6543 = vrot.slane %v6123, 1
        %v6544 = vsel %vm1072, %v6542, %v6543
        %v6545 = vsel %vm1072, %v6541, %v6542
        %v6546 = vsel %vm1072, %v6540, %v6541
        %v6547 = vsel %vm1072, %v6539, %v6540
        %v6548 = vsel %vm1072, %v6538, %v6539
        %v6549 = vsel %vm1072, %v6537, %v6538
        %v6550 = vsel %vm1072, %v6536, %v6537
        %v6551 = vsel %vm1072, %v6535, %v6536
        %v6552 = vsel %vm1072, %v6534, %v6535
        %v6553 = vsel %vm1072, %v6533, %v6534
        %v6554 = vsel %vm1072, %v6532, %v6533
        %v6555 = vsel %vm1072, %v6531, %v6532
        %v6556 = vsel %vm1072, %v6530, %v6531
        %v6557 = vsel %vm1072, %v6529, %v6530
        %v6558 = vsel %vm1072, %v6528, %v6529
        %v6559 = vsel %vm1072, %v6543, %v6528
        %v6560 = vmul.f32 %v6558, %v452
        %v6561 = vmul.f32 %v6557, %v453
        %v6562 = vmul.f32 %v6556, %v454
        %v6563 = vmul.f32 %v6555, %v455
        %v6564 = vmul.f32 %v6554, %v456
        %v6565 = vmul.f32 %v6553, %v457
        %v6566 = vmul.f32 %v6552, %v458
        %v6567 = vmul.f32 %v6551, %v459
        %v6568 = vmul.f32 %v6550, %v460
        %v6569 = vmul.f32 %v6549, %v461
        %v6570 = vmul.f32 %v6548, %v462
        %v6571 = vmul.f32 %v6547, %v463
        %v6572 = vmul.f32 %v6546, %v464
        %v6573 = vmul.f32 %v6545, %v465
        %v6574 = vmul.f32 %v6544, %v466
        %v6575 = vmul.f32 %v6559, %v467
        %s6576 = scalar_lea.vmem [#allocation4], 640
        %v6577 = vld [vmem:[%s6576] sm:$0xff]
        %v6578 = vld [vmem:[%s6576 + $0x8] sm:$0xff]
        %v6579 = vld [vmem:[%s6576 + $0x10] sm:$0xff]
        %v6580 = vld [vmem:[%s6576 + $0x18] sm:$0xff]
        %v6581 = vld [vmem:[%s6576 + $0x20] sm:$0xff]
        %v6582 = vld [vmem:[%s6576 + $0x28] sm:$0xff]
        %v6583 = vld [vmem:[%s6576 + $0x30] sm:$0xff]
        %v6584 = vld [vmem:[%s6576 + $0x38] sm:$0xff]
        %v6585 = vld [vmem:[%s6576 + $0x40] sm:$0xff]
        %v6586 = vld [vmem:[%s6576 + $0x48] sm:$0xff]
        %v6587 = vld [vmem:[%s6576 + $0x50] sm:$0xff]
        %v6588 = vld [vmem:[%s6576 + $0x58] sm:$0xff]
        %v6589 = vld [vmem:[%s6576 + $0x60] sm:$0xff]
        %v6590 = vld [vmem:[%s6576 + $0x68] sm:$0xff]
        %v6591 = vld [vmem:[%s6576 + $0x70] sm:$0xff]
        %v6592 = vld [vmem:[%s6576 + $0x78] sm:$0xff]
        %6593 = vmatprep.subr.mxu0 0.0
        %6594 = vmatpush1.msra.mxu0 %v6577
        %6595 = vmatprep.subr.mxu0 0.0
        %6596 = vmatpush1.msra.mxu0 %v6578
        %6597 = vmatprep.subr.mxu0 0.0
        %6598 = vmatpush1.msra.mxu0 %v6579
        %6599 = vmatprep.subr.mxu0 0.0
        %6600 = vmatpush1.msra.mxu0 %v6580
        %6601 = vmatprep.subr.mxu0 0.0
        %6602 = vmatpush1.msra.mxu0 %v6581
        %6603 = vmatprep.subr.mxu0 0.0
        %6604 = vmatpush1.msra.mxu0 %v6582
        %6605 = vmatprep.subr.mxu0 0.0
        %6606 = vmatpush1.msra.mxu0 %v6583
        %6607 = vmatprep.subr.mxu0 0.0
        %6608 = vmatpush1.msra.mxu0 %v6584
        %6609 = vmatprep.subr.mxu0 0.0
        %6610 = vmatpush1.msra.mxu0 %v6585
        %6611 = vmatprep.subr.mxu0 0.0
        %6612 = vmatpush1.msra.mxu0 %v6586
        %6613 = vmatprep.subr.mxu0 0.0
        %6614 = vmatpush1.msra.mxu0 %v6587
        %6615 = vmatprep.subr.mxu0 0.0
        %6616 = vmatpush1.msra.mxu0 %v6588
        %6617 = vmatprep.subr.mxu0 0.0
        %6618 = vmatpush1.msra.mxu0 %v6589
        %6619 = vmatprep.subr.mxu0 0.0
        %6620 = vmatpush1.msra.mxu0 %v6590
        %6621 = vmatprep.subr.mxu0 0.0
        %6622 = vmatpush1.msra.mxu0 %v6591
        %6623 = vmatprep.subr.mxu0 0.0
        %6624 = vmatpush1.msra.mxu0 %v6592
        %6625 = vmatprep.subr.mxu0 0.0
        %6626 = vmatpush1.msra.mxu0 0.0
        %6627 = vmatprep.subr.mxu0 0.0
        %6628 = vmatpush1.msra.mxu0 0.0
        %6629 = vmatprep.subr.mxu0 0.0
        %6630 = vmatpush1.msra.mxu0 0.0
        %6631 = vmatprep.subr.mxu0 0.0
        %6632 = vmatpush1.msra.mxu0 0.0
        %6633 = vmatprep.subr.mxu0 0.0
        %6634 = vmatpush1.msra.mxu0 0.0
        %6635 = vmatprep.subr.mxu0 0.0
        %6636 = vmatpush1.msra.mxu0 0.0
        %6637 = vmatprep.subr.mxu0 0.0
        %6638 = vmatpush1.msra.mxu0 0.0
        %6639 = vmatprep.subr.mxu0 0.0
        %6640 = vmatpush1.msra.mxu0 0.0
        %6641 = vmatprep.subr.mxu0 0.0
        %6642 = vmatpush1.msra.mxu0 0.0
        %6643 = vmatprep.subr.mxu0 0.0
        %6644 = vmatpush1.msra.mxu0 0.0
        %6645 = vmatprep.subr.mxu0 0.0
        %6646 = vmatpush1.msra.mxu0 0.0
        %6647 = vmatprep.subr.mxu0 0.0
        %6648 = vmatpush1.msra.mxu0 0.0
        %6649 = vmatprep.subr.mxu0 0.0
        %6650 = vmatpush1.msra.mxu0 0.0
        %6651 = vmatprep.subr.mxu0 0.0
        %6652 = vmatpush1.msra.mxu0 0.0
        %6653 = vmatprep.subr.mxu0 0.0
        %6654 = vmatpush1.msra.mxu0 0.0
        %6655 = vmatprep.subr.mxu0 0.0
        %6656 = vmatpush1.msra.mxu0 0.0
        %6657 = vmatprep.mubr.f32.mxu0 0.0
        %6658 = vmatmul.mubr.f32.gmra.mrb[0].mxu0 %v6560
        %v6659 = vpop.f32.mrb[0].mxu0
        %v6660 = vadd.f32 0.0, %v6659
        %v6661 = vpop.f32.mrb[0].mxu0
        %6662 = vmatprep.mubr.f32.mxu0 0.0
        %6663 = vmatmul.mubr.f32.gmra.mrb[0].mxu0 %v6561
        %v6664 = vpop.f32.mrb[0].mxu0
        %v6665 = vadd.f32 0.0, %v6664
        %v6666 = vpop.f32.mrb[0].mxu0
        %6667 = vmatprep.mubr.f32.mxu0 0.0
        %6668 = vmatmul.mubr.f32.gmra.mrb[0].mxu0 %v6562
        %v6669 = vpop.f32.mrb[0].mxu0
        %v6670 = vadd.f32 0.0, %v6669
        %v6671 = vpop.f32.mrb[0].mxu0
        %6672 = vmatprep.mubr.f32.mxu0 0.0
        %6673 = vmatmul.mubr.f32.gmra.mrb[0].mxu0 %v6563
        %v6674 = vpop.f32.mrb[0].mxu0
        %v6675 = vadd.f32 0.0, %v6674
        %v6676 = vpop.f32.mrb[0].mxu0
        %6677 = vmatprep.mubr.f32.mxu0 0.0
        %6678 = vmatmul.mubr.f32.gmra.mrb[0].mxu0 %v6564
        %v6679 = vpop.f32.mrb[0].mxu0
        %v6680 = vadd.f32 0.0, %v6679
        %v6681 = vpop.f32.mrb[0].mxu0
        %6682 = vmatprep.mubr.f32.mxu0 0.0
        %6683 = vmatmul.mubr.f32.gmra.mrb[0].mxu0 %v6565
        %v6684 = vpop.f32.mrb[0].mxu0
        %v6685 = vadd.f32 0.0, %v6684
        %v6686 = vpop.f32.mrb[0].mxu0
        %6687 = vmatprep.mubr.f32.mxu0 0.0
        %6688 = vmatmul.mubr.f32.gmra.mrb[0].mxu0 %v6566
        %v6689 = vpop.f32.mrb[0].mxu0
        %v6690 = vadd.f32 0.0, %v6689
        %v6691 = vpop.f32.mrb[0].mxu0
        %6692 = vmatprep.mubr.f32.mxu0 0.0
        %6693 = vmatmul.mubr.f32.gmra.mrb[0].mxu0 %v6567
        %v6694 = vpop.f32.mrb[0].mxu0
        %v6695 = vadd.f32 0.0, %v6694
        %v6696 = vpop.f32.mrb[0].mxu0
        %6697 = vmatprep.mubr.f32.mxu0 0.0
        %6698 = vmatmul.mubr.f32.gmra.mrb[0].mxu0 %v6568
        %v6699 = vpop.f32.mrb[0].mxu0
        %v6700 = vadd.f32 0.0, %v6699
        %v6701 = vpop.f32.mrb[0].mxu0
        %6702 = vmatprep.mubr.f32.mxu0 0.0
        %6703 = vmatmul.mubr.f32.gmra.mrb[0].mxu0 %v6569
        %v6704 = vpop.f32.mrb[0].mxu0
        %v6705 = vadd.f32 0.0, %v6704
        %v6706 = vpop.f32.mrb[0].mxu0
        %6707 = vmatprep.mubr.f32.mxu0 0.0
        %6708 = vmatmul.mubr.f32.gmra.mrb[0].mxu0 %v6570
        %v6709 = vpop.f32.mrb[0].mxu0
        %v6710 = vadd.f32 0.0, %v6709
        %v6711 = vpop.f32.mrb[0].mxu0
        %6712 = vmatprep.mubr.f32.mxu0 0.0
        %6713 = vmatmul.mubr.f32.gmra.mrb[0].mxu0 %v6571
        %v6714 = vpop.f32.mrb[0].mxu0
        %v6715 = vadd.f32 0.0, %v6714
        %v6716 = vpop.f32.mrb[0].mxu0
        %6717 = vmatprep.mubr.f32.mxu0 0.0
        %6718 = vmatmul.mubr.f32.gmra.mrb[0].mxu0 %v6572
        %v6719 = vpop.f32.mrb[0].mxu0
        %v6720 = vadd.f32 0.0, %v6719
        %v6721 = vpop.f32.mrb[0].mxu0
        %6722 = vmatprep.mubr.f32.mxu0 0.0
        %6723 = vmatmul.mubr.f32.gmra.mrb[0].mxu0 %v6573
        %v6724 = vpop.f32.mrb[0].mxu0
        %v6725 = vadd.f32 0.0, %v6724
        %v6726 = vpop.f32.mrb[0].mxu0
        %6727 = vmatprep.mubr.f32.mxu0 0.0
        %6728 = vmatmul.mubr.f32.gmra.mrb[0].mxu0 %v6574
        %v6729 = vpop.f32.mrb[0].mxu0
        %v6730 = vadd.f32 0.0, %v6729
        %v6731 = vpop.f32.mrb[0].mxu0
        %6732 = vmatprep.mubr.f32.mxu0 0.0
        %6733 = vmatmul.mubr.f32.gmra.mrb[0].mxu0 %v6575
        %v6734 = vpop.f32.mrb[0].mxu0
        %v6735 = vadd.f32 0.0, %v6734
        %v6736 = vpop.f32.mrb[0].mxu0
        %6737 = vdwg.mxu0
        %v6738 = vadd.f32 %v6512, %v6660
        %v6739 = vadd.f32 %v6513, %v6665
        %v6740 = vadd.f32 %v6514, %v6670
        %v6741 = vadd.f32 %v6515, %v6675
        %v6742 = vadd.f32 %v6516, %v6680
        %v6743 = vadd.f32 %v6517, %v6685
        %v6744 = vadd.f32 %v6518, %v6690
        %v6745 = vadd.f32 %v6519, %v6695
        %v6746 = vadd.f32 %v6520, %v6700
        %v6747 = vadd.f32 %v6521, %v6705
        %v6748 = vadd.f32 %v6522, %v6710
        %v6749 = vadd.f32 %v6523, %v6715
        %v6750 = vadd.f32 %v6524, %v6720
        %v6751 = vadd.f32 %v6525, %v6725
        %v6752 = vadd.f32 %v6526, %v6730
        %v6753 = vadd.f32 %v6527, %v6735
        %v6754 = vld [vmem:[#allocation3 + $0x20] sm:$0xff]
        %v6755 = vld [vmem:[#allocation3 + $0x28] sm:$0xff]
        %v6756 = vld [vmem:[#allocation3 + $0x30] sm:$0xff]
        %v6757 = vld [vmem:[#allocation3 + $0x38] sm:$0xff]
        %v6758 = vld [vmem:[#allocation3 + $0x40] sm:$0xff]
        %v6759 = vld [vmem:[#allocation3 + $0x48] sm:$0xff]
        %v6760 = vld [vmem:[#allocation3 + $0x50] sm:$0xff]
        %v6761 = vld [vmem:[#allocation3 + $0x58] sm:$0xff]
        %v6762 = vld [vmem:[#allocation3 + $0x60] sm:$0xff]
        %v6763 = vld [vmem:[#allocation3 + $0x68] sm:$0xff]
        %v6764 = vld [vmem:[#allocation3 + $0x70] sm:$0xff]
        %v6765 = vld [vmem:[#allocation3 + $0x78] sm:$0xff]
        %v6766 = vld [vmem:[#allocation3 + $0x80] sm:$0xff]
        %v6767 = vld [vmem:[#allocation3 + $0x88] sm:$0xff]
        %v6768 = vld [vmem:[#allocation3 + $0x90] sm:$0xff]
        %v6769 = vld [vmem:[#allocation3 + $0x98] sm:$0xff]
        %v6770 = vrot.slane %v6754, 7
        %v6771 = vrot.slane %v6755, 7
        %v6772 = vrot.slane %v6756, 7
        %v6773 = vrot.slane %v6757, 7
        %v6774 = vrot.slane %v6758, 7
        %v6775 = vrot.slane %v6759, 7
        %v6776 = vrot.slane %v6760, 7
        %v6777 = vrot.slane %v6761, 7
        %v6778 = vrot.slane %v6762, 7
        %v6779 = vrot.slane %v6763, 7
        %v6780 = vrot.slane %v6764, 7
        %v6781 = vrot.slane %v6765, 7
        %v6782 = vrot.slane %v6766, 7
        %v6783 = vrot.slane %v6767, 7
        %v6784 = vrot.slane %v6768, 7
        %v6785 = vrot.slane %v6769, 7
        %v6786 = vsel %vm627, %v6784, %v6785
        %v6787 = vsel %vm627, %v6783, %v6784
        %v6788 = vsel %vm627, %v6782, %v6783
        %v6789 = vsel %vm627, %v6781, %v6782
        %v6790 = vsel %vm627, %v6780, %v6781
        %v6791 = vsel %vm627, %v6779, %v6780
        %v6792 = vsel %vm627, %v6778, %v6779
        %v6793 = vsel %vm627, %v6777, %v6778
        %v6794 = vsel %vm627, %v6776, %v6777
        %v6795 = vsel %vm627, %v6775, %v6776
        %v6796 = vsel %vm627, %v6774, %v6775
        %v6797 = vsel %vm627, %v6773, %v6774
        %v6798 = vsel %vm627, %v6772, %v6773
        %v6799 = vsel %vm627, %v6771, %v6772
        %v6800 = vsel %vm627, %v6770, %v6771
        %v6801 = vsel %vm627, %v6785, %v6770
        %v6802 = vmul.f32 %v6801, %v500
        %v6803 = vmul.f32 %v6800, %v501
        %v6804 = vmul.f32 %v6799, %v502
        %v6805 = vmul.f32 %v6798, %v503
        %v6806 = vmul.f32 %v6797, %v504
        %v6807 = vmul.f32 %v6796, %v505
        %v6808 = vmul.f32 %v6795, %v506
        %v6809 = vmul.f32 %v6794, %v507
        %v6810 = vmul.f32 %v6793, %v508
        %v6811 = vmul.f32 %v6792, %v509
        %v6812 = vmul.f32 %v6791, %v510
        %v6813 = vmul.f32 %v6790, %v511
        %v6814 = vmul.f32 %v6789, %v512
        %v6815 = vmul.f32 %v6788, %v513
        %v6816 = vmul.f32 %v6787, %v514
        %v6817 = vmul.f32 %v6786, %v515
        %s6818 = scalar_lea.vmem [#allocation4], 768
        %v6819 = vld [vmem:[%s6818] sm:$0xff]
        %v6820 = vld [vmem:[%s6818 + $0x8] sm:$0xff]
        %v6821 = vld [vmem:[%s6818 + $0x10] sm:$0xff]
        %v6822 = vld [vmem:[%s6818 + $0x18] sm:$0xff]
        %v6823 = vld [vmem:[%s6818 + $0x20] sm:$0xff]
        %v6824 = vld [vmem:[%s6818 + $0x28] sm:$0xff]
        %v6825 = vld [vmem:[%s6818 + $0x30] sm:$0xff]
        %v6826 = vld [vmem:[%s6818 + $0x38] sm:$0xff]
        %v6827 = vld [vmem:[%s6818 + $0x40] sm:$0xff]
        %v6828 = vld [vmem:[%s6818 + $0x48] sm:$0xff]
        %v6829 = vld [vmem:[%s6818 + $0x50] sm:$0xff]
        %v6830 = vld [vmem:[%s6818 + $0x58] sm:$0xff]
        %v6831 = vld [vmem:[%s6818 + $0x60] sm:$0xff]
        %v6832 = vld [vmem:[%s6818 + $0x68] sm:$0xff]
        %v6833 = vld [vmem:[%s6818 + $0x70] sm:$0xff]
        %v6834 = vld [vmem:[%s6818 + $0x78] sm:$0xff]
        %6835 = vmatprep.subr.mxu0 0.0
        %6836 = vmatpush1.msra.mxu0 %v6819
        %6837 = vmatprep.subr.mxu0 0.0
        %6838 = vmatpush1.msra.mxu0 %v6820
        %6839 = vmatprep.subr.mxu0 0.0
        %6840 = vmatpush1.msra.mxu0 %v6821
        %6841 = vmatprep.subr.mxu0 0.0
        %6842 = vmatpush1.msra.mxu0 %v6822
        %6843 = vmatprep.subr.mxu0 0.0
        %6844 = vmatpush1.msra.mxu0 %v6823
        %6845 = vmatprep.subr.mxu0 0.0
        %6846 = vmatpush1.msra.mxu0 %v6824
        %6847 = vmatprep.subr.mxu0 0.0
        %6848 = vmatpush1.msra.mxu0 %v6825
        %6849 = vmatprep.subr.mxu0 0.0
        %6850 = vmatpush1.msra.mxu0 %v6826
        %6851 = vmatprep.subr.mxu0 0.0
        %6852 = vmatpush1.msra.mxu0 %v6827
        %6853 = vmatprep.subr.mxu0 0.0
        %6854 = vmatpush1.msra.mxu0 %v6828
        %6855 = vmatprep.subr.mxu0 0.0
        %6856 = vmatpush1.msra.mxu0 %v6829
        %6857 = vmatprep.subr.mxu0 0.0
        %6858 = vmatpush1.msra.mxu0 %v6830
        %6859 = vmatprep.subr.mxu0 0.0
        %6860 = vmatpush1.msra.mxu0 %v6831
        %6861 = vmatprep.subr.mxu0 0.0
        %6862 = vmatpush1.msra.mxu0 %v6832
        %6863 = vmatprep.subr.mxu0 0.0
        %6864 = vmatpush1.msra.mxu0 %v6833
        %6865 = vmatprep.subr.mxu0 0.0
        %6866 = vmatpush1.msra.mxu0 %v6834
        %6867 = vmatprep.subr.mxu0 0.0
        %6868 = vmatpush1.msra.mxu0 0.0
        %6869 = vmatprep.subr.mxu0 0.0
        %6870 = vmatpush1.msra.mxu0 0.0
        %6871 = vmatprep.subr.mxu0 0.0
        %6872 = vmatpush1.msra.mxu0 0.0
        %6873 = vmatprep.subr.mxu0 0.0
        %6874 = vmatpush1.msra.mxu0 0.0
        %6875 = vmatprep.subr.mxu0 0.0
        %6876 = vmatpush1.msra.mxu0 0.0
        %6877 = vmatprep.subr.mxu0 0.0
        %6878 = vmatpush1.msra.mxu0 0.0
        %6879 = vmatprep.subr.mxu0 0.0
        %6880 = vmatpush1.msra.mxu0 0.0
        %6881 = vmatprep.subr.mxu0 0.0
        %6882 = vmatpush1.msra.mxu0 0.0
        %6883 = vmatprep.subr.mxu0 0.0
        %6884 = vmatpush1.msra.mxu0 0.0
        %6885 = vmatprep.subr.mxu0 0.0
        %6886 = vmatpush1.msra.mxu0 0.0
        %6887 = vmatprep.subr.mxu0 0.0
        %6888 = vmatpush1.msra.mxu0 0.0
        %6889 = vmatprep.subr.mxu0 0.0
        %6890 = vmatpush1.msra.mxu0 0.0
        %6891 = vmatprep.subr.mxu0 0.0
        %6892 = vmatpush1.msra.mxu0 0.0
        %6893 = vmatprep.subr.mxu0 0.0
        %6894 = vmatpush1.msra.mxu0 0.0
        %6895 = vmatprep.subr.mxu0 0.0
        %6896 = vmatpush1.msra.mxu0 0.0
        %6897 = vmatprep.subr.mxu0 0.0
        %6898 = vmatpush1.msra.mxu0 0.0
        %6899 = vmatprep.mubr.f32.mxu0 0.0
        %6900 = vmatmul.mubr.f32.gmra.mrb[0].mxu0 %v6802
        %v6901 = vpop.f32.mrb[0].mxu0
        %v6902 = vadd.f32 0.0, %v6901
        %v6903 = vpop.f32.mrb[0].mxu0
        %6904 = vmatprep.mubr.f32.mxu0 0.0
        %6905 = vmatmul.mubr.f32.gmra.mrb[0].mxu0 %v6803
        %v6906 = vpop.f32.mrb[0].mxu0
        %v6907 = vadd.f32 0.0, %v6906
        %v6908 = vpop.f32.mrb[0].mxu0
        %6909 = vmatprep.mubr.f32.mxu0 0.0
        %6910 = vmatmul.mubr.f32.gmra.mrb[0].mxu0 %v6804
        %v6911 = vpop.f32.mrb[0].mxu0
        %v6912 = vadd.f32 0.0, %v6911
        %v6913 = vpop.f32.mrb[0].mxu0
        %6914 = vmatprep.mubr.f32.mxu0 0.0
        %6915 = vmatmul.mubr.f32.gmra.mrb[0].mxu0 %v6805
        %v6916 = vpop.f32.mrb[0].mxu0
        %v6917 = vadd.f32 0.0, %v6916
        %v6918 = vpop.f32.mrb[0].mxu0
        %6919 = vmatprep.mubr.f32.mxu0 0.0
        %6920 = vmatmul.mubr.f32.gmra.mrb[0].mxu0 %v6806
        %v6921 = vpop.f32.mrb[0].mxu0
        %v6922 = vadd.f32 0.0, %v6921
        %v6923 = vpop.f32.mrb[0].mxu0
        %6924 = vmatprep.mubr.f32.mxu0 0.0
        %6925 = vmatmul.mubr.f32.gmra.mrb[0].mxu0 %v6807
        %v6926 = vpop.f32.mrb[0].mxu0
        %v6927 = vadd.f32 0.0, %v6926
        %v6928 = vpop.f32.mrb[0].mxu0
        %6929 = vmatprep.mubr.f32.mxu0 0.0
        %6930 = vmatmul.mubr.f32.gmra.mrb[0].mxu0 %v6808
        %v6931 = vpop.f32.mrb[0].mxu0
        %v6932 = vadd.f32 0.0, %v6931
        %v6933 = vpop.f32.mrb[0].mxu0
        %6934 = vmatprep.mubr.f32.mxu0 0.0
        %6935 = vmatmul.mubr.f32.gmra.mrb[0].mxu0 %v6809
        %v6936 = vpop.f32.mrb[0].mxu0
        %v6937 = vadd.f32 0.0, %v6936
        %v6938 = vpop.f32.mrb[0].mxu0
        %6939 = vmatprep.mubr.f32.mxu0 0.0
        %6940 = vmatmul.mubr.f32.gmra.mrb[0].mxu0 %v6810
        %v6941 = vpop.f32.mrb[0].mxu0
        %v6942 = vadd.f32 0.0, %v6941
        %v6943 = vpop.f32.mrb[0].mxu0
        %6944 = vmatprep.mubr.f32.mxu0 0.0
        %6945 = vmatmul.mubr.f32.gmra.mrb[0].mxu0 %v6811
        %v6946 = vpop.f32.mrb[0].mxu0
        %v6947 = vadd.f32 0.0, %v6946
        %v6948 = vpop.f32.mrb[0].mxu0
        %6949 = vmatprep.mubr.f32.mxu0 0.0
        %6950 = vmatmul.mubr.f32.gmra.mrb[0].mxu0 %v6812
        %v6951 = vpop.f32.mrb[0].mxu0
        %v6952 = vadd.f32 0.0, %v6951
        %v6953 = vpop.f32.mrb[0].mxu0
        %6954 = vmatprep.mubr.f32.mxu0 0.0
        %6955 = vmatmul.mubr.f32.gmra.mrb[0].mxu0 %v6813
        %v6956 = vpop.f32.mrb[0].mxu0
        %v6957 = vadd.f32 0.0, %v6956
        %v6958 = vpop.f32.mrb[0].mxu0
        %6959 = vmatprep.mubr.f32.mxu0 0.0
        %6960 = vmatmul.mubr.f32.gmra.mrb[0].mxu0 %v6814
        %v6961 = vpop.f32.mrb[0].mxu0
        %v6962 = vadd.f32 0.0, %v6961
        %v6963 = vpop.f32.mrb[0].mxu0
        %6964 = vmatprep.mubr.f32.mxu0 0.0
        %6965 = vmatmul.mubr.f32.gmra.mrb[0].mxu0 %v6815
        %v6966 = vpop.f32.mrb[0].mxu0
        %v6967 = vadd.f32 0.0, %v6966
        %v6968 = vpop.f32.mrb[0].mxu0
        %6969 = vmatprep.mubr.f32.mxu0 0.0
        %6970 = vmatmul.mubr.f32.gmra.mrb[0].mxu0 %v6816
        %v6971 = vpop.f32.mrb[0].mxu0
        %v6972 = vadd.f32 0.0, %v6971
        %v6973 = vpop.f32.mrb[0].mxu0
        %6974 = vmatprep.mubr.f32.mxu0 0.0
        %6975 = vmatmul.mubr.f32.gmra.mrb[0].mxu0 %v6817
        %v6976 = vpop.f32.mrb[0].mxu0
        %v6977 = vadd.f32 0.0, %v6976
        %v6978 = vpop.f32.mrb[0].mxu0
        %6979 = vdwg.mxu0
        %v6980 = vadd.f32 %v6738, %v6902
        %v6981 = vadd.f32 %v6739, %v6907
        %v6982 = vadd.f32 %v6740, %v6912
        %v6983 = vadd.f32 %v6741, %v6917
        %v6984 = vadd.f32 %v6742, %v6922
        %v6985 = vadd.f32 %v6743, %v6927
        %v6986 = vadd.f32 %v6744, %v6932
        %v6987 = vadd.f32 %v6745, %v6937
        %v6988 = vadd.f32 %v6746, %v6942
        %v6989 = vadd.f32 %v6747, %v6947
        %v6990 = vadd.f32 %v6748, %v6952
        %v6991 = vadd.f32 %v6749, %v6957
        %v6992 = vadd.f32 %v6750, %v6962
        %v6993 = vadd.f32 %v6751, %v6967
        %v6994 = vadd.f32 %v6752, %v6972
        %v6995 = vadd.f32 %v6753, %v6977
        %s6996 = scalar_lea.vmem [#allocation4], 896
        %v6997 = vld [vmem:[%s6996] sm:$0xff]
        %v6998 = vld [vmem:[%s6996 + $0x8] sm:$0xff]
        %v6999 = vld [vmem:[%s6996 + $0x10] sm:$0xff]
        %v7000 = vld [vmem:[%s6996 + $0x18] sm:$0xff]
        %v7001 = vld [vmem:[%s6996 + $0x20] sm:$0xff]
        %v7002 = vld [vmem:[%s6996 + $0x28] sm:$0xff]
        %v7003 = vld [vmem:[%s6996 + $0x30] sm:$0xff]
        %v7004 = vld [vmem:[%s6996 + $0x38] sm:$0xff]
        %v7005 = vld [vmem:[%s6996 + $0x40] sm:$0xff]
        %v7006 = vld [vmem:[%s6996 + $0x48] sm:$0xff]
        %v7007 = vld [vmem:[%s6996 + $0x50] sm:$0xff]
        %v7008 = vld [vmem:[%s6996 + $0x58] sm:$0xff]
        %v7009 = vld [vmem:[%s6996 + $0x60] sm:$0xff]
        %v7010 = vld [vmem:[%s6996 + $0x68] sm:$0xff]
        %v7011 = vld [vmem:[%s6996 + $0x70] sm:$0xff]
        %v7012 = vld [vmem:[%s6996 + $0x78] sm:$0xff]
        %7013 = vmatprep.subr.mxu0 0.0
        %7014 = vmatpush1.msra.mxu0 %v6997
        %7015 = vmatprep.subr.mxu0 0.0
        %7016 = vmatpush1.msra.mxu0 %v6998
        %7017 = vmatprep.subr.mxu0 0.0
        %7018 = vmatpush1.msra.mxu0 %v6999
        %7019 = vmatprep.subr.mxu0 0.0
        %7020 = vmatpush1.msra.mxu0 %v7000
        %7021 = vmatprep.subr.mxu0 0.0
        %7022 = vmatpush1.msra.mxu0 %v7001
        %7023 = vmatprep.subr.mxu0 0.0
        %7024 = vmatpush1.msra.mxu0 %v7002
        %7025 = vmatprep.subr.mxu0 0.0
        %7026 = vmatpush1.msra.mxu0 %v7003
        %7027 = vmatprep.subr.mxu0 0.0
        %7028 = vmatpush1.msra.mxu0 %v7004
        %7029 = vmatprep.subr.mxu0 0.0
        %7030 = vmatpush1.msra.mxu0 %v7005
        %7031 = vmatprep.subr.mxu0 0.0
        %7032 = vmatpush1.msra.mxu0 %v7006
        %7033 = vmatprep.subr.mxu0 0.0
        %7034 = vmatpush1.msra.mxu0 %v7007
        %7035 = vmatprep.subr.mxu0 0.0
        %7036 = vmatpush1.msra.mxu0 %v7008
        %7037 = vmatprep.subr.mxu0 0.0
        %7038 = vmatpush1.msra.mxu0 %v7009
        %7039 = vmatprep.subr.mxu0 0.0
        %7040 = vmatpush1.msra.mxu0 %v7010
        %7041 = vmatprep.subr.mxu0 0.0
        %7042 = vmatpush1.msra.mxu0 %v7011
        %7043 = vmatprep.subr.mxu0 0.0
        %7044 = vmatpush1.msra.mxu0 %v7012
        %7045 = vmatprep.subr.mxu0 0.0
        %7046 = vmatpush1.msra.mxu0 0.0
        %7047 = vmatprep.subr.mxu0 0.0
        %7048 = vmatpush1.msra.mxu0 0.0
        %7049 = vmatprep.subr.mxu0 0.0
        %7050 = vmatpush1.msra.mxu0 0.0
        %7051 = vmatprep.subr.mxu0 0.0
        %7052 = vmatpush1.msra.mxu0 0.0
        %7053 = vmatprep.subr.mxu0 0.0
        %7054 = vmatpush1.msra.mxu0 0.0
        %7055 = vmatprep.subr.mxu0 0.0
        %7056 = vmatpush1.msra.mxu0 0.0
        %7057 = vmatprep.subr.mxu0 0.0
        %7058 = vmatpush1.msra.mxu0 0.0
        %7059 = vmatprep.subr.mxu0 0.0
        %7060 = vmatpush1.msra.mxu0 0.0
        %7061 = vmatprep.subr.mxu0 0.0
        %7062 = vmatpush1.msra.mxu0 0.0
        %7063 = vmatprep.subr.mxu0 0.0
        %7064 = vmatpush1.msra.mxu0 0.0
        %7065 = vmatprep.subr.mxu0 0.0
        %7066 = vmatpush1.msra.mxu0 0.0
        %7067 = vmatprep.subr.mxu0 0.0
        %7068 = vmatpush1.msra.mxu0 0.0
        %7069 = vmatprep.subr.mxu0 0.0
        %7070 = vmatpush1.msra.mxu0 0.0
        %7071 = vmatprep.subr.mxu0 0.0
        %7072 = vmatpush1.msra.mxu0 0.0
        %7073 = vmatprep.subr.mxu0 0.0
        %7074 = vmatpush1.msra.mxu0 0.0
        %7075 = vmatprep.subr.mxu0 0.0
        %7076 = vmatpush1.msra.mxu0 0.0
        %7077 = vmatprep.mubr.f32.mxu0 0.0
        %7078 = vmatmul.mubr.f32.gmra.mrb[0].mxu0 %v6754
        %v7079 = vpop.f32.mrb[0].mxu0
        %v7080 = vadd.f32 0.0, %v7079
        %v7081 = vpop.f32.mrb[0].mxu0
        %7082 = vmatprep.mubr.f32.mxu0 0.0
        %7083 = vmatmul.mubr.f32.gmra.mrb[0].mxu0 %v6755
        %v7084 = vpop.f32.mrb[0].mxu0
        %v7085 = vadd.f32 0.0, %v7084
        %v7086 = vpop.f32.mrb[0].mxu0
        %7087 = vmatprep.mubr.f32.mxu0 0.0
        %7088 = vmatmul.mubr.f32.gmra.mrb[0].mxu0 %v6756
        %v7089 = vpop.f32.mrb[0].mxu0
        %v7090 = vadd.f32 0.0, %v7089
        %v7091 = vpop.f32.mrb[0].mxu0
        %7092 = vmatprep.mubr.f32.mxu0 0.0
        %7093 = vmatmul.mubr.f32.gmra.mrb[0].mxu0 %v6757
        %v7094 = vpop.f32.mrb[0].mxu0
        %v7095 = vadd.f32 0.0, %v7094
        %v7096 = vpop.f32.mrb[0].mxu0
        %7097 = vmatprep.mubr.f32.mxu0 0.0
        %7098 = vmatmul.mubr.f32.gmra.mrb[0].mxu0 %v6758
        %v7099 = vpop.f32.mrb[0].mxu0
        %v7100 = vadd.f32 0.0, %v7099
        %v7101 = vpop.f32.mrb[0].mxu0
        %7102 = vmatprep.mubr.f32.mxu0 0.0
        %7103 = vmatmul.mubr.f32.gmra.mrb[0].mxu0 %v6759
        %v7104 = vpop.f32.mrb[0].mxu0
        %v7105 = vadd.f32 0.0, %v7104
        %v7106 = vpop.f32.mrb[0].mxu0
        %7107 = vmatprep.mubr.f32.mxu0 0.0
        %7108 = vmatmul.mubr.f32.gmra.mrb[0].mxu0 %v6760
        %v7109 = vpop.f32.mrb[0].mxu0
        %v7110 = vadd.f32 0.0, %v7109
        %v7111 = vpop.f32.mrb[0].mxu0
        %7112 = vmatprep.mubr.f32.mxu0 0.0
        %7113 = vmatmul.mubr.f32.gmra.mrb[0].mxu0 %v6761
        %v7114 = vpop.f32.mrb[0].mxu0
        %v7115 = vadd.f32 0.0, %v7114
        %v7116 = vpop.f32.mrb[0].mxu0
        %7117 = vmatprep.mubr.f32.mxu0 0.0
        %7118 = vmatmul.mubr.f32.gmra.mrb[0].mxu0 %v6762
        %v7119 = vpop.f32.mrb[0].mxu0
        %v7120 = vadd.f32 0.0, %v7119
        %v7121 = vpop.f32.mrb[0].mxu0
        %7122 = vmatprep.mubr.f32.mxu0 0.0
        %7123 = vmatmul.mubr.f32.gmra.mrb[0].mxu0 %v6763
        %v7124 = vpop.f32.mrb[0].mxu0
        %v7125 = vadd.f32 0.0, %v7124
        %v7126 = vpop.f32.mrb[0].mxu0
        %7127 = vmatprep.mubr.f32.mxu0 0.0
        %7128 = vmatmul.mubr.f32.gmra.mrb[0].mxu0 %v6764
        %v7129 = vpop.f32.mrb[0].mxu0
        %v7130 = vadd.f32 0.0, %v7129
        %v7131 = vpop.f32.mrb[0].mxu0
        %7132 = vmatprep.mubr.f32.mxu0 0.0
        %7133 = vmatmul.mubr.f32.gmra.mrb[0].mxu0 %v6765
        %v7134 = vpop.f32.mrb[0].mxu0
        %v7135 = vadd.f32 0.0, %v7134
        %v7136 = vpop.f32.mrb[0].mxu0
        %7137 = vmatprep.mubr.f32.mxu0 0.0
        %7138 = vmatmul.mubr.f32.gmra.mrb[0].mxu0 %v6766
        %v7139 = vpop.f32.mrb[0].mxu0
        %v7140 = vadd.f32 0.0, %v7139
        %v7141 = vpop.f32.mrb[0].mxu0
        %7142 = vmatprep.mubr.f32.mxu0 0.0
        %7143 = vmatmul.mubr.f32.gmra.mrb[0].mxu0 %v6767
        %v7144 = vpop.f32.mrb[0].mxu0
        %v7145 = vadd.f32 0.0, %v7144
        %v7146 = vpop.f32.mrb[0].mxu0
        %7147 = vmatprep.mubr.f32.mxu0 0.0
        %7148 = vmatmul.mubr.f32.gmra.mrb[0].mxu0 %v6768
        %v7149 = vpop.f32.mrb[0].mxu0
        %v7150 = vadd.f32 0.0, %v7149
        %v7151 = vpop.f32.mrb[0].mxu0
        %7152 = vmatprep.mubr.f32.mxu0 0.0
        %7153 = vmatmul.mubr.f32.gmra.mrb[0].mxu0 %v6769
        %v7154 = vpop.f32.mrb[0].mxu0
        %v7155 = vadd.f32 0.0, %v7154
        %v7156 = vpop.f32.mrb[0].mxu0
        %7157 = vdwg.mxu0
        %v7158 = vadd.f32 %v6980, %v7080
        %v7159 = vadd.f32 %v6981, %v7085
        %v7160 = vadd.f32 %v6982, %v7090
        %v7161 = vadd.f32 %v6983, %v7095
        %v7162 = vadd.f32 %v6984, %v7100
        %v7163 = vadd.f32 %v6985, %v7105
        %v7164 = vadd.f32 %v6986, %v7110
        %v7165 = vadd.f32 %v6987, %v7115
        %v7166 = vadd.f32 %v6988, %v7120
        %v7167 = vadd.f32 %v6989, %v7125
        %v7168 = vadd.f32 %v6990, %v7130
        %v7169 = vadd.f32 %v6991, %v7135
        %v7170 = vadd.f32 %v6992, %v7140
        %v7171 = vadd.f32 %v6993, %v7145
        %v7172 = vadd.f32 %v6994, %v7150
        %v7173 = vadd.f32 %v6995, %v7155
        %v7174 = vrot.slane %v6754, 1
        %v7175 = vrot.slane %v6755, 1
        %v7176 = vrot.slane %v6756, 1
        %v7177 = vrot.slane %v6757, 1
        %v7178 = vrot.slane %v6758, 1
        %v7179 = vrot.slane %v6759, 1
        %v7180 = vrot.slane %v6760, 1
        %v7181 = vrot.slane %v6761, 1
        %v7182 = vrot.slane %v6762, 1
        %v7183 = vrot.slane %v6763, 1
        %v7184 = vrot.slane %v6764, 1
        %v7185 = vrot.slane %v6765, 1
        %v7186 = vrot.slane %v6766, 1
        %v7187 = vrot.slane %v6767, 1
        %v7188 = vrot.slane %v6768, 1
        %v7189 = vrot.slane %v6769, 1
        %v7190 = vsel %vm1072, %v7188, %v7189
        %v7191 = vsel %vm1072, %v7187, %v7188
        %v7192 = vsel %vm1072, %v7186, %v7187
        %v7193 = vsel %vm1072, %v7185, %v7186
        %v7194 = vsel %vm1072, %v7184, %v7185
        %v7195 = vsel %vm1072, %v7183, %v7184
        %v7196 = vsel %vm1072, %v7182, %v7183
        %v7197 = vsel %vm1072, %v7181, %v7182
        %v7198 = vsel %vm1072, %v7180, %v7181
        %v7199 = vsel %vm1072, %v7179, %v7180
        %v7200 = vsel %vm1072, %v7178, %v7179
        %v7201 = vsel %vm1072, %v7177, %v7178
        %v7202 = vsel %vm1072, %v7176, %v7177
        %v7203 = vsel %vm1072, %v7175, %v7176
        %v7204 = vsel %vm1072, %v7174, %v7175
        %v7205 = vsel %vm1072, %v7189, %v7174
        %v7206 = vmul.f32 %v7204, %v452
        %v7207 = vmul.f32 %v7203, %v453
        %v7208 = vmul.f32 %v7202, %v454
        %v7209 = vmul.f32 %v7201, %v455
        %v7210 = vmul.f32 %v7200, %v456
        %v7211 = vmul.f32 %v7199, %v457
        %v7212 = vmul.f32 %v7198, %v458
        %v7213 = vmul.f32 %v7197, %v459
        %v7214 = vmul.f32 %v7196, %v460
        %v7215 = vmul.f32 %v7195, %v461
        %v7216 = vmul.f32 %v7194, %v462
        %v7217 = vmul.f32 %v7193, %v463
        %v7218 = vmul.f32 %v7192, %v464
        %v7219 = vmul.f32 %v7191, %v465
        %v7220 = vmul.f32 %v7190, %v466
        %v7221 = vmul.f32 %v7205, %v467
        %s7222 = scalar_lea.vmem [#allocation4], 1024
        %v7223 = vld [vmem:[%s7222] sm:$0xff]
        %v7224 = vld [vmem:[%s7222 + $0x8] sm:$0xff]
        %v7225 = vld [vmem:[%s7222 + $0x10] sm:$0xff]
        %v7226 = vld [vmem:[%s7222 + $0x18] sm:$0xff]
        %v7227 = vld [vmem:[%s7222 + $0x20] sm:$0xff]
        %v7228 = vld [vmem:[%s7222 + $0x28] sm:$0xff]
        %v7229 = vld [vmem:[%s7222 + $0x30] sm:$0xff]
        %v7230 = vld [vmem:[%s7222 + $0x38] sm:$0xff]
        %v7231 = vld [vmem:[%s7222 + $0x40] sm:$0xff]
        %v7232 = vld [vmem:[%s7222 + $0x48] sm:$0xff]
        %v7233 = vld [vmem:[%s7222 + $0x50] sm:$0xff]
        %v7234 = vld [vmem:[%s7222 + $0x58] sm:$0xff]
        %v7235 = vld [vmem:[%s7222 + $0x60] sm:$0xff]
        %v7236 = vld [vmem:[%s7222 + $0x68] sm:$0xff]
        %v7237 = vld [vmem:[%s7222 + $0x70] sm:$0xff]
        %v7238 = vld [vmem:[%s7222 + $0x78] sm:$0xff]
        %7239 = vmatprep.subr.mxu0 0.0
        %7240 = vmatpush1.msra.mxu0 %v7223
        %7241 = vmatprep.subr.mxu0 0.0
        %7242 = vmatpush1.msra.mxu0 %v7224
        %7243 = vmatprep.subr.mxu0 0.0
        %7244 = vmatpush1.msra.mxu0 %v7225
        %7245 = vmatprep.subr.mxu0 0.0
        %7246 = vmatpush1.msra.mxu0 %v7226
        %7247 = vmatprep.subr.mxu0 0.0
        %7248 = vmatpush1.msra.mxu0 %v7227
        %7249 = vmatprep.subr.mxu0 0.0
        %7250 = vmatpush1.msra.mxu0 %v7228
        %7251 = vmatprep.subr.mxu0 0.0
        %7252 = vmatpush1.msra.mxu0 %v7229
        %7253 = vmatprep.subr.mxu0 0.0
        %7254 = vmatpush1.msra.mxu0 %v7230
        %7255 = vmatprep.subr.mxu0 0.0
        %7256 = vmatpush1.msra.mxu0 %v7231
        %7257 = vmatprep.subr.mxu0 0.0
        %7258 = vmatpush1.msra.mxu0 %v7232
        %7259 = vmatprep.subr.mxu0 0.0
        %7260 = vmatpush1.msra.mxu0 %v7233
        %7261 = vmatprep.subr.mxu0 0.0
        %7262 = vmatpush1.msra.mxu0 %v7234
        %7263 = vmatprep.subr.mxu0 0.0
        %7264 = vmatpush1.msra.mxu0 %v7235
        %7265 = vmatprep.subr.mxu0 0.0
        %7266 = vmatpush1.msra.mxu0 %v7236
        %7267 = vmatprep.subr.mxu0 0.0
        %7268 = vmatpush1.msra.mxu0 %v7237
        %7269 = vmatprep.subr.mxu0 0.0
        %7270 = vmatpush1.msra.mxu0 %v7238
        %7271 = vmatprep.subr.mxu0 0.0
        %7272 = vmatpush1.msra.mxu0 0.0
        %7273 = vmatprep.subr.mxu0 0.0
        %7274 = vmatpush1.msra.mxu0 0.0
        %7275 = vmatprep.subr.mxu0 0.0
        %7276 = vmatpush1.msra.mxu0 0.0
        %7277 = vmatprep.subr.mxu0 0.0
        %7278 = vmatpush1.msra.mxu0 0.0
        %7279 = vmatprep.subr.mxu0 0.0
        %7280 = vmatpush1.msra.mxu0 0.0
        %7281 = vmatprep.subr.mxu0 0.0
        %7282 = vmatpush1.msra.mxu0 0.0
        %7283 = vmatprep.subr.mxu0 0.0
        %7284 = vmatpush1.msra.mxu0 0.0
        %7285 = vmatprep.subr.mxu0 0.0
        %7286 = vmatpush1.msra.mxu0 0.0
        %7287 = vmatprep.subr.mxu0 0.0
        %7288 = vmatpush1.msra.mxu0 0.0
        %7289 = vmatprep.subr.mxu0 0.0
        %7290 = vmatpush1.msra.mxu0 0.0
        %7291 = vmatprep.subr.mxu0 0.0
        %7292 = vmatpush1.msra.mxu0 0.0
        %7293 = vmatprep.subr.mxu0 0.0
        %7294 = vmatpush1.msra.mxu0 0.0
        %7295 = vmatprep.subr.mxu0 0.0
        %7296 = vmatpush1.msra.mxu0 0.0
        %7297 = vmatprep.subr.mxu0 0.0
        %7298 = vmatpush1.msra.mxu0 0.0
        %7299 = vmatprep.subr.mxu0 0.0
        %7300 = vmatpush1.msra.mxu0 0.0
        %7301 = vmatprep.subr.mxu0 0.0
        %7302 = vmatpush1.msra.mxu0 0.0
        %7303 = vmatprep.mubr.f32.mxu0 0.0
        %7304 = vmatmul.mubr.f32.gmra.mrb[0].mxu0 %v7206
        %v7305 = vpop.f32.mrb[0].mxu0
        %v7306 = vadd.f32 0.0, %v7305
        %v7307 = vpop.f32.mrb[0].mxu0
        %7308 = vmatprep.mubr.f32.mxu0 0.0
        %7309 = vmatmul.mubr.f32.gmra.mrb[0].mxu0 %v7207
        %v7310 = vpop.f32.mrb[0].mxu0
        %v7311 = vadd.f32 0.0, %v7310
        %v7312 = vpop.f32.mrb[0].mxu0
        %7313 = vmatprep.mubr.f32.mxu0 0.0
        %7314 = vmatmul.mubr.f32.gmra.mrb[0].mxu0 %v7208
        %v7315 = vpop.f32.mrb[0].mxu0
        %v7316 = vadd.f32 0.0, %v7315
        %v7317 = vpop.f32.mrb[0].mxu0
        %7318 = vmatprep.mubr.f32.mxu0 0.0
        %7319 = vmatmul.mubr.f32.gmra.mrb[0].mxu0 %v7209
        %v7320 = vpop.f32.mrb[0].mxu0
        %v7321 = vadd.f32 0.0, %v7320
        %v7322 = vpop.f32.mrb[0].mxu0
        %7323 = vmatprep.mubr.f32.mxu0 0.0
        %7324 = vmatmul.mubr.f32.gmra.mrb[0].mxu0 %v7210
        %v7325 = vpop.f32.mrb[0].mxu0
        %v7326 = vadd.f32 0.0, %v7325
        %v7327 = vpop.f32.mrb[0].mxu0
        %7328 = vmatprep.mubr.f32.mxu0 0.0
        %7329 = vmatmul.mubr.f32.gmra.mrb[0].mxu0 %v7211
        %v7330 = vpop.f32.mrb[0].mxu0
        %v7331 = vadd.f32 0.0, %v7330
        %v7332 = vpop.f32.mrb[0].mxu0
        %7333 = vmatprep.mubr.f32.mxu0 0.0
        %7334 = vmatmul.mubr.f32.gmra.mrb[0].mxu0 %v7212
        %v7335 = vpop.f32.mrb[0].mxu0
        %v7336 = vadd.f32 0.0, %v7335
        %v7337 = vpop.f32.mrb[0].mxu0
        %7338 = vmatprep.mubr.f32.mxu0 0.0
        %7339 = vmatmul.mubr.f32.gmra.mrb[0].mxu0 %v7213
        %v7340 = vpop.f32.mrb[0].mxu0
        %v7341 = vadd.f32 0.0, %v7340
        %v7342 = vpop.f32.mrb[0].mxu0
        %7343 = vmatprep.mubr.f32.mxu0 0.0
        %7344 = vmatmul.mubr.f32.gmra.mrb[0].mxu0 %v7214
        %v7345 = vpop.f32.mrb[0].mxu0
        %v7346 = vadd.f32 0.0, %v7345
        %v7347 = vpop.f32.mrb[0].mxu0
        %7348 = vmatprep.mubr.f32.mxu0 0.0
        %7349 = vmatmul.mubr.f32.gmra.mrb[0].mxu0 %v7215
        %v7350 = vpop.f32.mrb[0].mxu0
        %v7351 = vadd.f32 0.0, %v7350
        %v7352 = vpop.f32.mrb[0].mxu0
        %7353 = vmatprep.mubr.f32.mxu0 0.0
        %7354 = vmatmul.mubr.f32.gmra.mrb[0].mxu0 %v7216
        %v7355 = vpop.f32.mrb[0].mxu0
        %v7356 = vadd.f32 0.0, %v7355
        %v7357 = vpop.f32.mrb[0].mxu0
        %7358 = vmatprep.mubr.f32.mxu0 0.0
        %7359 = vmatmul.mubr.f32.gmra.mrb[0].mxu0 %v7217
        %v7360 = vpop.f32.mrb[0].mxu0
        %v7361 = vadd.f32 0.0, %v7360
        %v7362 = vpop.f32.mrb[0].mxu0
        %7363 = vmatprep.mubr.f32.mxu0 0.0
        %7364 = vmatmul.mubr.f32.gmra.mrb[0].mxu0 %v7218
        %v7365 = vpop.f32.mrb[0].mxu0
        %v7366 = vadd.f32 0.0, %v7365
        %v7367 = vpop.f32.mrb[0].mxu0
        %7368 = vmatprep.mubr.f32.mxu0 0.0
        %7369 = vmatmul.mubr.f32.gmra.mrb[0].mxu0 %v7219
        %v7370 = vpop.f32.mrb[0].mxu0
        %v7371 = vadd.f32 0.0, %v7370
        %v7372 = vpop.f32.mrb[0].mxu0
        %7373 = vmatprep.mubr.f32.mxu0 0.0
        %7374 = vmatmul.mubr.f32.gmra.mrb[0].mxu0 %v7220
        %v7375 = vpop.f32.mrb[0].mxu0
        %v7376 = vadd.f32 0.0, %v7375
        %v7377 = vpop.f32.mrb[0].mxu0
        %7378 = vmatprep.mubr.f32.mxu0 0.0
        %7379 = vmatmul.mubr.f32.gmra.mrb[0].mxu0 %v7221
        %v7380 = vpop.f32.mrb[0].mxu0
        %v7381 = vadd.f32 0.0, %v7380
        %v7382 = vpop.f32.mrb[0].mxu0
        %7383 = vdwg.mxu0
        %v7384 = vadd.f32 %v7158, %v7306
        %v7385 = vadd.f32 %v7159, %v7311
        %v7386 = vadd.f32 %v7160, %v7316
        %v7387 = vadd.f32 %v7161, %v7321
        %v7388 = vadd.f32 %v7162, %v7326
        %v7389 = vadd.f32 %v7163, %v7331
        %v7390 = vadd.f32 %v7164, %v7336
        %v7391 = vadd.f32 %v7165, %v7341
        %v7392 = vadd.f32 %v7166, %v7346
        %v7393 = vadd.f32 %v7167, %v7351
        %v7394 = vadd.f32 %v7168, %v7356
        %v7395 = vadd.f32 %v7169, %v7361
        %v7396 = vadd.f32 %v7170, %v7366
        %v7397 = vadd.f32 %v7171, %v7371
        %v7398 = vadd.f32 %v7172, %v7376
        %v7399 = vadd.f32 %v7173, %v7381
        %v7400 = vlaneseq
        %v7401 = vshrl.u32 %v7400, 7
        %v7402 = vsub.s32 0, %v7401
        %v7403 = vrot.slane %v592, %v7402
        %v7404 = vadd.f32 %v7384, %v7403
        %v7405 = vadd.f32 %v7385, %v7403
        %v7406 = vadd.f32 %v7386, %v7403
        %v7407 = vadd.f32 %v7387, %v7403
        %v7408 = vadd.f32 %v7388, %v7403
        %v7409 = vadd.f32 %v7389, %v7403
        %v7410 = vadd.f32 %v7390, %v7403
        %v7411 = vadd.f32 %v7391, %v7403
        %v7412 = vadd.f32 %v7392, %v7403
        %v7413 = vadd.f32 %v7393, %v7403
        %v7414 = vadd.f32 %v7394, %v7403
        %v7415 = vadd.f32 %v7395, %v7403
        %v7416 = vadd.f32 %v7396, %v7403
        %v7417 = vadd.f32 %v7397, %v7403
        %v7418 = vadd.f32 %v7398, %v7403
        %v7419 = vadd.f32 %v7399, %v7403
        %7420 = vst [vmem:[%s205] sm:$0xff] %v7404
        %7421 = vst [vmem:[%s205 + $0x8] sm:$0xff] %v7405
        %7422 = vst [vmem:[%s205 + $0x10] sm:$0xff] %v7406
        %7423 = vst [vmem:[%s205 + $0x18] sm:$0xff] %v7407
        %7424 = vst [vmem:[%s205 + $0x20] sm:$0xff] %v7408
        %7425 = vst [vmem:[%s205 + $0x28] sm:$0xff] %v7409
        %7426 = vst [vmem:[%s205 + $0x30] sm:$0xff] %v7410
        %7427 = vst [vmem:[%s205 + $0x38] sm:$0xff] %v7411
        %7428 = vst [vmem:[%s205 + $0x40] sm:$0xff] %v7412
        %7429 = vst [vmem:[%s205 + $0x48] sm:$0xff] %v7413
        %7430 = vst [vmem:[%s205 + $0x50] sm:$0xff] %v7414
        %7431 = vst [vmem:[%s205 + $0x58] sm:$0xff] %v7415
        %7432 = vst [vmem:[%s205 + $0x60] sm:$0xff] %v7416
        %7433 = vst [vmem:[%s205 + $0x68] sm:$0xff] %v7417
        %7434 = vst [vmem:[%s205 + $0x70] sm:$0xff] %v7418
        %7435 = vst [vmem:[%s205 + $0x78] sm:$0xff] %v7419
        %v7436 = vadd.f32 %v7404, %v7405
        %v7437 = vadd.f32 %v7436, %v7406
        %v7438 = vadd.f32 %v7437, %v7407
        %v7439 = vadd.f32 %v7438, %v7408
        %v7440 = vadd.f32 %v7439, %v7409
        %v7441 = vadd.f32 %v7440, %v7410
        %v7442 = vadd.f32 %v7441, %v7411
        %v7443 = vadd.f32 %v7442, %v7412
        %v7444 = vadd.f32 %v7443, %v7413
        %v7445 = vadd.f32 %v7444, %v7414
        %v7446 = vadd.f32 %v7445, %v7415
        %v7447 = vadd.f32 %v7446, %v7416
        %v7448 = vadd.f32 %v7447, %v7417
        %v7449 = vadd.f32 %v7448, %v7418
        %v7450 = vadd.f32 %v7449, %v7419
        %7451 = vadd.xlane.f32.xlu0 %v7450
        %v7452 = vpop.xlane.xlu0 %7451
        %v7453 = vrot.slane %v7452, 4
        %v7454 = vadd.f32 %v7452, %v7453
        %v7455 = vrot.slane %v7454, 2
        %v7456 = vadd.f32 %v7454, %v7455
        %v7457 = vrot.slane %v7456, 1
        %v7458 = vadd.f32 %v7456, %v7457
        %s7459 = vtos %v7458
        %s7460 = sadd.f32 %s7459, 0.0
        %v7461 = vmul.f32 %v7404, %v7404
        %v7462 = vmul.f32 %v7405, %v7405
        %v7463 = vmul.f32 %v7406, %v7406
        %v7464 = vmul.f32 %v7407, %v7407
        %v7465 = vmul.f32 %v7408, %v7408
        %v7466 = vmul.f32 %v7409, %v7409
        %v7467 = vmul.f32 %v7410, %v7410
        %v7468 = vmul.f32 %v7411, %v7411
        %v7469 = vmul.f32 %v7412, %v7412
        %v7470 = vmul.f32 %v7413, %v7413
        %v7471 = vmul.f32 %v7414, %v7414
        %v7472 = vmul.f32 %v7415, %v7415
        %v7473 = vmul.f32 %v7416, %v7416
        %v7474 = vmul.f32 %v7417, %v7417
        %v7475 = vmul.f32 %v7418, %v7418
        %v7476 = vmul.f32 %v7419, %v7419
        %v7477 = vadd.f32 %v7461, %v7462
        %v7478 = vadd.f32 %v7477, %v7463
        %v7479 = vadd.f32 %v7478, %v7464
        %v7480 = vadd.f32 %v7479, %v7465
        %v7481 = vadd.f32 %v7480, %v7466
        %v7482 = vadd.f32 %v7481, %v7467
        %v7483 = vadd.f32 %v7482, %v7468
        %v7484 = vadd.f32 %v7483, %v7469
        %v7485 = vadd.f32 %v7484, %v7470
        %v7486 = vadd.f32 %v7485, %v7471
        %v7487 = vadd.f32 %v7486, %v7472
        %v7488 = vadd.f32 %v7487, %v7473
        %v7489 = vadd.f32 %v7488, %v7474
        %v7490 = vadd.f32 %v7489, %v7475
        %v7491 = vadd.f32 %v7490, %v7476
        %7492 = vadd.xlane.f32.xlu0 %v7491
        %v7493 = vpop.xlane.xlu0 %7492
        %v7494 = vrot.slane %v7493, 4
        %v7495 = vadd.f32 %v7493, %v7494
        %v7496 = vrot.slane %v7495, 2
        %v7497 = vadd.f32 %v7495, %v7496
        %v7498 = vrot.slane %v7497, 1
        %v7499 = vadd.f32 %v7497, %v7498
        %s7500 = vtos %v7499
        %s7501 = sadd.f32 %s7500, 0.0
        %v7502 = vld [vmem:[#allocation3 + $0x80] sm:$0xff]
        %v7503 = vld [vmem:[#allocation3 + $0x88] sm:$0xff]
        %v7504 = vld [vmem:[#allocation3 + $0x90] sm:$0xff]
        %v7505 = vld [vmem:[#allocation3 + $0x98] sm:$0xff]
        %v7506 = vld [vmem:[#allocation3 + $0xa0] sm:$0xff]
        %v7507 = vld [vmem:[#allocation3 + $0xa8] sm:$0xff]
        %v7508 = vld [vmem:[#allocation3 + $0xb0] sm:$0xff]
        %v7509 = vld [vmem:[#allocation3 + $0xb8] sm:$0xff]
        %v7510 = vld [vmem:[#allocation3 + $0xc0] sm:$0xff]
        %v7511 = vld [vmem:[#allocation3 + $0xc8] sm:$0xff]
        %v7512 = vld [vmem:[#allocation3 + $0xd0] sm:$0xff]
        %v7513 = vld [vmem:[#allocation3 + $0xd8] sm:$0xff]
        %v7514 = vld [vmem:[#allocation3 + $0xe0] sm:$0xff]
        %v7515 = vld [vmem:[#allocation3 + $0xe8] sm:$0xff]
        %v7516 = vld [vmem:[#allocation3 + $0xf0] sm:$0xff]
        %v7517 = vld [vmem:[#allocation3 + $0xf8] sm:$0xff]
        %v7518 = vrot.slane %v7502, 7
        %v7519 = vrot.slane %v7503, 7
        %v7520 = vrot.slane %v7504, 7
        %v7521 = vrot.slane %v7505, 7
        %v7522 = vrot.slane %v7506, 7
        %v7523 = vrot.slane %v7507, 7
        %v7524 = vrot.slane %v7508, 7
        %v7525 = vrot.slane %v7509, 7
        %v7526 = vrot.slane %v7510, 7
        %v7527 = vrot.slane %v7511, 7
        %v7528 = vrot.slane %v7512, 7
        %v7529 = vrot.slane %v7513, 7
        %v7530 = vrot.slane %v7514, 7
        %v7531 = vrot.slane %v7515, 7
        %v7532 = vrot.slane %v7516, 7
        %v7533 = vrot.slane %v7517, 7
        %v7534 = vsel %vm627, %v7532, %v7533
        %v7535 = vsel %vm627, %v7531, %v7532
        %v7536 = vsel %vm627, %v7530, %v7531
        %v7537 = vsel %vm627, %v7529, %v7530
        %v7538 = vsel %vm627, %v7528, %v7529
        %v7539 = vsel %vm627, %v7527, %v7528
        %v7540 = vsel %vm627, %v7526, %v7527
        %v7541 = vsel %vm627, %v7525, %v7526
        %v7542 = vsel %vm627, %v7524, %v7525
        %v7543 = vsel %vm627, %v7523, %v7524
        %v7544 = vsel %vm627, %v7522, %v7523
        %v7545 = vsel %vm627, %v7521, %v7522
        %v7546 = vsel %vm627, %v7520, %v7521
        %v7547 = vsel %vm627, %v7519, %v7520
        %v7548 = vsel %vm627, %v7518, %v7519
        %v7549 = vsel %vm627, %v7533, %v7518
        %v7550 = vmul.f32 %v7549, %v500
        %v7551 = vmul.f32 %v7548, %v501
        %v7552 = vmul.f32 %v7547, %v502
        %v7553 = vmul.f32 %v7546, %v503
        %v7554 = vmul.f32 %v7545, %v504
        %v7555 = vmul.f32 %v7544, %v505
        %v7556 = vmul.f32 %v7543, %v506
        %v7557 = vmul.f32 %v7542, %v507
        %v7558 = vmul.f32 %v7541, %v508
        %v7559 = vmul.f32 %v7540, %v509
        %v7560 = vmul.f32 %v7539, %v510
        %v7561 = vmul.f32 %v7538, %v511
        %v7562 = vmul.f32 %v7537, %v512
        %v7563 = vmul.f32 %v7536, %v513
        %v7564 = vmul.f32 %v7535, %v514
        %v7565 = vmul.f32 %v7534, %v515
        %v7566 = vld [vmem:[#allocation4] sm:$0xff]
        %v7567 = vld [vmem:[#allocation4 + $0x8] sm:$0xff]
        %v7568 = vld [vmem:[#allocation4 + $0x10] sm:$0xff]
        %v7569 = vld [vmem:[#allocation4 + $0x18] sm:$0xff]
        %v7570 = vld [vmem:[#allocation4 + $0x20] sm:$0xff]
        %v7571 = vld [vmem:[#allocation4 + $0x28] sm:$0xff]
        %v7572 = vld [vmem:[#allocation4 + $0x30] sm:$0xff]
        %v7573 = vld [vmem:[#allocation4 + $0x38] sm:$0xff]
        %v7574 = vld [vmem:[#allocation4 + $0x40] sm:$0xff]
        %v7575 = vld [vmem:[#allocation4 + $0x48] sm:$0xff]
        %v7576 = vld [vmem:[#allocation4 + $0x50] sm:$0xff]
        %v7577 = vld [vmem:[#allocation4 + $0x58] sm:$0xff]
        %v7578 = vld [vmem:[#allocation4 + $0x60] sm:$0xff]
        %v7579 = vld [vmem:[#allocation4 + $0x68] sm:$0xff]
        %v7580 = vld [vmem:[#allocation4 + $0x70] sm:$0xff]
        %v7581 = vld [vmem:[#allocation4 + $0x78] sm:$0xff]
        %v7582 = vld [vmem:[%s5575] sm:$0xff]
        %v7583 = vld [vmem:[%s5575 + $0x8] sm:$0xff]
        %v7584 = vld [vmem:[%s5575 + $0x10] sm:$0xff]
        %v7585 = vld [vmem:[%s5575 + $0x18] sm:$0xff]
        %v7586 = vld [vmem:[%s5575 + $0x20] sm:$0xff]
        %v7587 = vld [vmem:[%s5575 + $0x28] sm:$0xff]
        %v7588 = vld [vmem:[%s5575 + $0x30] sm:$0xff]
        %v7589 = vld [vmem:[%s5575 + $0x38] sm:$0xff]
        %v7590 = vld [vmem:[%s5575 + $0x40] sm:$0xff]
        %v7591 = vld [vmem:[%s5575 + $0x48] sm:$0xff]
        %v7592 = vld [vmem:[%s5575 + $0x50] sm:$0xff]
        %v7593 = vld [vmem:[%s5575 + $0x58] sm:$0xff]
        %v7594 = vld [vmem:[%s5575 + $0x60] sm:$0xff]
        %v7595 = vld [vmem:[%s5575 + $0x68] sm:$0xff]
        %v7596 = vld [vmem:[%s5575 + $0x70] sm:$0xff]
        %v7597 = vld [vmem:[%s5575 + $0x78] sm:$0xff]
        %7598 = vmatprep.subr.mxu0 0.0
        %7599 = vmatpush1.msra.mxu0 %v7582
        %7600 = vmatprep.subr.mxu0 0.0
        %7601 = vmatpush1.msra.mxu0 %v7583
        %7602 = vmatprep.subr.mxu0 0.0
        %7603 = vmatpush1.msra.mxu0 %v7584
        %7604 = vmatprep.subr.mxu0 0.0
        %7605 = vmatpush1.msra.mxu0 %v7585
        %7606 = vmatprep.subr.mxu0 0.0
        %7607 = vmatpush1.msra.mxu0 %v7586
        %7608 = vmatprep.subr.mxu0 0.0
        %7609 = vmatpush1.msra.mxu0 %v7587
        %7610 = vmatprep.subr.mxu0 0.0
        %7611 = vmatpush1.msra.mxu0 %v7588
        %7612 = vmatprep.subr.mxu0 0.0
        %7613 = vmatpush1.msra.mxu0 %v7589
        %7614 = vmatprep.subr.mxu0 0.0
        %7615 = vmatpush1.msra.mxu0 %v7590
        %7616 = vmatprep.subr.mxu0 0.0
        %7617 = vmatpush1.msra.mxu0 %v7591
        %7618 = vmatprep.subr.mxu0 0.0
        %7619 = vmatpush1.msra.mxu0 %v7592
        %7620 = vmatprep.subr.mxu0 0.0
        %7621 = vmatpush1.msra.mxu0 %v7593
        %7622 = vmatprep.subr.mxu0 0.0
        %7623 = vmatpush1.msra.mxu0 %v7594
        %7624 = vmatprep.subr.mxu0 0.0
        %7625 = vmatpush1.msra.mxu0 %v7595
        %7626 = vmatprep.subr.mxu0 0.0
        %7627 = vmatpush1.msra.mxu0 %v7596
        %7628 = vmatprep.subr.mxu0 0.0
        %7629 = vmatpush1.msra.mxu0 %v7597
        %7630 = vmatprep.subr.mxu0 0.0
        %7631 = vmatpush1.msra.mxu0 0.0
        %7632 = vmatprep.subr.mxu0 0.0
        %7633 = vmatpush1.msra.mxu0 0.0
        %7634 = vmatprep.subr.mxu0 0.0
        %7635 = vmatpush1.msra.mxu0 0.0
        %7636 = vmatprep.subr.mxu0 0.0
        %7637 = vmatpush1.msra.mxu0 0.0
        %7638 = vmatprep.subr.mxu0 0.0
        %7639 = vmatpush1.msra.mxu0 0.0
        %7640 = vmatprep.subr.mxu0 0.0
        %7641 = vmatpush1.msra.mxu0 0.0
        %7642 = vmatprep.subr.mxu0 0.0
        %7643 = vmatpush1.msra.mxu0 0.0
        %7644 = vmatprep.subr.mxu0 0.0
        %7645 = vmatpush1.msra.mxu0 0.0
        %7646 = vmatprep.subr.mxu0 0.0
        %7647 = vmatpush1.msra.mxu0 0.0
        %7648 = vmatprep.subr.mxu0 0.0
        %7649 = vmatpush1.msra.mxu0 0.0
        %7650 = vmatprep.subr.mxu0 0.0
        %7651 = vmatpush1.msra.mxu0 0.0
        %7652 = vmatprep.subr.mxu0 0.0
        %7653 = vmatpush1.msra.mxu0 0.0
        %7654 = vmatprep.subr.mxu0 0.0
        %7655 = vmatpush1.msra.mxu0 0.0
        %7656 = vmatprep.subr.mxu0 0.0
        %7657 = vmatpush1.msra.mxu0 0.0
        %7658 = vmatprep.subr.mxu0 0.0
        %7659 = vmatpush1.msra.mxu0 0.0
        %7660 = vmatprep.subr.mxu0 0.0
        %7661 = vmatpush1.msra.mxu0 0.0
        %7662 = vmatprep.mubr.f32.mxu0 0.0
        %7663 = vmatmul.mubr.f32.gmra.mrb[0].mxu0 %v7502
        %v7664 = vpop.f32.mrb[0].mxu0
        %v7665 = vadd.f32 0.0, %v7664
        %v7666 = vpop.f32.mrb[0].mxu0
        %7667 = vmatprep.mubr.f32.mxu0 0.0
        %7668 = vmatmul.mubr.f32.gmra.mrb[0].mxu0 %v7503
        %v7669 = vpop.f32.mrb[0].mxu0
        %v7670 = vadd.f32 0.0, %v7669
        %v7671 = vpop.f32.mrb[0].mxu0
        %7672 = vmatprep.mubr.f32.mxu0 0.0
        %7673 = vmatmul.mubr.f32.gmra.mrb[0].mxu0 %v7504
        %v7674 = vpop.f32.mrb[0].mxu0
        %v7675 = vadd.f32 0.0, %v7674
        %v7676 = vpop.f32.mrb[0].mxu0
        %7677 = vmatprep.mubr.f32.mxu0 0.0
        %7678 = vmatmul.mubr.f32.gmra.mrb[0].mxu0 %v7505
        %v7679 = vpop.f32.mrb[0].mxu0
        %v7680 = vadd.f32 0.0, %v7679
        %v7681 = vpop.f32.mrb[0].mxu0
        %7682 = vmatprep.mubr.f32.mxu0 0.0
        %7683 = vmatmul.mubr.f32.gmra.mrb[0].mxu0 %v7506
        %v7684 = vpop.f32.mrb[0].mxu0
        %v7685 = vadd.f32 0.0, %v7684
        %v7686 = vpop.f32.mrb[0].mxu0
        %7687 = vmatprep.mubr.f32.mxu0 0.0
        %7688 = vmatmul.mubr.f32.gmra.mrb[0].mxu0 %v7507
        %v7689 = vpop.f32.mrb[0].mxu0
        %v7690 = vadd.f32 0.0, %v7689
        %v7691 = vpop.f32.mrb[0].mxu0
        %7692 = vmatprep.mubr.f32.mxu0 0.0
        %7693 = vmatmul.mubr.f32.gmra.mrb[0].mxu0 %v7508
        %v7694 = vpop.f32.mrb[0].mxu0
        %v7695 = vadd.f32 0.0, %v7694
        %v7696 = vpop.f32.mrb[0].mxu0
        %7697 = vmatprep.mubr.f32.mxu0 0.0
        %7698 = vmatmul.mubr.f32.gmra.mrb[0].mxu0 %v7509
        %v7699 = vpop.f32.mrb[0].mxu0
        %v7700 = vadd.f32 0.0, %v7699
        %v7701 = vpop.f32.mrb[0].mxu0
        %7702 = vmatprep.mubr.f32.mxu0 0.0
        %7703 = vmatmul.mubr.f32.gmra.mrb[0].mxu0 %v7510
        %v7704 = vpop.f32.mrb[0].mxu0
        %v7705 = vadd.f32 0.0, %v7704
        %v7706 = vpop.f32.mrb[0].mxu0
        %7707 = vmatprep.mubr.f32.mxu0 0.0
        %7708 = vmatmul.mubr.f32.gmra.mrb[0].mxu0 %v7511
        %v7709 = vpop.f32.mrb[0].mxu0
        %v7710 = vadd.f32 0.0, %v7709
        %v7711 = vpop.f32.mrb[0].mxu0
        %7712 = vmatprep.mubr.f32.mxu0 0.0
        %7713 = vmatmul.mubr.f32.gmra.mrb[0].mxu0 %v7512
        %v7714 = vpop.f32.mrb[0].mxu0
        %v7715 = vadd.f32 0.0, %v7714
        %v7716 = vpop.f32.mrb[0].mxu0
        %7717 = vmatprep.mubr.f32.mxu0 0.0
        %7718 = vmatmul.mubr.f32.gmra.mrb[0].mxu0 %v7513
        %v7719 = vpop.f32.mrb[0].mxu0
        %v7720 = vadd.f32 0.0, %v7719
        %v7721 = vpop.f32.mrb[0].mxu0
        %7722 = vmatprep.mubr.f32.mxu0 0.0
        %7723 = vmatmul.mubr.f32.gmra.mrb[0].mxu0 %v7514
        %v7724 = vpop.f32.mrb[0].mxu0
        %v7725 = vadd.f32 0.0, %v7724
        %v7726 = vpop.f32.mrb[0].mxu0
        %7727 = vmatprep.mubr.f32.mxu0 0.0
        %7728 = vmatmul.mubr.f32.gmra.mrb[0].mxu0 %v7515
        %v7729 = vpop.f32.mrb[0].mxu0
        %v7730 = vadd.f32 0.0, %v7729
        %v7731 = vpop.f32.mrb[0].mxu0
        %7732 = vmatprep.mubr.f32.mxu0 0.0
        %7733 = vmatmul.mubr.f32.gmra.mrb[0].mxu0 %v7516
        %v7734 = vpop.f32.mrb[0].mxu0
        %v7735 = vadd.f32 0.0, %v7734
        %v7736 = vpop.f32.mrb[0].mxu0
        %7737 = vmatprep.mubr.f32.mxu0 0.0
        %7738 = vmatmul.mubr.f32.gmra.mrb[0].mxu0 %v7517
        %v7739 = vpop.f32.mrb[0].mxu0
        %v7740 = vadd.f32 0.0, %v7739
        %v7741 = vpop.f32.mrb[0].mxu0
        %7742 = vdwg.mxu0
        %7743 = vmatprep.subr.mxu0 0.0
        %7744 = vmatpush1.msra.mxu0 %v7566
        %7745 = vmatprep.subr.mxu0 0.0
        %7746 = vmatpush1.msra.mxu0 %v7567
        %7747 = vmatprep.subr.mxu0 0.0
        %7748 = vmatpush1.msra.mxu0 %v7568
        %7749 = vmatprep.subr.mxu0 0.0
        %7750 = vmatpush1.msra.mxu0 %v7569
        %7751 = vmatprep.subr.mxu0 0.0
        %7752 = vmatpush1.msra.mxu0 %v7570
        %7753 = vmatprep.subr.mxu0 0.0
        %7754 = vmatpush1.msra.mxu0 %v7571
        %7755 = vmatprep.subr.mxu0 0.0
        %7756 = vmatpush1.msra.mxu0 %v7572
        %7757 = vmatprep.subr.mxu0 0.0
        %7758 = vmatpush1.msra.mxu0 %v7573
        %7759 = vmatprep.subr.mxu0 0.0
        %7760 = vmatpush1.msra.mxu0 %v7574
        %7761 = vmatprep.subr.mxu0 0.0
        %7762 = vmatpush1.msra.mxu0 %v7575
        %7763 = vmatprep.subr.mxu0 0.0
        %7764 = vmatpush1.msra.mxu0 %v7576
        %7765 = vmatprep.subr.mxu0 0.0
        %7766 = vmatpush1.msra.mxu0 %v7577
        %7767 = vmatprep.subr.mxu0 0.0
        %7768 = vmatpush1.msra.mxu0 %v7578
        %7769 = vmatprep.subr.mxu0 0.0
        %7770 = vmatpush1.msra.mxu0 %v7579
        %7771 = vmatprep.subr.mxu0 0.0
        %7772 = vmatpush1.msra.mxu0 %v7580
        %7773 = vmatprep.subr.mxu0 0.0
        %7774 = vmatpush1.msra.mxu0 %v7581
        %7775 = vmatprep.subr.mxu0 0.0
        %7776 = vmatpush1.msra.mxu0 0.0
        %7777 = vmatprep.subr.mxu0 0.0
        %7778 = vmatpush1.msra.mxu0 0.0
        %7779 = vmatprep.subr.mxu0 0.0
        %7780 = vmatpush1.msra.mxu0 0.0
        %7781 = vmatprep.subr.mxu0 0.0
        %7782 = vmatpush1.msra.mxu0 0.0
        %7783 = vmatprep.subr.mxu0 0.0
        %7784 = vmatpush1.msra.mxu0 0.0
        %7785 = vmatprep.subr.mxu0 0.0
        %7786 = vmatpush1.msra.mxu0 0.0
        %7787 = vmatprep.subr.mxu0 0.0
        %7788 = vmatpush1.msra.mxu0 0.0
        %7789 = vmatprep.subr.mxu0 0.0
        %7790 = vmatpush1.msra.mxu0 0.0
        %7791 = vmatprep.subr.mxu0 0.0
        %7792 = vmatpush1.msra.mxu0 0.0
        %7793 = vmatprep.subr.mxu0 0.0
        %7794 = vmatpush1.msra.mxu0 0.0
        %7795 = vmatprep.subr.mxu0 0.0
        %7796 = vmatpush1.msra.mxu0 0.0
        %7797 = vmatprep.subr.mxu0 0.0
        %7798 = vmatpush1.msra.mxu0 0.0
        %7799 = vmatprep.subr.mxu0 0.0
        %7800 = vmatpush1.msra.mxu0 0.0
        %7801 = vmatprep.subr.mxu0 0.0
        %7802 = vmatpush1.msra.mxu0 0.0
        %7803 = vmatprep.subr.mxu0 0.0
        %7804 = vmatpush1.msra.mxu0 0.0
        %7805 = vmatprep.subr.mxu0 0.0
        %7806 = vmatpush1.msra.mxu0 0.0
        %7807 = vmatprep.mubr.f32.mxu0 0.0
        %7808 = vmatmul.mubr.f32.gmra.mrb[0].mxu0 %v7550
        %v7809 = vpop.f32.mrb[0].mxu0
        %v7810 = vadd.f32 %v7665, %v7809
        %v7811 = vpop.f32.mrb[0].mxu0
        %7812 = vmatprep.mubr.f32.mxu0 0.0
        %7813 = vmatmul.mubr.f32.gmra.mrb[0].mxu0 %v7551
        %v7814 = vpop.f32.mrb[0].mxu0
        %v7815 = vadd.f32 %v7670, %v7814
        %v7816 = vpop.f32.mrb[0].mxu0
        %7817 = vmatprep.mubr.f32.mxu0 0.0
        %7818 = vmatmul.mubr.f32.gmra.mrb[0].mxu0 %v7552
        %v7819 = vpop.f32.mrb[0].mxu0
        %v7820 = vadd.f32 %v7675, %v7819
        %v7821 = vpop.f32.mrb[0].mxu0
        %7822 = vmatprep.mubr.f32.mxu0 0.0
        %7823 = vmatmul.mubr.f32.gmra.mrb[0].mxu0 %v7553
        %v7824 = vpop.f32.mrb[0].mxu0
        %v7825 = vadd.f32 %v7680, %v7824
        %v7826 = vpop.f32.mrb[0].mxu0
        %7827 = vmatprep.mubr.f32.mxu0 0.0
        %7828 = vmatmul.mubr.f32.gmra.mrb[0].mxu0 %v7554
        %v7829 = vpop.f32.mrb[0].mxu0
        %v7830 = vadd.f32 %v7685, %v7829
        %v7831 = vpop.f32.mrb[0].mxu0
        %7832 = vmatprep.mubr.f32.mxu0 0.0
        %7833 = vmatmul.mubr.f32.gmra.mrb[0].mxu0 %v7555
        %v7834 = vpop.f32.mrb[0].mxu0
        %v7835 = vadd.f32 %v7690, %v7834
        %v7836 = vpop.f32.mrb[0].mxu0
        %7837 = vmatprep.mubr.f32.mxu0 0.0
        %7838 = vmatmul.mubr.f32.gmra.mrb[0].mxu0 %v7556
        %v7839 = vpop.f32.mrb[0].mxu0
        %v7840 = vadd.f32 %v7695, %v7839
        %v7841 = vpop.f32.mrb[0].mxu0
        %7842 = vmatprep.mubr.f32.mxu0 0.0
        %7843 = vmatmul.mubr.f32.gmra.mrb[0].mxu0 %v7557
        %v7844 = vpop.f32.mrb[0].mxu0
        %v7845 = vadd.f32 %v7700, %v7844
        %v7846 = vpop.f32.mrb[0].mxu0
        %7847 = vmatprep.mubr.f32.mxu0 0.0
        %7848 = vmatmul.mubr.f32.gmra.mrb[0].mxu0 %v7558
        %v7849 = vpop.f32.mrb[0].mxu0
        %v7850 = vadd.f32 %v7705, %v7849
        %v7851 = vpop.f32.mrb[0].mxu0
        %7852 = vmatprep.mubr.f32.mxu0 0.0
        %7853 = vmatmul.mubr.f32.gmra.mrb[0].mxu0 %v7559
        %v7854 = vpop.f32.mrb[0].mxu0
        %v7855 = vadd.f32 %v7710, %v7854
        %v7856 = vpop.f32.mrb[0].mxu0
        %7857 = vmatprep.mubr.f32.mxu0 0.0
        %7858 = vmatmul.mubr.f32.gmra.mrb[0].mxu0 %v7560
        %v7859 = vpop.f32.mrb[0].mxu0
        %v7860 = vadd.f32 %v7715, %v7859
        %v7861 = vpop.f32.mrb[0].mxu0
        %7862 = vmatprep.mubr.f32.mxu0 0.0
        %7863 = vmatmul.mubr.f32.gmra.mrb[0].mxu0 %v7561
        %v7864 = vpop.f32.mrb[0].mxu0
        %v7865 = vadd.f32 %v7720, %v7864
        %v7866 = vpop.f32.mrb[0].mxu0
        %7867 = vmatprep.mubr.f32.mxu0 0.0
        %7868 = vmatmul.mubr.f32.gmra.mrb[0].mxu0 %v7562
        %v7869 = vpop.f32.mrb[0].mxu0
        %v7870 = vadd.f32 %v7725, %v7869
        %v7871 = vpop.f32.mrb[0].mxu0
        %7872 = vmatprep.mubr.f32.mxu0 0.0
        %7873 = vmatmul.mubr.f32.gmra.mrb[0].mxu0 %v7563
        %v7874 = vpop.f32.mrb[0].mxu0
        %v7875 = vadd.f32 %v7730, %v7874
        %v7876 = vpop.f32.mrb[0].mxu0
        %7877 = vmatprep.mubr.f32.mxu0 0.0
        %7878 = vmatmul.mubr.f32.gmra.mrb[0].mxu0 %v7564
        %v7879 = vpop.f32.mrb[0].mxu0
        %v7880 = vadd.f32 %v7735, %v7879
        %v7881 = vpop.f32.mrb[0].mxu0
        %7882 = vmatprep.mubr.f32.mxu0 0.0
        %7883 = vmatmul.mubr.f32.gmra.mrb[0].mxu0 %v7565
        %v7884 = vpop.f32.mrb[0].mxu0
        %v7885 = vadd.f32 %v7740, %v7884
        %v7886 = vpop.f32.mrb[0].mxu0
        %7887 = vdwg.mxu0
        %v7888 = vrot.slane %v7502, 1
        %v7889 = vrot.slane %v7503, 1
        %v7890 = vrot.slane %v7504, 1
        %v7891 = vrot.slane %v7505, 1
        %v7892 = vrot.slane %v7506, 1
        %v7893 = vrot.slane %v7507, 1
        %v7894 = vrot.slane %v7508, 1
        %v7895 = vrot.slane %v7509, 1
        %v7896 = vrot.slane %v7510, 1
        %v7897 = vrot.slane %v7511, 1
        %v7898 = vrot.slane %v7512, 1
        %v7899 = vrot.slane %v7513, 1
        %v7900 = vrot.slane %v7514, 1
        %v7901 = vrot.slane %v7515, 1
        %v7902 = vrot.slane %v7516, 1
        %v7903 = vrot.slane %v7517, 1
        %v7904 = vsel %vm1072, %v7902, %v7903
        %v7905 = vsel %vm1072, %v7901, %v7902
        %v7906 = vsel %vm1072, %v7900, %v7901
        %v7907 = vsel %vm1072, %v7899, %v7900
        %v7908 = vsel %vm1072, %v7898, %v7899
        %v7909 = vsel %vm1072, %v7897, %v7898
        %v7910 = vsel %vm1072, %v7896, %v7897
        %v7911 = vsel %vm1072, %v7895, %v7896
        %v7912 = vsel %vm1072, %v7894, %v7895
        %v7913 = vsel %vm1072, %v7893, %v7894
        %v7914 = vsel %vm1072, %v7892, %v7893
        %v7915 = vsel %vm1072, %v7891, %v7892
        %v7916 = vsel %vm1072, %v7890, %v7891
        %v7917 = vsel %vm1072, %v7889, %v7890
        %v7918 = vsel %vm1072, %v7888, %v7889
        %v7919 = vsel %vm1072, %v7903, %v7888
        %v7920 = vmul.f32 %v7918, %v452
        %v7921 = vmul.f32 %v7917, %v453
        %v7922 = vmul.f32 %v7916, %v454
        %v7923 = vmul.f32 %v7915, %v455
        %v7924 = vmul.f32 %v7914, %v456
        %v7925 = vmul.f32 %v7913, %v457
        %v7926 = vmul.f32 %v7912, %v458
        %v7927 = vmul.f32 %v7911, %v459
        %v7928 = vmul.f32 %v7910, %v460
        %v7929 = vmul.f32 %v7909, %v461
        %v7930 = vmul.f32 %v7908, %v462
        %v7931 = vmul.f32 %v7907, %v463
        %v7932 = vmul.f32 %v7906, %v464
        %v7933 = vmul.f32 %v7905, %v465
        %v7934 = vmul.f32 %v7904, %v466
        %v7935 = vmul.f32 %v7919, %v467
        %v7936 = vld [vmem:[%s5930] sm:$0xff]
        %v7937 = vld [vmem:[%s5930 + $0x8] sm:$0xff]
        %v7938 = vld [vmem:[%s5930 + $0x10] sm:$0xff]
        %v7939 = vld [vmem:[%s5930 + $0x18] sm:$0xff]
        %v7940 = vld [vmem:[%s5930 + $0x20] sm:$0xff]
        %v7941 = vld [vmem:[%s5930 + $0x28] sm:$0xff]
        %v7942 = vld [vmem:[%s5930 + $0x30] sm:$0xff]
        %v7943 = vld [vmem:[%s5930 + $0x38] sm:$0xff]
        %v7944 = vld [vmem:[%s5930 + $0x40] sm:$0xff]
        %v7945 = vld [vmem:[%s5930 + $0x48] sm:$0xff]
        %v7946 = vld [vmem:[%s5930 + $0x50] sm:$0xff]
        %v7947 = vld [vmem:[%s5930 + $0x58] sm:$0xff]
        %v7948 = vld [vmem:[%s5930 + $0x60] sm:$0xff]
        %v7949 = vld [vmem:[%s5930 + $0x68] sm:$0xff]
        %v7950 = vld [vmem:[%s5930 + $0x70] sm:$0xff]
        %v7951 = vld [vmem:[%s5930 + $0x78] sm:$0xff]
        %7952 = vmatprep.subr.mxu0 0.0
        %7953 = vmatpush1.msra.mxu0 %v7936
        %7954 = vmatprep.subr.mxu0 0.0
        %7955 = vmatpush1.msra.mxu0 %v7937
        %7956 = vmatprep.subr.mxu0 0.0
        %7957 = vmatpush1.msra.mxu0 %v7938
        %7958 = vmatprep.subr.mxu0 0.0
        %7959 = vmatpush1.msra.mxu0 %v7939
        %7960 = vmatprep.subr.mxu0 0.0
        %7961 = vmatpush1.msra.mxu0 %v7940
        %7962 = vmatprep.subr.mxu0 0.0
        %7963 = vmatpush1.msra.mxu0 %v7941
        %7964 = vmatprep.subr.mxu0 0.0
        %7965 = vmatpush1.msra.mxu0 %v7942
        %7966 = vmatprep.subr.mxu0 0.0
        %7967 = vmatpush1.msra.mxu0 %v7943
        %7968 = vmatprep.subr.mxu0 0.0
        %7969 = vmatpush1.msra.mxu0 %v7944
        %7970 = vmatprep.subr.mxu0 0.0
        %7971 = vmatpush1.msra.mxu0 %v7945
        %7972 = vmatprep.subr.mxu0 0.0
        %7973 = vmatpush1.msra.mxu0 %v7946
        %7974 = vmatprep.subr.mxu0 0.0
        %7975 = vmatpush1.msra.mxu0 %v7947
        %7976 = vmatprep.subr.mxu0 0.0
        %7977 = vmatpush1.msra.mxu0 %v7948
        %7978 = vmatprep.subr.mxu0 0.0
        %7979 = vmatpush1.msra.mxu0 %v7949
        %7980 = vmatprep.subr.mxu0 0.0
        %7981 = vmatpush1.msra.mxu0 %v7950
        %7982 = vmatprep.subr.mxu0 0.0
        %7983 = vmatpush1.msra.mxu0 %v7951
        %7984 = vmatprep.subr.mxu0 0.0
        %7985 = vmatpush1.msra.mxu0 0.0
        %7986 = vmatprep.subr.mxu0 0.0
        %7987 = vmatpush1.msra.mxu0 0.0
        %7988 = vmatprep.subr.mxu0 0.0
        %7989 = vmatpush1.msra.mxu0 0.0
        %7990 = vmatprep.subr.mxu0 0.0
        %7991 = vmatpush1.msra.mxu0 0.0
        %7992 = vmatprep.subr.mxu0 0.0
        %7993 = vmatpush1.msra.mxu0 0.0
        %7994 = vmatprep.subr.mxu0 0.0
        %7995 = vmatpush1.msra.mxu0 0.0
        %7996 = vmatprep.subr.mxu0 0.0
        %7997 = vmatpush1.msra.mxu0 0.0
        %7998 = vmatprep.subr.mxu0 0.0
        %7999 = vmatpush1.msra.mxu0 0.0
        %8000 = vmatprep.subr.mxu0 0.0
        %8001 = vmatpush1.msra.mxu0 0.0
        %8002 = vmatprep.subr.mxu0 0.0
        %8003 = vmatpush1.msra.mxu0 0.0
        %8004 = vmatprep.subr.mxu0 0.0
        %8005 = vmatpush1.msra.mxu0 0.0
        %8006 = vmatprep.subr.mxu0 0.0
        %8007 = vmatpush1.msra.mxu0 0.0
        %8008 = vmatprep.subr.mxu0 0.0
        %8009 = vmatpush1.msra.mxu0 0.0
        %8010 = vmatprep.subr.mxu0 0.0
        %8011 = vmatpush1.msra.mxu0 0.0
        %8012 = vmatprep.subr.mxu0 0.0
        %8013 = vmatpush1.msra.mxu0 0.0
        %8014 = vmatprep.subr.mxu0 0.0
        %8015 = vmatpush1.msra.mxu0 0.0
        %8016 = vmatprep.mubr.f32.mxu0 0.0
        %8017 = vmatmul.mubr.f32.gmra.mrb[0].mxu0 %v7920
        %v8018 = vpop.f32.mrb[0].mxu0
        %v8019 = vadd.f32 0.0, %v8018
        %v8020 = vpop.f32.mrb[0].mxu0
        %8021 = vmatprep.mubr.f32.mxu0 0.0
        %8022 = vmatmul.mubr.f32.gmra.mrb[0].mxu0 %v7921
        %v8023 = vpop.f32.mrb[0].mxu0
        %v8024 = vadd.f32 0.0, %v8023
        %v8025 = vpop.f32.mrb[0].mxu0
        %8026 = vmatprep.mubr.f32.mxu0 0.0
        %8027 = vmatmul.mubr.f32.gmra.mrb[0].mxu0 %v7922
        %v8028 = vpop.f32.mrb[0].mxu0
        %v8029 = vadd.f32 0.0, %v8028
        %v8030 = vpop.f32.mrb[0].mxu0
        %8031 = vmatprep.mubr.f32.mxu0 0.0
        %8032 = vmatmul.mubr.f32.gmra.mrb[0].mxu0 %v7923
        %v8033 = vpop.f32.mrb[0].mxu0
        %v8034 = vadd.f32 0.0, %v8033
        %v8035 = vpop.f32.mrb[0].mxu0
        %8036 = vmatprep.mubr.f32.mxu0 0.0
        %8037 = vmatmul.mubr.f32.gmra.mrb[0].mxu0 %v7924
        %v8038 = vpop.f32.mrb[0].mxu0
        %v8039 = vadd.f32 0.0, %v8038
        %v8040 = vpop.f32.mrb[0].mxu0
        %8041 = vmatprep.mubr.f32.mxu0 0.0
        %8042 = vmatmul.mubr.f32.gmra.mrb[0].mxu0 %v7925
        %v8043 = vpop.f32.mrb[0].mxu0
        %v8044 = vadd.f32 0.0, %v8043
        %v8045 = vpop.f32.mrb[0].mxu0
        %8046 = vmatprep.mubr.f32.mxu0 0.0
        %8047 = vmatmul.mubr.f32.gmra.mrb[0].mxu0 %v7926
        %v8048 = vpop.f32.mrb[0].mxu0
        %v8049 = vadd.f32 0.0, %v8048
        %v8050 = vpop.f32.mrb[0].mxu0
        %8051 = vmatprep.mubr.f32.mxu0 0.0
        %8052 = vmatmul.mubr.f32.gmra.mrb[0].mxu0 %v7927
        %v8053 = vpop.f32.mrb[0].mxu0
        %v8054 = vadd.f32 0.0, %v8053
        %v8055 = vpop.f32.mrb[0].mxu0
        %8056 = vmatprep.mubr.f32.mxu0 0.0
        %8057 = vmatmul.mubr.f32.gmra.mrb[0].mxu0 %v7928
        %v8058 = vpop.f32.mrb[0].mxu0
        %v8059 = vadd.f32 0.0, %v8058
        %v8060 = vpop.f32.mrb[0].mxu0
        %8061 = vmatprep.mubr.f32.mxu0 0.0
        %8062 = vmatmul.mubr.f32.gmra.mrb[0].mxu0 %v7929
        %v8063 = vpop.f32.mrb[0].mxu0
        %v8064 = vadd.f32 0.0, %v8063
        %v8065 = vpop.f32.mrb[0].mxu0
        %8066 = vmatprep.mubr.f32.mxu0 0.0
        %8067 = vmatmul.mubr.f32.gmra.mrb[0].mxu0 %v7930
        %v8068 = vpop.f32.mrb[0].mxu0
        %v8069 = vadd.f32 0.0, %v8068
        %v8070 = vpop.f32.mrb[0].mxu0
        %8071 = vmatprep.mubr.f32.mxu0 0.0
        %8072 = vmatmul.mubr.f32.gmra.mrb[0].mxu0 %v7931
        %v8073 = vpop.f32.mrb[0].mxu0
        %v8074 = vadd.f32 0.0, %v8073
        %v8075 = vpop.f32.mrb[0].mxu0
        %8076 = vmatprep.mubr.f32.mxu0 0.0
        %8077 = vmatmul.mubr.f32.gmra.mrb[0].mxu0 %v7932
        %v8078 = vpop.f32.mrb[0].mxu0
        %v8079 = vadd.f32 0.0, %v8078
        %v8080 = vpop.f32.mrb[0].mxu0
        %8081 = vmatprep.mubr.f32.mxu0 0.0
        %8082 = vmatmul.mubr.f32.gmra.mrb[0].mxu0 %v7933
        %v8083 = vpop.f32.mrb[0].mxu0
        %v8084 = vadd.f32 0.0, %v8083
        %v8085 = vpop.f32.mrb[0].mxu0
        %8086 = vmatprep.mubr.f32.mxu0 0.0
        %8087 = vmatmul.mubr.f32.gmra.mrb[0].mxu0 %v7934
        %v8088 = vpop.f32.mrb[0].mxu0
        %v8089 = vadd.f32 0.0, %v8088
        %v8090 = vpop.f32.mrb[0].mxu0
        %8091 = vmatprep.mubr.f32.mxu0 0.0
        %8092 = vmatmul.mubr.f32.gmra.mrb[0].mxu0 %v7935
        %v8093 = vpop.f32.mrb[0].mxu0
        %v8094 = vadd.f32 0.0, %v8093
        %v8095 = vpop.f32.mrb[0].mxu0
        %8096 = vdwg.mxu0
        %v8097 = vadd.f32 %v7810, %v8019
        %v8098 = vadd.f32 %v7815, %v8024
        %v8099 = vadd.f32 %v7820, %v8029
        %v8100 = vadd.f32 %v7825, %v8034
        %v8101 = vadd.f32 %v7830, %v8039
        %v8102 = vadd.f32 %v7835, %v8044
        %v8103 = vadd.f32 %v7840, %v8049
        %v8104 = vadd.f32 %v7845, %v8054
        %v8105 = vadd.f32 %v7850, %v8059
        %v8106 = vadd.f32 %v7855, %v8064
        %v8107 = vadd.f32 %v7860, %v8069
        %v8108 = vadd.f32 %v7865, %v8074
        %v8109 = vadd.f32 %v7870, %v8079
        %v8110 = vadd.f32 %v7875, %v8084
        %v8111 = vadd.f32 %v7880, %v8089
        %v8112 = vadd.f32 %v7885, %v8094
        %v8113 = vld [vmem:[#allocation3 + $0x90] sm:$0xff]
        %v8114 = vld [vmem:[#allocation3 + $0x98] sm:$0xff]
        %v8115 = vld [vmem:[#allocation3 + $0xa0] sm:$0xff]
        %v8116 = vld [vmem:[#allocation3 + $0xa8] sm:$0xff]
        %v8117 = vld [vmem:[#allocation3 + $0xb0] sm:$0xff]
        %v8118 = vld [vmem:[#allocation3 + $0xb8] sm:$0xff]
        %v8119 = vld [vmem:[#allocation3 + $0xc0] sm:$0xff]
        %v8120 = vld [vmem:[#allocation3 + $0xc8] sm:$0xff]
        %v8121 = vld [vmem:[#allocation3 + $0xd0] sm:$0xff]
        %v8122 = vld [vmem:[#allocation3 + $0xd8] sm:$0xff]
        %v8123 = vld [vmem:[#allocation3 + $0xe0] sm:$0xff]
        %v8124 = vld [vmem:[#allocation3 + $0xe8] sm:$0xff]
        %v8125 = vld [vmem:[#allocation3 + $0xf0] sm:$0xff]
        %v8126 = vld [vmem:[#allocation3 + $0xf8] sm:$0xff]
        %v8127 = vld [vmem:[#allocation3 + $0x100] sm:$0xff]
        %v8128 = vld [vmem:[#allocation3 + $0x108] sm:$0xff]
        %v8129 = vrot.slane %v8113, 7
        %v8130 = vrot.slane %v8114, 7
        %v8131 = vrot.slane %v8115, 7
        %v8132 = vrot.slane %v8116, 7
        %v8133 = vrot.slane %v8117, 7
        %v8134 = vrot.slane %v8118, 7
        %v8135 = vrot.slane %v8119, 7
        %v8136 = vrot.slane %v8120, 7
        %v8137 = vrot.slane %v8121, 7
        %v8138 = vrot.slane %v8122, 7
        %v8139 = vrot.slane %v8123, 7
        %v8140 = vrot.slane %v8124, 7
        %v8141 = vrot.slane %v8125, 7
        %v8142 = vrot.slane %v8126, 7
        %v8143 = vrot.slane %v8127, 7
        %v8144 = vrot.slane %v8128, 7
        %v8145 = vsel %vm627, %v8143, %v8144
        %v8146 = vsel %vm627, %v8142, %v8143
        %v8147 = vsel %vm627, %v8141, %v8142
        %v8148 = vsel %vm627, %v8140, %v8141
        %v8149 = vsel %vm627, %v8139, %v8140
        %v8150 = vsel %vm627, %v8138, %v8139
        %v8151 = vsel %vm627, %v8137, %v8138
        %v8152 = vsel %vm627, %v8136, %v8137
        %v8153 = vsel %vm627, %v8135, %v8136
        %v8154 = vsel %vm627, %v8134, %v8135
        %v8155 = vsel %vm627, %v8133, %v8134
        %v8156 = vsel %vm627, %v8132, %v8133
        %v8157 = vsel %vm627, %v8131, %v8132
        %v8158 = vsel %vm627, %v8130, %v8131
        %v8159 = vsel %vm627, %v8129, %v8130
        %v8160 = vsel %vm627, %v8144, %v8129
        %v8161 = vmul.f32 %v8160, %v500
        %v8162 = vmul.f32 %v8159, %v501
        %v8163 = vmul.f32 %v8158, %v502
        %v8164 = vmul.f32 %v8157, %v503
        %v8165 = vmul.f32 %v8156, %v504
        %v8166 = vmul.f32 %v8155, %v505
        %v8167 = vmul.f32 %v8154, %v506
        %v8168 = vmul.f32 %v8153, %v507
        %v8169 = vmul.f32 %v8152, %v508
        %v8170 = vmul.f32 %v8151, %v509
        %v8171 = vmul.f32 %v8150, %v510
        %v8172 = vmul.f32 %v8149, %v511
        %v8173 = vmul.f32 %v8148, %v512
        %v8174 = vmul.f32 %v8147, %v513
        %v8175 = vmul.f32 %v8146, %v514
        %v8176 = vmul.f32 %v8145, %v515
        %v8177 = vld [vmem:[%s6172] sm:$0xff]
        %v8178 = vld [vmem:[%s6172 + $0x8] sm:$0xff]
        %v8179 = vld [vmem:[%s6172 + $0x10] sm:$0xff]
        %v8180 = vld [vmem:[%s6172 + $0x18] sm:$0xff]
        %v8181 = vld [vmem:[%s6172 + $0x20] sm:$0xff]
        %v8182 = vld [vmem:[%s6172 + $0x28] sm:$0xff]
        %v8183 = vld [vmem:[%s6172 + $0x30] sm:$0xff]
        %v8184 = vld [vmem:[%s6172 + $0x38] sm:$0xff]
        %v8185 = vld [vmem:[%s6172 + $0x40] sm:$0xff]
        %v8186 = vld [vmem:[%s6172 + $0x48] sm:$0xff]
        %v8187 = vld [vmem:[%s6172 + $0x50] sm:$0xff]
        %v8188 = vld [vmem:[%s6172 + $0x58] sm:$0xff]
        %v8189 = vld [vmem:[%s6172 + $0x60] sm:$0xff]
        %v8190 = vld [vmem:[%s6172 + $0x68] sm:$0xff]
        %v8191 = vld [vmem:[%s6172 + $0x70] sm:$0xff]
        %v8192 = vld [vmem:[%s6172 + $0x78] sm:$0xff]
        %8193 = vmatprep.subr.mxu0 0.0
        %8194 = vmatpush1.msra.mxu0 %v8177
        %8195 = vmatprep.subr.mxu0 0.0
        %8196 = vmatpush1.msra.mxu0 %v8178
        %8197 = vmatprep.subr.mxu0 0.0
        %8198 = vmatpush1.msra.mxu0 %v8179
        %8199 = vmatprep.subr.mxu0 0.0
        %8200 = vmatpush1.msra.mxu0 %v8180
        %8201 = vmatprep.subr.mxu0 0.0
        %8202 = vmatpush1.msra.mxu0 %v8181
        %8203 = vmatprep.subr.mxu0 0.0
        %8204 = vmatpush1.msra.mxu0 %v8182
        %8205 = vmatprep.subr.mxu0 0.0
        %8206 = vmatpush1.msra.mxu0 %v8183
        %8207 = vmatprep.subr.mxu0 0.0
        %8208 = vmatpush1.msra.mxu0 %v8184
        %8209 = vmatprep.subr.mxu0 0.0
        %8210 = vmatpush1.msra.mxu0 %v8185
        %8211 = vmatprep.subr.mxu0 0.0
        %8212 = vmatpush1.msra.mxu0 %v8186
        %8213 = vmatprep.subr.mxu0 0.0
        %8214 = vmatpush1.msra.mxu0 %v8187
        %8215 = vmatprep.subr.mxu0 0.0
        %8216 = vmatpush1.msra.mxu0 %v8188
        %8217 = vmatprep.subr.mxu0 0.0
        %8218 = vmatpush1.msra.mxu0 %v8189
        %8219 = vmatprep.subr.mxu0 0.0
        %8220 = vmatpush1.msra.mxu0 %v8190
        %8221 = vmatprep.subr.mxu0 0.0
        %8222 = vmatpush1.msra.mxu0 %v8191
        %8223 = vmatprep.subr.mxu0 0.0
        %8224 = vmatpush1.msra.mxu0 %v8192
        %8225 = vmatprep.subr.mxu0 0.0
        %8226 = vmatpush1.msra.mxu0 0.0
        %8227 = vmatprep.subr.mxu0 0.0
        %8228 = vmatpush1.msra.mxu0 0.0
        %8229 = vmatprep.subr.mxu0 0.0
        %8230 = vmatpush1.msra.mxu0 0.0
        %8231 = vmatprep.subr.mxu0 0.0
        %8232 = vmatpush1.msra.mxu0 0.0
        %8233 = vmatprep.subr.mxu0 0.0
        %8234 = vmatpush1.msra.mxu0 0.0
        %8235 = vmatprep.subr.mxu0 0.0
        %8236 = vmatpush1.msra.mxu0 0.0
        %8237 = vmatprep.subr.mxu0 0.0
        %8238 = vmatpush1.msra.mxu0 0.0
        %8239 = vmatprep.subr.mxu0 0.0
        %8240 = vmatpush1.msra.mxu0 0.0
        %8241 = vmatprep.subr.mxu0 0.0
        %8242 = vmatpush1.msra.mxu0 0.0
        %8243 = vmatprep.subr.mxu0 0.0
        %8244 = vmatpush1.msra.mxu0 0.0
        %8245 = vmatprep.subr.mxu0 0.0
        %8246 = vmatpush1.msra.mxu0 0.0
        %8247 = vmatprep.subr.mxu0 0.0
        %8248 = vmatpush1.msra.mxu0 0.0
        %8249 = vmatprep.subr.mxu0 0.0
        %8250 = vmatpush1.msra.mxu0 0.0
        %8251 = vmatprep.subr.mxu0 0.0
        %8252 = vmatpush1.msra.mxu0 0.0
        %8253 = vmatprep.subr.mxu0 0.0
        %8254 = vmatpush1.msra.mxu0 0.0
        %8255 = vmatprep.subr.mxu0 0.0
        %8256 = vmatpush1.msra.mxu0 0.0
        %8257 = vmatprep.mubr.f32.mxu0 0.0
        %8258 = vmatmul.mubr.f32.gmra.mrb[0].mxu0 %v8161
        %v8259 = vpop.f32.mrb[0].mxu0
        %v8260 = vadd.f32 0.0, %v8259
        %v8261 = vpop.f32.mrb[0].mxu0
        %8262 = vmatprep.mubr.f32.mxu0 0.0
        %8263 = vmatmul.mubr.f32.gmra.mrb[0].mxu0 %v8162
        %v8264 = vpop.f32.mrb[0].mxu0
        %v8265 = vadd.f32 0.0, %v8264
        %v8266 = vpop.f32.mrb[0].mxu0
        %8267 = vmatprep.mubr.f32.mxu0 0.0
        %8268 = vmatmul.mubr.f32.gmra.mrb[0].mxu0 %v8163
        %v8269 = vpop.f32.mrb[0].mxu0
        %v8270 = vadd.f32 0.0, %v8269
        %v8271 = vpop.f32.mrb[0].mxu0
        %8272 = vmatprep.mubr.f32.mxu0 0.0
        %8273 = vmatmul.mubr.f32.gmra.mrb[0].mxu0 %v8164
        %v8274 = vpop.f32.mrb[0].mxu0
        %v8275 = vadd.f32 0.0, %v8274
        %v8276 = vpop.f32.mrb[0].mxu0
        %8277 = vmatprep.mubr.f32.mxu0 0.0
        %8278 = vmatmul.mubr.f32.gmra.mrb[0].mxu0 %v8165
        %v8279 = vpop.f32.mrb[0].mxu0
        %v8280 = vadd.f32 0.0, %v8279
        %v8281 = vpop.f32.mrb[0].mxu0
        %8282 = vmatprep.mubr.f32.mxu0 0.0
        %8283 = vmatmul.mubr.f32.gmra.mrb[0].mxu0 %v8166
        %v8284 = vpop.f32.mrb[0].mxu0
        %v8285 = vadd.f32 0.0, %v8284
        %v8286 = vpop.f32.mrb[0].mxu0
        %8287 = vmatprep.mubr.f32.mxu0 0.0
        %8288 = vmatmul.mubr.f32.gmra.mrb[0].mxu0 %v8167
        %v8289 = vpop.f32.mrb[0].mxu0
        %v8290 = vadd.f32 0.0, %v8289
        %v8291 = vpop.f32.mrb[0].mxu0
        %8292 = vmatprep.mubr.f32.mxu0 0.0
        %8293 = vmatmul.mubr.f32.gmra.mrb[0].mxu0 %v8168
        %v8294 = vpop.f32.mrb[0].mxu0
        %v8295 = vadd.f32 0.0, %v8294
        %v8296 = vpop.f32.mrb[0].mxu0
        %8297 = vmatprep.mubr.f32.mxu0 0.0
        %8298 = vmatmul.mubr.f32.gmra.mrb[0].mxu0 %v8169
        %v8299 = vpop.f32.mrb[0].mxu0
        %v8300 = vadd.f32 0.0, %v8299
        %v8301 = vpop.f32.mrb[0].mxu0
        %8302 = vmatprep.mubr.f32.mxu0 0.0
        %8303 = vmatmul.mubr.f32.gmra.mrb[0].mxu0 %v8170
        %v8304 = vpop.f32.mrb[0].mxu0
        %v8305 = vadd.f32 0.0, %v8304
        %v8306 = vpop.f32.mrb[0].mxu0
        %8307 = vmatprep.mubr.f32.mxu0 0.0
        %8308 = vmatmul.mubr.f32.gmra.mrb[0].mxu0 %v8171
        %v8309 = vpop.f32.mrb[0].mxu0
        %v8310 = vadd.f32 0.0, %v8309
        %v8311 = vpop.f32.mrb[0].mxu0
        %8312 = vmatprep.mubr.f32.mxu0 0.0
        %8313 = vmatmul.mubr.f32.gmra.mrb[0].mxu0 %v8172
        %v8314 = vpop.f32.mrb[0].mxu0
        %v8315 = vadd.f32 0.0, %v8314
        %v8316 = vpop.f32.mrb[0].mxu0
        %8317 = vmatprep.mubr.f32.mxu0 0.0
        %8318 = vmatmul.mubr.f32.gmra.mrb[0].mxu0 %v8173
        %v8319 = vpop.f32.mrb[0].mxu0
        %v8320 = vadd.f32 0.0, %v8319
        %v8321 = vpop.f32.mrb[0].mxu0
        %8322 = vmatprep.mubr.f32.mxu0 0.0
        %8323 = vmatmul.mubr.f32.gmra.mrb[0].mxu0 %v8174
        %v8324 = vpop.f32.mrb[0].mxu0
        %v8325 = vadd.f32 0.0, %v8324
        %v8326 = vpop.f32.mrb[0].mxu0
        %8327 = vmatprep.mubr.f32.mxu0 0.0
        %8328 = vmatmul.mubr.f32.gmra.mrb[0].mxu0 %v8175
        %v8329 = vpop.f32.mrb[0].mxu0
        %v8330 = vadd.f32 0.0, %v8329
        %v8331 = vpop.f32.mrb[0].mxu0
        %8332 = vmatprep.mubr.f32.mxu0 0.0
        %8333 = vmatmul.mubr.f32.gmra.mrb[0].mxu0 %v8176
        %v8334 = vpop.f32.mrb[0].mxu0
        %v8335 = vadd.f32 0.0, %v8334
        %v8336 = vpop.f32.mrb[0].mxu0
        %8337 = vdwg.mxu0
        %v8338 = vadd.f32 %v8097, %v8260
        %v8339 = vadd.f32 %v8098, %v8265
        %v8340 = vadd.f32 %v8099, %v8270
        %v8341 = vadd.f32 %v8100, %v8275
        %v8342 = vadd.f32 %v8101, %v8280
        %v8343 = vadd.f32 %v8102, %v8285
        %v8344 = vadd.f32 %v8103, %v8290
        %v8345 = vadd.f32 %v8104, %v8295
        %v8346 = vadd.f32 %v8105, %v8300
        %v8347 = vadd.f32 %v8106, %v8305
        %v8348 = vadd.f32 %v8107, %v8310
        %v8349 = vadd.f32 %v8108, %v8315
        %v8350 = vadd.f32 %v8109, %v8320
        %v8351 = vadd.f32 %v8110, %v8325
        %v8352 = vadd.f32 %v8111, %v8330
        %v8353 = vadd.f32 %v8112, %v8335
        %v8354 = vld [vmem:[%s6350] sm:$0xff]
        %v8355 = vld [vmem:[%s6350 + $0x8] sm:$0xff]
        %v8356 = vld [vmem:[%s6350 + $0x10] sm:$0xff]
        %v8357 = vld [vmem:[%s6350 + $0x18] sm:$0xff]
        %v8358 = vld [vmem:[%s6350 + $0x20] sm:$0xff]
        %v8359 = vld [vmem:[%s6350 + $0x28] sm:$0xff]
        %v8360 = vld [vmem:[%s6350 + $0x30] sm:$0xff]
        %v8361 = vld [vmem:[%s6350 + $0x38] sm:$0xff]
        %v8362 = vld [vmem:[%s6350 + $0x40] sm:$0xff]
        %v8363 = vld [vmem:[%s6350 + $0x48] sm:$0xff]
        %v8364 = vld [vmem:[%s6350 + $0x50] sm:$0xff]
        %v8365 = vld [vmem:[%s6350 + $0x58] sm:$0xff]
        %v8366 = vld [vmem:[%s6350 + $0x60] sm:$0xff]
        %v8367 = vld [vmem:[%s6350 + $0x68] sm:$0xff]
        %v8368 = vld [vmem:[%s6350 + $0x70] sm:$0xff]
        %v8369 = vld [vmem:[%s6350 + $0x78] sm:$0xff]
        %8370 = vmatprep.subr.mxu0 0.0
        %8371 = vmatpush1.msra.mxu0 %v8354
        %8372 = vmatprep.subr.mxu0 0.0
        %8373 = vmatpush1.msra.mxu0 %v8355
        %8374 = vmatprep.subr.mxu0 0.0
        %8375 = vmatpush1.msra.mxu0 %v8356
        %8376 = vmatprep.subr.mxu0 0.0
        %8377 = vmatpush1.msra.mxu0 %v8357
        %8378 = vmatprep.subr.mxu0 0.0
        %8379 = vmatpush1.msra.mxu0 %v8358
        %8380 = vmatprep.subr.mxu0 0.0
        %8381 = vmatpush1.msra.mxu0 %v8359
        %8382 = vmatprep.subr.mxu0 0.0
        %8383 = vmatpush1.msra.mxu0 %v8360
        %8384 = vmatprep.subr.mxu0 0.0
        %8385 = vmatpush1.msra.mxu0 %v8361
        %8386 = vmatprep.subr.mxu0 0.0
        %8387 = vmatpush1.msra.mxu0 %v8362
        %8388 = vmatprep.subr.mxu0 0.0
        %8389 = vmatpush1.msra.mxu0 %v8363
        %8390 = vmatprep.subr.mxu0 0.0
        %8391 = vmatpush1.msra.mxu0 %v8364
        %8392 = vmatprep.subr.mxu0 0.0
        %8393 = vmatpush1.msra.mxu0 %v8365
        %8394 = vmatprep.subr.mxu0 0.0
        %8395 = vmatpush1.msra.mxu0 %v8366
        %8396 = vmatprep.subr.mxu0 0.0
        %8397 = vmatpush1.msra.mxu0 %v8367
        %8398 = vmatprep.subr.mxu0 0.0
        %8399 = vmatpush1.msra.mxu0 %v8368
        %8400 = vmatprep.subr.mxu0 0.0
        %8401 = vmatpush1.msra.mxu0 %v8369
        %8402 = vmatprep.subr.mxu0 0.0
        %8403 = vmatpush1.msra.mxu0 0.0
        %8404 = vmatprep.subr.mxu0 0.0
        %8405 = vmatpush1.msra.mxu0 0.0
        %8406 = vmatprep.subr.mxu0 0.0
        %8407 = vmatpush1.msra.mxu0 0.0
        %8408 = vmatprep.subr.mxu0 0.0
        %8409 = vmatpush1.msra.mxu0 0.0
        %8410 = vmatprep.subr.mxu0 0.0
        %8411 = vmatpush1.msra.mxu0 0.0
        %8412 = vmatprep.subr.mxu0 0.0
        %8413 = vmatpush1.msra.mxu0 0.0
        %8414 = vmatprep.subr.mxu0 0.0
        %8415 = vmatpush1.msra.mxu0 0.0
        %8416 = vmatprep.subr.mxu0 0.0
        %8417 = vmatpush1.msra.mxu0 0.0
        %8418 = vmatprep.subr.mxu0 0.0
        %8419 = vmatpush1.msra.mxu0 0.0
        %8420 = vmatprep.subr.mxu0 0.0
        %8421 = vmatpush1.msra.mxu0 0.0
        %8422 = vmatprep.subr.mxu0 0.0
        %8423 = vmatpush1.msra.mxu0 0.0
        %8424 = vmatprep.subr.mxu0 0.0
        %8425 = vmatpush1.msra.mxu0 0.0
        %8426 = vmatprep.subr.mxu0 0.0
        %8427 = vmatpush1.msra.mxu0 0.0
        %8428 = vmatprep.subr.mxu0 0.0
        %8429 = vmatpush1.msra.mxu0 0.0
        %8430 = vmatprep.subr.mxu0 0.0
        %8431 = vmatpush1.msra.mxu0 0.0
        %8432 = vmatprep.subr.mxu0 0.0
        %8433 = vmatpush1.msra.mxu0 0.0
        %8434 = vmatprep.mubr.f32.mxu0 0.0
        %8435 = vmatmul.mubr.f32.gmra.mrb[0].mxu0 %v8113
        %v8436 = vpop.f32.mrb[0].mxu0
        %v8437 = vadd.f32 0.0, %v8436
        %v8438 = vpop.f32.mrb[0].mxu0
        %8439 = vmatprep.mubr.f32.mxu0 0.0
        %8440 = vmatmul.mubr.f32.gmra.mrb[0].mxu0 %v8114
        %v8441 = vpop.f32.mrb[0].mxu0
        %v8442 = vadd.f32 0.0, %v8441
        %v8443 = vpop.f32.mrb[0].mxu0
        %8444 = vmatprep.mubr.f32.mxu0 0.0
        %8445 = vmatmul.mubr.f32.gmra.mrb[0].mxu0 %v8115
        %v8446 = vpop.f32.mrb[0].mxu0
        %v8447 = vadd.f32 0.0, %v8446
        %v8448 = vpop.f32.mrb[0].mxu0
        %8449 = vmatprep.mubr.f32.mxu0 0.0
        %8450 = vmatmul.mubr.f32.gmra.mrb[0].mxu0 %v8116
        %v8451 = vpop.f32.mrb[0].mxu0
        %v8452 = vadd.f32 0.0, %v8451
        %v8453 = vpop.f32.mrb[0].mxu0
        %8454 = vmatprep.mubr.f32.mxu0 0.0
        %8455 = vmatmul.mubr.f32.gmra.mrb[0].mxu0 %v8117
        %v8456 = vpop.f32.mrb[0].mxu0
        %v8457 = vadd.f32 0.0, %v8456
        %v8458 = vpop.f32.mrb[0].mxu0
        %8459 = vmatprep.mubr.f32.mxu0 0.0
        %8460 = vmatmul.mubr.f32.gmra.mrb[0].mxu0 %v8118
        %v8461 = vpop.f32.mrb[0].mxu0
        %v8462 = vadd.f32 0.0, %v8461
        %v8463 = vpop.f32.mrb[0].mxu0
        %8464 = vmatprep.mubr.f32.mxu0 0.0
        %8465 = vmatmul.mubr.f32.gmra.mrb[0].mxu0 %v8119
        %v8466 = vpop.f32.mrb[0].mxu0
        %v8467 = vadd.f32 0.0, %v8466
        %v8468 = vpop.f32.mrb[0].mxu0
        %8469 = vmatprep.mubr.f32.mxu0 0.0
        %8470 = vmatmul.mubr.f32.gmra.mrb[0].mxu0 %v8120
        %v8471 = vpop.f32.mrb[0].mxu0
        %v8472 = vadd.f32 0.0, %v8471
        %v8473 = vpop.f32.mrb[0].mxu0
        %8474 = vmatprep.mubr.f32.mxu0 0.0
        %8475 = vmatmul.mubr.f32.gmra.mrb[0].mxu0 %v8121
        %v8476 = vpop.f32.mrb[0].mxu0
        %v8477 = vadd.f32 0.0, %v8476
        %v8478 = vpop.f32.mrb[0].mxu0
        %8479 = vmatprep.mubr.f32.mxu0 0.0
        %8480 = vmatmul.mubr.f32.gmra.mrb[0].mxu0 %v8122
        %v8481 = vpop.f32.mrb[0].mxu0
        %v8482 = vadd.f32 0.0, %v8481
        %v8483 = vpop.f32.mrb[0].mxu0
        %8484 = vmatprep.mubr.f32.mxu0 0.0
        %8485 = vmatmul.mubr.f32.gmra.mrb[0].mxu0 %v8123
        %v8486 = vpop.f32.mrb[0].mxu0
        %v8487 = vadd.f32 0.0, %v8486
        %v8488 = vpop.f32.mrb[0].mxu0
        %8489 = vmatprep.mubr.f32.mxu0 0.0
        %8490 = vmatmul.mubr.f32.gmra.mrb[0].mxu0 %v8124
        %v8491 = vpop.f32.mrb[0].mxu0
        %v8492 = vadd.f32 0.0, %v8491
        %v8493 = vpop.f32.mrb[0].mxu0
        %8494 = vmatprep.mubr.f32.mxu0 0.0
        %8495 = vmatmul.mubr.f32.gmra.mrb[0].mxu0 %v8125
        %v8496 = vpop.f32.mrb[0].mxu0
        %v8497 = vadd.f32 0.0, %v8496
        %v8498 = vpop.f32.mrb[0].mxu0
        %8499 = vmatprep.mubr.f32.mxu0 0.0
        %8500 = vmatmul.mubr.f32.gmra.mrb[0].mxu0 %v8126
        %v8501 = vpop.f32.mrb[0].mxu0
        %v8502 = vadd.f32 0.0, %v8501
        %v8503 = vpop.f32.mrb[0].mxu0
        %8504 = vmatprep.mubr.f32.mxu0 0.0
        %8505 = vmatmul.mubr.f32.gmra.mrb[0].mxu0 %v8127
        %v8506 = vpop.f32.mrb[0].mxu0
        %v8507 = vadd.f32 0.0, %v8506
        %v8508 = vpop.f32.mrb[0].mxu0
        %8509 = vmatprep.mubr.f32.mxu0 0.0
        %8510 = vmatmul.mubr.f32.gmra.mrb[0].mxu0 %v8128
        %v8511 = vpop.f32.mrb[0].mxu0
        %v8512 = vadd.f32 0.0, %v8511
        %v8513 = vpop.f32.mrb[0].mxu0
        %8514 = vdwg.mxu0
        %v8515 = vadd.f32 %v8338, %v8437
        %v8516 = vadd.f32 %v8339, %v8442
        %v8517 = vadd.f32 %v8340, %v8447
        %v8518 = vadd.f32 %v8341, %v8452
        %v8519 = vadd.f32 %v8342, %v8457
        %v8520 = vadd.f32 %v8343, %v8462
        %v8521 = vadd.f32 %v8344, %v8467
        %v8522 = vadd.f32 %v8345, %v8472
        %v8523 = vadd.f32 %v8346, %v8477
        %v8524 = vadd.f32 %v8347, %v8482
        %v8525 = vadd.f32 %v8348, %v8487
        %v8526 = vadd.f32 %v8349, %v8492
        %v8527 = vadd.f32 %v8350, %v8497
        %v8528 = vadd.f32 %v8351, %v8502
        %v8529 = vadd.f32 %v8352, %v8507
        %v8530 = vadd.f32 %v8353, %v8512
        %v8531 = vrot.slane %v8113, 1
        %v8532 = vrot.slane %v8114, 1
        %v8533 = vrot.slane %v8115, 1
        %v8534 = vrot.slane %v8116, 1
        %v8535 = vrot.slane %v8117, 1
        %v8536 = vrot.slane %v8118, 1
        %v8537 = vrot.slane %v8119, 1
        %v8538 = vrot.slane %v8120, 1
        %v8539 = vrot.slane %v8121, 1
        %v8540 = vrot.slane %v8122, 1
        %v8541 = vrot.slane %v8123, 1
        %v8542 = vrot.slane %v8124, 1
        %v8543 = vrot.slane %v8125, 1
        %v8544 = vrot.slane %v8126, 1
        %v8545 = vrot.slane %v8127, 1
        %v8546 = vrot.slane %v8128, 1
        %v8547 = vsel %vm1072, %v8545, %v8546
        %v8548 = vsel %vm1072, %v8544, %v8545
        %v8549 = vsel %vm1072, %v8543, %v8544
        %v8550 = vsel %vm1072, %v8542, %v8543
        %v8551 = vsel %vm1072, %v8541, %v8542
        %v8552 = vsel %vm1072, %v8540, %v8541
        %v8553 = vsel %vm1072, %v8539, %v8540
        %v8554 = vsel %vm1072, %v8538, %v8539
        %v8555 = vsel %vm1072, %v8537, %v8538
        %v8556 = vsel %vm1072, %v8536, %v8537
        %v8557 = vsel %vm1072, %v8535, %v8536
        %v8558 = vsel %vm1072, %v8534, %v8535
        %v8559 = vsel %vm1072, %v8533, %v8534
        %v8560 = vsel %vm1072, %v8532, %v8533
        %v8561 = vsel %vm1072, %v8531, %v8532
        %v8562 = vsel %vm1072, %v8546, %v8531
        %v8563 = vmul.f32 %v8561, %v452
        %v8564 = vmul.f32 %v8560, %v453
        %v8565 = vmul.f32 %v8559, %v454
        %v8566 = vmul.f32 %v8558, %v455
        %v8567 = vmul.f32 %v8557, %v456
        %v8568 = vmul.f32 %v8556, %v457
        %v8569 = vmul.f32 %v8555, %v458
        %v8570 = vmul.f32 %v8554, %v459
        %v8571 = vmul.f32 %v8553, %v460
        %v8572 = vmul.f32 %v8552, %v461
        %v8573 = vmul.f32 %v8551, %v462
        %v8574 = vmul.f32 %v8550, %v463
        %v8575 = vmul.f32 %v8549, %v464
        %v8576 = vmul.f32 %v8548, %v465
        %v8577 = vmul.f32 %v8547, %v466
        %v8578 = vmul.f32 %v8562, %v467
        %v8579 = vld [vmem:[%s6576] sm:$0xff]
        %v8580 = vld [vmem:[%s6576 + $0x8] sm:$0xff]
        %v8581 = vld [vmem:[%s6576 + $0x10] sm:$0xff]
        %v8582 = vld [vmem:[%s6576 + $0x18] sm:$0xff]
        %v8583 = vld [vmem:[%s6576 + $0x20] sm:$0xff]
        %v8584 = vld [vmem:[%s6576 + $0x28] sm:$0xff]
        %v8585 = vld [vmem:[%s6576 + $0x30] sm:$0xff]
        %v8586 = vld [vmem:[%s6576 + $0x38] sm:$0xff]
        %v8587 = vld [vmem:[%s6576 + $0x40] sm:$0xff]
        %v8588 = vld [vmem:[%s6576 + $0x48] sm:$0xff]
        %v8589 = vld [vmem:[%s6576 + $0x50] sm:$0xff]
        %v8590 = vld [vmem:[%s6576 + $0x58] sm:$0xff]
        %v8591 = vld [vmem:[%s6576 + $0x60] sm:$0xff]
        %v8592 = vld [vmem:[%s6576 + $0x68] sm:$0xff]
        %v8593 = vld [vmem:[%s6576 + $0x70] sm:$0xff]
        %v8594 = vld [vmem:[%s6576 + $0x78] sm:$0xff]
        %8595 = vmatprep.subr.mxu0 0.0
        %8596 = vmatpush1.msra.mxu0 %v8579
        %8597 = vmatprep.subr.mxu0 0.0
        %8598 = vmatpush1.msra.mxu0 %v8580
        %8599 = vmatprep.subr.mxu0 0.0
        %8600 = vmatpush1.msra.mxu0 %v8581
        %8601 = vmatprep.subr.mxu0 0.0
        %8602 = vmatpush1.msra.mxu0 %v8582
        %8603 = vmatprep.subr.mxu0 0.0
        %8604 = vmatpush1.msra.mxu0 %v8583
        %8605 = vmatprep.subr.mxu0 0.0
        %8606 = vmatpush1.msra.mxu0 %v8584
        %8607 = vmatprep.subr.mxu0 0.0
        %8608 = vmatpush1.msra.mxu0 %v8585
        %8609 = vmatprep.subr.mxu0 0.0
        %8610 = vmatpush1.msra.mxu0 %v8586
        %8611 = vmatprep.subr.mxu0 0.0
        %8612 = vmatpush1.msra.mxu0 %v8587
        %8613 = vmatprep.subr.mxu0 0.0
        %8614 = vmatpush1.msra.mxu0 %v8588
        %8615 = vmatprep.subr.mxu0 0.0
        %8616 = vmatpush1.msra.mxu0 %v8589
        %8617 = vmatprep.subr.mxu0 0.0
        %8618 = vmatpush1.msra.mxu0 %v8590
        %8619 = vmatprep.subr.mxu0 0.0
        %8620 = vmatpush1.msra.mxu0 %v8591
        %8621 = vmatprep.subr.mxu0 0.0
        %8622 = vmatpush1.msra.mxu0 %v8592
        %8623 = vmatprep.subr.mxu0 0.0
        %8624 = vmatpush1.msra.mxu0 %v8593
        %8625 = vmatprep.subr.mxu0 0.0
        %8626 = vmatpush1.msra.mxu0 %v8594
        %8627 = vmatprep.subr.mxu0 0.0
        %8628 = vmatpush1.msra.mxu0 0.0
        %8629 = vmatprep.subr.mxu0 0.0
        %8630 = vmatpush1.msra.mxu0 0.0
        %8631 = vmatprep.subr.mxu0 0.0
        %8632 = vmatpush1.msra.mxu0 0.0
        %8633 = vmatprep.subr.mxu0 0.0
        %8634 = vmatpush1.msra.mxu0 0.0
        %8635 = vmatprep.subr.mxu0 0.0
        %8636 = vmatpush1.msra.mxu0 0.0
        %8637 = vmatprep.subr.mxu0 0.0
        %8638 = vmatpush1.msra.mxu0 0.0
        %8639 = vmatprep.subr.mxu0 0.0
        %8640 = vmatpush1.msra.mxu0 0.0
        %8641 = vmatprep.subr.mxu0 0.0
        %8642 = vmatpush1.msra.mxu0 0.0
        %8643 = vmatprep.subr.mxu0 0.0
        %8644 = vmatpush1.msra.mxu0 0.0
        %8645 = vmatprep.subr.mxu0 0.0
        %8646 = vmatpush1.msra.mxu0 0.0
        %8647 = vmatprep.subr.mxu0 0.0
        %8648 = vmatpush1.msra.mxu0 0.0
        %8649 = vmatprep.subr.mxu0 0.0
        %8650 = vmatpush1.msra.mxu0 0.0
        %8651 = vmatprep.subr.mxu0 0.0
        %8652 = vmatpush1.msra.mxu0 0.0
        %8653 = vmatprep.subr.mxu0 0.0
        %8654 = vmatpush1.msra.mxu0 0.0
        %8655 = vmatprep.subr.mxu0 0.0
        %8656 = vmatpush1.msra.mxu0 0.0
        %8657 = vmatprep.subr.mxu0 0.0
        %8658 = vmatpush1.msra.mxu0 0.0
        %8659 = vmatprep.mubr.f32.mxu0 0.0
        %8660 = vmatmul.mubr.f32.gmra.mrb[0].mxu0 %v8563
        %v8661 = vpop.f32.mrb[0].mxu0
        %v8662 = vadd.f32 0.0, %v8661
        %v8663 = vpop.f32.mrb[0].mxu0
        %8664 = vmatprep.mubr.f32.mxu0 0.0
        %8665 = vmatmul.mubr.f32.gmra.mrb[0].mxu0 %v8564
        %v8666 = vpop.f32.mrb[0].mxu0
        %v8667 = vadd.f32 0.0, %v8666
        %v8668 = vpop.f32.mrb[0].mxu0
        %8669 = vmatprep.mubr.f32.mxu0 0.0
        %8670 = vmatmul.mubr.f32.gmra.mrb[0].mxu0 %v8565
        %v8671 = vpop.f32.mrb[0].mxu0
        %v8672 = vadd.f32 0.0, %v8671
        %v8673 = vpop.f32.mrb[0].mxu0
        %8674 = vmatprep.mubr.f32.mxu0 0.0
        %8675 = vmatmul.mubr.f32.gmra.mrb[0].mxu0 %v8566
        %v8676 = vpop.f32.mrb[0].mxu0
        %v8677 = vadd.f32 0.0, %v8676
        %v8678 = vpop.f32.mrb[0].mxu0
        %8679 = vmatprep.mubr.f32.mxu0 0.0
        %8680 = vmatmul.mubr.f32.gmra.mrb[0].mxu0 %v8567
        %v8681 = vpop.f32.mrb[0].mxu0
        %v8682 = vadd.f32 0.0, %v8681
        %v8683 = vpop.f32.mrb[0].mxu0
        %8684 = vmatprep.mubr.f32.mxu0 0.0
        %8685 = vmatmul.mubr.f32.gmra.mrb[0].mxu0 %v8568
        %v8686 = vpop.f32.mrb[0].mxu0
        %v8687 = vadd.f32 0.0, %v8686
        %v8688 = vpop.f32.mrb[0].mxu0
        %8689 = vmatprep.mubr.f32.mxu0 0.0
        %8690 = vmatmul.mubr.f32.gmra.mrb[0].mxu0 %v8569
        %v8691 = vpop.f32.mrb[0].mxu0
        %v8692 = vadd.f32 0.0, %v8691
        %v8693 = vpop.f32.mrb[0].mxu0
        %8694 = vmatprep.mubr.f32.mxu0 0.0
        %8695 = vmatmul.mubr.f32.gmra.mrb[0].mxu0 %v8570
        %v8696 = vpop.f32.mrb[0].mxu0
        %v8697 = vadd.f32 0.0, %v8696
        %v8698 = vpop.f32.mrb[0].mxu0
        %8699 = vmatprep.mubr.f32.mxu0 0.0
        %8700 = vmatmul.mubr.f32.gmra.mrb[0].mxu0 %v8571
        %v8701 = vpop.f32.mrb[0].mxu0
        %v8702 = vadd.f32 0.0, %v8701
        %v8703 = vpop.f32.mrb[0].mxu0
        %8704 = vmatprep.mubr.f32.mxu0 0.0
        %8705 = vmatmul.mubr.f32.gmra.mrb[0].mxu0 %v8572
        %v8706 = vpop.f32.mrb[0].mxu0
        %v8707 = vadd.f32 0.0, %v8706
        %v8708 = vpop.f32.mrb[0].mxu0
        %8709 = vmatprep.mubr.f32.mxu0 0.0
        %8710 = vmatmul.mubr.f32.gmra.mrb[0].mxu0 %v8573
        %v8711 = vpop.f32.mrb[0].mxu0
        %v8712 = vadd.f32 0.0, %v8711
        %v8713 = vpop.f32.mrb[0].mxu0
        %8714 = vmatprep.mubr.f32.mxu0 0.0
        %8715 = vmatmul.mubr.f32.gmra.mrb[0].mxu0 %v8574
        %v8716 = vpop.f32.mrb[0].mxu0
        %v8717 = vadd.f32 0.0, %v8716
        %v8718 = vpop.f32.mrb[0].mxu0
        %8719 = vmatprep.mubr.f32.mxu0 0.0
        %8720 = vmatmul.mubr.f32.gmra.mrb[0].mxu0 %v8575
        %v8721 = vpop.f32.mrb[0].mxu0
        %v8722 = vadd.f32 0.0, %v8721
        %v8723 = vpop.f32.mrb[0].mxu0
        %8724 = vmatprep.mubr.f32.mxu0 0.0
        %8725 = vmatmul.mubr.f32.gmra.mrb[0].mxu0 %v8576
        %v8726 = vpop.f32.mrb[0].mxu0
        %v8727 = vadd.f32 0.0, %v8726
        %v8728 = vpop.f32.mrb[0].mxu0
        %8729 = vmatprep.mubr.f32.mxu0 0.0
        %8730 = vmatmul.mubr.f32.gmra.mrb[0].mxu0 %v8577
        %v8731 = vpop.f32.mrb[0].mxu0
        %v8732 = vadd.f32 0.0, %v8731
        %v8733 = vpop.f32.mrb[0].mxu0
        %8734 = vmatprep.mubr.f32.mxu0 0.0
        %8735 = vmatmul.mubr.f32.gmra.mrb[0].mxu0 %v8578
        %v8736 = vpop.f32.mrb[0].mxu0
        %v8737 = vadd.f32 0.0, %v8736
        %v8738 = vpop.f32.mrb[0].mxu0
        %8739 = vdwg.mxu0
        %v8740 = vadd.f32 %v8515, %v8662
        %v8741 = vadd.f32 %v8516, %v8667
        %v8742 = vadd.f32 %v8517, %v8672
        %v8743 = vadd.f32 %v8518, %v8677
        %v8744 = vadd.f32 %v8519, %v8682
        %v8745 = vadd.f32 %v8520, %v8687
        %v8746 = vadd.f32 %v8521, %v8692
        %v8747 = vadd.f32 %v8522, %v8697
        %v8748 = vadd.f32 %v8523, %v8702
        %v8749 = vadd.f32 %v8524, %v8707
        %v8750 = vadd.f32 %v8525, %v8712
        %v8751 = vadd.f32 %v8526, %v8717
        %v8752 = vadd.f32 %v8527, %v8722
        %v8753 = vadd.f32 %v8528, %v8727
        %v8754 = vadd.f32 %v8529, %v8732
        %v8755 = vadd.f32 %v8530, %v8737
        %v8756 = vld [vmem:[#allocation3 + $0xa0] sm:$0xff]
        %v8757 = vld [vmem:[#allocation3 + $0xa8] sm:$0xff]
        %v8758 = vld [vmem:[#allocation3 + $0xb0] sm:$0xff]
        %v8759 = vld [vmem:[#allocation3 + $0xb8] sm:$0xff]
        %v8760 = vld [vmem:[#allocation3 + $0xc0] sm:$0xff]
        %v8761 = vld [vmem:[#allocation3 + $0xc8] sm:$0xff]
        %v8762 = vld [vmem:[#allocation3 + $0xd0] sm:$0xff]
        %v8763 = vld [vmem:[#allocation3 + $0xd8] sm:$0xff]
        %v8764 = vld [vmem:[#allocation3 + $0xe0] sm:$0xff]
        %v8765 = vld [vmem:[#allocation3 + $0xe8] sm:$0xff]
        %v8766 = vld [vmem:[#allocation3 + $0xf0] sm:$0xff]
        %v8767 = vld [vmem:[#allocation3 + $0xf8] sm:$0xff]
        %v8768 = vld [vmem:[#allocation3 + $0x100] sm:$0xff]
        %v8769 = vld [vmem:[#allocation3 + $0x108] sm:$0xff]
        %v8770 = vld [vmem:[#allocation3 + $0x110] sm:$0xff]
        %v8771 = vld [vmem:[#allocation3 + $0x118] sm:$0xff]
        %v8772 = vrot.slane %v8756, 7
        %v8773 = vrot.slane %v8757, 7
        %v8774 = vrot.slane %v8758, 7
        %v8775 = vrot.slane %v8759, 7
        %v8776 = vrot.slane %v8760, 7
        %v8777 = vrot.slane %v8761, 7
        %v8778 = vrot.slane %v8762, 7
        %v8779 = vrot.slane %v8763, 7
        %v8780 = vrot.slane %v8764, 7
        %v8781 = vrot.slane %v8765, 7
        %v8782 = vrot.slane %v8766, 7
        %v8783 = vrot.slane %v8767, 7
        %v8784 = vrot.slane %v8768, 7
        %v8785 = vrot.slane %v8769, 7
        %v8786 = vrot.slane %v8770, 7
        %v8787 = vrot.slane %v8771, 7
        %v8788 = vsel %vm627, %v8786, %v8787
        %v8789 = vsel %vm627, %v8785, %v8786
        %v8790 = vsel %vm627, %v8784, %v8785
        %v8791 = vsel %vm627, %v8783, %v8784
        %v8792 = vsel %vm627, %v8782, %v8783
        %v8793 = vsel %vm627, %v8781, %v8782
        %v8794 = vsel %vm627, %v8780, %v8781
        %v8795 = vsel %vm627, %v8779, %v8780
        %v8796 = vsel %vm627, %v8778, %v8779
        %v8797 = vsel %vm627, %v8777, %v8778
        %v8798 = vsel %vm627, %v8776, %v8777
        %v8799 = vsel %vm627, %v8775, %v8776
        %v8800 = vsel %vm627, %v8774, %v8775
        %v8801 = vsel %vm627, %v8773, %v8774
        %v8802 = vsel %vm627, %v8772, %v8773
        %v8803 = vsel %vm627, %v8787, %v8772
        %v8804 = vmul.f32 %v8803, %v500
        %v8805 = vmul.f32 %v8802, %v501
        %v8806 = vmul.f32 %v8801, %v502
        %v8807 = vmul.f32 %v8800, %v503
        %v8808 = vmul.f32 %v8799, %v504
        %v8809 = vmul.f32 %v8798, %v505
        %v8810 = vmul.f32 %v8797, %v506
        %v8811 = vmul.f32 %v8796, %v507
        %v8812 = vmul.f32 %v8795, %v508
        %v8813 = vmul.f32 %v8794, %v509
        %v8814 = vmul.f32 %v8793, %v510
        %v8815 = vmul.f32 %v8792, %v511
        %v8816 = vmul.f32 %v8791, %v512
        %v8817 = vmul.f32 %v8790, %v513
        %v8818 = vmul.f32 %v8789, %v514
        %v8819 = vmul.f32 %v8788, %v515
        %v8820 = vld [vmem:[%s6818] sm:$0xff]
        %v8821 = vld [vmem:[%s6818 + $0x8] sm:$0xff]
        %v8822 = vld [vmem:[%s6818 + $0x10] sm:$0xff]
        %v8823 = vld [vmem:[%s6818 + $0x18] sm:$0xff]
        %v8824 = vld [vmem:[%s6818 + $0x20] sm:$0xff]
        %v8825 = vld [vmem:[%s6818 + $0x28] sm:$0xff]
        %v8826 = vld [vmem:[%s6818 + $0x30] sm:$0xff]
        %v8827 = vld [vmem:[%s6818 + $0x38] sm:$0xff]
        %v8828 = vld [vmem:[%s6818 + $0x40] sm:$0xff]
        %v8829 = vld [vmem:[%s6818 + $0x48] sm:$0xff]
        %v8830 = vld [vmem:[%s6818 + $0x50] sm:$0xff]
        %v8831 = vld [vmem:[%s6818 + $0x58] sm:$0xff]
        %v8832 = vld [vmem:[%s6818 + $0x60] sm:$0xff]
        %v8833 = vld [vmem:[%s6818 + $0x68] sm:$0xff]
        %v8834 = vld [vmem:[%s6818 + $0x70] sm:$0xff]
        %v8835 = vld [vmem:[%s6818 + $0x78] sm:$0xff]
        %8836 = vmatprep.subr.mxu0 0.0
        %8837 = vmatpush1.msra.mxu0 %v8820
        %8838 = vmatprep.subr.mxu0 0.0
        %8839 = vmatpush1.msra.mxu0 %v8821
        %8840 = vmatprep.subr.mxu0 0.0
        %8841 = vmatpush1.msra.mxu0 %v8822
        %8842 = vmatprep.subr.mxu0 0.0
        %8843 = vmatpush1.msra.mxu0 %v8823
        %8844 = vmatprep.subr.mxu0 0.0
        %8845 = vmatpush1.msra.mxu0 %v8824
        %8846 = vmatprep.subr.mxu0 0.0
        %8847 = vmatpush1.msra.mxu0 %v8825
        %8848 = vmatprep.subr.mxu0 0.0
        %8849 = vmatpush1.msra.mxu0 %v8826
        %8850 = vmatprep.subr.mxu0 0.0
        %8851 = vmatpush1.msra.mxu0 %v8827
        %8852 = vmatprep.subr.mxu0 0.0
        %8853 = vmatpush1.msra.mxu0 %v8828
        %8854 = vmatprep.subr.mxu0 0.0
        %8855 = vmatpush1.msra.mxu0 %v8829
        %8856 = vmatprep.subr.mxu0 0.0
        %8857 = vmatpush1.msra.mxu0 %v8830
        %8858 = vmatprep.subr.mxu0 0.0
        %8859 = vmatpush1.msra.mxu0 %v8831
        %8860 = vmatprep.subr.mxu0 0.0
        %8861 = vmatpush1.msra.mxu0 %v8832
        %8862 = vmatprep.subr.mxu0 0.0
        %8863 = vmatpush1.msra.mxu0 %v8833
        %8864 = vmatprep.subr.mxu0 0.0
        %8865 = vmatpush1.msra.mxu0 %v8834
        %8866 = vmatprep.subr.mxu0 0.0
        %8867 = vmatpush1.msra.mxu0 %v8835
        %8868 = vmatprep.subr.mxu0 0.0
        %8869 = vmatpush1.msra.mxu0 0.0
        %8870 = vmatprep.subr.mxu0 0.0
        %8871 = vmatpush1.msra.mxu0 0.0
        %8872 = vmatprep.subr.mxu0 0.0
        %8873 = vmatpush1.msra.mxu0 0.0
        %8874 = vmatprep.subr.mxu0 0.0
        %8875 = vmatpush1.msra.mxu0 0.0
        %8876 = vmatprep.subr.mxu0 0.0
        %8877 = vmatpush1.msra.mxu0 0.0
        %8878 = vmatprep.subr.mxu0 0.0
        %8879 = vmatpush1.msra.mxu0 0.0
        %8880 = vmatprep.subr.mxu0 0.0
        %8881 = vmatpush1.msra.mxu0 0.0
        %8882 = vmatprep.subr.mxu0 0.0
        %8883 = vmatpush1.msra.mxu0 0.0
        %8884 = vmatprep.subr.mxu0 0.0
        %8885 = vmatpush1.msra.mxu0 0.0
        %8886 = vmatprep.subr.mxu0 0.0
        %8887 = vmatpush1.msra.mxu0 0.0
        %8888 = vmatprep.subr.mxu0 0.0
        %8889 = vmatpush1.msra.mxu0 0.0
        %8890 = vmatprep.subr.mxu0 0.0
        %8891 = vmatpush1.msra.mxu0 0.0
        %8892 = vmatprep.subr.mxu0 0.0
        %8893 = vmatpush1.msra.mxu0 0.0
        %8894 = vmatprep.subr.mxu0 0.0
        %8895 = vmatpush1.msra.mxu0 0.0
        %8896 = vmatprep.subr.mxu0 0.0
        %8897 = vmatpush1.msra.mxu0 0.0
        %8898 = vmatprep.subr.mxu0 0.0
        %8899 = vmatpush1.msra.mxu0 0.0
        %8900 = vmatprep.mubr.f32.mxu0 0.0
        %8901 = vmatmul.mubr.f32.gmra.mrb[0].mxu0 %v8804
        %v8902 = vpop.f32.mrb[0].mxu0
        %v8903 = vadd.f32 0.0, %v8902
        %v8904 = vpop.f32.mrb[0].mxu0
        %8905 = vmatprep.mubr.f32.mxu0 0.0
        %8906 = vmatmul.mubr.f32.gmra.mrb[0].mxu0 %v8805
        %v8907 = vpop.f32.mrb[0].mxu0
        %v8908 = vadd.f32 0.0, %v8907
        %v8909 = vpop.f32.mrb[0].mxu0
        %8910 = vmatprep.mubr.f32.mxu0 0.0
        %8911 = vmatmul.mubr.f32.gmra.mrb[0].mxu0 %v8806
        %v8912 = vpop.f32.mrb[0].mxu0
        %v8913 = vadd.f32 0.0, %v8912
        %v8914 = vpop.f32.mrb[0].mxu0
        %8915 = vmatprep.mubr.f32.mxu0 0.0
        %8916 = vmatmul.mubr.f32.gmra.mrb[0].mxu0 %v8807
        %v8917 = vpop.f32.mrb[0].mxu0
        %v8918 = vadd.f32 0.0, %v8917
        %v8919 = vpop.f32.mrb[0].mxu0
        %8920 = vmatprep.mubr.f32.mxu0 0.0
        %8921 = vmatmul.mubr.f32.gmra.mrb[0].mxu0 %v8808
        %v8922 = vpop.f32.mrb[0].mxu0
        %v8923 = vadd.f32 0.0, %v8922
        %v8924 = vpop.f32.mrb[0].mxu0
        %8925 = vmatprep.mubr.f32.mxu0 0.0
        %8926 = vmatmul.mubr.f32.gmra.mrb[0].mxu0 %v8809
        %v8927 = vpop.f32.mrb[0].mxu0
        %v8928 = vadd.f32 0.0, %v8927
        %v8929 = vpop.f32.mrb[0].mxu0
        %8930 = vmatprep.mubr.f32.mxu0 0.0
        %8931 = vmatmul.mubr.f32.gmra.mrb[0].mxu0 %v8810
        %v8932 = vpop.f32.mrb[0].mxu0
        %v8933 = vadd.f32 0.0, %v8932
        %v8934 = vpop.f32.mrb[0].mxu0
        %8935 = vmatprep.mubr.f32.mxu0 0.0
        %8936 = vmatmul.mubr.f32.gmra.mrb[0].mxu0 %v8811
        %v8937 = vpop.f32.mrb[0].mxu0
        %v8938 = vadd.f32 0.0, %v8937
        %v8939 = vpop.f32.mrb[0].mxu0
        %8940 = vmatprep.mubr.f32.mxu0 0.0
        %8941 = vmatmul.mubr.f32.gmra.mrb[0].mxu0 %v8812
        %v8942 = vpop.f32.mrb[0].mxu0
        %v8943 = vadd.f32 0.0, %v8942
        %v8944 = vpop.f32.mrb[0].mxu0
        %8945 = vmatprep.mubr.f32.mxu0 0.0
        %8946 = vmatmul.mubr.f32.gmra.mrb[0].mxu0 %v8813
        %v8947 = vpop.f32.mrb[0].mxu0
        %v8948 = vadd.f32 0.0, %v8947
        %v8949 = vpop.f32.mrb[0].mxu0
        %8950 = vmatprep.mubr.f32.mxu0 0.0
        %8951 = vmatmul.mubr.f32.gmra.mrb[0].mxu0 %v8814
        %v8952 = vpop.f32.mrb[0].mxu0
        %v8953 = vadd.f32 0.0, %v8952
        %v8954 = vpop.f32.mrb[0].mxu0
        %8955 = vmatprep.mubr.f32.mxu0 0.0
        %8956 = vmatmul.mubr.f32.gmra.mrb[0].mxu0 %v8815
        %v8957 = vpop.f32.mrb[0].mxu0
        %v8958 = vadd.f32 0.0, %v8957
        %v8959 = vpop.f32.mrb[0].mxu0
        %8960 = vmatprep.mubr.f32.mxu0 0.0
        %8961 = vmatmul.mubr.f32.gmra.mrb[0].mxu0 %v8816
        %v8962 = vpop.f32.mrb[0].mxu0
        %v8963 = vadd.f32 0.0, %v8962
        %v8964 = vpop.f32.mrb[0].mxu0
        %8965 = vmatprep.mubr.f32.mxu0 0.0
        %8966 = vmatmul.mubr.f32.gmra.mrb[0].mxu0 %v8817
        %v8967 = vpop.f32.mrb[0].mxu0
        %v8968 = vadd.f32 0.0, %v8967
        %v8969 = vpop.f32.mrb[0].mxu0
        %8970 = vmatprep.mubr.f32.mxu0 0.0
        %8971 = vmatmul.mubr.f32.gmra.mrb[0].mxu0 %v8818
        %v8972 = vpop.f32.mrb[0].mxu0
        %v8973 = vadd.f32 0.0, %v8972
        %v8974 = vpop.f32.mrb[0].mxu0
        %8975 = vmatprep.mubr.f32.mxu0 0.0
        %8976 = vmatmul.mubr.f32.gmra.mrb[0].mxu0 %v8819
        %v8977 = vpop.f32.mrb[0].mxu0
        %v8978 = vadd.f32 0.0, %v8977
        %v8979 = vpop.f32.mrb[0].mxu0
        %8980 = vdwg.mxu0
        %v8981 = vadd.f32 %v8740, %v8903
        %v8982 = vadd.f32 %v8741, %v8908
        %v8983 = vadd.f32 %v8742, %v8913
        %v8984 = vadd.f32 %v8743, %v8918
        %v8985 = vadd.f32 %v8744, %v8923
        %v8986 = vadd.f32 %v8745, %v8928
        %v8987 = vadd.f32 %v8746, %v8933
        %v8988 = vadd.f32 %v8747, %v8938
        %v8989 = vadd.f32 %v8748, %v8943
        %v8990 = vadd.f32 %v8749, %v8948
        %v8991 = vadd.f32 %v8750, %v8953
        %v8992 = vadd.f32 %v8751, %v8958
        %v8993 = vadd.f32 %v8752, %v8963
        %v8994 = vadd.f32 %v8753, %v8968
        %v8995 = vadd.f32 %v8754, %v8973
        %v8996 = vadd.f32 %v8755, %v8978
        %v8997 = vld [vmem:[%s6996] sm:$0xff]
        %v8998 = vld [vmem:[%s6996 + $0x8] sm:$0xff]
        %v8999 = vld [vmem:[%s6996 + $0x10] sm:$0xff]
        %v9000 = vld [vmem:[%s6996 + $0x18] sm:$0xff]
        %v9001 = vld [vmem:[%s6996 + $0x20] sm:$0xff]
        %v9002 = vld [vmem:[%s6996 + $0x28] sm:$0xff]
        %v9003 = vld [vmem:[%s6996 + $0x30] sm:$0xff]
        %v9004 = vld [vmem:[%s6996 + $0x38] sm:$0xff]
        %v9005 = vld [vmem:[%s6996 + $0x40] sm:$0xff]
        %v9006 = vld [vmem:[%s6996 + $0x48] sm:$0xff]
        %v9007 = vld [vmem:[%s6996 + $0x50] sm:$0xff]
        %v9008 = vld [vmem:[%s6996 + $0x58] sm:$0xff]
        %v9009 = vld [vmem:[%s6996 + $0x60] sm:$0xff]
        %v9010 = vld [vmem:[%s6996 + $0x68] sm:$0xff]
        %v9011 = vld [vmem:[%s6996 + $0x70] sm:$0xff]
        %v9012 = vld [vmem:[%s6996 + $0x78] sm:$0xff]
        %9013 = vmatprep.subr.mxu0 0.0
        %9014 = vmatpush1.msra.mxu0 %v8997
        %9015 = vmatprep.subr.mxu0 0.0
        %9016 = vmatpush1.msra.mxu0 %v8998
        %9017 = vmatprep.subr.mxu0 0.0
        %9018 = vmatpush1.msra.mxu0 %v8999
        %9019 = vmatprep.subr.mxu0 0.0
        %9020 = vmatpush1.msra.mxu0 %v9000
        %9021 = vmatprep.subr.mxu0 0.0
        %9022 = vmatpush1.msra.mxu0 %v9001
        %9023 = vmatprep.subr.mxu0 0.0
        %9024 = vmatpush1.msra.mxu0 %v9002
        %9025 = vmatprep.subr.mxu0 0.0
        %9026 = vmatpush1.msra.mxu0 %v9003
        %9027 = vmatprep.subr.mxu0 0.0
        %9028 = vmatpush1.msra.mxu0 %v9004
        %9029 = vmatprep.subr.mxu0 0.0
        %9030 = vmatpush1.msra.mxu0 %v9005
        %9031 = vmatprep.subr.mxu0 0.0
        %9032 = vmatpush1.msra.mxu0 %v9006
        %9033 = vmatprep.subr.mxu0 0.0
        %9034 = vmatpush1.msra.mxu0 %v9007
        %9035 = vmatprep.subr.mxu0 0.0
        %9036 = vmatpush1.msra.mxu0 %v9008
        %9037 = vmatprep.subr.mxu0 0.0
        %9038 = vmatpush1.msra.mxu0 %v9009
        %9039 = vmatprep.subr.mxu0 0.0
        %9040 = vmatpush1.msra.mxu0 %v9010
        %9041 = vmatprep.subr.mxu0 0.0
        %9042 = vmatpush1.msra.mxu0 %v9011
        %9043 = vmatprep.subr.mxu0 0.0
        %9044 = vmatpush1.msra.mxu0 %v9012
        %9045 = vmatprep.subr.mxu0 0.0
        %9046 = vmatpush1.msra.mxu0 0.0
        %9047 = vmatprep.subr.mxu0 0.0
        %9048 = vmatpush1.msra.mxu0 0.0
        %9049 = vmatprep.subr.mxu0 0.0
        %9050 = vmatpush1.msra.mxu0 0.0
        %9051 = vmatprep.subr.mxu0 0.0
        %9052 = vmatpush1.msra.mxu0 0.0
        %9053 = vmatprep.subr.mxu0 0.0
        %9054 = vmatpush1.msra.mxu0 0.0
        %9055 = vmatprep.subr.mxu0 0.0
        %9056 = vmatpush1.msra.mxu0 0.0
        %9057 = vmatprep.subr.mxu0 0.0
        %9058 = vmatpush1.msra.mxu0 0.0
        %9059 = vmatprep.subr.mxu0 0.0
        %9060 = vmatpush1.msra.mxu0 0.0
        %9061 = vmatprep.subr.mxu0 0.0
        %9062 = vmatpush1.msra.mxu0 0.0
        %9063 = vmatprep.subr.mxu0 0.0
        %9064 = vmatpush1.msra.mxu0 0.0
        %9065 = vmatprep.subr.mxu0 0.0
        %9066 = vmatpush1.msra.mxu0 0.0
        %9067 = vmatprep.subr.mxu0 0.0
        %9068 = vmatpush1.msra.mxu0 0.0
        %9069 = vmatprep.subr.mxu0 0.0
        %9070 = vmatpush1.msra.mxu0 0.0
        %9071 = vmatprep.subr.mxu0 0.0
        %9072 = vmatpush1.msra.mxu0 0.0
        %9073 = vmatprep.subr.mxu0 0.0
        %9074 = vmatpush1.msra.mxu0 0.0
        %9075 = vmatprep.subr.mxu0 0.0
        %9076 = vmatpush1.msra.mxu0 0.0
        %9077 = vmatprep.mubr.f32.mxu0 0.0
        %9078 = vmatmul.mubr.f32.gmra.mrb[0].mxu0 %v8756
        %v9079 = vpop.f32.mrb[0].mxu0
        %v9080 = vadd.f32 0.0, %v9079
        %v9081 = vpop.f32.mrb[0].mxu0
        %9082 = vmatprep.mubr.f32.mxu0 0.0
        %9083 = vmatmul.mubr.f32.gmra.mrb[0].mxu0 %v8757
        %v9084 = vpop.f32.mrb[0].mxu0
        %v9085 = vadd.f32 0.0, %v9084
        %v9086 = vpop.f32.mrb[0].mxu0
        %9087 = vmatprep.mubr.f32.mxu0 0.0
        %9088 = vmatmul.mubr.f32.gmra.mrb[0].mxu0 %v8758
        %v9089 = vpop.f32.mrb[0].mxu0
        %v9090 = vadd.f32 0.0, %v9089
        %v9091 = vpop.f32.mrb[0].mxu0
        %9092 = vmatprep.mubr.f32.mxu0 0.0
        %9093 = vmatmul.mubr.f32.gmra.mrb[0].mxu0 %v8759
        %v9094 = vpop.f32.mrb[0].mxu0
        %v9095 = vadd.f32 0.0, %v9094
        %v9096 = vpop.f32.mrb[0].mxu0
        %9097 = vmatprep.mubr.f32.mxu0 0.0
        %9098 = vmatmul.mubr.f32.gmra.mrb[0].mxu0 %v8760
        %v9099 = vpop.f32.mrb[0].mxu0
        %v9100 = vadd.f32 0.0, %v9099
        %v9101 = vpop.f32.mrb[0].mxu0
        %9102 = vmatprep.mubr.f32.mxu0 0.0
        %9103 = vmatmul.mubr.f32.gmra.mrb[0].mxu0 %v8761
        %v9104 = vpop.f32.mrb[0].mxu0
        %v9105 = vadd.f32 0.0, %v9104
        %v9106 = vpop.f32.mrb[0].mxu0
        %9107 = vmatprep.mubr.f32.mxu0 0.0
        %9108 = vmatmul.mubr.f32.gmra.mrb[0].mxu0 %v8762
        %v9109 = vpop.f32.mrb[0].mxu0
        %v9110 = vadd.f32 0.0, %v9109
        %v9111 = vpop.f32.mrb[0].mxu0
        %9112 = vmatprep.mubr.f32.mxu0 0.0
        %9113 = vmatmul.mubr.f32.gmra.mrb[0].mxu0 %v8763
        %v9114 = vpop.f32.mrb[0].mxu0
        %v9115 = vadd.f32 0.0, %v9114
        %v9116 = vpop.f32.mrb[0].mxu0
        %9117 = vmatprep.mubr.f32.mxu0 0.0
        %9118 = vmatmul.mubr.f32.gmra.mrb[0].mxu0 %v8764
        %v9119 = vpop.f32.mrb[0].mxu0
        %v9120 = vadd.f32 0.0, %v9119
        %v9121 = vpop.f32.mrb[0].mxu0
        %9122 = vmatprep.mubr.f32.mxu0 0.0
        %9123 = vmatmul.mubr.f32.gmra.mrb[0].mxu0 %v8765
        %v9124 = vpop.f32.mrb[0].mxu0
        %v9125 = vadd.f32 0.0, %v9124
        %v9126 = vpop.f32.mrb[0].mxu0
        %9127 = vmatprep.mubr.f32.mxu0 0.0
        %9128 = vmatmul.mubr.f32.gmra.mrb[0].mxu0 %v8766
        %v9129 = vpop.f32.mrb[0].mxu0
        %v9130 = vadd.f32 0.0, %v9129
        %v9131 = vpop.f32.mrb[0].mxu0
        %9132 = vmatprep.mubr.f32.mxu0 0.0
        %9133 = vmatmul.mubr.f32.gmra.mrb[0].mxu0 %v8767
        %v9134 = vpop.f32.mrb[0].mxu0
        %v9135 = vadd.f32 0.0, %v9134
        %v9136 = vpop.f32.mrb[0].mxu0
        %9137 = vmatprep.mubr.f32.mxu0 0.0
        %9138 = vmatmul.mubr.f32.gmra.mrb[0].mxu0 %v8768
        %v9139 = vpop.f32.mrb[0].mxu0
        %v9140 = vadd.f32 0.0, %v9139
        %v9141 = vpop.f32.mrb[0].mxu0
        %9142 = vmatprep.mubr.f32.mxu0 0.0
        %9143 = vmatmul.mubr.f32.gmra.mrb[0].mxu0 %v8769
        %v9144 = vpop.f32.mrb[0].mxu0
        %v9145 = vadd.f32 0.0, %v9144
        %v9146 = vpop.f32.mrb[0].mxu0
        %9147 = vmatprep.mubr.f32.mxu0 0.0
        %9148 = vmatmul.mubr.f32.gmra.mrb[0].mxu0 %v8770
        %v9149 = vpop.f32.mrb[0].mxu0
        %v9150 = vadd.f32 0.0, %v9149
        %v9151 = vpop.f32.mrb[0].mxu0
        %9152 = vmatprep.mubr.f32.mxu0 0.0
        %9153 = vmatmul.mubr.f32.gmra.mrb[0].mxu0 %v8771
        %v9154 = vpop.f32.mrb[0].mxu0
        %v9155 = vadd.f32 0.0, %v9154
        %v9156 = vpop.f32.mrb[0].mxu0
        %9157 = vdwg.mxu0
        %v9158 = vadd.f32 %v8981, %v9080
        %v9159 = vadd.f32 %v8982, %v9085
        %v9160 = vadd.f32 %v8983, %v9090
        %v9161 = vadd.f32 %v8984, %v9095
        %v9162 = vadd.f32 %v8985, %v9100
        %v9163 = vadd.f32 %v8986, %v9105
        %v9164 = vadd.f32 %v8987, %v9110
        %v9165 = vadd.f32 %v8988, %v9115
        %v9166 = vadd.f32 %v8989, %v9120
        %v9167 = vadd.f32 %v8990, %v9125
        %v9168 = vadd.f32 %v8991, %v9130
        %v9169 = vadd.f32 %v8992, %v9135
        %v9170 = vadd.f32 %v8993, %v9140
        %v9171 = vadd.f32 %v8994, %v9145
        %v9172 = vadd.f32 %v8995, %v9150
        %v9173 = vadd.f32 %v8996, %v9155
        %v9174 = vrot.slane %v8756, 1
        %v9175 = vrot.slane %v8757, 1
        %v9176 = vrot.slane %v8758, 1
        %v9177 = vrot.slane %v8759, 1
        %v9178 = vrot.slane %v8760, 1
        %v9179 = vrot.slane %v8761, 1
        %v9180 = vrot.slane %v8762, 1
        %v9181 = vrot.slane %v8763, 1
        %v9182 = vrot.slane %v8764, 1
        %v9183 = vrot.slane %v8765, 1
        %v9184 = vrot.slane %v8766, 1
        %v9185 = vrot.slane %v8767, 1
        %v9186 = vrot.slane %v8768, 1
        %v9187 = vrot.slane %v8769, 1
        %v9188 = vrot.slane %v8770, 1
        %v9189 = vrot.slane %v8771, 1
        %v9190 = vsel %vm1072, %v9188, %v9189
        %v9191 = vsel %vm1072, %v9187, %v9188
        %v9192 = vsel %vm1072, %v9186, %v9187
        %v9193 = vsel %vm1072, %v9185, %v9186
        %v9194 = vsel %vm1072, %v9184, %v9185
        %v9195 = vsel %vm1072, %v9183, %v9184
        %v9196 = vsel %vm1072, %v9182, %v9183
        %v9197 = vsel %vm1072, %v9181, %v9182
        %v9198 = vsel %vm1072, %v9180, %v9181
        %v9199 = vsel %vm1072, %v9179, %v9180
        %v9200 = vsel %vm1072, %v9178, %v9179
        %v9201 = vsel %vm1072, %v9177, %v9178
        %v9202 = vsel %vm1072, %v9176, %v9177
        %v9203 = vsel %vm1072, %v9175, %v9176
        %v9204 = vsel %vm1072, %v9174, %v9175
        %v9205 = vsel %vm1072, %v9189, %v9174
        %v9206 = vmul.f32 %v9204, %v452
        %v9207 = vmul.f32 %v9203, %v453
        %v9208 = vmul.f32 %v9202, %v454
        %v9209 = vmul.f32 %v9201, %v455
        %v9210 = vmul.f32 %v9200, %v456
        %v9211 = vmul.f32 %v9199, %v457
        %v9212 = vmul.f32 %v9198, %v458
        %v9213 = vmul.f32 %v9197, %v459
        %v9214 = vmul.f32 %v9196, %v460
        %v9215 = vmul.f32 %v9195, %v461
        %v9216 = vmul.f32 %v9194, %v462
        %v9217 = vmul.f32 %v9193, %v463
        %v9218 = vmul.f32 %v9192, %v464
        %v9219 = vmul.f32 %v9191, %v465
        %v9220 = vmul.f32 %v9190, %v466
        %v9221 = vmul.f32 %v9205, %v467
        %v9222 = vld [vmem:[%s7222] sm:$0xff]
        %v9223 = vld [vmem:[%s7222 + $0x8] sm:$0xff]
        %v9224 = vld [vmem:[%s7222 + $0x10] sm:$0xff]
        %v9225 = vld [vmem:[%s7222 + $0x18] sm:$0xff]
        %v9226 = vld [vmem:[%s7222 + $0x20] sm:$0xff]
        %v9227 = vld [vmem:[%s7222 + $0x28] sm:$0xff]
        %v9228 = vld [vmem:[%s7222 + $0x30] sm:$0xff]
        %v9229 = vld [vmem:[%s7222 + $0x38] sm:$0xff]
        %v9230 = vld [vmem:[%s7222 + $0x40] sm:$0xff]
        %v9231 = vld [vmem:[%s7222 + $0x48] sm:$0xff]
        %v9232 = vld [vmem:[%s7222 + $0x50] sm:$0xff]
        %v9233 = vld [vmem:[%s7222 + $0x58] sm:$0xff]
        %v9234 = vld [vmem:[%s7222 + $0x60] sm:$0xff]
        %v9235 = vld [vmem:[%s7222 + $0x68] sm:$0xff]
        %v9236 = vld [vmem:[%s7222 + $0x70] sm:$0xff]
        %v9237 = vld [vmem:[%s7222 + $0x78] sm:$0xff]
        %9238 = vmatprep.subr.mxu0 0.0
        %9239 = vmatpush1.msra.mxu0 %v9222
        %9240 = vmatprep.subr.mxu0 0.0
        %9241 = vmatpush1.msra.mxu0 %v9223
        %9242 = vmatprep.subr.mxu0 0.0
        %9243 = vmatpush1.msra.mxu0 %v9224
        %9244 = vmatprep.subr.mxu0 0.0
        %9245 = vmatpush1.msra.mxu0 %v9225
        %9246 = vmatprep.subr.mxu0 0.0
        %9247 = vmatpush1.msra.mxu0 %v9226
        %9248 = vmatprep.subr.mxu0 0.0
        %9249 = vmatpush1.msra.mxu0 %v9227
        %9250 = vmatprep.subr.mxu0 0.0
        %9251 = vmatpush1.msra.mxu0 %v9228
        %9252 = vmatprep.subr.mxu0 0.0
        %9253 = vmatpush1.msra.mxu0 %v9229
        %9254 = vmatprep.subr.mxu0 0.0
        %9255 = vmatpush1.msra.mxu0 %v9230
        %9256 = vmatprep.subr.mxu0 0.0
        %9257 = vmatpush1.msra.mxu0 %v9231
        %9258 = vmatprep.subr.mxu0 0.0
        %9259 = vmatpush1.msra.mxu0 %v9232
        %9260 = vmatprep.subr.mxu0 0.0
        %9261 = vmatpush1.msra.mxu0 %v9233
        %9262 = vmatprep.subr.mxu0 0.0
        %9263 = vmatpush1.msra.mxu0 %v9234
        %9264 = vmatprep.subr.mxu0 0.0
        %9265 = vmatpush1.msra.mxu0 %v9235
        %9266 = vmatprep.subr.mxu0 0.0
        %9267 = vmatpush1.msra.mxu0 %v9236
        %9268 = vmatprep.subr.mxu0 0.0
        %9269 = vmatpush1.msra.mxu0 %v9237
        %9270 = vmatprep.subr.mxu0 0.0
        %9271 = vmatpush1.msra.mxu0 0.0
        %9272 = vmatprep.subr.mxu0 0.0
        %9273 = vmatpush1.msra.mxu0 0.0
        %9274 = vmatprep.subr.mxu0 0.0
        %9275 = vmatpush1.msra.mxu0 0.0
        %9276 = vmatprep.subr.mxu0 0.0
        %9277 = vmatpush1.msra.mxu0 0.0
        %9278 = vmatprep.subr.mxu0 0.0
        %9279 = vmatpush1.msra.mxu0 0.0
        %9280 = vmatprep.subr.mxu0 0.0
        %9281 = vmatpush1.msra.mxu0 0.0
        %9282 = vmatprep.subr.mxu0 0.0
        %9283 = vmatpush1.msra.mxu0 0.0
        %9284 = vmatprep.subr.mxu0 0.0
        %9285 = vmatpush1.msra.mxu0 0.0
        %9286 = vmatprep.subr.mxu0 0.0
        %9287 = vmatpush1.msra.mxu0 0.0
        %9288 = vmatprep.subr.mxu0 0.0
        %9289 = vmatpush1.msra.mxu0 0.0
        %9290 = vmatprep.subr.mxu0 0.0
        %9291 = vmatpush1.msra.mxu0 0.0
        %9292 = vmatprep.subr.mxu0 0.0
        %9293 = vmatpush1.msra.mxu0 0.0
        %9294 = vmatprep.subr.mxu0 0.0
        %9295 = vmatpush1.msra.mxu0 0.0
        %9296 = vmatprep.subr.mxu0 0.0
        %9297 = vmatpush1.msra.mxu0 0.0
        %9298 = vmatprep.subr.mxu0 0.0
        %9299 = vmatpush1.msra.mxu0 0.0
        %9300 = vmatprep.subr.mxu0 0.0
        %9301 = vmatpush1.msra.mxu0 0.0
        %9302 = vmatprep.mubr.f32.mxu0 0.0
        %9303 = vmatmul.mubr.f32.gmra.mrb[0].mxu0 %v9206
        %v9304 = vpop.f32.mrb[0].mxu0
        %v9305 = vadd.f32 0.0, %v9304
        %v9306 = vpop.f32.mrb[0].mxu0
        %9307 = vmatprep.mubr.f32.mxu0 0.0
        %9308 = vmatmul.mubr.f32.gmra.mrb[0].mxu0 %v9207
        %v9309 = vpop.f32.mrb[0].mxu0
        %v9310 = vadd.f32 0.0, %v9309
        %v9311 = vpop.f32.mrb[0].mxu0
        %9312 = vmatprep.mubr.f32.mxu0 0.0
        %9313 = vmatmul.mubr.f32.gmra.mrb[0].mxu0 %v9208
        %v9314 = vpop.f32.mrb[0].mxu0
        %v9315 = vadd.f32 0.0, %v9314
        %v9316 = vpop.f32.mrb[0].mxu0
        %9317 = vmatprep.mubr.f32.mxu0 0.0
        %9318 = vmatmul.mubr.f32.gmra.mrb[0].mxu0 %v9209
        %v9319 = vpop.f32.mrb[0].mxu0
        %v9320 = vadd.f32 0.0, %v9319
        %v9321 = vpop.f32.mrb[0].mxu0
        %9322 = vmatprep.mubr.f32.mxu0 0.0
        %9323 = vmatmul.mubr.f32.gmra.mrb[0].mxu0 %v9210
        %v9324 = vpop.f32.mrb[0].mxu0
        %v9325 = vadd.f32 0.0, %v9324
        %v9326 = vpop.f32.mrb[0].mxu0
        %9327 = vmatprep.mubr.f32.mxu0 0.0
        %9328 = vmatmul.mubr.f32.gmra.mrb[0].mxu0 %v9211
        %v9329 = vpop.f32.mrb[0].mxu0
        %v9330 = vadd.f32 0.0, %v9329
        %v9331 = vpop.f32.mrb[0].mxu0
        %9332 = vmatprep.mubr.f32.mxu0 0.0
        %9333 = vmatmul.mubr.f32.gmra.mrb[0].mxu0 %v9212
        %v9334 = vpop.f32.mrb[0].mxu0
        %v9335 = vadd.f32 0.0, %v9334
        %v9336 = vpop.f32.mrb[0].mxu0
        %9337 = vmatprep.mubr.f32.mxu0 0.0
        %9338 = vmatmul.mubr.f32.gmra.mrb[0].mxu0 %v9213
        %v9339 = vpop.f32.mrb[0].mxu0
        %v9340 = vadd.f32 0.0, %v9339
        %v9341 = vpop.f32.mrb[0].mxu0
        %9342 = vmatprep.mubr.f32.mxu0 0.0
        %9343 = vmatmul.mubr.f32.gmra.mrb[0].mxu0 %v9214
        %v9344 = vpop.f32.mrb[0].mxu0
        %v9345 = vadd.f32 0.0, %v9344
        %v9346 = vpop.f32.mrb[0].mxu0
        %9347 = vmatprep.mubr.f32.mxu0 0.0
        %9348 = vmatmul.mubr.f32.gmra.mrb[0].mxu0 %v9215
        %v9349 = vpop.f32.mrb[0].mxu0
        %v9350 = vadd.f32 0.0, %v9349
        %v9351 = vpop.f32.mrb[0].mxu0
        %9352 = vmatprep.mubr.f32.mxu0 0.0
        %9353 = vmatmul.mubr.f32.gmra.mrb[0].mxu0 %v9216
        %v9354 = vpop.f32.mrb[0].mxu0
        %v9355 = vadd.f32 0.0, %v9354
        %v9356 = vpop.f32.mrb[0].mxu0
        %9357 = vmatprep.mubr.f32.mxu0 0.0
        %9358 = vmatmul.mubr.f32.gmra.mrb[0].mxu0 %v9217
        %v9359 = vpop.f32.mrb[0].mxu0
        %v9360 = vadd.f32 0.0, %v9359
        %v9361 = vpop.f32.mrb[0].mxu0
        %9362 = vmatprep.mubr.f32.mxu0 0.0
        %9363 = vmatmul.mubr.f32.gmra.mrb[0].mxu0 %v9218
        %v9364 = vpop.f32.mrb[0].mxu0
        %v9365 = vadd.f32 0.0, %v9364
        %v9366 = vpop.f32.mrb[0].mxu0
        %9367 = vmatprep.mubr.f32.mxu0 0.0
        %9368 = vmatmul.mubr.f32.gmra.mrb[0].mxu0 %v9219
        %v9369 = vpop.f32.mrb[0].mxu0
        %v9370 = vadd.f32 0.0, %v9369
        %v9371 = vpop.f32.mrb[0].mxu0
        %9372 = vmatprep.mubr.f32.mxu0 0.0
        %9373 = vmatmul.mubr.f32.gmra.mrb[0].mxu0 %v9220
        %v9374 = vpop.f32.mrb[0].mxu0
        %v9375 = vadd.f32 0.0, %v9374
        %v9376 = vpop.f32.mrb[0].mxu0
        %9377 = vmatprep.mubr.f32.mxu0 0.0
        %9378 = vmatmul.mubr.f32.gmra.mrb[0].mxu0 %v9221
        %v9379 = vpop.f32.mrb[0].mxu0
        %v9380 = vadd.f32 0.0, %v9379
        %v9381 = vpop.f32.mrb[0].mxu0
        %9382 = vdwg.mxu0
        %v9383 = vadd.f32 %v9158, %v9305
        %v9384 = vadd.f32 %v9159, %v9310
        %v9385 = vadd.f32 %v9160, %v9315
        %v9386 = vadd.f32 %v9161, %v9320
        %v9387 = vadd.f32 %v9162, %v9325
        %v9388 = vadd.f32 %v9163, %v9330
        %v9389 = vadd.f32 %v9164, %v9335
        %v9390 = vadd.f32 %v9165, %v9340
        %v9391 = vadd.f32 %v9166, %v9345
        %v9392 = vadd.f32 %v9167, %v9350
        %v9393 = vadd.f32 %v9168, %v9355
        %v9394 = vadd.f32 %v9169, %v9360
        %v9395 = vadd.f32 %v9170, %v9365
        %v9396 = vadd.f32 %v9171, %v9370
        %v9397 = vadd.f32 %v9172, %v9375
        %v9398 = vadd.f32 %v9173, %v9380
        %v9399 = vadd.f32 %v9383, %v7403
        %v9400 = vadd.f32 %v9384, %v7403
        %v9401 = vadd.f32 %v9385, %v7403
        %v9402 = vadd.f32 %v9386, %v7403
        %v9403 = vadd.f32 %v9387, %v7403
        %v9404 = vadd.f32 %v9388, %v7403
        %v9405 = vadd.f32 %v9389, %v7403
        %v9406 = vadd.f32 %v9390, %v7403
        %v9407 = vadd.f32 %v9391, %v7403
        %v9408 = vadd.f32 %v9392, %v7403
        %v9409 = vadd.f32 %v9393, %v7403
        %v9410 = vadd.f32 %v9394, %v7403
        %v9411 = vadd.f32 %v9395, %v7403
        %v9412 = vadd.f32 %v9396, %v7403
        %v9413 = vadd.f32 %v9397, %v7403
        %v9414 = vadd.f32 %v9398, %v7403
        %9415 = vst [vmem:[%s205 + $0x80] sm:$0xff] %v9399
        %9416 = vst [vmem:[%s205 + $0x88] sm:$0xff] %v9400
        %9417 = vst [vmem:[%s205 + $0x90] sm:$0xff] %v9401
        %9418 = vst [vmem:[%s205 + $0x98] sm:$0xff] %v9402
        %9419 = vst [vmem:[%s205 + $0xa0] sm:$0xff] %v9403
        %9420 = vst [vmem:[%s205 + $0xa8] sm:$0xff] %v9404
        %9421 = vst [vmem:[%s205 + $0xb0] sm:$0xff] %v9405
        %9422 = vst [vmem:[%s205 + $0xb8] sm:$0xff] %v9406
        %9423 = vst [vmem:[%s205 + $0xc0] sm:$0xff] %v9407
        %9424 = vst [vmem:[%s205 + $0xc8] sm:$0xff] %v9408
        %9425 = vst [vmem:[%s205 + $0xd0] sm:$0xff] %v9409
        %9426 = vst [vmem:[%s205 + $0xd8] sm:$0xff] %v9410
        %9427 = vst [vmem:[%s205 + $0xe0] sm:$0xff] %v9411
        %9428 = vst [vmem:[%s205 + $0xe8] sm:$0xff] %v9412
        %9429 = vst [vmem:[%s205 + $0xf0] sm:$0xff] %v9413
        %9430 = vst [vmem:[%s205 + $0xf8] sm:$0xff] %v9414
        %v9431 = vadd.f32 %v9399, %v9400
        %v9432 = vadd.f32 %v9431, %v9401
        %v9433 = vadd.f32 %v9432, %v9402
        %v9434 = vadd.f32 %v9433, %v9403
        %v9435 = vadd.f32 %v9434, %v9404
        %v9436 = vadd.f32 %v9435, %v9405
        %v9437 = vadd.f32 %v9436, %v9406
        %v9438 = vadd.f32 %v9437, %v9407
        %v9439 = vadd.f32 %v9438, %v9408
        %v9440 = vadd.f32 %v9439, %v9409
        %v9441 = vadd.f32 %v9440, %v9410
        %v9442 = vadd.f32 %v9441, %v9411
        %v9443 = vadd.f32 %v9442, %v9412
        %v9444 = vadd.f32 %v9443, %v9413
        %v9445 = vadd.f32 %v9444, %v9414
        %9446 = vadd.xlane.f32.xlu0 %v9445
        %v9447 = vpop.xlane.xlu0 %9446
        %v9448 = vrot.slane %v9447, 4
        %v9449 = vadd.f32 %v9447, %v9448
        %v9450 = vrot.slane %v9449, 2
        %v9451 = vadd.f32 %v9449, %v9450
        %v9452 = vrot.slane %v9451, 1
        %v9453 = vadd.f32 %v9451, %v9452
        %s9454 = vtos %v9453
        %s9455 = sadd.f32 %s7460, %s9454
        %v9456 = vmul.f32 %v9399, %v9399
        %v9457 = vmul.f32 %v9400, %v9400
        %v9458 = vmul.f32 %v9401, %v9401
        %v9459 = vmul.f32 %v9402, %v9402
        %v9460 = vmul.f32 %v9403, %v9403
        %v9461 = vmul.f32 %v9404, %v9404
        %v9462 = vmul.f32 %v9405, %v9405
        %v9463 = vmul.f32 %v9406, %v9406
        %v9464 = vmul.f32 %v9407, %v9407
        %v9465 = vmul.f32 %v9408, %v9408
        %v9466 = vmul.f32 %v9409, %v9409
        %v9467 = vmul.f32 %v9410, %v9410
        %v9468 = vmul.f32 %v9411, %v9411
        %v9469 = vmul.f32 %v9412, %v9412
        %v9470 = vmul.f32 %v9413, %v9413
        %v9471 = vmul.f32 %v9414, %v9414
        %v9472 = vadd.f32 %v9456, %v9457
        %v9473 = vadd.f32 %v9472, %v9458
        %v9474 = vadd.f32 %v9473, %v9459
        %v9475 = vadd.f32 %v9474, %v9460
        %v9476 = vadd.f32 %v9475, %v9461
        %v9477 = vadd.f32 %v9476, %v9462
        %v9478 = vadd.f32 %v9477, %v9463
        %v9479 = vadd.f32 %v9478, %v9464
        %v9480 = vadd.f32 %v9479, %v9465
        %v9481 = vadd.f32 %v9480, %v9466
        %v9482 = vadd.f32 %v9481, %v9467
        %v9483 = vadd.f32 %v9482, %v9468
        %v9484 = vadd.f32 %v9483, %v9469
        %v9485 = vadd.f32 %v9484, %v9470
        %v9486 = vadd.f32 %v9485, %v9471
        %9487 = vadd.xlane.f32.xlu0 %v9486
        %v9488 = vpop.xlane.xlu0 %9487
        %v9489 = vrot.slane %v9488, 4
        %v9490 = vadd.f32 %v9488, %v9489
        %v9491 = vrot.slane %v9490, 2
        %v9492 = vadd.f32 %v9490, %v9491
        %v9493 = vrot.slane %v9492, 1
        %v9494 = vadd.f32 %v9492, %v9493
        %s9495 = vtos %v9494
        %s9496 = sadd.f32 %s7501, %s9495
        %v9497 = vrcp.pop 2048.0
        %s9498 = vtos %v9497
        %s9499 = smul.f32 %s9455, %s9498
        %v9500 = vrcp.pop 2048.0
        %s9501 = vtos %v9500
        %s9502 = smul.f32 %s9496, %s9501
        %s9503 = smul.f32 %s9499, %s9499
        %s9504 = ssub.f32 %s9502, %s9503
        %s9505 = smax.f32 %s9504, 0.0
        %s9506 = sadd.f32 %s9505, 1e-05
        %v9507 = vstv %s9506
        %v9508 = vrsqrt.pop %v9507
        %s9509 = vtos %v9508
        %v9510 = vld [vmem:[%s205] sm:$0xff]
        %v9511 = vld [vmem:[%s205 + $0x8] sm:$0xff]
        %v9512 = vld [vmem:[%s205 + $0x10] sm:$0xff]
        %v9513 = vld [vmem:[%s205 + $0x18] sm:$0xff]
        %v9514 = vld [vmem:[%s205 + $0x20] sm:$0xff]
        %v9515 = vld [vmem:[%s205 + $0x28] sm:$0xff]
        %v9516 = vld [vmem:[%s205 + $0x30] sm:$0xff]
        %v9517 = vld [vmem:[%s205 + $0x38] sm:$0xff]
        %v9518 = vld [vmem:[%s205 + $0x40] sm:$0xff]
        %v9519 = vld [vmem:[%s205 + $0x48] sm:$0xff]
        %v9520 = vld [vmem:[%s205 + $0x50] sm:$0xff]
        %v9521 = vld [vmem:[%s205 + $0x58] sm:$0xff]
        %v9522 = vld [vmem:[%s205 + $0x60] sm:$0xff]
        %v9523 = vld [vmem:[%s205 + $0x68] sm:$0xff]
        %v9524 = vld [vmem:[%s205 + $0x70] sm:$0xff]
        %v9525 = vld [vmem:[%s205 + $0x78] sm:$0xff]
        %v9526 = vstv %s9499
        %v9527 = vsub.f32 %v9510, %v9526
        %v9528 = vsub.f32 %v9511, %v9526
        %v9529 = vsub.f32 %v9512, %v9526
        %v9530 = vsub.f32 %v9513, %v9526
        %v9531 = vsub.f32 %v9514, %v9526
        %v9532 = vsub.f32 %v9515, %v9526
        %v9533 = vsub.f32 %v9516, %v9526
        %v9534 = vsub.f32 %v9517, %v9526
        %v9535 = vsub.f32 %v9518, %v9526
        %v9536 = vsub.f32 %v9519, %v9526
        %v9537 = vsub.f32 %v9520, %v9526
        %v9538 = vsub.f32 %v9521, %v9526
        %v9539 = vsub.f32 %v9522, %v9526
        %v9540 = vsub.f32 %v9523, %v9526
        %v9541 = vsub.f32 %v9524, %v9526
        %v9542 = vsub.f32 %v9525, %v9526
        %v9543 = vstv %s9509
        %v9544 = vmul.f32 %v9527, %v9543
        %v9545 = vmul.f32 %v9528, %v9543
        %v9546 = vmul.f32 %v9529, %v9543
        %v9547 = vmul.f32 %v9530, %v9543
        %v9548 = vmul.f32 %v9531, %v9543
        %v9549 = vmul.f32 %v9532, %v9543
        %v9550 = vmul.f32 %v9533, %v9543
        %v9551 = vmul.f32 %v9534, %v9543
        %v9552 = vmul.f32 %v9535, %v9543
        %v9553 = vmul.f32 %v9536, %v9543
        %v9554 = vmul.f32 %v9537, %v9543
        %v9555 = vmul.f32 %v9538, %v9543
        %v9556 = vmul.f32 %v9539, %v9543
        %v9557 = vmul.f32 %v9540, %v9543
        %v9558 = vmul.f32 %v9541, %v9543
        %v9559 = vmul.f32 %v9542, %v9543
        %v9560 = vlaneseq
        %v9561 = vshrl.u32 %v9560, 7
        %v9562 = vsub.s32 0, %v9561
        %v9563 = vrot.slane %v593, %v9562
        %v9564 = vmul.f32 %v9544, %v9563
        %v9565 = vmul.f32 %v9545, %v9563
        %v9566 = vmul.f32 %v9546, %v9563
        %v9567 = vmul.f32 %v9547, %v9563
        %v9568 = vmul.f32 %v9548, %v9563
        %v9569 = vmul.f32 %v9549, %v9563
        %v9570 = vmul.f32 %v9550, %v9563
        %v9571 = vmul.f32 %v9551, %v9563
        %v9572 = vmul.f32 %v9552, %v9563
        %v9573 = vmul.f32 %v9553, %v9563
        %v9574 = vmul.f32 %v9554, %v9563
        %v9575 = vmul.f32 %v9555, %v9563
        %v9576 = vmul.f32 %v9556, %v9563
        %v9577 = vmul.f32 %v9557, %v9563
        %v9578 = vmul.f32 %v9558, %v9563
        %v9579 = vmul.f32 %v9559, %v9563
        %v9580 = vlaneseq
        %v9581 = vshrl.u32 %v9580, 7
        %v9582 = vsub.s32 0, %v9581
        %v9583 = vrot.slane %v594, %v9582
        %v9584 = vadd.f32 %v9564, %v9583
        %v9585 = vadd.f32 %v9565, %v9583
        %v9586 = vadd.f32 %v9566, %v9583
        %v9587 = vadd.f32 %v9567, %v9583
        %v9588 = vadd.f32 %v9568, %v9583
        %v9589 = vadd.f32 %v9569, %v9583
        %v9590 = vadd.f32 %v9570, %v9583
        %v9591 = vadd.f32 %v9571, %v9583
        %v9592 = vadd.f32 %v9572, %v9583
        %v9593 = vadd.f32 %v9573, %v9583
        %v9594 = vadd.f32 %v9574, %v9583
        %v9595 = vadd.f32 %v9575, %v9583
        %v9596 = vadd.f32 %v9576, %v9583
        %v9597 = vadd.f32 %v9577, %v9583
        %v9598 = vadd.f32 %v9578, %v9583
        %v9599 = vadd.f32 %v9579, %v9583
        %v9600 = vmax.f32 %v9584, 0.0
        %v9601 = vmax.f32 %v9585, 0.0
        %v9602 = vmax.f32 %v9586, 0.0
        %v9603 = vmax.f32 %v9587, 0.0
        %v9604 = vmax.f32 %v9588, 0.0
        %v9605 = vmax.f32 %v9589, 0.0
        %v9606 = vmax.f32 %v9590, 0.0
        %v9607 = vmax.f32 %v9591, 0.0
        %v9608 = vmax.f32 %v9592, 0.0
        %v9609 = vmax.f32 %v9593, 0.0
        %v9610 = vmax.f32 %v9594, 0.0
        %v9611 = vmax.f32 %v9595, 0.0
        %v9612 = vmax.f32 %v9596, 0.0
        %v9613 = vmax.f32 %v9597, 0.0
        %v9614 = vmax.f32 %v9598, 0.0
        %v9615 = vmax.f32 %v9599, 0.0
        %9616 = vst [vmem:[%s205] sm:$0xff] %v9600
        %9617 = vst [vmem:[%s205 + $0x8] sm:$0xff] %v9601
        %9618 = vst [vmem:[%s205 + $0x10] sm:$0xff] %v9602
        %9619 = vst [vmem:[%s205 + $0x18] sm:$0xff] %v9603
        %9620 = vst [vmem:[%s205 + $0x20] sm:$0xff] %v9604
        %9621 = vst [vmem:[%s205 + $0x28] sm:$0xff] %v9605
        %9622 = vst [vmem:[%s205 + $0x30] sm:$0xff] %v9606
        %9623 = vst [vmem:[%s205 + $0x38] sm:$0xff] %v9607
        %9624 = vst [vmem:[%s205 + $0x40] sm:$0xff] %v9608
        %9625 = vst [vmem:[%s205 + $0x48] sm:$0xff] %v9609
        %9626 = vst [vmem:[%s205 + $0x50] sm:$0xff] %v9610
        %9627 = vst [vmem:[%s205 + $0x58] sm:$0xff] %v9611
        %9628 = vst [vmem:[%s205 + $0x60] sm:$0xff] %v9612
        %9629 = vst [vmem:[%s205 + $0x68] sm:$0xff] %v9613
        %9630 = vst [vmem:[%s205 + $0x70] sm:$0xff] %v9614
        %9631 = vst [vmem:[%s205 + $0x78] sm:$0xff] %v9615
        %v9632 = vld [vmem:[%s205 + $0x80] sm:$0xff]
        %v9633 = vld [vmem:[%s205 + $0x88] sm:$0xff]
        %v9634 = vld [vmem:[%s205 + $0x90] sm:$0xff]
        %v9635 = vld [vmem:[%s205 + $0x98] sm:$0xff]
        %v9636 = vld [vmem:[%s205 + $0xa0] sm:$0xff]
        %v9637 = vld [vmem:[%s205 + $0xa8] sm:$0xff]
        %v9638 = vld [vmem:[%s205 + $0xb0] sm:$0xff]
        %v9639 = vld [vmem:[%s205 + $0xb8] sm:$0xff]
        %v9640 = vld [vmem:[%s205 + $0xc0] sm:$0xff]
        %v9641 = vld [vmem:[%s205 + $0xc8] sm:$0xff]
        %v9642 = vld [vmem:[%s205 + $0xd0] sm:$0xff]
        %v9643 = vld [vmem:[%s205 + $0xd8] sm:$0xff]
        %v9644 = vld [vmem:[%s205 + $0xe0] sm:$0xff]
        %v9645 = vld [vmem:[%s205 + $0xe8] sm:$0xff]
        %v9646 = vld [vmem:[%s205 + $0xf0] sm:$0xff]
        %v9647 = vld [vmem:[%s205 + $0xf8] sm:$0xff]
        %v9648 = vsub.f32 %v9632, %v9526
        %v9649 = vsub.f32 %v9633, %v9526
        %v9650 = vsub.f32 %v9634, %v9526
        %v9651 = vsub.f32 %v9635, %v9526
        %v9652 = vsub.f32 %v9636, %v9526
        %v9653 = vsub.f32 %v9637, %v9526
        %v9654 = vsub.f32 %v9638, %v9526
        %v9655 = vsub.f32 %v9639, %v9526
        %v9656 = vsub.f32 %v9640, %v9526
        %v9657 = vsub.f32 %v9641, %v9526
        %v9658 = vsub.f32 %v9642, %v9526
        %v9659 = vsub.f32 %v9643, %v9526
        %v9660 = vsub.f32 %v9644, %v9526
        %v9661 = vsub.f32 %v9645, %v9526
        %v9662 = vsub.f32 %v9646, %v9526
        %v9663 = vsub.f32 %v9647, %v9526
        %v9664 = vmul.f32 %v9648, %v9543
        %v9665 = vmul.f32 %v9649, %v9543
        %v9666 = vmul.f32 %v9650, %v9543
        %v9667 = vmul.f32 %v9651, %v9543
        %v9668 = vmul.f32 %v9652, %v9543
        %v9669 = vmul.f32 %v9653, %v9543
        %v9670 = vmul.f32 %v9654, %v9543
        %v9671 = vmul.f32 %v9655, %v9543
        %v9672 = vmul.f32 %v9656, %v9543
        %v9673 = vmul.f32 %v9657, %v9543
        %v9674 = vmul.f32 %v9658, %v9543
        %v9675 = vmul.f32 %v9659, %v9543
        %v9676 = vmul.f32 %v9660, %v9543
        %v9677 = vmul.f32 %v9661, %v9543
        %v9678 = vmul.f32 %v9662, %v9543
        %v9679 = vmul.f32 %v9663, %v9543
        %v9680 = vmul.f32 %v9664, %v9563
        %v9681 = vmul.f32 %v9665, %v9563
        %v9682 = vmul.f32 %v9666, %v9563
        %v9683 = vmul.f32 %v9667, %v9563
        %v9684 = vmul.f32 %v9668, %v9563
        %v9685 = vmul.f32 %v9669, %v9563
        %v9686 = vmul.f32 %v9670, %v9563
        %v9687 = vmul.f32 %v9671, %v9563
        %v9688 = vmul.f32 %v9672, %v9563
        %v9689 = vmul.f32 %v9673, %v9563
        %v9690 = vmul.f32 %v9674, %v9563
        %v9691 = vmul.f32 %v9675, %v9563
        %v9692 = vmul.f32 %v9676, %v9563
        %v9693 = vmul.f32 %v9677, %v9563
        %v9694 = vmul.f32 %v9678, %v9563
        %v9695 = vmul.f32 %v9679, %v9563
        %v9696 = vadd.f32 %v9680, %v9583
        %v9697 = vadd.f32 %v9681, %v9583
        %v9698 = vadd.f32 %v9682, %v9583
        %v9699 = vadd.f32 %v9683, %v9583
        %v9700 = vadd.f32 %v9684, %v9583
        %v9701 = vadd.f32 %v9685, %v9583
        %v9702 = vadd.f32 %v9686, %v9583
        %v9703 = vadd.f32 %v9687, %v9583
        %v9704 = vadd.f32 %v9688, %v9583
        %v9705 = vadd.f32 %v9689, %v9583
        %v9706 = vadd.f32 %v9690, %v9583
        %v9707 = vadd.f32 %v9691, %v9583
        %v9708 = vadd.f32 %v9692, %v9583
        %v9709 = vadd.f32 %v9693, %v9583
        %v9710 = vadd.f32 %v9694, %v9583
        %v9711 = vadd.f32 %v9695, %v9583
        %v9712 = vmax.f32 %v9696, 0.0
        %v9713 = vmax.f32 %v9697, 0.0
        %v9714 = vmax.f32 %v9698, 0.0
        %v9715 = vmax.f32 %v9699, 0.0
        %v9716 = vmax.f32 %v9700, 0.0
        %v9717 = vmax.f32 %v9701, 0.0
        %v9718 = vmax.f32 %v9702, 0.0
        %v9719 = vmax.f32 %v9703, 0.0
        %v9720 = vmax.f32 %v9704, 0.0
        %v9721 = vmax.f32 %v9705, 0.0
        %v9722 = vmax.f32 %v9706, 0.0
        %v9723 = vmax.f32 %v9707, 0.0
        %v9724 = vmax.f32 %v9708, 0.0
        %v9725 = vmax.f32 %v9709, 0.0
        %v9726 = vmax.f32 %v9710, 0.0
        %v9727 = vmax.f32 %v9711, 0.0
        %9728 = vst [vmem:[%s205 + $0x80] sm:$0xff] %v9712
        %9729 = vst [vmem:[%s205 + $0x88] sm:$0xff] %v9713
        %9730 = vst [vmem:[%s205 + $0x90] sm:$0xff] %v9714
        %9731 = vst [vmem:[%s205 + $0x98] sm:$0xff] %v9715
        %9732 = vst [vmem:[%s205 + $0xa0] sm:$0xff] %v9716
        %9733 = vst [vmem:[%s205 + $0xa8] sm:$0xff] %v9717
        %9734 = vst [vmem:[%s205 + $0xb0] sm:$0xff] %v9718
        %9735 = vst [vmem:[%s205 + $0xb8] sm:$0xff] %v9719
        %9736 = vst [vmem:[%s205 + $0xc0] sm:$0xff] %v9720
        %9737 = vst [vmem:[%s205 + $0xc8] sm:$0xff] %v9721
        %9738 = vst [vmem:[%s205 + $0xd0] sm:$0xff] %v9722
        %9739 = vst [vmem:[%s205 + $0xd8] sm:$0xff] %v9723
        %9740 = vst [vmem:[%s205 + $0xe0] sm:$0xff] %v9724
        %9741 = vst [vmem:[%s205 + $0xe8] sm:$0xff] %v9725
        %9742 = vst [vmem:[%s205 + $0xf0] sm:$0xff] %v9726
        %9743 = vst [vmem:[%s205 + $0xf8] sm:$0xff] %v9727
        %s9744 = sand.u32 %s116, 1
        %s9745 = scalar_lea.sflag [#allocation6], %s9744
        %s9746 = sand.u32 %s116, 1
        %s9747 = smul.addr %s9746, 256
        %s9748 = scalar_lea.vmem [#allocation7], %s9747
        // Predicated region
        $region41: #{tpu_custom_call.1} parent=35 // pred_check
          %p9749 = pneg %p126
        $region42: #{tpu_custom_call.1} parent=35 // pred_check_branch
          %9751 = sbr.rel (%p9749) target = $region44
        $region43: #{tpu_custom_call.1} parent=35 // pred_region
          %s9753 = ssub.s32 4096, 4096
          %9754 = vsyncadd %s9745, %s9753
          %s9755 = smul.addr %s19, 32
          %s9756 = smul.addr %s9755, 128
          %s9757 = scalar_lea.hbm %s4, %s9756
          %s9758 = sshll.u32 %s9748, 4
          %s9759 = int_to_ptr.vmem [resolvable:$true] %s9758
          %9764 = dma.vmem_to_hbm [thread:$0]  %s9759, 4096, %s9757, %s9745, 128, 128, 8
        $region44: #{tpu_custom_call.1} parent=35 // pred_fallthru
          _
      $region36: #{tpu_custom_call.1} parent=5 // pred_fallthru
        _
      %p9765 = scmp.le.s32.totalorder 2, %s14
      // Predicated region
      $region45: #{tpu_custom_call.1} parent=5 // pred_check
        %p9766 = pneg %p9765
      $region46: #{tpu_custom_call.1} parent=5 // pred_check_branch
        %9768 = sbr.rel (%p9766) target = $region48
      $region47: #{tpu_custom_call.1} parent=5 // pred_region
        %s9769 = ssub.s32 %s14, 2
        // Predicated region
        $region49: #{tpu_custom_call.1} parent=47 // pred_check
          %p9770 = pneg %p132
        $region50: #{tpu_custom_call.1} parent=47 // pred_check_branch
          %9772 = sbr.rel (%p9770) target = $region52
        $region51: #{tpu_custom_call.1} parent=47 // pred_region
          %s9773 = sand.u32 %s117, 1
          %s9774 = scalar_lea.sflag [#allocation6], %s9773
          %s9775 = sand.u32 %s117, 1
          %s9776 = smul.addr %s9775, 256
          %s9777 = scalar_lea.vmem [#allocation7], %s9776
          %9778 = dma.done %s9774, 4096
        $region52: #{tpu_custom_call.1} parent=47 // pred_fallthru
          _
      $region48: #{tpu_custom_call.1} parent=5 // pred_fallthru
        _
    $region6: #{tpu_custom_call.1} parent=1 // loop_footer
      %s18 = sadd.s32 1, %s14
    $region7: #{tpu_custom_call.1} parent=1 // loop_footer_branch
      %13 = sbr.rel target = $region3
    $region8: #{tpu_custom_call.1} parent=1 // loop_exit
      _
    %9779 = vsyncpa [#allocation5], 1
    %s9780 = scalar_lea.sflag [#allocation5], 1
    %9781 = vsyncpa %s9780, 1
    %9782 = vsyncpa [#allocation6], 1
    %s9783 = scalar_lea.sflag [#allocation6], 1
    %9784 = vsyncpa %s9783, 1

</llo_original>
